<compile_context>
chip_gen: v6e
topology: v6e:2x2x1
jax: 0.10.0
libtpu: 0.0.40
codegen_flags: <defaults>
</compile_context>

<pallas_src>
import functools

import jax
import jax.numpy as jnp
from jax.experimental import pallas as pl
from jax.experimental.pallas import tpu as pltpu

LRELU_SLOPE = 0.01               # matches nn.LeakyReLU(lrelu_slope=0.01) in the spec
TIME_TILE_CAP = 512              # max lane tile (multiple of 128); tune up for real T
HALO_BLOCK = 128                 # lane block used to fetch the inter-tile halo
COMPUTE_DTYPE = jnp.bfloat16     # MXU operand dtype; accumulation is always f32
VMEM_LIMIT_BYTES = 32 * 1024 * 1024   # safe on v5e/v6e/v7x; tiles sized well under it


def _pick_time_tile(T):
    """Largest multiple-of-128 divisor of T that is <= TIME_TILE_CAP (else full T)."""
    if T <= TIME_TILE_CAP:
        return T
    for tt in range(TIME_TILE_CAP, HALO_BLOCK - 1, -HALO_BLOCK):
        if T % tt == 0:
            return tt
    return T


# ----------------------------------------------------------------------------
# Fused Conv1d kernel: im2col single-dot + bias + (pre/post) activation +
# optional residual add (own input) + optional extra-branch add + output scale.
# ----------------------------------------------------------------------------
def _conv1d_kernel(x0_ref, *rest, K, dilation, TT, halo, left, tiled,
                   pre_act, post_act, add_input, has_extra, out_scale,
                   compute_dtype):
    pos = 0
    x1_ref = None
    if tiled:
        x1_ref = rest[pos]; pos += 1
    w_ref = rest[pos]; pos += 1
    b_ref = rest[pos]; pos += 1
    extra_ref = None
    if has_extra:
        extra_ref = rest[pos]; pos += 1
    o_ref = rest[pos]

    if tiled and halo > 0:
        # current tile + halo lanes from the next 128-lane block of the same array
        win = jnp.concatenate([x0_ref[0], x1_ref[0, :, :halo]], axis=1)
    else:
        win = x0_ref[0]                              # (Cin, TT + halo)
    x = win.astype(jnp.float32)

    if pre_act == "lrelu":
        # lrelu(0) == 0, so applying it to the zero padding is exact.
        xa = jnp.where(x > 0, x, LRELU_SLOPE * x)
    else:
        xa = x

    # im2col: stack the K shifted tap windows -> single MXU contraction.
    taps = [xa[:, k * dilation:k * dilation + TT] for k in range(K)]
    xcol = jnp.concatenate(taps, axis=0) if K > 1 else taps[0]   # (K*Cin, TT), f32
    xcol = xcol.astype(compute_dtype)

    acc = jnp.dot(w_ref[...], xcol, preferred_element_type=jnp.float32)  # (Cout, TT)
    acc = acc + b_ref[...].astype(jnp.float32)

    if add_input:                                    # fused ResBlock residual (raw input)
        acc = acc + x[:, left:left + TT]
    if has_extra:                                    # fused MRF branch accumulation
        acc = acc + extra_ref[0].astype(jnp.float32)
    if out_scale != 1.0:                             # fused MRF mean
        acc = acc * out_scale

    if post_act == "lrelu":
        acc = jnp.where(acc > 0, acc, LRELU_SLOPE * acc)
    elif post_act == "tanh":
        acc = jnp.tanh(acc)                          # f32 tanh -> |out| <= 1

    o_ref[0] = acc.astype(o_ref.dtype)


def _conv1d_call(x, w2d, b2, *, K, dilation, pre_act="none", post_act="none",
                 add_input=False, extra=None, out_scale=1.0):
    """x: (B, Cin, T); w2d: (Cout, K*Cin) im2col weights; b2: (Cout, 1)."""
    B, Cin, T = x.shape
    Cout = w2d.shape[0]
    assert w2d.shape[1] == K * Cin
    if add_input:
        assert Cin == Cout, "fused residual add requires Cin == Cout"

    halo = dilation * (K - 1)
    left = halo // 2
    TT = _pick_time_tile(T)
    nT = T // TT
    tiled = nT > 1

    if tiled:
        assert TT % HALO_BLOCK == 0 and halo <= HALO_BLOCK
        xp = jnp.pad(x, ((0, 0), (0, 0), (left, HALO_BLOCK - left)))
        in_specs = [pl.BlockSpec((1, Cin, TT), lambda b, t: (b, 0, t))]
        hb = TT // HALO_BLOCK
        in_specs.append(pl.BlockSpec((1, Cin, HALO_BLOCK),
                                     lambda b, t, hb=hb: (b, 0, (t + 1) * hb)))
        inputs = [xp, xp]
    else:
        xp = jnp.pad(x, ((0, 0), (0, 0), (left, halo - left)))
        in_specs = [pl.BlockSpec((1, Cin, T + halo), lambda b, t: (b, 0, 0))]
        inputs = [xp]

    in_specs.append(pl.BlockSpec((Cout, K * Cin), lambda b, t: (0, 0)))
    inputs.append(w2d)
    in_specs.append(pl.BlockSpec((Cout, 1), lambda b, t: (0, 0)))
    inputs.append(b2)
    if extra is not None:
        in_specs.append(pl.BlockSpec((1, Cout, TT), lambda b, t: (b, 0, t)))
        inputs.append(extra)

    kernel = functools.partial(
        _conv1d_kernel, K=K, dilation=dilation, TT=TT, halo=halo, left=left,
        tiled=tiled, pre_act=pre_act, post_act=post_act, add_input=add_input,
        has_extra=extra is not None, out_scale=float(out_scale),
        compute_dtype=w2d.dtype)

    return pl.pallas_call(
        kernel,
        out_shape=jax.ShapeDtypeStruct((B, Cout, T), x.dtype),
        grid=(B, nT),
        in_specs=in_specs,
        out_specs=pl.BlockSpec((1, Cout, TT), lambda b, t: (b, 0, t)),
        compiler_params=pltpu.CompilerParams(
            dimension_semantics=("parallel", "parallel"),
            vmem_limit_bytes=VMEM_LIMIT_BYTES),
    )(*inputs)


# ----------------------------------------------------------------------------
# Polyphase ConvTranspose1d (K = 2*stride, padding = stride//2) with fused
# pre-activation LeakyReLU.  Each output phase r is a 2-tap conv on the
# ORIGINAL signal (no zero insertion, no wasted FLOPs).
# ----------------------------------------------------------------------------
def _upsample_kernel(x0_ref, *rest, S, TT, d_list, tiled, compute_dtype):
    pos = 0
    x1_ref = None
    if tiled:
        x1_ref = rest[pos]; pos += 1
    w_ref = rest[pos]
    b_ref = rest[pos + 1]
    o_ref = rest[pos + 2]

    if tiled:
        win = jnp.concatenate([x0_ref[0], x1_ref[0, :, :2]], axis=1)  # (Cin, TT+2)
    else:
        win = x0_ref[0]
    x = win.astype(jnp.float32)
    x = jnp.where(x > 0, x, LRELU_SLOPE * x)         # fused UpMRF pre-lrelu
    b = b_ref[...].astype(jnp.float32)               # (Cout, 1)

    for r in range(S):
        d = d_list[r]
        xcol = jnp.concatenate([x[:, d:d + TT], x[:, d + 1:d + 1 + TT]], axis=0)
        xcol = xcol.astype(compute_dtype)            # (2*Cin, TT)
        ph = jnp.dot(w_ref[r], xcol, preferred_element_type=jnp.float32) + b
        o_ref[0, r] = ph.astype(o_ref.dtype)


def _upsample_call(x, wph, b2, d_list, stride):
    """x: (B, Cin, T); wph: (stride, Cout, 2*Cin); returns (B, Cout, T*stride)."""
    B, Cin, T = x.shape
    S, Cout, two_cin = wph.shape
    assert two_cin == 2 * Cin and S == stride

    TT = _pick_time_tile(T)
    nT = T // TT
    tiled = nT > 1

    if tiled:
        assert TT % HALO_BLOCK == 0
        xp = jnp.pad(x, ((0, 0), (0, 0), (1, HALO_BLOCK - 1)))
        in_specs = [pl.BlockSpec((1, Cin, TT), lambda b, t: (b, 0, t))]
        hb = TT // HALO_BLOCK
        in_specs.append(pl.BlockSpec((1, Cin, HALO_BLOCK),
                                     lambda b, t, hb=hb: (b, 0, (t + 1) * hb)))
        inputs = [xp, xp]
    else:
        xp = jnp.pad(x, ((0, 0), (0, 0), (1, 1)))
        in_specs = [pl.BlockSpec((1, Cin, T + 2), lambda b, t: (b, 0, 0))]
        inputs = [xp]

    in_specs += [pl.BlockSpec((S, Cout, 2 * Cin), lambda b, t: (0, 0, 0)),
                 pl.BlockSpec((Cout, 1), lambda b, t: (0, 0))]
    inputs += [wph, b2]

    kernel = functools.partial(_upsample_kernel, S=S, TT=TT,
                               d_list=tuple(d_list), tiled=tiled,
                               compute_dtype=wph.dtype)

    y = pl.pallas_call(
        kernel,
        out_shape=jax.ShapeDtypeStruct((B, S, Cout, T), x.dtype),
        grid=(B, nT),
        in_specs=in_specs,
        out_specs=pl.BlockSpec((1, S, Cout, TT), lambda b, t: (b, 0, 0, t)),
        compiler_params=pltpu.CompilerParams(
            dimension_semantics=("parallel", "parallel"),
            vmem_limit_bytes=VMEM_LIMIT_BYTES),
    )(*inputs)

    # interleave phases on the time axis: out[..., q*S + r] = y[:, r, :, q]
    return jnp.transpose(y, (0, 2, 3, 1)).reshape(B, Cout, T * stride)


# ----------------------------------------------------------------------------
# Parameter construction (deterministic synthetic weights) + one-time prep.
# ----------------------------------------------------------------------------
def _winit(key, shape, scale=0.01):
    return scale * jax.random.normal(key, shape, dtype=jnp.float32)


def make_generator_params(key, *, feat_in, kernel_pre, c_stack_i, upmrf_cfgs,
                          c_stack_o, kernel_post,
                          res_kernels=(3, 5), res_dilations=(1, 3)):
    keys = iter(jax.random.split(key, 256))
    params = {
        "pre_w": _winit(next(keys), (c_stack_i, feat_in, kernel_pre)),
        "pre_b": jnp.zeros((c_stack_i,), jnp.float32),
        "post_w": _winit(next(keys), (1, c_stack_o, kernel_post)),
        "post_b": jnp.zeros((1,), jnp.float32),
        "upmrfs": [],
    }
    c_in = c_stack_i
    for (c_out, stride) in upmrf_cfgs:
        layer = {
            "stride": stride,
            "up_w": _winit(next(keys), (c_in, c_out, 2 * stride)),  # ConvTranspose1d layout
            "up_b": jnp.zeros((c_out,), jnp.float32),
            "resblocks": [],
        }
        for rk in res_kernels:
            rb = []
            for d in res_dilations:
                rb.append((_winit(next(keys), (c_out, c_out, rk)),
                           jnp.zeros((c_out,), jnp.float32), d))
            layer["resblocks"].append(rb)
        params["upmrfs"].append(layer)
        c_in = c_out
    assert c_in == c_stack_o, "last UpMRF output channels must equal c_stack_o"
    return params


def _im2col_weight(w):
    cout, cin, k = w.shape
    return jnp.transpose(w, (0, 2, 1)).reshape(cout, k * cin)   # rows: [tap0|tap1|...]


def _polyphase_weights(w_t, stride):
    """Split ConvTranspose1d weights (Cin, Cout, K=2*stride, pad=stride//2) into
    per-phase 2-tap im2col filters.  y[q*s+r] = W_r @ [xp[:,q+d_r]; xp[:,q+d_r+1]]."""
    cin, cout, k = w_t.shape
    assert k == 2 * stride and stride % 2 == 0, \
        "polyphase path assumes K == 2*stride and even stride"
    p = stride // 2
    phases, d_list = [], []
    for r in range(stride):
        k0 = (r + p) % stride
        k1 = k0 + stride
        d_list.append((r + p) // stride)
        w_lo = jnp.transpose(w_t[:, :, k1])     # multiplies xp[:, q + d]
        w_hi = jnp.transpose(w_t[:, :, k0])     # multiplies xp[:, q + d + 1]
        phases.append(jnp.concatenate([w_lo, w_hi], axis=1))    # (Cout, 2*Cin)
    return jnp.stack(phases, axis=0), tuple(d_list)


def prepare_params(params, compute_dtype=COMPUTE_DTYPE):
    """One-time weight transforms (im2col / polyphase / bf16 cast)."""
    def conv_entry(w, b, dil):
        cout, cin, k = w.shape
        return dict(w=_im2col_weight(w).astype(compute_dtype),
                    b=b.reshape(-1, 1).astype(jnp.float32),
                    K=int(k), dil=int(dil))
    prep = dict(
        pre=conv_entry(params["pre_w"], params["pre_b"], 1),
        post=conv_entry(params["post_w"], params["post_b"], 1),
        upmrfs=[],
    )
    for up in params["upmrfs"]:
        wph, d_list = _polyphase_weights(up["up_w"], up["stride"])
        entry = dict(stride=int(up["stride"]),
                     wph=wph.astype(compute_dtype),
                     b=up["up_b"].reshape(-1, 1).astype(jnp.float32),
                     d_list=d_list,
                     resblocks=[])
        for rb in up["resblocks"]:
            entry["resblocks"].append([conv_entry(w, b, d) for (w, b, d) in rb])
        prep["upmrfs"].append(entry)
    return prep


# ----------------------------------------------------------------------------
# Generator forward: pre_conv -> UpMRF xL -> LeakyReLU -> post_conv -> Tanh
# ----------------------------------------------------------------------------
def generator_forward(prep, cond_series):
    pre = prep["pre"]
    h = _conv1d_call(cond_series, pre["w"], pre["b"], K=pre["K"], dilation=pre["dil"])

    for up in prep["upmrfs"]:
        # lrelu + polyphase ConvTranspose1d upsample (fused)
        h = _upsample_call(h, up["wph"], up["b"], up["d_list"], up["stride"])

        # MRF: mean over ResBlock2-style stacks; residual adds, the branch sum
        # and the 1/n mean are all fused into the conv kernels.
        rbs = up["resblocks"]
        n_rb = len(rbs)
        branch_sum = None
        for rb in rbs[:-1]:
            xr = h
            for lay in rb:
                xr = _conv1d_call(xr, lay["w"], lay["b"], K=lay["K"],
                                  dilation=lay["dil"], pre_act="lrelu",
                                  add_input=True)
            branch_sum = xr if branch_sum is None else branch_sum + xr
        xr = h
        last_rb = rbs[-1]
        for lay in last_rb[:-1]:
            xr = _conv1d_call(xr, lay["w"], lay["b"], K=lay["K"],
                              dilation=lay["dil"], pre_act="lrelu",
                              add_input=True)
        lay = last_rb[-1]
        h = _conv1d_call(xr, lay["w"], lay["b"], K=lay["K"], dilation=lay["dil"],
                         pre_act="lrelu", add_input=True,
                         extra=branch_sum, out_scale=1.0 / n_rb)

    # final LeakyReLU + post_conv + Tanh, fused into one Pallas conv kernel
    post = prep["post"]
    h = _conv1d_call(h, post["w"], post["b"], K=post["K"], dilation=post["dil"],
                     pre_act="lrelu", post_act="tanh")
    return h[:, 0, :]                                # (B, T_out)


if __name__ == "__main__":
    # Small, self-consistent configuration.  T=320 is chosen so that both the
    # single-tile and the T-tiled (multi-block + halo) kernel paths execute.
    B, FEAT_IN, T = 2, 8, 320
    KERNEL_PRE, KERNEL_POST = 7, 7
    C_STACK_I, C_STACK_O = 32, 8
    UPMRF_CFGS = [(16, 2), (8, 2)]        # (out_channels, stride) per UpMRF

    root = jax.random.PRNGKey(0)
    k_params, k_input = jax.random.split(root)

    params = make_generator_params(
        k_params,
        feat_in=FEAT_IN, kernel_pre=KERNEL_PRE, c_stack_i=C_STACK_I,
        upmrf_cfgs=UPMRF_CFGS, c_stack_o=C_STACK_O, kernel_post=KERNEL_POST,
    )
    prep = prepare_params(params)

    cond_series = jax.random.normal(k_input, (B, FEAT_IN, T), dtype=jnp.float32)

    fwd = jax.jit(lambda c: generator_forward(prep, c))
    wav = jax.block_until_ready(fwd(cond_series))

    expected_T = T
    for (_, s) in UPMRF_CFGS:
        expected_T *= s
    assert wav.shape == (B, expected_T), wav.shape
    assert bool(jnp.all(jnp.isfinite(wav)))
    assert bool(jnp.all(jnp.abs(wav) <= 1.0))   # tanh (computed in f32) output

    print("KERNEL_OK")
</pallas_src>

<mosaic_0001>
module attributes {stable_mosaic.version = 11 : i64} {
  func.func @_conv1d_kernel(%arg0: i32, %arg1: i32, %arg2: memref<1x8x326xf32, #tpu.memory_space<vmem>>, %arg3: memref<32x56xbf16, #tpu.memory_space<vmem>>, %arg4: memref<32x1xf32, #tpu.memory_space<vmem>>, %arg5: memref<1x32x320xf32, #tpu.memory_space<vmem>>) attributes {dimension_semantics = [#tpu.dimension_semantics<parallel>, #tpu.dimension_semantics<parallel>], iteration_bounds = array<i64: 2, 1>, scalar_prefetch = 0 : i64, scratch_operands = 0 : i64, tpu.core_type = #tpu.core_type<tc>, window_params = [{transform_indices = @transform_0, window_bounds = array<i64: 1, 8, 326>}, {pipeline_mode = #tpu.pipeline_mode<synchronous>, transform_indices = @transform_1, window_bounds = array<i64: 32, 56>}, {pipeline_mode = #tpu.pipeline_mode<synchronous>, transform_indices = @transform_2, window_bounds = array<i64: 32, 1>}, {transform_indices = @transform_3, window_bounds = array<i64: 1, 32, 320>}]} {
    %c0 = arith.constant 0 : index
    %c0_0 = arith.constant 0 : index
    %c0_1 = arith.constant 0 : index
    %0 = vector.load %arg2[%c0, %c0_0, %c0_1] : memref<1x8x326xf32, #tpu.memory_space<vmem>>, vector<1x8x326xf32>
    %1 = vector.shape_cast %0 : vector<1x8x326xf32> to vector<8x326xf32>
    %2 = vector.extract_strided_slice %1 {offsets = [0, 0], sizes = [8, 320], strides = [1, 1]} : vector<8x326xf32> to vector<8x320xf32>
    %3 = vector.extract_strided_slice %1 {offsets = [0, 1], sizes = [8, 320], strides = [1, 1]} : vector<8x326xf32> to vector<8x320xf32>
    %4 = vector.extract_strided_slice %1 {offsets = [0, 2], sizes = [8, 320], strides = [1, 1]} : vector<8x326xf32> to vector<8x320xf32>
    %5 = vector.extract_strided_slice %1 {offsets = [0, 3], sizes = [8, 320], strides = [1, 1]} : vector<8x326xf32> to vector<8x320xf32>
    %6 = vector.extract_strided_slice %1 {offsets = [0, 4], sizes = [8, 320], strides = [1, 1]} : vector<8x326xf32> to vector<8x320xf32>
    %7 = vector.extract_strided_slice %1 {offsets = [0, 5], sizes = [8, 320], strides = [1, 1]} : vector<8x326xf32> to vector<8x320xf32>
    %8 = vector.extract_strided_slice %1 {offsets = [0, 6], sizes = [8, 320], strides = [1, 1]} : vector<8x326xf32> to vector<8x320xf32>
    %9 = tpu.concatenate %2, %3, %4, %5, %6, %7, %8 in 0 : vector<8x320xf32>, vector<8x320xf32>, vector<8x320xf32>, vector<8x320xf32>, vector<8x320xf32>, vector<8x320xf32>, vector<8x320xf32> -> vector<56x320xf32>
    %10 = arith.truncf %9 : vector<56x320xf32> to vector<56x320xbf16>
    %c0_2 = arith.constant 0 : index
    %c0_3 = arith.constant 0 : index
    %11 = vector.load %arg3[%c0_2, %c0_3] : memref<32x56xbf16, #tpu.memory_space<vmem>>, vector<32x56xbf16>
    %cst = arith.constant dense<0.000000e+00> : vector<32x320xf32>
    %12 = tpu.matmul %11, %10, %cst {dimension_numbers = #tpu.dot_dimension_numbers<[1], [0], [0], [1], [0, 0, 1, 1], [], []>} : vector<32x56xbf16>, vector<56x320xbf16>, vector<32x320xf32> -> vector<32x320xf32>
    %c0_4 = arith.constant 0 : index
    %c0_5 = arith.constant 0 : index
    %13 = vector.load %arg4[%c0_4, %c0_5] : memref<32x1xf32, #tpu.memory_space<vmem>>, vector<32x1xf32>
    %14 = vector.broadcast %13 : vector<32x1xf32> to vector<32x320xf32>
    %15 = arith.addf %12, %14 : vector<32x320xf32>
    %c0_6 = arith.constant 0 : index
    %c0_7 = arith.constant 0 : index
    %c0_8 = arith.constant 0 : index
    %16 = vector.load %arg5[%c0_6, %c0_7, %c0_8] : memref<1x32x320xf32, #tpu.memory_space<vmem>>, vector<1x32x320xf32>
    %17 = vector.shape_cast %16 : vector<1x32x320xf32> to vector<32x320xf32>
    %18 = vector.shape_cast %15 : vector<32x320xf32> to vector<1x32x320xf32>
    tpu.vector_store %arg5[%c0_6, %c0_7, %c0_8], %18 {strides = array<i32>} : memref<1x32x320xf32, #tpu.memory_space<vmem>>, vector<1x32x320xf32>,
    return
  }
  func.func @transform_0(%arg0: i32, %arg1: i32) -> (i32, i32, i32) {
    %c0_i32 = arith.constant 0 : i32
    %c0_i32_0 = arith.constant 0 : i32
    %c0_i32_1 = arith.constant 0 : i32
    return %arg0, %c0_i32, %c0_i32_0 : i32, i32, i32
  }
  func.func @transform_1(%arg0: i32, %arg1: i32) -> (i32, i32) {
    %c0_i32 = arith.constant 0 : i32
    %c0_i32_0 = arith.constant 0 : i32
    %c0_i32_1 = arith.constant 0 : i32
    return %c0_i32, %c0_i32_0 : i32, i32
  }
  func.func @transform_2(%arg0: i32, %arg1: i32) -> (i32, i32) {
    %c0_i32 = arith.constant 0 : i32
    %c0_i32_0 = arith.constant 0 : i32
    %c0_i32_1 = arith.constant 0 : i32
    return %c0_i32, %c0_i32_0 : i32, i32
  }
  func.func @transform_3(%arg0: i32, %arg1: i32) -> (i32, i32, i32) {
    %c0_i32 = arith.constant 0 : i32
    %c0_i32_0 = arith.constant 0 : i32
    return %arg0, %c0_i32, %arg1 : i32, i32, i32
  }
}

module attributes {stable_mosaic.version = 11 : i64} {
  func.func @_upsample_kernel(%arg0: i32, %arg1: i32, %arg2: memref<1x32x322xf32, #tpu.memory_space<vmem>>, %arg3: memref<2x16x64xbf16, #tpu.memory_space<vmem>>, %arg4: memref<16x1xf32, #tpu.memory_space<vmem>>, %arg5: memref<1x2x16x320xf32, #tpu.memory_space<vmem>>) attributes {dimension_semantics = [#tpu.dimension_semantics<parallel>, #tpu.dimension_semantics<parallel>], iteration_bounds = array<i64: 2, 1>, scalar_prefetch = 0 : i64, scratch_operands = 0 : i64, tpu.core_type = #tpu.core_type<tc>, window_params = [{transform_indices = @transform_0, window_bounds = array<i64: 1, 32, 322>}, {pipeline_mode = #tpu.pipeline_mode<synchronous>, transform_indices = @transform_1, window_bounds = array<i64: 2, 16, 64>}, {pipeline_mode = #tpu.pipeline_mode<synchronous>, transform_indices = @transform_2, window_bounds = array<i64: 16, 1>}, {transform_indices = @transform_3, window_bounds = array<i64: 1, 2, 16, 320>}]} {
    %c0 = arith.constant 0 : index
    %c0_0 = arith.constant 0 : index
    %c0_1 = arith.constant 0 : index
    %0 = vector.load %arg2[%c0, %c0_0, %c0_1] : memref<1x32x322xf32, #tpu.memory_space<vmem>>, vector<1x32x322xf32>
    %1 = vector.shape_cast %0 : vector<1x32x322xf32> to vector<32x322xf32>
    %cst = arith.constant 0.000000e+00 : f32
    %2 = vector.broadcast %cst : f32 to vector<32x322xf32>
    %3 = arith.cmpf ogt, %1, %2 : vector<32x322xf32>
    %cst_2 = arith.constant 0.00999999977 : f32
    %4 = vector.broadcast %cst_2 : f32 to vector<32x322xf32>
    %5 = arith.mulf %4, %1 : vector<32x322xf32>
    %6 = arith.select %3, %1, %5 : vector<32x322xi1>, vector<32x322xf32>
    %c0_3 = arith.constant 0 : index
    %c0_4 = arith.constant 0 : index
    %7 = vector.load %arg4[%c0_3, %c0_4] : memref<16x1xf32, #tpu.memory_space<vmem>>, vector<16x1xf32>
    %8 = vector.extract_strided_slice %6 {offsets = [0, 0], sizes = [32, 320], strides = [1, 1]} : vector<32x322xf32> to vector<32x320xf32>
    %9 = vector.extract_strided_slice %6 {offsets = [0, 1], sizes = [32, 320], strides = [1, 1]} : vector<32x322xf32> to vector<32x320xf32>
    %10 = tpu.concatenate %8, %9 in 0 : vector<32x320xf32>, vector<32x320xf32> -> vector<64x320xf32>
    %11 = arith.truncf %10 : vector<64x320xf32> to vector<64x320xbf16>
    %c0_5 = arith.constant 0 : index
    %c0_6 = arith.constant 0 : index
    %c0_7 = arith.constant 0 : index
    %12 = vector.load %arg3[%c0_5, %c0_6, %c0_7] : memref<2x16x64xbf16, #tpu.memory_space<vmem>>, vector<1x16x64xbf16>
    %13 = vector.shape_cast %12 : vector<1x16x64xbf16> to vector<16x64xbf16>
    %cst_8 = arith.constant dense<0.000000e+00> : vector<16x320xf32>
    %14 = tpu.matmul %13, %11, %cst_8 {dimension_numbers = #tpu.dot_dimension_numbers<[1], [0], [0], [1], [0, 0, 1, 1], [], []>} : vector<16x64xbf16>, vector<64x320xbf16>, vector<16x320xf32> -> vector<16x320xf32>
    %15 = vector.broadcast %7 : vector<16x1xf32> to vector<16x320xf32>
    %16 = arith.addf %14, %15 : vector<16x320xf32>
    %c0_9 = arith.constant 0 : index
    %c0_10 = arith.constant 0 : index
    %c0_11 = arith.constant 0 : index
    %c0_12 = arith.constant 0 : index
    %17 = vector.load %arg5[%c0_9, %c0_10, %c0_11, %c0_12] : memref<1x2x16x320xf32, #tpu.memory_space<vmem>>, vector<1x1x16x320xf32>
    %18 = vector.shape_cast %17 : vector<1x1x16x320xf32> to vector<16x320xf32>
    %19 = vector.shape_cast %16 : vector<16x320xf32> to vector<1x1x16x320xf32>
    tpu.vector_store %arg5[%c0_9, %c0_10, %c0_11, %c0_12], %19 {strides = array<i32>} : memref<1x2x16x320xf32, #tpu.memory_space<vmem>>, vector<1x1x16x320xf32>,
    %20 = vector.extract_strided_slice %6 {offsets = [0, 1], sizes = [32, 320], strides = [1, 1]} : vector<32x322xf32> to vector<32x320xf32>
    %21 = vector.extract_strided_slice %6 {offsets = [0, 2], sizes = [32, 320], strides = [1, 1]} : vector<32x322xf32> to vector<32x320xf32>
    %22 = tpu.concatenate %20, %21 in 0 : vector<32x320xf32>, vector<32x320xf32> -> vector<64x320xf32>
    %23 = arith.truncf %22 : vector<64x320xf32> to vector<64x320xbf16>
    %c1 = arith.constant 1 : index
    %c0_13 = arith.constant 0 : index
    %c0_14 = arith.constant 0 : index
    %24 = vector.load %arg3[%c1, %c0_13, %c0_14] : memref<2x16x64xbf16, #tpu.memory_space<vmem>>, vector<1x16x64xbf16>
    %25 = vector.shape_cast %24 : vector<1x16x64xbf16> to vector<16x64xbf16>
    %cst_15 = arith.constant dense<0.000000e+00> : vector<16x320xf32>
    %26 = tpu.matmul %25, %23, %cst_15 {dimension_numbers = #tpu.dot_dimension_numbers<[1], [0], [0], [1], [0, 0, 1, 1], [], []>} : vector<16x64xbf16>, vector<64x320xbf16>, vector<16x320xf32> -> vector<16x320xf32>
    %27 = vector.broadcast %7 : vector<16x1xf32> to vector<16x320xf32>
    %28 = arith.addf %26, %27 : vector<16x320xf32>
    %c0_16 = arith.constant 0 : index
    %c1_17 = arith.constant 1 : index
    %c0_18 = arith.constant 0 : index
    %c0_19 = arith.constant 0 : index
    %29 = vector.load %arg5[%c0_16, %c1_17, %c0_18, %c0_19] : memref<1x2x16x320xf32, #tpu.memory_space<vmem>>, vector<1x1x16x320xf32>
    %30 = vector.shape_cast %29 : vector<1x1x16x320xf32> to vector<16x320xf32>
    %31 = vector.shape_cast %28 : vector<16x320xf32> to vector<1x1x16x320xf32>
    tpu.vector_store %arg5[%c0_16, %c1_17, %c0_18, %c0_19], %31 {strides = array<i32>} : memref<1x2x16x320xf32, #tpu.memory_space<vmem>>, vector<1x1x16x320xf32>,
    return
  }
  func.func @transform_0(%arg0: i32, %arg1: i32) -> (i32, i32, i32) {
    %c0_i32 = arith.constant 0 : i32
    %c0_i32_0 = arith.constant 0 : i32
    %c0_i32_1 = arith.constant 0 : i32
    return %arg0, %c0_i32, %c0_i32_0 : i32, i32, i32
  }
  func.func @transform_1(%arg0: i32, %arg1: i32) -> (i32, i32, i32) {
    %c0_i32 = arith.constant 0 : i32
    %c0_i32_0 = arith.constant 0 : i32
    %c0_i32_1 = arith.constant 0 : i32
    %c0_i32_2 = arith.constant 0 : i32
    return %c0_i32, %c0_i32_0, %c0_i32_1 : i32, i32, i32
  }
  func.func @transform_2(%arg0: i32, %arg1: i32) -> (i32, i32) {
    %c0_i32 = arith.constant 0 : i32
    %c0_i32_0 = arith.constant 0 : i32
    %c0_i32_1 = arith.constant 0 : i32
    return %c0_i32, %c0_i32_0 : i32, i32
  }
  func.func @transform_3(%arg0: i32, %arg1: i32) -> (i32, i32, i32, i32) {
    %c0_i32 = arith.constant 0 : i32
    %c0_i32_0 = arith.constant 0 : i32
    %c0_i32_1 = arith.constant 0 : i32
    return %arg0, %c0_i32, %c0_i32_0, %arg1 : i32, i32, i32, i32
  }
}

module attributes {stable_mosaic.version = 11 : i64} {
  func.func @_conv1d_kernel(%arg0: i32, %arg1: i32, %arg2: memref<1x16x128xf32, #tpu.memory_space<vmem>>, %arg3: memref<1x16x128xf32, #tpu.memory_space<vmem>>, %arg4: memref<16x80xbf16, #tpu.memory_space<vmem>>, %arg5: memref<16x1xf32, #tpu.memory_space<vmem>>, %arg6: memref<1x16x128xf32, #tpu.memory_space<vmem>>) attributes {dimension_semantics = [#tpu.dimension_semantics<parallel>, #tpu.dimension_semantics<parallel>], iteration_bounds = array<i64: 2, 5>, scalar_prefetch = 0 : i64, scratch_operands = 0 : i64, tpu.core_type = #tpu.core_type<tc>, window_params = [{transform_indices = @transform_0, window_bounds = array<i64: 1, 16, 128>}, {transform_indices = @transform_1, window_bounds = array<i64: 1, 16, 128>}, {pipeline_mode = #tpu.pipeline_mode<synchronous>, transform_indices = @transform_2, window_bounds = array<i64: 16, 80>}, {pipeline_mode = #tpu.pipeline_mode<synchronous>, transform_indices = @transform_3, window_bounds = array<i64: 16, 1>}, {transform_indices = @transform_4, window_bounds = array<i64: 1, 16, 128>}]} {
    %c0 = arith.constant 0 : index
    %c0_0 = arith.constant 0 : index
    %c0_1 = arith.constant 0 : index
    %0 = vector.load %arg2[%c0, %c0_0, %c0_1] : memref<1x16x128xf32, #tpu.memory_space<vmem>>, vector<1x16x128xf32>
    %1 = vector.shape_cast %0 : vector<1x16x128xf32> to vector<16x128xf32>
    %c0_2 = arith.constant 0 : index
    %c0_3 = arith.constant 0 : index
    %c0_4 = arith.constant 0 : index
    %2 = vector.load %arg3[%c0_2, %c0_3, %c0_4] : memref<1x16x128xf32, #tpu.memory_space<vmem>>, vector<1x16x4xf32>
    %3 = vector.shape_cast %2 : vector<1x16x4xf32> to vector<16x4xf32>
    %4 = tpu.concatenate %1, %3 in 1 : vector<16x128xf32>, vector<16x4xf32> -> vector<16x132xf32>
    %cst = arith.constant 0.000000e+00 : f32
    %5 = vector.broadcast %cst : f32 to vector<16x132xf32>
    %6 = arith.cmpf ogt, %4, %5 : vector<16x132xf32>
    %cst_5 = arith.constant 0.00999999977 : f32
    %7 = vector.broadcast %cst_5 : f32 to vector<16x132xf32>
    %8 = arith.mulf %7, %4 : vector<16x132xf32>
    %9 = arith.select %6, %4, %8 : vector<16x132xi1>, vector<16x132xf32>
    %10 = vector.extract_strided_slice %9 {offsets = [0, 0], sizes = [16, 128], strides = [1, 1]} : vector<16x132xf32> to vector<16x128xf32>
    %11 = vector.extract_strided_slice %9 {offsets = [0, 1], sizes = [16, 128], strides = [1, 1]} : vector<16x132xf32> to vector<16x128xf32>
    %12 = vector.extract_strided_slice %9 {offsets = [0, 2], sizes = [16, 128], strides = [1, 1]} : vector<16x132xf32> to vector<16x128xf32>
    %13 = vector.extract_strided_slice %9 {offsets = [0, 3], sizes = [16, 128], strides = [1, 1]} : vector<16x132xf32> to vector<16x128xf32>
    %14 = vector.extract_strided_slice %9 {offsets = [0, 4], sizes = [16, 128], strides = [1, 1]} : vector<16x132xf32> to vector<16x128xf32>
    %15 = tpu.concatenate %10, %11, %12, %13, %14 in 0 : vector<16x128xf32>, vector<16x128xf32>, vector<16x128xf32>, vector<16x128xf32>, vector<16x128xf32> -> vector<80x128xf32>
    %16 = arith.truncf %15 : vector<80x128xf32> to vector<80x128xbf16>
    %c0_6 = arith.constant 0 : index
    %c0_7 = arith.constant 0 : index
    %17 = vector.load %arg4[%c0_6, %c0_7] : memref<16x80xbf16, #tpu.memory_space<vmem>>, vector<16x80xbf16>
    %cst_8 = arith.constant dense<0.000000e+00> : vector<16x128xf32>
    %18 = tpu.matmul %17, %16, %cst_8 {dimension_numbers = #tpu.dot_dimension_numbers<[1], [0], [0], [1], [0, 0, 1, 1], [], []>} : vector<16x80xbf16>, vector<80x128xbf16>, vector<16x128xf32> -> vector<16x128xf32>
    %c0_9 = arith.constant 0 : index
    %c0_10 = arith.constant 0 : index
    %19 = vector.load %arg5[%c0_9, %c0_10] : memref<16x1xf32, #tpu.memory_space<vmem>>, vector<16x1xf32>
    %20 = vector.broadcast %19 : vector<16x1xf32> to vector<16x128xf32>
    %21 = arith.addf %18, %20 : vector<16x128xf32>
    %22 = vector.extract_strided_slice %4 {offsets = [0, 2], sizes = [16, 128], strides = [1, 1]} : vector<16x132xf32> to vector<16x128xf32>
    %23 = arith.addf %21, %22 : vector<16x128xf32>
    %c0_11 = arith.constant 0 : index
    %c0_12 = arith.constant 0 : index
    %c0_13 = arith.constant 0 : index
    %24 = vector.load %arg6[%c0_11, %c0_12, %c0_13] : memref<1x16x128xf32, #tpu.memory_space<vmem>>, vector<1x16x128xf32>
    %25 = vector.shape_cast %24 : vector<1x16x128xf32> to vector<16x128xf32>
    %26 = vector.shape_cast %23 : vector<16x128xf32> to vector<1x16x128xf32>
    tpu.vector_store %arg6[%c0_11, %c0_12, %c0_13], %26 {strides = array<i32>} : memref<1x16x128xf32, #tpu.memory_space<vmem>>, vector<1x16x128xf32>,
    return
  }
  func.func @transform_0(%arg0: i32, %arg1: i32) -> (i32, i32, i32) {
    %c0_i32 = arith.constant 0 : i32
    %c0_i32_0 = arith.constant 0 : i32
    return %arg0, %c0_i32, %arg1 : i32, i32, i32
  }
  func.func @transform_1(%arg0: i32, %arg1: i32) -> (i32, i32, i32) {
    %c1_i32 = arith.constant 1 : i32
    %0 = arith.addi %arg1, %c1_i32 : i32
    %c1_i32_0 = arith.constant 1 : i32
    %1 = arith.muli %0, %c1_i32_0 : i32
    %c0_i32 = arith.constant 0 : i32
    %c0_i32_1 = arith.constant 0 : i32
    return %arg0, %c0_i32, %1 : i32, i32, i32
  }
  func.func @transform_2(%arg0: i32, %arg1: i32) -> (i32, i32) {
    %c0_i32 = arith.constant 0 : i32
    %c0_i32_0 = arith.constant 0 : i32
    %c0_i32_1 = arith.constant 0 : i32
    return %c0_i32, %c0_i32_0 : i32, i32
  }
  func.func @transform_3(%arg0: i32, %arg1: i32) -> (i32, i32) {
    %c0_i32 = arith.constant 0 : i32
    %c0_i32_0 = arith.constant 0 : i32
    %c0_i32_1 = arith.constant 0 : i32
    return %c0_i32, %c0_i32_0 : i32, i32
  }
  func.func @transform_4(%arg0: i32, %arg1: i32) -> (i32, i32, i32) {
    %c0_i32 = arith.constant 0 : i32
    %c0_i32_0 = arith.constant 0 : i32
    return %arg0, %c0_i32, %arg1 : i32, i32, i32
  }
}

module attributes {stable_mosaic.version = 11 : i64} {
  func.func @_conv1d_kernel(%arg0: i32, %arg1: i32, %arg2: memref<1x16x128xf32, #tpu.memory_space<vmem>>, %arg3: memref<1x16x128xf32, #tpu.memory_space<vmem>>, %arg4: memref<16x48xbf16, #tpu.memory_space<vmem>>, %arg5: memref<16x1xf32, #tpu.memory_space<vmem>>, %arg6: memref<1x16x128xf32, #tpu.memory_space<vmem>>) attributes {dimension_semantics = [#tpu.dimension_semantics<parallel>, #tpu.dimension_semantics<parallel>], iteration_bounds = array<i64: 2, 5>, scalar_prefetch = 0 : i64, scratch_operands = 0 : i64, tpu.core_type = #tpu.core_type<tc>, window_params = [{transform_indices = @transform_0, window_bounds = array<i64: 1, 16, 128>}, {transform_indices = @transform_1, window_bounds = array<i64: 1, 16, 128>}, {pipeline_mode = #tpu.pipeline_mode<synchronous>, transform_indices = @transform_2, window_bounds = array<i64: 16, 48>}, {pipeline_mode = #tpu.pipeline_mode<synchronous>, transform_indices = @transform_3, window_bounds = array<i64: 16, 1>}, {transform_indices = @transform_4, window_bounds = array<i64: 1, 16, 128>}]} {
    %c0 = arith.constant 0 : index
    %c0_0 = arith.constant 0 : index
    %c0_1 = arith.constant 0 : index
    %0 = vector.load %arg2[%c0, %c0_0, %c0_1] : memref<1x16x128xf32, #tpu.memory_space<vmem>>, vector<1x16x128xf32>
    %1 = vector.shape_cast %0 : vector<1x16x128xf32> to vector<16x128xf32>
    %c0_2 = arith.constant 0 : index
    %c0_3 = arith.constant 0 : index
    %c0_4 = arith.constant 0 : index
    %2 = vector.load %arg3[%c0_2, %c0_3, %c0_4] : memref<1x16x128xf32, #tpu.memory_space<vmem>>, vector<1x16x6xf32>
    %3 = vector.shape_cast %2 : vector<1x16x6xf32> to vector<16x6xf32>
    %4 = tpu.concatenate %1, %3 in 1 : vector<16x128xf32>, vector<16x6xf32> -> vector<16x134xf32>
    %cst = arith.constant 0.000000e+00 : f32
    %5 = vector.broadcast %cst : f32 to vector<16x134xf32>
    %6 = arith.cmpf ogt, %4, %5 : vector<16x134xf32>
    %cst_5 = arith.constant 0.00999999977 : f32
    %7 = vector.broadcast %cst_5 : f32 to vector<16x134xf32>
    %8 = arith.mulf %7, %4 : vector<16x134xf32>
    %9 = arith.select %6, %4, %8 : vector<16x134xi1>, vector<16x134xf32>
    %10 = vector.extract_strided_slice %9 {offsets = [0, 0], sizes = [16, 128], strides = [1, 1]} : vector<16x134xf32> to vector<16x128xf32>
    %11 = vector.extract_strided_slice %9 {offsets = [0, 3], sizes = [16, 128], strides = [1, 1]} : vector<16x134xf32> to vector<16x128xf32>
    %12 = vector.extract_strided_slice %9 {offsets = [0, 6], sizes = [16, 128], strides = [1, 1]} : vector<16x134xf32> to vector<16x128xf32>
    %13 = tpu.concatenate %10, %11, %12 in 0 : vector<16x128xf32>, vector<16x128xf32>, vector<16x128xf32> -> vector<48x128xf32>
    %14 = arith.truncf %13 : vector<48x128xf32> to vector<48x128xbf16>
    %c0_6 = arith.constant 0 : index
    %c0_7 = arith.constant 0 : index
    %15 = vector.load %arg4[%c0_6, %c0_7] : memref<16x48xbf16, #tpu.memory_space<vmem>>, vector<16x48xbf16>
    %cst_8 = arith.constant dense<0.000000e+00> : vector<16x128xf32>
    %16 = tpu.matmul %15, %14, %cst_8 {dimension_numbers = #tpu.dot_dimension_numbers<[1], [0], [0], [1], [0, 0, 1, 1], [], []>} : vector<16x48xbf16>, vector<48x128xbf16>, vector<16x128xf32> -> vector<16x128xf32>
    %c0_9 = arith.constant 0 : index
    %c0_10 = arith.constant 0 : index
    %17 = vector.load %arg5[%c0_9, %c0_10] : memref<16x1xf32, #tpu.memory_space<vmem>>, vector<16x1xf32>
    %18 = vector.broadcast %17 : vector<16x1xf32> to vector<16x128xf32>
    %19 = arith.addf %16, %18 : vector<16x128xf32>
    %20 = vector.extract_strided_slice %4 {offsets = [0, 3], sizes = [16, 128], strides = [1, 1]} : vector<16x134xf32> to vector<16x128xf32>
    %21 = arith.addf %19, %20 : vector<16x128xf32>
    %c0_11 = arith.constant 0 : index
    %c0_12 = arith.constant 0 : index
    %c0_13 = arith.constant 0 : index
    %22 = vector.load %arg6[%c0_11, %c0_12, %c0_13] : memref<1x16x128xf32, #tpu.memory_space<vmem>>, vector<1x16x128xf32>
    %23 = vector.shape_cast %22 : vector<1x16x128xf32> to vector<16x128xf32>
    %24 = vector.shape_cast %21 : vector<16x128xf32> to vector<1x16x128xf32>
    tpu.vector_store %arg6[%c0_11, %c0_12, %c0_13], %24 {strides = array<i32>} : memref<1x16x128xf32, #tpu.memory_space<vmem>>, vector<1x16x128xf32>,
    return
  }
  func.func @transform_0(%arg0: i32, %arg1: i32) -> (i32, i32, i32) {
    %c0_i32 = arith.constant 0 : i32
    %c0_i32_0 = arith.constant 0 : i32
    return %arg0, %c0_i32, %arg1 : i32, i32, i32
  }
  func.func @transform_1(%arg0: i32, %arg1: i32) -> (i32, i32, i32) {
    %c1_i32 = arith.constant 1 : i32
    %0 = arith.addi %arg1, %c1_i32 : i32
    %c1_i32_0 = arith.constant 1 : i32
    %1 = arith.muli %0, %c1_i32_0 : i32
    %c0_i32 = arith.constant 0 : i32
    %c0_i32_1 = arith.constant 0 : i32
    return %arg0, %c0_i32, %1 : i32, i32, i32
  }
  func.func @transform_2(%arg0: i32, %arg1: i32) -> (i32, i32) {
    %c0_i32 = arith.constant 0 : i32
    %c0_i32_0 = arith.constant 0 : i32
    %c0_i32_1 = arith.constant 0 : i32
    return %c0_i32, %c0_i32_0 : i32, i32
  }
  func.func @transform_3(%arg0: i32, %arg1: i32) -> (i32, i32) {
    %c0_i32 = arith.constant 0 : i32
    %c0_i32_0 = arith.constant 0 : i32
    %c0_i32_1 = arith.constant 0 : i32
    return %c0_i32, %c0_i32_0 : i32, i32
  }
  func.func @transform_4(%arg0: i32, %arg1: i32) -> (i32, i32, i32) {
    %c0_i32 = arith.constant 0 : i32
    %c0_i32_0 = arith.constant 0 : i32
    return %arg0, %c0_i32, %arg1 : i32, i32, i32
  }
}

module attributes {stable_mosaic.version = 11 : i64} {
  func.func @_conv1d_kernel(%arg0: i32, %arg1: i32, %arg2: memref<1x16x128xf32, #tpu.memory_space<vmem>>, %arg3: memref<1x16x128xf32, #tpu.memory_space<vmem>>, %arg4: memref<16x80xbf16, #tpu.memory_space<vmem>>, %arg5: memref<16x1xf32, #tpu.memory_space<vmem>>, %arg6: memref<1x16x128xf32, #tpu.memory_space<vmem>>, %arg7: memref<1x16x128xf32, #tpu.memory_space<vmem>>) attributes {dimension_semantics = [#tpu.dimension_semantics<parallel>, #tpu.dimension_semantics<parallel>], iteration_bounds = array<i64: 2, 5>, scalar_prefetch = 0 : i64, scratch_operands = 0 : i64, tpu.core_type = #tpu.core_type<tc>, window_params = [{transform_indices = @transform_0, window_bounds = array<i64: 1, 16, 128>}, {transform_indices = @transform_1, window_bounds = array<i64: 1, 16, 128>}, {pipeline_mode = #tpu.pipeline_mode<synchronous>, transform_indices = @transform_2, window_bounds = array<i64: 16, 80>}, {pipeline_mode = #tpu.pipeline_mode<synchronous>, transform_indices = @transform_3, window_bounds = array<i64: 16, 1>}, {transform_indices = @transform_4, window_bounds = array<i64: 1, 16, 128>}, {transform_indices = @transform_5, window_bounds = array<i64: 1, 16, 128>}]} {
    %c0 = arith.constant 0 : index
    %c0_0 = arith.constant 0 : index
    %c0_1 = arith.constant 0 : index
    %0 = vector.load %arg2[%c0, %c0_0, %c0_1] : memref<1x16x128xf32, #tpu.memory_space<vmem>>, vector<1x16x128xf32>
    %1 = vector.shape_cast %0 : vector<1x16x128xf32> to vector<16x128xf32>
    %c0_2 = arith.constant 0 : index
    %c0_3 = arith.constant 0 : index
    %c0_4 = arith.constant 0 : index
    %2 = vector.load %arg3[%c0_2, %c0_3, %c0_4] : memref<1x16x128xf32, #tpu.memory_space<vmem>>, vector<1x16x12xf32>
    %3 = vector.shape_cast %2 : vector<1x16x12xf32> to vector<16x12xf32>
    %4 = tpu.concatenate %1, %3 in 1 : vector<16x128xf32>, vector<16x12xf32> -> vector<16x140xf32>
    %cst = arith.constant 0.000000e+00 : f32
    %5 = vector.broadcast %cst : f32 to vector<16x140xf32>
    %6 = arith.cmpf ogt, %4, %5 : vector<16x140xf32>
    %cst_5 = arith.constant 0.00999999977 : f32
    %7 = vector.broadcast %cst_5 : f32 to vector<16x140xf32>
    %8 = arith.mulf %7, %4 : vector<16x140xf32>
    %9 = arith.select %6, %4, %8 : vector<16x140xi1>, vector<16x140xf32>
    %10 = vector.extract_strided_slice %9 {offsets = [0, 0], sizes = [16, 128], strides = [1, 1]} : vector<16x140xf32> to vector<16x128xf32>
    %11 = vector.extract_strided_slice %9 {offsets = [0, 3], sizes = [16, 128], strides = [1, 1]} : vector<16x140xf32> to vector<16x128xf32>
    %12 = vector.extract_strided_slice %9 {offsets = [0, 6], sizes = [16, 128], strides = [1, 1]} : vector<16x140xf32> to vector<16x128xf32>
    %13 = vector.extract_strided_slice %9 {offsets = [0, 9], sizes = [16, 128], strides = [1, 1]} : vector<16x140xf32> to vector<16x128xf32>
    %14 = vector.extract_strided_slice %9 {offsets = [0, 12], sizes = [16, 128], strides = [1, 1]} : vector<16x140xf32> to vector<16x128xf32>
    %15 = tpu.concatenate %10, %11, %12, %13, %14 in 0 : vector<16x128xf32>, vector<16x128xf32>, vector<16x128xf32>, vector<16x128xf32>, vector<16x128xf32> -> vector<80x128xf32>
    %16 = arith.truncf %15 : vector<80x128xf32> to vector<80x128xbf16>
    %c0_6 = arith.constant 0 : index
    %c0_7 = arith.constant 0 : index
    %17 = vector.load %arg4[%c0_6, %c0_7] : memref<16x80xbf16, #tpu.memory_space<vmem>>, vector<16x80xbf16>
    %cst_8 = arith.constant dense<0.000000e+00> : vector<16x128xf32>
    %18 = tpu.matmul %17, %16, %cst_8 {dimension_numbers = #tpu.dot_dimension_numbers<[1], [0], [0], [1], [0, 0, 1, 1], [], []>} : vector<16x80xbf16>, vector<80x128xbf16>, vector<16x128xf32> -> vector<16x128xf32>
    %c0_9 = arith.constant 0 : index
    %c0_10 = arith.constant 0 : index
    %19 = vector.load %arg5[%c0_9, %c0_10] : memref<16x1xf32, #tpu.memory_space<vmem>>, vector<16x1xf32>
    %20 = vector.broadcast %19 : vector<16x1xf32> to vector<16x128xf32>
    %21 = arith.addf %18, %20 : vector<16x128xf32>
    %22 = vector.extract_strided_slice %4 {offsets = [0, 6], sizes = [16, 128], strides = [1, 1]} : vector<16x140xf32> to vector<16x128xf32>
    %23 = arith.addf %21, %22 : vector<16x128xf32>
    %c0_11 = arith.constant 0 : index
    %c0_12 = arith.constant 0 : index
    %c0_13 = arith.constant 0 : index
    %24 = vector.load %arg6[%c0_11, %c0_12, %c0_13] : memref<1x16x128xf32, #tpu.memory_space<vmem>>, vector<1x16x128xf32>
    %25 = vector.shape_cast %24 : vector<1x16x128xf32> to vector<16x128xf32>
    %26 = arith.addf %23, %25 : vector<16x128xf32>
    %cst_14 = arith.constant 5.000000e-01 : f32
    %27 = vector.broadcast %cst_14 : f32 to vector<16x128xf32>
    %28 = arith.mulf %26, %27 : vector<16x128xf32>
    %c0_15 = arith.constant 0 : index
    %c0_16 = arith.constant 0 : index
    %c0_17 = arith.constant 0 : index
    %29 = vector.load %arg7[%c0_15, %c0_16, %c0_17] : memref<1x16x128xf32, #tpu.memory_space<vmem>>, vector<1x16x128xf32>
    %30 = vector.shape_cast %29 : vector<1x16x128xf32> to vector<16x128xf32>
    %31 = vector.shape_cast %28 : vector<16x128xf32> to vector<1x16x128xf32>
    tpu.vector_store %arg7[%c0_15, %c0_16, %c0_17], %31 {strides = array<i32>} : memref<1x16x128xf32, #tpu.memory_space<vmem>>, vector<1x16x128xf32>,
    return
  }
  func.func @transform_0(%arg0: i32, %arg1: i32) -> (i32, i32, i32) {
    %c0_i32 = arith.constant 0 : i32
    %c0_i32_0 = arith.constant 0 : i32
    return %arg0, %c0_i32, %arg1 : i32, i32, i32
  }
  func.func @transform_1(%arg0: i32, %arg1: i32) -> (i32, i32, i32) {
    %c1_i32 = arith.constant 1 : i32
    %0 = arith.addi %arg1, %c1_i32 : i32
    %c1_i32_0 = arith.constant 1 : i32
    %1 = arith.muli %0, %c1_i32_0 : i32
    %c0_i32 = arith.constant 0 : i32
    %c0_i32_1 = arith.constant 0 : i32
    return %arg0, %c0_i32, %1 : i32, i32, i32
  }
  func.func @transform_2(%arg0: i32, %arg1: i32) -> (i32, i32) {
    %c0_i32 = arith.constant 0 : i32
    %c0_i32_0 = arith.constant 0 : i32
    %c0_i32_1 = arith.constant 0 : i32
    return %c0_i32, %c0_i32_0 : i32, i32
  }
  func.func @transform_3(%arg0: i32, %arg1: i32) -> (i32, i32) {
    %c0_i32 = arith.constant 0 : i32
    %c0_i32_0 = arith.constant 0 : i32
    %c0_i32_1 = arith.constant 0 : i32
    return %c0_i32, %c0_i32_0 : i32, i32
  }
  func.func @transform_4(%arg0: i32, %arg1: i32) -> (i32, i32, i32) {
    %c0_i32 = arith.constant 0 : i32
    %c0_i32_0 = arith.constant 0 : i32
    return %arg0, %c0_i32, %arg1 : i32, i32, i32
  }
  func.func @transform_5(%arg0: i32, %arg1: i32) -> (i32, i32, i32) {
    %c0_i32 = arith.constant 0 : i32
    %c0_i32_0 = arith.constant 0 : i32
    return %arg0, %c0_i32, %arg1 : i32, i32, i32
  }
}

module attributes {stable_mosaic.version = 11 : i64} {
  func.func @_conv1d_kernel(%arg0: i32, %arg1: i32, %arg2: memref<1x16x128xf32, #tpu.memory_space<vmem>>, %arg3: memref<1x16x128xf32, #tpu.memory_space<vmem>>, %arg4: memref<16x48xbf16, #tpu.memory_space<vmem>>, %arg5: memref<16x1xf32, #tpu.memory_space<vmem>>, %arg6: memref<1x16x128xf32, #tpu.memory_space<vmem>>) attributes {dimension_semantics = [#tpu.dimension_semantics<parallel>, #tpu.dimension_semantics<parallel>], iteration_bounds = array<i64: 2, 5>, scalar_prefetch = 0 : i64, scratch_operands = 0 : i64, tpu.core_type = #tpu.core_type<tc>, window_params = [{transform_indices = @transform_0, window_bounds = array<i64: 1, 16, 128>}, {transform_indices = @transform_1, window_bounds = array<i64: 1, 16, 128>}, {pipeline_mode = #tpu.pipeline_mode<synchronous>, transform_indices = @transform_2, window_bounds = array<i64: 16, 48>}, {pipeline_mode = #tpu.pipeline_mode<synchronous>, transform_indices = @transform_3, window_bounds = array<i64: 16, 1>}, {transform_indices = @transform_4, window_bounds = array<i64: 1, 16, 128>}]} {
    %c0 = arith.constant 0 : index
    %c0_0 = arith.constant 0 : index
    %c0_1 = arith.constant 0 : index
    %0 = vector.load %arg2[%c0, %c0_0, %c0_1] : memref<1x16x128xf32, #tpu.memory_space<vmem>>, vector<1x16x128xf32>
    %1 = vector.shape_cast %0 : vector<1x16x128xf32> to vector<16x128xf32>
    %c0_2 = arith.constant 0 : index
    %c0_3 = arith.constant 0 : index
    %c0_4 = arith.constant 0 : index
    %2 = vector.load %arg3[%c0_2, %c0_3, %c0_4] : memref<1x16x128xf32, #tpu.memory_space<vmem>>, vector<1x16x2xf32>
    %3 = vector.shape_cast %2 : vector<1x16x2xf32> to vector<16x2xf32>
    %4 = tpu.concatenate %1, %3 in 1 : vector<16x128xf32>, vector<16x2xf32> -> vector<16x130xf32>
    %cst = arith.constant 0.000000e+00 : f32
    %5 = vector.broadcast %cst : f32 to vector<16x130xf32>
    %6 = arith.cmpf ogt, %4, %5 : vector<16x130xf32>
    %cst_5 = arith.constant 0.00999999977 : f32
    %7 = vector.broadcast %cst_5 : f32 to vector<16x130xf32>
    %8 = arith.mulf %7, %4 : vector<16x130xf32>
    %9 = arith.select %6, %4, %8 : vector<16x130xi1>, vector<16x130xf32>
    %10 = vector.extract_strided_slice %9 {offsets = [0, 0], sizes = [16, 128], strides = [1, 1]} : vector<16x130xf32> to vector<16x128xf32>
    %11 = vector.extract_strided_slice %9 {offsets = [0, 1], sizes = [16, 128], strides = [1, 1]} : vector<16x130xf32> to vector<16x128xf32>
    %12 = vector.extract_strided_slice %9 {offsets = [0, 2], sizes = [16, 128], strides = [1, 1]} : vector<16x130xf32> to vector<16x128xf32>
    %13 = tpu.concatenate %10, %11, %12 in 0 : vector<16x128xf32>, vector<16x128xf32>, vector<16x128xf32> -> vector<48x128xf32>
    %14 = arith.truncf %13 : vector<48x128xf32> to vector<48x128xbf16>
    %c0_6 = arith.constant 0 : index
    %c0_7 = arith.constant 0 : index
    %15 = vector.load %arg4[%c0_6, %c0_7] : memref<16x48xbf16, #tpu.memory_space<vmem>>, vector<16x48xbf16>
    %cst_8 = arith.constant dense<0.000000e+00> : vector<16x128xf32>
    %16 = tpu.matmul %15, %14, %cst_8 {dimension_numbers = #tpu.dot_dimension_numbers<[1], [0], [0], [1], [0, 0, 1, 1], [], []>} : vector<16x48xbf16>, vector<48x128xbf16>, vector<16x128xf32> -> vector<16x128xf32>
    %c0_9 = arith.constant 0 : index
    %c0_10 = arith.constant 0 : index
    %17 = vector.load %arg5[%c0_9, %c0_10] : memref<16x1xf32, #tpu.memory_space<vmem>>, vector<16x1xf32>
    %18 = vector.broadcast %17 : vector<16x1xf32> to vector<16x128xf32>
    %19 = arith.addf %16, %18 : vector<16x128xf32>
    %20 = vector.extract_strided_slice %4 {offsets = [0, 1], sizes = [16, 128], strides = [1, 1]} : vector<16x130xf32> to vector<16x128xf32>
    %21 = arith.addf %19, %20 : vector<16x128xf32>
    %c0_11 = arith.constant 0 : index
    %c0_12 = arith.constant 0 : index
    %c0_13 = arith.constant 0 : index
    %22 = vector.load %arg6[%c0_11, %c0_12, %c0_13] : memref<1x16x128xf32, #tpu.memory_space<vmem>>, vector<1x16x128xf32>
    %23 = vector.shape_cast %22 : vector<1x16x128xf32> to vector<16x128xf32>
    %24 = vector.shape_cast %21 : vector<16x128xf32> to vector<1x16x128xf32>
    tpu.vector_store %arg6[%c0_11, %c0_12, %c0_13], %24 {strides = array<i32>} : memref<1x16x128xf32, #tpu.memory_space<vmem>>, vector<1x16x128xf32>,
    return
  }
  func.func @transform_0(%arg0: i32, %arg1: i32) -> (i32, i32, i32) {
    %c0_i32 = arith.constant 0 : i32
    %c0_i32_0 = arith.constant 0 : i32
    return %arg0, %c0_i32, %arg1 : i32, i32, i32
  }
  func.func @transform_1(%arg0: i32, %arg1: i32) -> (i32, i32, i32) {
    %c1_i32 = arith.constant 1 : i32
    %0 = arith.addi %arg1, %c1_i32 : i32
    %c1_i32_0 = arith.constant 1 : i32
    %1 = arith.muli %0, %c1_i32_0 : i32
    %c0_i32 = arith.constant 0 : i32
    %c0_i32_1 = arith.constant 0 : i32
    return %arg0, %c0_i32, %1 : i32, i32, i32
  }
  func.func @transform_2(%arg0: i32, %arg1: i32) -> (i32, i32) {
    %c0_i32 = arith.constant 0 : i32
    %c0_i32_0 = arith.constant 0 : i32
    %c0_i32_1 = arith.constant 0 : i32
    return %c0_i32, %c0_i32_0 : i32, i32
  }
  func.func @transform_3(%arg0: i32, %arg1: i32) -> (i32, i32) {
    %c0_i32 = arith.constant 0 : i32
    %c0_i32_0 = arith.constant 0 : i32
    %c0_i32_1 = arith.constant 0 : i32
    return %c0_i32, %c0_i32_0 : i32, i32
  }
  func.func @transform_4(%arg0: i32, %arg1: i32) -> (i32, i32, i32) {
    %c0_i32 = arith.constant 0 : i32
    %c0_i32_0 = arith.constant 0 : i32
    return %arg0, %c0_i32, %arg1 : i32, i32, i32
  }
}

module attributes {stable_mosaic.version = 11 : i64} {
  func.func @_upsample_kernel(%arg0: i32, %arg1: i32, %arg2: memref<1x16x128xf32, #tpu.memory_space<vmem>>, %arg3: memref<1x16x128xf32, #tpu.memory_space<vmem>>, %arg4: memref<2x8x32xbf16, #tpu.memory_space<vmem>>, %arg5: memref<8x1xf32, #tpu.memory_space<vmem>>, %arg6: memref<1x2x8x128xf32, #tpu.memory_space<vmem>>) attributes {dimension_semantics = [#tpu.dimension_semantics<parallel>, #tpu.dimension_semantics<parallel>], iteration_bounds = array<i64: 2, 5>, scalar_prefetch = 0 : i64, scratch_operands = 0 : i64, tpu.core_type = #tpu.core_type<tc>, window_params = [{transform_indices = @transform_0, window_bounds = array<i64: 1, 16, 128>}, {transform_indices = @transform_1, window_bounds = array<i64: 1, 16, 128>}, {pipeline_mode = #tpu.pipeline_mode<synchronous>, transform_indices = @transform_2, window_bounds = array<i64: 2, 8, 32>}, {pipeline_mode = #tpu.pipeline_mode<synchronous>, transform_indices = @transform_3, window_bounds = array<i64: 8, 1>}, {transform_indices = @transform_4, window_bounds = array<i64: 1, 2, 8, 128>}]} {
    %c0 = arith.constant 0 : index
    %c0_0 = arith.constant 0 : index
    %c0_1 = arith.constant 0 : index
    %0 = vector.load %arg2[%c0, %c0_0, %c0_1] : memref<1x16x128xf32, #tpu.memory_space<vmem>>, vector<1x16x128xf32>
    %1 = vector.shape_cast %0 : vector<1x16x128xf32> to vector<16x128xf32>
    %c0_2 = arith.constant 0 : index
    %c0_3 = arith.constant 0 : index
    %c0_4 = arith.constant 0 : index
    %2 = vector.load %arg3[%c0_2, %c0_3, %c0_4] : memref<1x16x128xf32, #tpu.memory_space<vmem>>, vector<1x16x2xf32>
    %3 = vector.shape_cast %2 : vector<1x16x2xf32> to vector<16x2xf32>
    %4 = tpu.concatenate %1, %3 in 1 : vector<16x128xf32>, vector<16x2xf32> -> vector<16x130xf32>
    %cst = arith.constant 0.000000e+00 : f32
    %5 = vector.broadcast %cst : f32 to vector<16x130xf32>
    %6 = arith.cmpf ogt, %4, %5 : vector<16x130xf32>
    %cst_5 = arith.constant 0.00999999977 : f32
    %7 = vector.broadcast %cst_5 : f32 to vector<16x130xf32>
    %8 = arith.mulf %7, %4 : vector<16x130xf32>
    %9 = arith.select %6, %4, %8 : vector<16x130xi1>, vector<16x130xf32>
    %c0_6 = arith.constant 0 : index
    %c0_7 = arith.constant 0 : index
    %10 = vector.load %arg5[%c0_6, %c0_7] : memref<8x1xf32, #tpu.memory_space<vmem>>, vector<8x1xf32>
    %11 = vector.extract_strided_slice %9 {offsets = [0, 0], sizes = [16, 128], strides = [1, 1]} : vector<16x130xf32> to vector<16x128xf32>
    %12 = vector.extract_strided_slice %9 {offsets = [0, 1], sizes = [16, 128], strides = [1, 1]} : vector<16x130xf32> to vector<16x128xf32>
    %13 = tpu.concatenate %11, %12 in 0 : vector<16x128xf32>, vector<16x128xf32> -> vector<32x128xf32>
    %14 = arith.truncf %13 : vector<32x128xf32> to vector<32x128xbf16>
    %c0_8 = arith.constant 0 : index
    %c0_9 = arith.constant 0 : index
    %c0_10 = arith.constant 0 : index
    %15 = vector.load %arg4[%c0_8, %c0_9, %c0_10] : memref<2x8x32xbf16, #tpu.memory_space<vmem>>, vector<1x8x32xbf16>
    %16 = vector.shape_cast %15 : vector<1x8x32xbf16> to vector<8x32xbf16>
    %cst_11 = arith.constant dense<0.000000e+00> : vector<8x128xf32>
    %17 = tpu.matmul %16, %14, %cst_11 {dimension_numbers = #tpu.dot_dimension_numbers<[1], [0], [0], [1], [0, 0, 1, 1], [], []>} : vector<8x32xbf16>, vector<32x128xbf16>, vector<8x128xf32> -> vector<8x128xf32>
    %18 = vector.broadcast %10 : vector<8x1xf32> to vector<8x128xf32>
    %19 = arith.addf %17, %18 : vector<8x128xf32>
    %c0_12 = arith.constant 0 : index
    %c0_13 = arith.constant 0 : index
    %c0_14 = arith.constant 0 : index
    %c0_15 = arith.constant 0 : index
    %20 = vector.load %arg6[%c0_12, %c0_13, %c0_14, %c0_15] : memref<1x2x8x128xf32, #tpu.memory_space<vmem>>, vector<1x1x8x128xf32>
    %21 = vector.shape_cast %20 : vector<1x1x8x128xf32> to vector<8x128xf32>
    %22 = vector.shape_cast %19 : vector<8x128xf32> to vector<1x1x8x128xf32>
    tpu.vector_store %arg6[%c0_12, %c0_13, %c0_14, %c0_15], %22 {strides = array<i32>} : memref<1x2x8x128xf32, #tpu.memory_space<vmem>>, vector<1x1x8x128xf32>,
    %23 = vector.extract_strided_slice %9 {offsets = [0, 1], sizes = [16, 128], strides = [1, 1]} : vector<16x130xf32> to vector<16x128xf32>
    %24 = vector.extract_strided_slice %9 {offsets = [0, 2], sizes = [16, 128], strides = [1, 1]} : vector<16x130xf32> to vector<16x128xf32>
    %25 = tpu.concatenate %23, %24 in 0 : vector<16x128xf32>, vector<16x128xf32> -> vector<32x128xf32>
    %26 = arith.truncf %25 : vector<32x128xf32> to vector<32x128xbf16>
    %c1 = arith.constant 1 : index
    %c0_16 = arith.constant 0 : index
    %c0_17 = arith.constant 0 : index
    %27 = vector.load %arg4[%c1, %c0_16, %c0_17] : memref<2x8x32xbf16, #tpu.memory_space<vmem>>, vector<1x8x32xbf16>
    %28 = vector.shape_cast %27 : vector<1x8x32xbf16> to vector<8x32xbf16>
    %cst_18 = arith.constant dense<0.000000e+00> : vector<8x128xf32>
    %29 = tpu.matmul %28, %26, %cst_18 {dimension_numbers = #tpu.dot_dimension_numbers<[1], [0], [0], [1], [0, 0, 1, 1], [], []>} : vector<8x32xbf16>, vector<32x128xbf16>, vector<8x128xf32> -> vector<8x128xf32>
    %30 = vector.broadcast %10 : vector<8x1xf32> to vector<8x128xf32>
    %31 = arith.addf %29, %30 : vector<8x128xf32>
    %c0_19 = arith.constant 0 : index
    %c1_20 = arith.constant 1 : index
    %c0_21 = arith.constant 0 : index
    %c0_22 = arith.constant 0 : index
    %32 = vector.load %arg6[%c0_19, %c1_20, %c0_21, %c0_22] : memref<1x2x8x128xf32, #tpu.memory_space<vmem>>, vector<1x1x8x128xf32>
    %33 = vector.shape_cast %32 : vector<1x1x8x128xf32> to vector<8x128xf32>
    %34 = vector.shape_cast %31 : vector<8x128xf32> to vector<1x1x8x128xf32>
    tpu.vector_store %arg6[%c0_19, %c1_20, %c0_21, %c0_22], %34 {strides = array<i32>} : memref<1x2x8x128xf32, #tpu.memory_space<vmem>>, vector<1x1x8x128xf32>,
    return
  }
  func.func @transform_0(%arg0: i32, %arg1: i32) -> (i32, i32, i32) {
    %c0_i32 = arith.constant 0 : i32
    %c0_i32_0 = arith.constant 0 : i32
    return %arg0, %c0_i32, %arg1 : i32, i32, i32
  }
  func.func @transform_1(%arg0: i32, %arg1: i32) -> (i32, i32, i32) {
    %c1_i32 = arith.constant 1 : i32
    %0 = arith.addi %arg1, %c1_i32 : i32
    %c1_i32_0 = arith.constant 1 : i32
    %1 = arith.muli %0, %c1_i32_0 : i32
    %c0_i32 = arith.constant 0 : i32
    %c0_i32_1 = arith.constant 0 : i32
    return %arg0, %c0_i32, %1 : i32, i32, i32
  }
  func.func @transform_2(%arg0: i32, %arg1: i32) -> (i32, i32, i32) {
    %c0_i32 = arith.constant 0 : i32
    %c0_i32_0 = arith.constant 0 : i32
    %c0_i32_1 = arith.constant 0 : i32
    %c0_i32_2 = arith.constant 0 : i32
    return %c0_i32, %c0_i32_0, %c0_i32_1 : i32, i32, i32
  }
  func.func @transform_3(%arg0: i32, %arg1: i32) -> (i32, i32) {
    %c0_i32 = arith.constant 0 : i32
    %c0_i32_0 = arith.constant 0 : i32
    %c0_i32_1 = arith.constant 0 : i32
    return %c0_i32, %c0_i32_0 : i32, i32
  }
  func.func @transform_4(%arg0: i32, %arg1: i32) -> (i32, i32, i32, i32) {
    %c0_i32 = arith.constant 0 : i32
    %c0_i32_0 = arith.constant 0 : i32
    %c0_i32_1 = arith.constant 0 : i32
    return %arg0, %c0_i32, %c0_i32_0, %arg1 : i32, i32, i32, i32
  }
}

module attributes {stable_mosaic.version = 11 : i64} {
  func.func @_conv1d_kernel(%arg0: i32, %arg1: i32, %arg2: memref<1x8x256xf32, #tpu.memory_space<vmem>>, %arg3: memref<1x8x128xf32, #tpu.memory_space<vmem>>, %arg4: memref<8x24xbf16, #tpu.memory_space<vmem>>, %arg5: memref<8x1xf32, #tpu.memory_space<vmem>>, %arg6: memref<1x8x256xf32, #tpu.memory_space<vmem>>) attributes {dimension_semantics = [#tpu.dimension_semantics<parallel>, #tpu.dimension_semantics<parallel>], iteration_bounds = array<i64: 2, 5>, scalar_prefetch = 0 : i64, scratch_operands = 0 : i64, tpu.core_type = #tpu.core_type<tc>, window_params = [{transform_indices = @transform_0, window_bounds = array<i64: 1, 8, 256>}, {transform_indices = @transform_1, window_bounds = array<i64: 1, 8, 128>}, {pipeline_mode = #tpu.pipeline_mode<synchronous>, transform_indices = @transform_2, window_bounds = array<i64: 8, 24>}, {pipeline_mode = #tpu.pipeline_mode<synchronous>, transform_indices = @transform_3, window_bounds = array<i64: 8, 1>}, {transform_indices = @transform_4, window_bounds = array<i64: 1, 8, 256>}]} {
    %c0 = arith.constant 0 : index
    %c0_0 = arith.constant 0 : index
    %c0_1 = arith.constant 0 : index
    %0 = vector.load %arg2[%c0, %c0_0, %c0_1] : memref<1x8x256xf32, #tpu.memory_space<vmem>>, vector<1x8x256xf32>
    %1 = vector.shape_cast %0 : vector<1x8x256xf32> to vector<8x256xf32>
    %c0_2 = arith.constant 0 : index
    %c0_3 = arith.constant 0 : index
    %c0_4 = arith.constant 0 : index
    %2 = vector.load %arg3[%c0_2, %c0_3, %c0_4] : memref<1x8x128xf32, #tpu.memory_space<vmem>>, vector<1x8x2xf32>
    %3 = vector.shape_cast %2 : vector<1x8x2xf32> to vector<8x2xf32>
    %4 = tpu.concatenate %1, %3 in 1 : vector<8x256xf32>, vector<8x2xf32> -> vector<8x258xf32>
    %cst = arith.constant 0.000000e+00 : f32
    %5 = vector.broadcast %cst : f32 to vector<8x258xf32>
    %6 = arith.cmpf ogt, %4, %5 : vector<8x258xf32>
    %cst_5 = arith.constant 0.00999999977 : f32
    %7 = vector.broadcast %cst_5 : f32 to vector<8x258xf32>
    %8 = arith.mulf %7, %4 : vector<8x258xf32>
    %9 = arith.select %6, %4, %8 : vector<8x258xi1>, vector<8x258xf32>
    %10 = vector.extract_strided_slice %9 {offsets = [0, 0], sizes = [8, 256], strides = [1, 1]} : vector<8x258xf32> to vector<8x256xf32>
    %11 = vector.extract_strided_slice %9 {offsets = [0, 1], sizes = [8, 256], strides = [1, 1]} : vector<8x258xf32> to vector<8x256xf32>
    %12 = vector.extract_strided_slice %9 {offsets = [0, 2], sizes = [8, 256], strides = [1, 1]} : vector<8x258xf32> to vector<8x256xf32>
    %13 = tpu.concatenate %10, %11, %12 in 0 : vector<8x256xf32>, vector<8x256xf32>, vector<8x256xf32> -> vector<24x256xf32>
    %14 = arith.truncf %13 : vector<24x256xf32> to vector<24x256xbf16>
    %c0_6 = arith.constant 0 : index
    %c0_7 = arith.constant 0 : index
    %15 = vector.load %arg4[%c0_6, %c0_7] : memref<8x24xbf16, #tpu.memory_space<vmem>>, vector<8x24xbf16>
    %cst_8 = arith.constant dense<0.000000e+00> : vector<8x256xf32>
    %16 = tpu.matmul %15, %14, %cst_8 {dimension_numbers = #tpu.dot_dimension_numbers<[1], [0], [0], [1], [0, 0, 1, 1], [], []>} : vector<8x24xbf16>, vector<24x256xbf16>, vector<8x256xf32> -> vector<8x256xf32>
    %c0_9 = arith.constant 0 : index
    %c0_10 = arith.constant 0 : index
    %17 = vector.load %arg5[%c0_9, %c0_10] : memref<8x1xf32, #tpu.memory_space<vmem>>, vector<8x1xf32>
    %18 = vector.broadcast %17 : vector<8x1xf32> to vector<8x256xf32>
    %19 = arith.addf %16, %18 : vector<8x256xf32>
    %20 = vector.extract_strided_slice %4 {offsets = [0, 1], sizes = [8, 256], strides = [1, 1]} : vector<8x258xf32> to vector<8x256xf32>
    %21 = arith.addf %19, %20 : vector<8x256xf32>
    %c0_11 = arith.constant 0 : index
    %c0_12 = arith.constant 0 : index
    %c0_13 = arith.constant 0 : index
    %22 = vector.load %arg6[%c0_11, %c0_12, %c0_13] : memref<1x8x256xf32, #tpu.memory_space<vmem>>, vector<1x8x256xf32>
    %23 = vector.shape_cast %22 : vector<1x8x256xf32> to vector<8x256xf32>
    %24 = vector.shape_cast %21 : vector<8x256xf32> to vector<1x8x256xf32>
    tpu.vector_store %arg6[%c0_11, %c0_12, %c0_13], %24 {strides = array<i32>} : memref<1x8x256xf32, #tpu.memory_space<vmem>>, vector<1x8x256xf32>,
    return
  }
  func.func @transform_0(%arg0: i32, %arg1: i32) -> (i32, i32, i32) {
    %c0_i32 = arith.constant 0 : i32
    %c0_i32_0 = arith.constant 0 : i32
    return %arg0, %c0_i32, %arg1 : i32, i32, i32
  }
  func.func @transform_1(%arg0: i32, %arg1: i32) -> (i32, i32, i32) {
    %c1_i32 = arith.constant 1 : i32
    %0 = arith.addi %arg1, %c1_i32 : i32
    %c2_i32 = arith.constant 2 : i32
    %1 = arith.muli %0, %c2_i32 : i32
    %c0_i32 = arith.constant 0 : i32
    %c0_i32_0 = arith.constant 0 : i32
    return %arg0, %c0_i32, %1 : i32, i32, i32
  }
  func.func @transform_2(%arg0: i32, %arg1: i32) -> (i32, i32) {
    %c0_i32 = arith.constant 0 : i32
    %c0_i32_0 = arith.constant 0 : i32
    %c0_i32_1 = arith.constant 0 : i32
    return %c0_i32, %c0_i32_0 : i32, i32
  }
  func.func @transform_3(%arg0: i32, %arg1: i32) -> (i32, i32) {
    %c0_i32 = arith.constant 0 : i32
    %c0_i32_0 = arith.constant 0 : i32
    %c0_i32_1 = arith.constant 0 : i32
    return %c0_i32, %c0_i32_0 : i32, i32
  }
  func.func @transform_4(%arg0: i32, %arg1: i32) -> (i32, i32, i32) {
    %c0_i32 = arith.constant 0 : i32
    %c0_i32_0 = arith.constant 0 : i32
    return %arg0, %c0_i32, %arg1 : i32, i32, i32
  }
}

module attributes {stable_mosaic.version = 11 : i64} {
  func.func @_conv1d_kernel(%arg0: i32, %arg1: i32, %arg2: memref<1x8x256xf32, #tpu.memory_space<vmem>>, %arg3: memref<1x8x128xf32, #tpu.memory_space<vmem>>, %arg4: memref<8x24xbf16, #tpu.memory_space<vmem>>, %arg5: memref<8x1xf32, #tpu.memory_space<vmem>>, %arg6: memref<1x8x256xf32, #tpu.memory_space<vmem>>) attributes {dimension_semantics = [#tpu.dimension_semantics<parallel>, #tpu.dimension_semantics<parallel>], iteration_bounds = array<i64: 2, 5>, scalar_prefetch = 0 : i64, scratch_operands = 0 : i64, tpu.core_type = #tpu.core_type<tc>, window_params = [{transform_indices = @transform_0, window_bounds = array<i64: 1, 8, 256>}, {transform_indices = @transform_1, window_bounds = array<i64: 1, 8, 128>}, {pipeline_mode = #tpu.pipeline_mode<synchronous>, transform_indices = @transform_2, window_bounds = array<i64: 8, 24>}, {pipeline_mode = #tpu.pipeline_mode<synchronous>, transform_indices = @transform_3, window_bounds = array<i64: 8, 1>}, {transform_indices = @transform_4, window_bounds = array<i64: 1, 8, 256>}]} {
    %c0 = arith.constant 0 : index
    %c0_0 = arith.constant 0 : index
    %c0_1 = arith.constant 0 : index
    %0 = vector.load %arg2[%c0, %c0_0, %c0_1] : memref<1x8x256xf32, #tpu.memory_space<vmem>>, vector<1x8x256xf32>
    %1 = vector.shape_cast %0 : vector<1x8x256xf32> to vector<8x256xf32>
    %c0_2 = arith.constant 0 : index
    %c0_3 = arith.constant 0 : index
    %c0_4 = arith.constant 0 : index
    %2 = vector.load %arg3[%c0_2, %c0_3, %c0_4] : memref<1x8x128xf32, #tpu.memory_space<vmem>>, vector<1x8x6xf32>
    %3 = vector.shape_cast %2 : vector<1x8x6xf32> to vector<8x6xf32>
    %4 = tpu.concatenate %1, %3 in 1 : vector<8x256xf32>, vector<8x6xf32> -> vector<8x262xf32>
    %cst = arith.constant 0.000000e+00 : f32
    %5 = vector.broadcast %cst : f32 to vector<8x262xf32>
    %6 = arith.cmpf ogt, %4, %5 : vector<8x262xf32>
    %cst_5 = arith.constant 0.00999999977 : f32
    %7 = vector.broadcast %cst_5 : f32 to vector<8x262xf32>
    %8 = arith.mulf %7, %4 : vector<8x262xf32>
    %9 = arith.select %6, %4, %8 : vector<8x262xi1>, vector<8x262xf32>
    %10 = vector.extract_strided_slice %9 {offsets = [0, 0], sizes = [8, 256], strides = [1, 1]} : vector<8x262xf32> to vector<8x256xf32>
    %11 = vector.extract_strided_slice %9 {offsets = [0, 3], sizes = [8, 256], strides = [1, 1]} : vector<8x262xf32> to vector<8x256xf32>
    %12 = vector.extract_strided_slice %9 {offsets = [0, 6], sizes = [8, 256], strides = [1, 1]} : vector<8x262xf32> to vector<8x256xf32>
    %13 = tpu.concatenate %10, %11, %12 in 0 : vector<8x256xf32>, vector<8x256xf32>, vector<8x256xf32> -> vector<24x256xf32>
    %14 = arith.truncf %13 : vector<24x256xf32> to vector<24x256xbf16>
    %c0_6 = arith.constant 0 : index
    %c0_7 = arith.constant 0 : index
    %15 = vector.load %arg4[%c0_6, %c0_7] : memref<8x24xbf16, #tpu.memory_space<vmem>>, vector<8x24xbf16>
    %cst_8 = arith.constant dense<0.000000e+00> : vector<8x256xf32>
    %16 = tpu.matmul %15, %14, %cst_8 {dimension_numbers = #tpu.dot_dimension_numbers<[1], [0], [0], [1], [0, 0, 1, 1], [], []>} : vector<8x24xbf16>, vector<24x256xbf16>, vector<8x256xf32> -> vector<8x256xf32>
    %c0_9 = arith.constant 0 : index
    %c0_10 = arith.constant 0 : index
    %17 = vector.load %arg5[%c0_9, %c0_10] : memref<8x1xf32, #tpu.memory_space<vmem>>, vector<8x1xf32>
    %18 = vector.broadcast %17 : vector<8x1xf32> to vector<8x256xf32>
    %19 = arith.addf %16, %18 : vector<8x256xf32>
    %20 = vector.extract_strided_slice %4 {offsets = [0, 3], sizes = [8, 256], strides = [1, 1]} : vector<8x262xf32> to vector<8x256xf32>
    %21 = arith.addf %19, %20 : vector<8x256xf32>
    %c0_11 = arith.constant 0 : index
    %c0_12 = arith.constant 0 : index
    %c0_13 = arith.constant 0 : index
    %22 = vector.load %arg6[%c0_11, %c0_12, %c0_13] : memref<1x8x256xf32, #tpu.memory_space<vmem>>, vector<1x8x256xf32>
    %23 = vector.shape_cast %22 : vector<1x8x256xf32> to vector<8x256xf32>
    %24 = vector.shape_cast %21 : vector<8x256xf32> to vector<1x8x256xf32>
    tpu.vector_store %arg6[%c0_11, %c0_12, %c0_13], %24 {strides = array<i32>} : memref<1x8x256xf32, #tpu.memory_space<vmem>>, vector<1x8x256xf32>,
    return
  }
  func.func @transform_0(%arg0: i32, %arg1: i32) -> (i32, i32, i32) {
    %c0_i32 = arith.constant 0 : i32
    %c0_i32_0 = arith.constant 0 : i32
    return %arg0, %c0_i32, %arg1 : i32, i32, i32
  }
  func.func @transform_1(%arg0: i32, %arg1: i32) -> (i32, i32, i32) {
    %c1_i32 = arith.constant 1 : i32
    %0 = arith.addi %arg1, %c1_i32 : i32
    %c2_i32 = arith.constant 2 : i32
    %1 = arith.muli %0, %c2_i32 : i32
    %c0_i32 = arith.constant 0 : i32
    %c0_i32_0 = arith.constant 0 : i32
    return %arg0, %c0_i32, %1 : i32, i32, i32
  }
  func.func @transform_2(%arg0: i32, %arg1: i32) -> (i32, i32) {
    %c0_i32 = arith.constant 0 : i32
    %c0_i32_0 = arith.constant 0 : i32
    %c0_i32_1 = arith.constant 0 : i32
    return %c0_i32, %c0_i32_0 : i32, i32
  }
  func.func @transform_3(%arg0: i32, %arg1: i32) -> (i32, i32) {
    %c0_i32 = arith.constant 0 : i32
    %c0_i32_0 = arith.constant 0 : i32
    %c0_i32_1 = arith.constant 0 : i32
    return %c0_i32, %c0_i32_0 : i32, i32
  }
  func.func @transform_4(%arg0: i32, %arg1: i32) -> (i32, i32, i32) {
    %c0_i32 = arith.constant 0 : i32
    %c0_i32_0 = arith.constant 0 : i32
    return %arg0, %c0_i32, %arg1 : i32, i32, i32
  }
}

module attributes {stable_mosaic.version = 11 : i64} {
  func.func @_conv1d_kernel(%arg0: i32, %arg1: i32, %arg2: memref<1x8x256xf32, #tpu.memory_space<vmem>>, %arg3: memref<1x8x128xf32, #tpu.memory_space<vmem>>, %arg4: memref<8x40xbf16, #tpu.memory_space<vmem>>, %arg5: memref<8x1xf32, #tpu.memory_space<vmem>>, %arg6: memref<1x8x256xf32, #tpu.memory_space<vmem>>) attributes {dimension_semantics = [#tpu.dimension_semantics<parallel>, #tpu.dimension_semantics<parallel>], iteration_bounds = array<i64: 2, 5>, scalar_prefetch = 0 : i64, scratch_operands = 0 : i64, tpu.core_type = #tpu.core_type<tc>, window_params = [{transform_indices = @transform_0, window_bounds = array<i64: 1, 8, 256>}, {transform_indices = @transform_1, window_bounds = array<i64: 1, 8, 128>}, {pipeline_mode = #tpu.pipeline_mode<synchronous>, transform_indices = @transform_2, window_bounds = array<i64: 8, 40>}, {pipeline_mode = #tpu.pipeline_mode<synchronous>, transform_indices = @transform_3, window_bounds = array<i64: 8, 1>}, {transform_indices = @transform_4, window_bounds = array<i64: 1, 8, 256>}]} {
    %c0 = arith.constant 0 : index
    %c0_0 = arith.constant 0 : index
    %c0_1 = arith.constant 0 : index
    %0 = vector.load %arg2[%c0, %c0_0, %c0_1] : memref<1x8x256xf32, #tpu.memory_space<vmem>>, vector<1x8x256xf32>
    %1 = vector.shape_cast %0 : vector<1x8x256xf32> to vector<8x256xf32>
    %c0_2 = arith.constant 0 : index
    %c0_3 = arith.constant 0 : index
    %c0_4 = arith.constant 0 : index
    %2 = vector.load %arg3[%c0_2, %c0_3, %c0_4] : memref<1x8x128xf32, #tpu.memory_space<vmem>>, vector<1x8x4xf32>
    %3 = vector.shape_cast %2 : vector<1x8x4xf32> to vector<8x4xf32>
    %4 = tpu.concatenate %1, %3 in 1 : vector<8x256xf32>, vector<8x4xf32> -> vector<8x260xf32>
    %cst = arith.constant 0.000000e+00 : f32
    %5 = vector.broadcast %cst : f32 to vector<8x260xf32>
    %6 = arith.cmpf ogt, %4, %5 : vector<8x260xf32>
    %cst_5 = arith.constant 0.00999999977 : f32
    %7 = vector.broadcast %cst_5 : f32 to vector<8x260xf32>
    %8 = arith.mulf %7, %4 : vector<8x260xf32>
    %9 = arith.select %6, %4, %8 : vector<8x260xi1>, vector<8x260xf32>
    %10 = vector.extract_strided_slice %9 {offsets = [0, 0], sizes = [8, 256], strides = [1, 1]} : vector<8x260xf32> to vector<8x256xf32>
    %11 = vector.extract_strided_slice %9 {offsets = [0, 1], sizes = [8, 256], strides = [1, 1]} : vector<8x260xf32> to vector<8x256xf32>
    %12 = vector.extract_strided_slice %9 {offsets = [0, 2], sizes = [8, 256], strides = [1, 1]} : vector<8x260xf32> to vector<8x256xf32>
    %13 = vector.extract_strided_slice %9 {offsets = [0, 3], sizes = [8, 256], strides = [1, 1]} : vector<8x260xf32> to vector<8x256xf32>
    %14 = vector.extract_strided_slice %9 {offsets = [0, 4], sizes = [8, 256], strides = [1, 1]} : vector<8x260xf32> to vector<8x256xf32>
    %15 = tpu.concatenate %10, %11, %12, %13, %14 in 0 : vector<8x256xf32>, vector<8x256xf32>, vector<8x256xf32>, vector<8x256xf32>, vector<8x256xf32> -> vector<40x256xf32>
    %16 = arith.truncf %15 : vector<40x256xf32> to vector<40x256xbf16>
    %c0_6 = arith.constant 0 : index
    %c0_7 = arith.constant 0 : index
    %17 = vector.load %arg4[%c0_6, %c0_7] : memref<8x40xbf16, #tpu.memory_space<vmem>>, vector<8x40xbf16>
    %cst_8 = arith.constant dense<0.000000e+00> : vector<8x256xf32>
    %18 = tpu.matmul %17, %16, %cst_8 {dimension_numbers = #tpu.dot_dimension_numbers<[1], [0], [0], [1], [0, 0, 1, 1], [], []>} : vector<8x40xbf16>, vector<40x256xbf16>, vector<8x256xf32> -> vector<8x256xf32>
    %c0_9 = arith.constant 0 : index
    %c0_10 = arith.constant 0 : index
    %19 = vector.load %arg5[%c0_9, %c0_10] : memref<8x1xf32, #tpu.memory_space<vmem>>, vector<8x1xf32>
    %20 = vector.broadcast %19 : vector<8x1xf32> to vector<8x256xf32>
    %21 = arith.addf %18, %20 : vector<8x256xf32>
    %22 = vector.extract_strided_slice %4 {offsets = [0, 2], sizes = [8, 256], strides = [1, 1]} : vector<8x260xf32> to vector<8x256xf32>
    %23 = arith.addf %21, %22 : vector<8x256xf32>
    %c0_11 = arith.constant 0 : index
    %c0_12 = arith.constant 0 : index
    %c0_13 = arith.constant 0 : index
    %24 = vector.load %arg6[%c0_11, %c0_12, %c0_13] : memref<1x8x256xf32, #tpu.memory_space<vmem>>, vector<1x8x256xf32>
    %25 = vector.shape_cast %24 : vector<1x8x256xf32> to vector<8x256xf32>
    %26 = vector.shape_cast %23 : vector<8x256xf32> to vector<1x8x256xf32>
    tpu.vector_store %arg6[%c0_11, %c0_12, %c0_13], %26 {strides = array<i32>} : memref<1x8x256xf32, #tpu.memory_space<vmem>>, vector<1x8x256xf32>,
    return
  }
  func.func @transform_0(%arg0: i32, %arg1: i32) -> (i32, i32, i32) {
    %c0_i32 = arith.constant 0 : i32
    %c0_i32_0 = arith.constant 0 : i32
    return %arg0, %c0_i32, %arg1 : i32, i32, i32
  }
  func.func @transform_1(%arg0: i32, %arg1: i32) -> (i32, i32, i32) {
    %c1_i32 = arith.constant 1 : i32
    %0 = arith.addi %arg1, %c1_i32 : i32
    %c2_i32 = arith.constant 2 : i32
    %1 = arith.muli %0, %c2_i32 : i32
    %c0_i32 = arith.constant 0 : i32
    %c0_i32_0 = arith.constant 0 : i32
    return %arg0, %c0_i32, %1 : i32, i32, i32
  }
  func.func @transform_2(%arg0: i32, %arg1: i32) -> (i32, i32) {
    %c0_i32 = arith.constant 0 : i32
    %c0_i32_0 = arith.constant 0 : i32
    %c0_i32_1 = arith.constant 0 : i32
    return %c0_i32, %c0_i32_0 : i32, i32
  }
  func.func @transform_3(%arg0: i32, %arg1: i32) -> (i32, i32) {
    %c0_i32 = arith.constant 0 : i32
    %c0_i32_0 = arith.constant 0 : i32
    %c0_i32_1 = arith.constant 0 : i32
    return %c0_i32, %c0_i32_0 : i32, i32
  }
  func.func @transform_4(%arg0: i32, %arg1: i32) -> (i32, i32, i32) {
    %c0_i32 = arith.constant 0 : i32
    %c0_i32_0 = arith.constant 0 : i32
    return %arg0, %c0_i32, %arg1 : i32, i32, i32
  }
}

module attributes {stable_mosaic.version = 11 : i64} {
  func.func @_conv1d_kernel(%arg0: i32, %arg1: i32, %arg2: memref<1x8x256xf32, #tpu.memory_space<vmem>>, %arg3: memref<1x8x128xf32, #tpu.memory_space<vmem>>, %arg4: memref<1x56xbf16, #tpu.memory_space<vmem>>, %arg5: memref<1x1xf32, #tpu.memory_space<vmem>>, %arg6: memref<1x1x256xf32, #tpu.memory_space<vmem>>) attributes {dimension_semantics = [#tpu.dimension_semantics<parallel>, #tpu.dimension_semantics<parallel>], iteration_bounds = array<i64: 2, 5>, scalar_prefetch = 0 : i64, scratch_operands = 0 : i64, tpu.core_type = #tpu.core_type<tc>, window_params = [{transform_indices = @transform_0, window_bounds = array<i64: 1, 8, 256>}, {transform_indices = @transform_1, window_bounds = array<i64: 1, 8, 128>}, {pipeline_mode = #tpu.pipeline_mode<synchronous>, transform_indices = @transform_2, window_bounds = array<i64: 1, 56>}, {pipeline_mode = #tpu.pipeline_mode<synchronous>, transform_indices = @transform_3, window_bounds = array<i64: 1, 1>}, {transform_indices = @transform_4, window_bounds = array<i64: 1, 1, 256>}]} {
    %c0 = arith.constant 0 : index
    %c0_0 = arith.constant 0 : index
    %c0_1 = arith.constant 0 : index
    %0 = vector.load %arg2[%c0, %c0_0, %c0_1] : memref<1x8x256xf32, #tpu.memory_space<vmem>>, vector<1x8x256xf32>
    %1 = vector.shape_cast %0 : vector<1x8x256xf32> to vector<8x256xf32>
    %c0_2 = arith.constant 0 : index
    %c0_3 = arith.constant 0 : index
    %c0_4 = arith.constant 0 : index
    %2 = vector.load %arg3[%c0_2, %c0_3, %c0_4] : memref<1x8x128xf32, #tpu.memory_space<vmem>>, vector<1x8x6xf32>
    %3 = vector.shape_cast %2 : vector<1x8x6xf32> to vector<8x6xf32>
    %4 = tpu.concatenate %1, %3 in 1 : vector<8x256xf32>, vector<8x6xf32> -> vector<8x262xf32>
    %cst = arith.constant 0.000000e+00 : f32
    %5 = vector.broadcast %cst : f32 to vector<8x262xf32>
    %6 = arith.cmpf ogt, %4, %5 : vector<8x262xf32>
    %cst_5 = arith.constant 0.00999999977 : f32
    %7 = vector.broadcast %cst_5 : f32 to vector<8x262xf32>
    %8 = arith.mulf %7, %4 : vector<8x262xf32>
    %9 = arith.select %6, %4, %8 : vector<8x262xi1>, vector<8x262xf32>
    %10 = vector.extract_strided_slice %9 {offsets = [0, 0], sizes = [8, 256], strides = [1, 1]} : vector<8x262xf32> to vector<8x256xf32>
    %11 = vector.extract_strided_slice %9 {offsets = [0, 1], sizes = [8, 256], strides = [1, 1]} : vector<8x262xf32> to vector<8x256xf32>
    %12 = vector.extract_strided_slice %9 {offsets = [0, 2], sizes = [8, 256], strides = [1, 1]} : vector<8x262xf32> to vector<8x256xf32>
    %13 = vector.extract_strided_slice %9 {offsets = [0, 3], sizes = [8, 256], strides = [1, 1]} : vector<8x262xf32> to vector<8x256xf32>
    %14 = vector.extract_strided_slice %9 {offsets = [0, 4], sizes = [8, 256], strides = [1, 1]} : vector<8x262xf32> to vector<8x256xf32>
    %15 = vector.extract_strided_slice %9 {offsets = [0, 5], sizes = [8, 256], strides = [1, 1]} : vector<8x262xf32> to vector<8x256xf32>
    %16 = vector.extract_strided_slice %9 {offsets = [0, 6], sizes = [8, 256], strides = [1, 1]} : vector<8x262xf32> to vector<8x256xf32>
    %17 = tpu.concatenate %10, %11, %12, %13, %14, %15, %16 in 0 : vector<8x256xf32>, vector<8x256xf32>, vector<8x256xf32>, vector<8x256xf32>, vector<8x256xf32>, vector<8x256xf32>, vector<8x256xf32> -> vector<56x256xf32>
    %18 = arith.truncf %17 : vector<56x256xf32> to vector<56x256xbf16>
    %c0_6 = arith.constant 0 : index
    %c0_7 = arith.constant 0 : index
    %19 = vector.load %arg4[%c0_6, %c0_7] : memref<1x56xbf16, #tpu.memory_space<vmem>>, vector<1x56xbf16>
    %cst_8 = arith.constant dense<0.000000e+00> : vector<1x256xf32>
    %20 = tpu.matmul %19, %18, %cst_8 {dimension_numbers = #tpu.dot_dimension_numbers<[1], [0], [0], [1], [0, 0, 1, 1], [], []>} : vector<1x56xbf16>, vector<56x256xbf16>, vector<1x256xf32> -> vector<1x256xf32>
    %c0_9 = arith.constant 0 : index
    %c0_10 = arith.constant 0 : index
    %21 = vector.load %arg5[%c0_9, %c0_10] : memref<1x1xf32, #tpu.memory_space<vmem>>, vector<1x1xf32>
    %22 = vector.broadcast %21 : vector<1x1xf32> to vector<1x256xf32>
    %23 = arith.addf %20, %22 : vector<1x256xf32>
    %24 = math.tanh %23 : vector<1x256xf32>
    %c0_11 = arith.constant 0 : index
    %c0_12 = arith.constant 0 : index
    %c0_13 = arith.constant 0 : index
    %25 = vector.load %arg6[%c0_11, %c0_12, %c0_13] : memref<1x1x256xf32, #tpu.memory_space<vmem>>, vector<1x1x256xf32>
    %26 = vector.shape_cast %25 : vector<1x1x256xf32> to vector<1x256xf32>
    %27 = vector.shape_cast %24 : vector<1x256xf32> to vector<1x1x256xf32>
    tpu.vector_store %arg6[%c0_11, %c0_12, %c0_13], %27 {strides = array<i32>} : memref<1x1x256xf32, #tpu.memory_space<vmem>>, vector<1x1x256xf32>,
    return
  }
  func.func @transform_0(%arg0: i32, %arg1: i32) -> (i32, i32, i32) {
    %c0_i32 = arith.constant 0 : i32
    %c0_i32_0 = arith.constant 0 : i32
    return %arg0, %c0_i32, %arg1 : i32, i32, i32
  }
  func.func @transform_1(%arg0: i32, %arg1: i32) -> (i32, i32, i32) {
    %c1_i32 = arith.constant 1 : i32
    %0 = arith.addi %arg1, %c1_i32 : i32
    %c2_i32 = arith.constant 2 : i32
    %1 = arith.muli %0, %c2_i32 : i32
    %c0_i32 = arith.constant 0 : i32
    %c0_i32_0 = arith.constant 0 : i32
    return %arg0, %c0_i32, %1 : i32, i32, i32
  }
  func.func @transform_2(%arg0: i32, %arg1: i32) -> (i32, i32) {
    %c0_i32 = arith.constant 0 : i32
    %c0_i32_0 = arith.constant 0 : i32
    %c0_i32_1 = arith.constant 0 : i32
    return %c0_i32, %c0_i32_0 : i32, i32
  }
  func.func @transform_3(%arg0: i32, %arg1: i32) -> (i32, i32) {
    %c0_i32 = arith.constant 0 : i32
    %c0_i32_0 = arith.constant 0 : i32
    %c0_i32_1 = arith.constant 0 : i32
    return %c0_i32, %c0_i32_0 : i32, i32
  }
  func.func @transform_4(%arg0: i32, %arg1: i32) -> (i32, i32, i32) {
    %c0_i32 = arith.constant 0 : i32
    %c0_i32_0 = arith.constant 0 : i32
    return %arg0, %c0_i32, %arg1 : i32, i32, i32
  }
}

module attributes {stable_mosaic.version = 11 : i64} {
  func.func @_conv1d_kernel(%arg0: i32, %arg1: i32, %arg2: memref<1x8x256xf32, #tpu.memory_space<vmem>>, %arg3: memref<1x8x128xf32, #tpu.memory_space<vmem>>, %arg4: memref<8x40xbf16, #tpu.memory_space<vmem>>, %arg5: memref<8x1xf32, #tpu.memory_space<vmem>>, %arg6: memref<1x8x256xf32, #tpu.memory_space<vmem>>, %arg7: memref<1x8x256xf32, #tpu.memory_space<vmem>>) attributes {dimension_semantics = [#tpu.dimension_semantics<parallel>, #tpu.dimension_semantics<parallel>], iteration_bounds = array<i64: 2, 5>, scalar_prefetch = 0 : i64, scratch_operands = 0 : i64, tpu.core_type = #tpu.core_type<tc>, window_params = [{transform_indices = @transform_0, window_bounds = array<i64: 1, 8, 256>}, {transform_indices = @transform_1, window_bounds = array<i64: 1, 8, 128>}, {pipeline_mode = #tpu.pipeline_mode<synchronous>, transform_indices = @transform_2, window_bounds = array<i64: 8, 40>}, {pipeline_mode = #tpu.pipeline_mode<synchronous>, transform_indices = @transform_3, window_bounds = array<i64: 8, 1>}, {transform_indices = @transform_4, window_bounds = array<i64: 1, 8, 256>}, {transform_indices = @transform_5, window_bounds = array<i64: 1, 8, 256>}]} {
    %c0 = arith.constant 0 : index
    %c0_0 = arith.constant 0 : index
    %c0_1 = arith.constant 0 : index
    %0 = vector.load %arg2[%c0, %c0_0, %c0_1] : memref<1x8x256xf32, #tpu.memory_space<vmem>>, vector<1x8x256xf32>
    %1 = vector.shape_cast %0 : vector<1x8x256xf32> to vector<8x256xf32>
    %c0_2 = arith.constant 0 : index
    %c0_3 = arith.constant 0 : index
    %c0_4 = arith.constant 0 : index
    %2 = vector.load %arg3[%c0_2, %c0_3, %c0_4] : memref<1x8x128xf32, #tpu.memory_space<vmem>>, vector<1x8x12xf32>
    %3 = vector.shape_cast %2 : vector<1x8x12xf32> to vector<8x12xf32>
    %4 = tpu.concatenate %1, %3 in 1 : vector<8x256xf32>, vector<8x12xf32> -> vector<8x268xf32>
    %cst = arith.constant 0.000000e+00 : f32
    %5 = vector.broadcast %cst : f32 to vector<8x268xf32>
    %6 = arith.cmpf ogt, %4, %5 : vector<8x268xf32>
    %cst_5 = arith.constant 0.00999999977 : f32
    %7 = vector.broadcast %cst_5 : f32 to vector<8x268xf32>
    %8 = arith.mulf %7, %4 : vector<8x268xf32>
    %9 = arith.select %6, %4, %8 : vector<8x268xi1>, vector<8x268xf32>
    %10 = vector.extract_strided_slice %9 {offsets = [0, 0], sizes = [8, 256], strides = [1, 1]} : vector<8x268xf32> to vector<8x256xf32>
    %11 = vector.extract_strided_slice %9 {offsets = [0, 3], sizes = [8, 256], strides = [1, 1]} : vector<8x268xf32> to vector<8x256xf32>
    %12 = vector.extract_strided_slice %9 {offsets = [0, 6], sizes = [8, 256], strides = [1, 1]} : vector<8x268xf32> to vector<8x256xf32>
    %13 = vector.extract_strided_slice %9 {offsets = [0, 9], sizes = [8, 256], strides = [1, 1]} : vector<8x268xf32> to vector<8x256xf32>
    %14 = vector.extract_strided_slice %9 {offsets = [0, 12], sizes = [8, 256], strides = [1, 1]} : vector<8x268xf32> to vector<8x256xf32>
    %15 = tpu.concatenate %10, %11, %12, %13, %14 in 0 : vector<8x256xf32>, vector<8x256xf32>, vector<8x256xf32>, vector<8x256xf32>, vector<8x256xf32> -> vector<40x256xf32>
    %16 = arith.truncf %15 : vector<40x256xf32> to vector<40x256xbf16>
    %c0_6 = arith.constant 0 : index
    %c0_7 = arith.constant 0 : index
    %17 = vector.load %arg4[%c0_6, %c0_7] : memref<8x40xbf16, #tpu.memory_space<vmem>>, vector<8x40xbf16>
    %cst_8 = arith.constant dense<0.000000e+00> : vector<8x256xf32>
    %18 = tpu.matmul %17, %16, %cst_8 {dimension_numbers = #tpu.dot_dimension_numbers<[1], [0], [0], [1], [0, 0, 1, 1], [], []>} : vector<8x40xbf16>, vector<40x256xbf16>, vector<8x256xf32> -> vector<8x256xf32>
    %c0_9 = arith.constant 0 : index
    %c0_10 = arith.constant 0 : index
    %19 = vector.load %arg5[%c0_9, %c0_10] : memref<8x1xf32, #tpu.memory_space<vmem>>, vector<8x1xf32>
    %20 = vector.broadcast %19 : vector<8x1xf32> to vector<8x256xf32>
    %21 = arith.addf %18, %20 : vector<8x256xf32>
    %22 = vector.extract_strided_slice %4 {offsets = [0, 6], sizes = [8, 256], strides = [1, 1]} : vector<8x268xf32> to vector<8x256xf32>
    %23 = arith.addf %21, %22 : vector<8x256xf32>
    %c0_11 = arith.constant 0 : index
    %c0_12 = arith.constant 0 : index
    %c0_13 = arith.constant 0 : index
    %24 = vector.load %arg6[%c0_11, %c0_12, %c0_13] : memref<1x8x256xf32, #tpu.memory_space<vmem>>, vector<1x8x256xf32>
    %25 = vector.shape_cast %24 : vector<1x8x256xf32> to vector<8x256xf32>
    %26 = arith.addf %23, %25 : vector<8x256xf32>
    %cst_14 = arith.constant 5.000000e-01 : f32
    %27 = vector.broadcast %cst_14 : f32 to vector<8x256xf32>
    %28 = arith.mulf %26, %27 : vector<8x256xf32>
    %c0_15 = arith.constant 0 : index
    %c0_16 = arith.constant 0 : index
    %c0_17 = arith.constant 0 : index
    %29 = vector.load %arg7[%c0_15, %c0_16, %c0_17] : memref<1x8x256xf32, #tpu.memory_space<vmem>>, vector<1x8x256xf32>
    %30 = vector.shape_cast %29 : vector<1x8x256xf32> to vector<8x256xf32>
    %31 = vector.shape_cast %28 : vector<8x256xf32> to vector<1x8x256xf32>
    tpu.vector_store %arg7[%c0_15, %c0_16, %c0_17], %31 {strides = array<i32>} : memref<1x8x256xf32, #tpu.memory_space<vmem>>, vector<1x8x256xf32>,
    return
  }
  func.func @transform_0(%arg0: i32, %arg1: i32) -> (i32, i32, i32) {
    %c0_i32 = arith.constant 0 : i32
    %c0_i32_0 = arith.constant 0 : i32
    return %arg0, %c0_i32, %arg1 : i32, i32, i32
  }
  func.func @transform_1(%arg0: i32, %arg1: i32) -> (i32, i32, i32) {
    %c1_i32 = arith.constant 1 : i32
    %0 = arith.addi %arg1, %c1_i32 : i32
    %c2_i32 = arith.constant 2 : i32
    %1 = arith.muli %0, %c2_i32 : i32
    %c0_i32 = arith.constant 0 : i32
    %c0_i32_0 = arith.constant 0 : i32
    return %arg0, %c0_i32, %1 : i32, i32, i32
  }
  func.func @transform_2(%arg0: i32, %arg1: i32) -> (i32, i32) {
    %c0_i32 = arith.constant 0 : i32
    %c0_i32_0 = arith.constant 0 : i32
    %c0_i32_1 = arith.constant 0 : i32
    return %c0_i32, %c0_i32_0 : i32, i32
  }
  func.func @transform_3(%arg0: i32, %arg1: i32) -> (i32, i32) {
    %c0_i32 = arith.constant 0 : i32
    %c0_i32_0 = arith.constant 0 : i32
    %c0_i32_1 = arith.constant 0 : i32
    return %c0_i32, %c0_i32_0 : i32, i32
  }
  func.func @transform_4(%arg0: i32, %arg1: i32) -> (i32, i32, i32) {
    %c0_i32 = arith.constant 0 : i32
    %c0_i32_0 = arith.constant 0 : i32
    return %arg0, %c0_i32, %arg1 : i32, i32, i32
  }
  func.func @transform_5(%arg0: i32, %arg1: i32) -> (i32, i32, i32) {
    %c0_i32 = arith.constant 0 : i32
    %c0_i32_0 = arith.constant 0 : i32
    return %arg0, %c0_i32, %arg1 : i32, i32, i32
  }
}

</mosaic_0001>

<llo_original>
// kernel: _lambda_.12
$region0: #{_lambda_.12}
  #allocation0 [shape = 'u32[]', space=smem, size = 0x4, offset = 0x4, fixed_abs, tag = 'smem constant byte address 0x4 - core index']
  #allocation1 [shape = 'u32[144,128]{1,0:T(1,128)}', space=vmem, size = 0x12000, scoped, tag = 'internal scratch']
  %s0 = inlined_call_operand.vmem [shape: f32[2,8,326], index: 0, kind: input, shape index: {}]
  %s1 = inlined_call_operand.hbm [shape: bf16[32,56], index: 1, kind: input, shape index: {}]
  %s2 = inlined_call_operand.vmem [shape: f32[32,1], index: 2, kind: input, shape index: {}]
  %s3 = inlined_call_operand.vmem [shape: f32[2,32,320], index: 3, kind: output, shape index: {}]
  %s4 = sld [smem:[#allocation0]]
  $region49: #{_lambda_.12} parent=0
    _
  %s6 = ssub.s32 1, %s4
  %s7 = scalar_select 0, %s6, %s4
  $region1: #{_lambda_.12} parent=0
    #allocation2 [shape = 'u8[8192]{0}', space=vmem, size = 0x2000, scoped, tag = 'input window, operand 1, single buffered']
    #allocation3 [shape = 's32[2]{0}', space=sflag, size = 0x8, scoped, tag = 'scoped memory for _lambda_.12']
    %8 = vsyncpa [#allocation3], 0
    loop: start=0, step=1, limit=4
    $region2: #{_lambda_.12} parent=1 // loop_pre_header
      _
    $region3: #{_lambda_.12} parent=1 // loop_header
      %s10 = sphi 0, %s14
      %p11 = scmp.ge.s32.totalorder %s10, 4
      %s17 = sphi 0, %s29
      %s18 = sphi 0, %s25
      %s19 = sphi 0, %s17
      %s20 = sphi 0, %s18
      %s21 = sphi 0, %s19
      %s22 = sphi 0, %s20
      %s32 = sphi 0, %s34
      %s35 = sphi 0, %s32
      %s36 = sphi 0, %s35
      %s52 = sphi 0, %s36
      %s56 = sphi 0, %s56
      %s58 = sphi 0, %s56
      %s59 = sphi 0, %s58
      %s73 = sphi 0, %s59
      %s77 = sphi 0, %s77
      %s79 = sphi 0, %s77
      %s80 = sphi 0, %s79
      %s94 = sphi 0, %s80
      %s102 = sphi 0, %s104
      %s105 = sphi 0, %s102
      %s106 = sphi 0, %s105
      %s122 = sphi 0, %s106
    $region4: #{_lambda_.12} parent=1 // loop_header_branch
      %13 = sbr.rel (%p11) target = $region8
    $region5: #{_lambda_.12} parent=1 // loop_body
      %s15 = ssub.s32 %s10, 1
      %s16 = ssub.s32 %s10, 2
      %s23 = sadd.s32 1, %s18
      %p24 = scmp.ge.s32.totalorder %s23, 1
      %s25 = scalar_select %p24, 0, %s23
      %s26 = sadd.s32 1, %s17
      %s27 = scalar_select %p24, %s26, %s17
      %p28 = scmp.ge.s32.totalorder %s27, 2
      %s29 = scalar_select %p28, 0, %s27
      %s30 = ssub.s32 %s17, %s29
      %p31 = scmp.eq.s32.totalorder %s30, 0
      %s33 = sadd.s32 %s32, 1
      %s34 = scalar_select %p31, %s32, %s33
      %p37 = pneg %p31
      %p38 = scmp.eq.s32.totalorder %s10, 1
      %p39 = por %p37, %p38
      %p40 = scmp.ne.s32.totalorder %s32, %s35
      %p41 = scmp.eq.s32.totalorder %s10, 0
      %p42 = por %p40, %p41
      %p43 = scmp.ne.s32.totalorder %s32, %s35
      %p44 = scmp.eq.s32.totalorder %s15, 1
      %p45 = por %p43, %p44
      %p46 = scmp.ne.s32.totalorder %s35, %s36
      %p47 = scmp.eq.s32.totalorder %s15, 0
      %p48 = por %p46, %p47
      %p49 = scmp.ne.s32.totalorder %s35, %s36
      %p50 = scmp.eq.s32.totalorder %s16, 1
      %p51 = por %p49, %p50
      %p53 = scmp.ne.s32.totalorder %s36, %s52
      %p54 = scmp.eq.s32.totalorder %s16, 0
      %p55 = por %p53, %p54
      %s57 = sadd.s32 %s56, 1
      %p60 = scmp.eq.s32.totalorder %s10, 1
      %p61 = scmp.ne.s32.totalorder %s56, %s58
      %p62 = scmp.eq.s32.totalorder %s10, 0
      %p63 = por %p61, %p62
      %p64 = scmp.ne.s32.totalorder %s56, %s58
      %p65 = scmp.eq.s32.totalorder %s15, 1
      %p66 = por %p64, %p65
      %p67 = scmp.ne.s32.totalorder %s58, %s59
      %p68 = scmp.eq.s32.totalorder %s15, 0
      %p69 = por %p67, %p68
      %p70 = scmp.ne.s32.totalorder %s58, %s59
      %p71 = scmp.eq.s32.totalorder %s16, 1
      %p72 = por %p70, %p71
      %p74 = scmp.ne.s32.totalorder %s59, %s73
      %p75 = scmp.eq.s32.totalorder %s16, 0
      %p76 = por %p74, %p75
      %s78 = sadd.s32 %s77, 1
      %p81 = scmp.eq.s32.totalorder %s10, 1
      %p82 = scmp.ne.s32.totalorder %s77, %s79
      %p83 = scmp.eq.s32.totalorder %s10, 0
      %p84 = por %p82, %p83
      %p85 = scmp.ne.s32.totalorder %s77, %s79
      %p86 = scmp.eq.s32.totalorder %s15, 1
      %p87 = por %p85, %p86
      %p88 = scmp.ne.s32.totalorder %s79, %s80
      %p89 = scmp.eq.s32.totalorder %s15, 0
      %p90 = por %p88, %p89
      %p91 = scmp.ne.s32.totalorder %s79, %s80
      %p92 = scmp.eq.s32.totalorder %s16, 1
      %p93 = por %p91, %p92
      %p95 = scmp.ne.s32.totalorder %s80, %s94
      %p96 = scmp.eq.s32.totalorder %s16, 0
      %p97 = por %p95, %p96
      %s98 = ssub.s32 %s17, %s29
      %s99 = ssub.s32 %s18, %s25
      %s100 = sor.u32 %s98, %s99
      %p101 = scmp.eq.s32.totalorder %s100, 0
      %s103 = sadd.s32 %s102, 1
      %s104 = scalar_select %p101, %s102, %s103
      %p107 = pneg %p101
      %p108 = scmp.eq.s32.totalorder %s10, 1
      %p109 = por %p107, %p108
      %p110 = scmp.ne.s32.totalorder %s102, %s105
      %p111 = scmp.eq.s32.totalorder %s10, 0
      %p112 = por %p110, %p111
      %p113 = scmp.ne.s32.totalorder %s102, %s105
      %p114 = scmp.eq.s32.totalorder %s15, 1
      %p115 = por %p113, %p114
      %p116 = scmp.ne.s32.totalorder %s105, %s106
      %p117 = scmp.eq.s32.totalorder %s15, 0
      %p118 = por %p116, %p117
      %p119 = scmp.ne.s32.totalorder %s105, %s106
      %p120 = scmp.eq.s32.totalorder %s16, 1
      %p121 = por %p119, %p120
      %p123 = scmp.ne.s32.totalorder %s106, %s122
      %p124 = scmp.eq.s32.totalorder %s16, 0
      %p125 = por %p123, %p124
      %p126 = scmp.le.s32.totalorder 1, %s10
      %p127 = scmp.lt.s32.totalorder %s10, 3
      %p128 = pnand %p126, %p127
      %p129 = pneg %p128
      // Predicated region
      $region9: #{_lambda_.12} parent=5 // pred_check
        _
      $region10: #{_lambda_.12} parent=5 // pred_check_branch
        %131 = sbr.rel (%p128) target = $region12
      $region11: #{_lambda_.12} parent=5 // pred_region
        %s132 = ssub.s32 %s10, 1
        // Predicated region
        $region13: #{_lambda_.12} parent=11 // pred_check
          %p133 = pneg %p69
        $region14: #{_lambda_.12} parent=11 // pred_check_branch
          %135 = sbr.rel (%p133) target = $region16
        $region15: #{_lambda_.12} parent=11 // pred_region
          %s137 = ssub.s32 256, 256
          %138 = vsyncadd [#allocation3], %s137
          %s139 = sshll.u32 [#allocation2], 4
          %s140 = int_to_ptr.vmem [resolvable:$true] %s139
          %145 = dma.hbm_to_vmem [thread:$0]  %s1, 256, %s140, [#allocation3], 64, 64, 4
        $region16: #{_lambda_.12} parent=11 // pred_fallthru
          _
        // Predicated region
        $region17: #{_lambda_.12} parent=11 // pred_check
          %p146 = pneg %p90
        $region18: #{_lambda_.12} parent=11 // pred_check_branch
          %148 = sbr.rel (%p146) target = $region20
        $region19: #{_lambda_.12} parent=11 // pred_region
          _
        $region20: #{_lambda_.12} parent=11 // pred_fallthru
          _
      $region12: #{_lambda_.12} parent=5 // pred_fallthru
        _
      %p149 = scmp.lt.s32.totalorder %s10, 2
      // Predicated region
      $region21: #{_lambda_.12} parent=5 // pred_check
        %p150 = pneg %p149
      $region22: #{_lambda_.12} parent=5 // pred_check_branch
        %152 = sbr.rel (%p150) target = $region24
      $region23: #{_lambda_.12} parent=5 // pred_region
        // Predicated region
        $region25: #{_lambda_.12} parent=23 // pred_check
          %p153 = pneg %p42
        $region26: #{_lambda_.12} parent=23 // pred_check_branch
          %155 = sbr.rel (%p153) target = $region28
        $region27: #{_lambda_.12} parent=23 // pred_region
          %p156 = scmp.lt.s32.totalorder %s17, 1
          %s157 = scalar_select %p156, %s17, 1
          %s158 = smul.addr %s157, 3
          %s159 = smul.addr %s158, 8
          %s160 = scalar_lea.vmem %s0, %s159
        $region28: #{_lambda_.12} parent=23 // pred_fallthru
          _
      $region24: #{_lambda_.12} parent=5 // pred_fallthru
        _
      %p161 = scmp.le.s32.totalorder 1, %s10
      %p162 = scmp.lt.s32.totalorder %s10, 3
      %p163 = pnand %p161, %p162
      %p164 = pneg %p163
      // Predicated region
      $region29: #{_lambda_.12} parent=5 // pred_check
        _
      $region30: #{_lambda_.12} parent=5 // pred_check_branch
        %166 = sbr.rel (%p163) target = $region32
      $region31: #{_lambda_.12} parent=5 // pred_region
        %s167 = ssub.s32 %s10, 1
        // Predicated region
        $region33: #{_lambda_.12} parent=31 // pred_check
          %p168 = pneg %p69
        $region34: #{_lambda_.12} parent=31 // pred_check_branch
          %170 = sbr.rel (%p168) target = $region36
        $region35: #{_lambda_.12} parent=31 // pred_region
          %171 = dma.done [#allocation3], 256
        $region36: #{_lambda_.12} parent=31 // pred_fallthru
          _
        %p172 = scmp.lt.s32.totalorder %s19, 1
        %s173 = scalar_select %p172, %s19, 1
        %s174 = smul.addr %s173, 3
        %s175 = smul.addr %s174, 8
        %s176 = scalar_lea.vmem %s0, %s175
        %p177 = pneg %p48
        %p178 = pneg %p45
        %p179 = pneg %p69
        %p180 = pneg %p66
        %p181 = pneg %p90
        %p182 = pneg %p87
        %p183 = pneg %p118
        %p184 = pneg %p115
        %s185 = smul.u32 3, %s20
        %p186 = scmp.lt.s32.totalorder %s19, 1
        %s187 = scalar_select %p186, %s19, 1
        %p188 = scmp.lt.s32.totalorder %s185, 2
        %s189 = scalar_select %p188, %s185, 2
        %s190 = smul.addr %s187, 12
        %s191 = sadd.s32 %s189, %s190
        %s192 = smul.addr %s191, 8
        %s193 = scalar_lea.vmem %s3, %s192
        %p194 = scmp.lt.s32.totalorder %s19, 1
        %s195 = scalar_select %p194, %s19, 1
        %s196 = smul.addr %s195, 3
        %s197 = smul.addr %s196, 8
        %s198 = scalar_lea.vmem %s0, %s197
        %s199 = smul.u32 3, %s20
        %p200 = scmp.lt.s32.totalorder %s19, 1
        %s201 = scalar_select %p200, %s19, 1
        %p202 = scmp.lt.s32.totalorder %s199, 2
        %s203 = scalar_select %p202, %s199, 2
        %s204 = smul.addr %s201, 12
        %s205 = sadd.s32 %s203, %s204
        %s206 = smul.addr %s205, 8
        %s207 = scalar_lea.vmem %s3, %s206
        %s208 = smul.u32 3, %s20
        %v210 = vld [vmem:[%s198] sm:$0xff]
        %v211 = vld [vmem:[%s198 + $0x8] sm:$0xff]
        %v212 = vld [vmem:[%s198 + $0x10] sm:$0xff]
        %216 = vrot.lane.b32.xlu0 %v210, 127
        %v217 = vpop.permute.xlu0 %216
        %218 = vrot.lane.b32.xlu0 %v211, 127
        %v219 = vpop.permute.xlu0 %218
        %220 = vrot.lane.b32.xlu0 %v212, 127
        %v221 = vpop.permute.xlu0 %220
        %vm222 = vcmask 1039360
        %v223 = vsel %vm222, %v217, %v219
        %v224 = vsel %vm222, %v219, %v221
        %228 = vrot.lane.b32.xlu0 %v210, 126
        %v229 = vpop.permute.xlu0 %228
        %230 = vrot.lane.b32.xlu0 %v211, 126
        %v231 = vpop.permute.xlu0 %230
        %232 = vrot.lane.b32.xlu0 %v212, 126
        %v233 = vpop.permute.xlu0 %232
        %vm234 = vcmask 1031168
        %v235 = vsel %vm234, %v229, %v231
        %v236 = vsel %vm234, %v231, %v233
        %240 = vrot.lane.b32.xlu0 %v210, 125
        %v241 = vpop.permute.xlu0 %240
        %242 = vrot.lane.b32.xlu0 %v211, 125
        %v243 = vpop.permute.xlu0 %242
        %244 = vrot.lane.b32.xlu0 %v212, 125
        %v245 = vpop.permute.xlu0 %244
        %vm246 = vcmask 1022976
        %v247 = vsel %vm246, %v241, %v243
        %v248 = vsel %vm246, %v243, %v245
        %252 = vrot.lane.b32.xlu0 %v210, 124
        %v253 = vpop.permute.xlu0 %252
        %254 = vrot.lane.b32.xlu0 %v211, 124
        %v255 = vpop.permute.xlu0 %254
        %256 = vrot.lane.b32.xlu0 %v212, 124
        %v257 = vpop.permute.xlu0 %256
        %vm258 = vcmask 1014784
        %v259 = vsel %vm258, %v253, %v255
        %v260 = vsel %vm258, %v255, %v257
        %264 = vrot.lane.b32.xlu0 %v210, 123
        %v265 = vpop.permute.xlu0 %264
        %266 = vrot.lane.b32.xlu0 %v211, 123
        %v267 = vpop.permute.xlu0 %266
        %268 = vrot.lane.b32.xlu0 %v212, 123
        %v269 = vpop.permute.xlu0 %268
        %vm270 = vcmask 1006592
        %v271 = vsel %vm270, %v265, %v267
        %v272 = vsel %vm270, %v267, %v269
        %276 = vrot.lane.b32.xlu0 %v210, 122
        %v277 = vpop.permute.xlu0 %276
        %278 = vrot.lane.b32.xlu0 %v211, 122
        %v279 = vpop.permute.xlu0 %278
        %280 = vrot.lane.b32.xlu0 %v212, 122
        %v281 = vpop.permute.xlu0 %280
        %vm282 = vcmask 998400
        %v283 = vsel %vm282, %v277, %v279
        %v284 = vsel %vm282, %v279, %v281
        %v288 = vpack.c.bf16 %v223, %v210
        %v289 = vpack.c.bf16 %v224, %v211
        %v290 = vpack.c.bf16 %v221, %v212
        %v291 = vpack.c.bf16 %v247, %v235
        %v292 = vpack.c.bf16 %v248, %v236
        %v293 = vpack.c.bf16 %v245, %v233
        %v294 = vpack.c.bf16 %v271, %v259
        %v295 = vpack.c.bf16 %v272, %v260
        %v296 = vpack.c.bf16 %v269, %v257
        %v297 = vpack.c.bf16 %v283, %v283
        %v298 = vpack.c.bf16 %v284, %v284
        %v299 = vpack.c.bf16 %v281, %v281
        %v300 = vld [vmem:[#allocation2] sm:$0xf]
        %v301 = vld [vmem:[#allocation2 + $0x4] sm:$0xf]
        %v302 = vld [vmem:[#allocation2 + $0x8] sm:$0xf]
        %v303 = vld [vmem:[#allocation2 + $0xc] sm:$0xf]
        %v304 = vld [vmem:[%s2] sm:$0xff]
        %v305 = vld [vmem:[%s2 + $0x8] sm:$0xff]
        %v306 = vld [vmem:[%s2 + $0x10] sm:$0xff]
        %v307 = vld [vmem:[%s2 + $0x18] sm:$0xff]
        %309 = vset.pattern.permute.xlu0 0
        %310 = vperm.xlu0 %309, %v304
        %v311 = vpop.permute.xlu0 %310
        %314 = vset.pattern.permute.xlu0 0
        %315 = vperm.xlu0 %314, %v305
        %v316 = vpop.permute.xlu0 %315
        %319 = vset.pattern.permute.xlu0 0
        %320 = vperm.xlu0 %319, %v306
        %v321 = vpop.permute.xlu0 %320
        %324 = vset.pattern.permute.xlu0 0
        %325 = vperm.xlu0 %324, %v307
        %v326 = vpop.permute.xlu0 %325
        %v332 = vunpack.c.l.b16 %v300
        %v333 = vunpack.c.l.b16 %v301
        %v334 = vunpack.c.l.b16 %v302
        %v335 = vunpack.c.l.b16 %v303
        %v336 = vpack.c.b16 %v333, %v332
        %v337 = vpack.c.b16 %v335, %v334
        %vm338 = vcmask 457728
        %v340 = vsel %vm338, %v336, 0
        %v343 = vsel %vm338, %v337, 0
        %vm345 = vcmask 1043456
        %v347 = vsel %vm345, %v297, 0
        %v350 = vsel %vm345, %v298, 0
        %v353 = vsel %vm345, %v299, 0
        %355 = vmatprep.subr.bf16.mxu0 0
        %356 = vmatpush1.bf16.msra.mxu0 0
        %357 = vmatprep.subr.bf16.mxu0 0
        %358 = vmatpush1.bf16.msra.mxu0 0
        %359 = vmatprep.subr.bf16.mxu0 0
        %360 = vmatpush1.bf16.msra.mxu0 0
        %361 = vmatprep.subr.bf16.mxu0 0
        %362 = vmatpush1.bf16.msra.mxu0 0
        %363 = vmatprep.subr.bf16.mxu0 %v350
        %364 = vmatpush1.bf16.msra.mxu0 %v347
        %365 = vmatprep.subr.bf16.mxu0 %v295
        %366 = vmatpush1.bf16.msra.mxu0 %v294
        %367 = vmatprep.subr.bf16.mxu0 %v292
        %368 = vmatpush1.bf16.msra.mxu0 %v291
        %369 = vmatprep.subr.bf16.mxu0 %v289
        %370 = vmatpush1.bf16.msra.mxu0 %v288
        %371 = vmatprep.subr.bf16.mxu0 0
        %372 = vmatpush2.bf16.msra.mxu0 0
        %373 = vmatprep.subr.bf16.mxu0 0
        %374 = vmatpush2.bf16.msra.mxu0 0
        %375 = vmatprep.subr.bf16.mxu0 0
        %376 = vmatpush2.bf16.msra.mxu0 0
        %377 = vmatprep.subr.bf16.mxu0 0
        %378 = vmatpush2.bf16.msra.mxu0 0
        %379 = vmatprep.subr.bf16.mxu0 0
        %380 = vmatpush2.bf16.msra.mxu0 0
        %381 = vmatprep.subr.bf16.mxu0 0
        %382 = vmatpush2.bf16.msra.mxu0 0
        %383 = vmatprep.subr.bf16.mxu0 0
        %384 = vmatpush2.bf16.msra.mxu0 0
        %385 = vmatprep.subr.bf16.mxu0 0
        %386 = vmatpush2.bf16.msra.mxu0 0
        %387 = vmatprep.mubr.bf16.mxu0 0
        %388 = vmatmul.mubr.bf16.gmra.mxu0 %v340
        %v389 = vpop.f32.mrf.mxu0
        %v390 = vadd.f32 %v311, %v389
        %v391 = vpop.f32.mrf.mxu0
        %v392 = vadd.f32 %v311, %v391
        %v393 = vpop.f32.mrf.mxu0
        %v394 = vadd.f32 %v316, %v393
        %v395 = vpop.f32.mrf.mxu0
        %v396 = vadd.f32 %v316, %v395
        %397 = vmatprep.mubr.bf16.mxu0 0
        %398 = vmatmul.mubr.bf16.gmra.mxu0 %v343
        %v399 = vpop.f32.mrf.mxu0
        %v400 = vadd.f32 %v321, %v399
        %v401 = vpop.f32.mrf.mxu0
        %v402 = vadd.f32 %v321, %v401
        %v403 = vpop.f32.mrf.mxu0
        %v404 = vadd.f32 %v326, %v403
        %v405 = vpop.f32.mrf.mxu0
        %v406 = vadd.f32 %v326, %v405
        %407 = vdwg.mxu0
        %408 = vmatprep.subr.bf16.mxu0 0
        %409 = vmatpush1.bf16.msra.mxu0 0
        %410 = vmatprep.subr.bf16.mxu0 0
        %411 = vmatpush1.bf16.msra.mxu0 0
        %412 = vmatprep.subr.bf16.mxu0 0
        %413 = vmatpush1.bf16.msra.mxu0 0
        %414 = vmatprep.subr.bf16.mxu0 0
        %415 = vmatpush1.bf16.msra.mxu0 0
        %416 = vmatprep.subr.bf16.mxu0 0
        %417 = vmatpush1.bf16.msra.mxu0 %v353
        %418 = vmatprep.subr.bf16.mxu0 0
        %419 = vmatpush1.bf16.msra.mxu0 %v296
        %420 = vmatprep.subr.bf16.mxu0 0
        %421 = vmatpush1.bf16.msra.mxu0 %v293
        %422 = vmatprep.subr.bf16.mxu0 0
        %423 = vmatpush1.bf16.msra.mxu0 %v290
        %424 = vmatprep.subr.bf16.mxu0 0
        %425 = vmatpush2.bf16.msra.mxu0 0
        %426 = vmatprep.subr.bf16.mxu0 0
        %427 = vmatpush2.bf16.msra.mxu0 0
        %428 = vmatprep.subr.bf16.mxu0 0
        %429 = vmatpush2.bf16.msra.mxu0 0
        %430 = vmatprep.subr.bf16.mxu0 0
        %431 = vmatpush2.bf16.msra.mxu0 0
        %432 = vmatprep.subr.bf16.mxu0 0
        %433 = vmatpush2.bf16.msra.mxu0 0
        %434 = vmatprep.subr.bf16.mxu0 0
        %435 = vmatpush2.bf16.msra.mxu0 0
        %436 = vmatprep.subr.bf16.mxu0 0
        %437 = vmatpush2.bf16.msra.mxu0 0
        %438 = vmatprep.subr.bf16.mxu0 0
        %439 = vmatpush2.bf16.msra.mxu0 0
        %440 = vmatprep.mubr.bf16.mxu0 0
        %441 = vmatmul.mubr.bf16.gmra.mxu0 %v340
        %v442 = vpop.f32.mrf.mxu0
        %v443 = vadd.f32 %v311, %v442
        %v444 = vpop.f32.mrf.mxu0
        %v445 = vpop.f32.mrf.mxu0
        %v446 = vadd.f32 %v316, %v445
        %v447 = vpop.f32.mrf.mxu0
        %448 = vmatprep.mubr.bf16.mxu0 0
        %449 = vmatmul.mubr.bf16.gmra.mxu0 %v343
        %v450 = vpop.f32.mrf.mxu0
        %v451 = vadd.f32 %v321, %v450
        %v452 = vpop.f32.mrf.mxu0
        %v453 = vpop.f32.mrf.mxu0
        %v454 = vadd.f32 %v326, %v453
        %v455 = vpop.f32.mrf.mxu0
        %456 = vdwg.mxu0
        %457 = vst [vmem:[%s207] sm:$0xff] %v390
        %458 = vst [vmem:[%s207 + $0x8] sm:$0xff] %v392
        %vm459 = vcmask 523264
        %460 = vst.msk [vmem:[%s207 + $0x10] sm:$0xff] %vm459, %v443
        %461 = vst [vmem:[%s207 + $0x18] sm:$0xff] %v394
        %462 = vst [vmem:[%s207 + $0x20] sm:$0xff] %v396
        %463 = vst.msk [vmem:[%s207 + $0x28] sm:$0xff] %vm459, %v446
        %464 = vst [vmem:[%s207 + $0x30] sm:$0xff] %v400
        %465 = vst [vmem:[%s207 + $0x38] sm:$0xff] %v402
        %466 = vst.msk [vmem:[%s207 + $0x40] sm:$0xff] %vm459, %v451
        %467 = vst [vmem:[%s207 + $0x48] sm:$0xff] %v404
        %468 = vst [vmem:[%s207 + $0x50] sm:$0xff] %v406
        %469 = vst.msk [vmem:[%s207 + $0x58] sm:$0xff] %vm459, %v454
        %s470 = smul.u32 3, %s20
        %p471 = scmp.lt.s32.totalorder %s19, 1
        %s472 = scalar_select %p471, %s19, 1
        %p473 = scmp.lt.s32.totalorder %s470, 2
        %s474 = scalar_select %p473, %s470, 2
        %s475 = smul.addr %s472, 12
        %s476 = sadd.s32 %s474, %s475
        %s477 = smul.addr %s476, 8
        %s478 = scalar_lea.vmem %s3, %s477
        // Predicated region
        $region37: #{_lambda_.12} parent=31 // pred_check
          %p479 = pneg %p115
        $region38: #{_lambda_.12} parent=31 // pred_check_branch
          %481 = sbr.rel (%p479) target = $region40
        $region39: #{_lambda_.12} parent=31 // pred_region
          %s482 = smul.u32 3, %s20
        $region40: #{_lambda_.12} parent=31 // pred_fallthru
          _
      $region32: #{_lambda_.12} parent=5 // pred_fallthru
        _
      %p483 = scmp.le.s32.totalorder 2, %s10
      // Predicated region
      $region41: #{_lambda_.12} parent=5 // pred_check
        %p484 = pneg %p483
      $region42: #{_lambda_.12} parent=5 // pred_check_branch
        %486 = sbr.rel (%p484) target = $region44
      $region43: #{_lambda_.12} parent=5 // pred_region
        %s487 = ssub.s32 %s10, 2
        // Predicated region
        $region45: #{_lambda_.12} parent=43 // pred_check
          %p488 = pneg %p121
        $region46: #{_lambda_.12} parent=43 // pred_check_branch
          %490 = sbr.rel (%p488) target = $region48
        $region47: #{_lambda_.12} parent=43 // pred_region
          %s491 = smul.u32 3, %s22
          %p492 = scmp.lt.s32.totalorder %s21, 1
          %s493 = scalar_select %p492, %s21, 1
          %p494 = scmp.lt.s32.totalorder %s491, 2
          %s495 = scalar_select %p494, %s491, 2
          %s496 = smul.addr %s493, 12
          %s497 = sadd.s32 %s495, %s496
          %s498 = smul.addr %s497, 8
          %s499 = scalar_lea.vmem %s3, %s498
        $region48: #{_lambda_.12} parent=43 // pred_fallthru
          _
      $region44: #{_lambda_.12} parent=5 // pred_fallthru
        _
    $region6: #{_lambda_.12} parent=1 // loop_footer
      %s14 = sadd.s32 1, %s10
    $region7: #{_lambda_.12} parent=1 // loop_footer_branch
      %9 = sbr.rel target = $region3
    $region8: #{_lambda_.12} parent=1 // loop_exit
      _
    %500 = vsyncpa [#allocation3], 1
    %s501 = scalar_lea.sflag [#allocation3], 1
    %502 = vsyncpa %s501, 1

// kernel: _lambda_.13
$region0: #{_lambda_.13}
  #allocation0 [shape = 'u32[]', space=smem, size = 0x4, offset = 0x4, fixed_abs, tag = 'smem constant byte address 0x4 - core index']
  #allocation1 [shape = 'u32[144,128]{1,0:T(1,128)}', space=vmem, size = 0x12000, scoped, tag = 'internal scratch']
  %s0 = inlined_call_operand.vmem [shape: f32[2,32,322], index: 0, kind: input, shape index: {}]
  %s1 = inlined_call_operand.hbm [shape: bf16[2,16,64], index: 1, kind: input, shape index: {}]
  %s2 = inlined_call_operand.vmem [shape: f32[16,1], index: 2, kind: input, shape index: {}]
  %s3 = inlined_call_operand.vmem [shape: f32[2,2,16,320], index: 3, kind: output, shape index: {}]
  %s4 = sld [smem:[#allocation0]]
  $region49: #{_lambda_.13} parent=0
    _
  %s6 = ssub.s32 1, %s4
  %s7 = scalar_select 0, %s6, %s4
  $region1: #{_lambda_.13} parent=0
    #allocation2 [shape = 'u8[8192]{0}', space=vmem, size = 0x2000, scoped, tag = 'input window, operand 1, single buffered']
    #allocation3 [shape = 's32[2]{0}', space=sflag, size = 0x8, scoped, tag = 'scoped memory for _lambda_.13']
    %8 = vsyncpa [#allocation3], 0
    loop: start=0, step=1, limit=4
    $region2: #{_lambda_.13} parent=1 // loop_pre_header
      _
    $region3: #{_lambda_.13} parent=1 // loop_header
      %s10 = sphi 0, %s14
      %p11 = scmp.ge.s32.totalorder %s10, 4
      %s17 = sphi 0, %s29
      %s18 = sphi 0, %s25
      %s19 = sphi 0, %s17
      %s20 = sphi 0, %s18
      %s21 = sphi 0, %s19
      %s22 = sphi 0, %s20
      %s32 = sphi 0, %s34
      %s35 = sphi 0, %s32
      %s36 = sphi 0, %s35
      %s52 = sphi 0, %s36
      %s56 = sphi 0, %s56
      %s58 = sphi 0, %s56
      %s59 = sphi 0, %s58
      %s73 = sphi 0, %s59
      %s77 = sphi 0, %s77
      %s79 = sphi 0, %s77
      %s80 = sphi 0, %s79
      %s94 = sphi 0, %s80
      %s102 = sphi 0, %s104
      %s105 = sphi 0, %s102
      %s106 = sphi 0, %s105
      %s122 = sphi 0, %s106
    $region4: #{_lambda_.13} parent=1 // loop_header_branch
      %13 = sbr.rel (%p11) target = $region8
    $region5: #{_lambda_.13} parent=1 // loop_body
      %s15 = ssub.s32 %s10, 1
      %s16 = ssub.s32 %s10, 2
      %s23 = sadd.s32 1, %s18
      %p24 = scmp.ge.s32.totalorder %s23, 1
      %s25 = scalar_select %p24, 0, %s23
      %s26 = sadd.s32 1, %s17
      %s27 = scalar_select %p24, %s26, %s17
      %p28 = scmp.ge.s32.totalorder %s27, 2
      %s29 = scalar_select %p28, 0, %s27
      %s30 = ssub.s32 %s17, %s29
      %p31 = scmp.eq.s32.totalorder %s30, 0
      %s33 = sadd.s32 %s32, 1
      %s34 = scalar_select %p31, %s32, %s33
      %p37 = pneg %p31
      %p38 = scmp.eq.s32.totalorder %s10, 1
      %p39 = por %p37, %p38
      %p40 = scmp.ne.s32.totalorder %s32, %s35
      %p41 = scmp.eq.s32.totalorder %s10, 0
      %p42 = por %p40, %p41
      %p43 = scmp.ne.s32.totalorder %s32, %s35
      %p44 = scmp.eq.s32.totalorder %s15, 1
      %p45 = por %p43, %p44
      %p46 = scmp.ne.s32.totalorder %s35, %s36
      %p47 = scmp.eq.s32.totalorder %s15, 0
      %p48 = por %p46, %p47
      %p49 = scmp.ne.s32.totalorder %s35, %s36
      %p50 = scmp.eq.s32.totalorder %s16, 1
      %p51 = por %p49, %p50
      %p53 = scmp.ne.s32.totalorder %s36, %s52
      %p54 = scmp.eq.s32.totalorder %s16, 0
      %p55 = por %p53, %p54
      %s57 = sadd.s32 %s56, 1
      %p60 = scmp.eq.s32.totalorder %s10, 1
      %p61 = scmp.ne.s32.totalorder %s56, %s58
      %p62 = scmp.eq.s32.totalorder %s10, 0
      %p63 = por %p61, %p62
      %p64 = scmp.ne.s32.totalorder %s56, %s58
      %p65 = scmp.eq.s32.totalorder %s15, 1
      %p66 = por %p64, %p65
      %p67 = scmp.ne.s32.totalorder %s58, %s59
      %p68 = scmp.eq.s32.totalorder %s15, 0
      %p69 = por %p67, %p68
      %p70 = scmp.ne.s32.totalorder %s58, %s59
      %p71 = scmp.eq.s32.totalorder %s16, 1
      %p72 = por %p70, %p71
      %p74 = scmp.ne.s32.totalorder %s59, %s73
      %p75 = scmp.eq.s32.totalorder %s16, 0
      %p76 = por %p74, %p75
      %s78 = sadd.s32 %s77, 1
      %p81 = scmp.eq.s32.totalorder %s10, 1
      %p82 = scmp.ne.s32.totalorder %s77, %s79
      %p83 = scmp.eq.s32.totalorder %s10, 0
      %p84 = por %p82, %p83
      %p85 = scmp.ne.s32.totalorder %s77, %s79
      %p86 = scmp.eq.s32.totalorder %s15, 1
      %p87 = por %p85, %p86
      %p88 = scmp.ne.s32.totalorder %s79, %s80
      %p89 = scmp.eq.s32.totalorder %s15, 0
      %p90 = por %p88, %p89
      %p91 = scmp.ne.s32.totalorder %s79, %s80
      %p92 = scmp.eq.s32.totalorder %s16, 1
      %p93 = por %p91, %p92
      %p95 = scmp.ne.s32.totalorder %s80, %s94
      %p96 = scmp.eq.s32.totalorder %s16, 0
      %p97 = por %p95, %p96
      %s98 = ssub.s32 %s17, %s29
      %s99 = ssub.s32 %s18, %s25
      %s100 = sor.u32 %s98, %s99
      %p101 = scmp.eq.s32.totalorder %s100, 0
      %s103 = sadd.s32 %s102, 1
      %s104 = scalar_select %p101, %s102, %s103
      %p107 = pneg %p101
      %p108 = scmp.eq.s32.totalorder %s10, 1
      %p109 = por %p107, %p108
      %p110 = scmp.ne.s32.totalorder %s102, %s105
      %p111 = scmp.eq.s32.totalorder %s10, 0
      %p112 = por %p110, %p111
      %p113 = scmp.ne.s32.totalorder %s102, %s105
      %p114 = scmp.eq.s32.totalorder %s15, 1
      %p115 = por %p113, %p114
      %p116 = scmp.ne.s32.totalorder %s105, %s106
      %p117 = scmp.eq.s32.totalorder %s15, 0
      %p118 = por %p116, %p117
      %p119 = scmp.ne.s32.totalorder %s105, %s106
      %p120 = scmp.eq.s32.totalorder %s16, 1
      %p121 = por %p119, %p120
      %p123 = scmp.ne.s32.totalorder %s106, %s122
      %p124 = scmp.eq.s32.totalorder %s16, 0
      %p125 = por %p123, %p124
      %p126 = scmp.le.s32.totalorder 1, %s10
      %p127 = scmp.lt.s32.totalorder %s10, 3
      %p128 = pnand %p126, %p127
      %p129 = pneg %p128
      // Predicated region
      $region9: #{_lambda_.13} parent=5 // pred_check
        _
      $region10: #{_lambda_.13} parent=5 // pred_check_branch
        %131 = sbr.rel (%p128) target = $region12
      $region11: #{_lambda_.13} parent=5 // pred_region
        %s132 = ssub.s32 %s10, 1
        // Predicated region
        $region13: #{_lambda_.13} parent=11 // pred_check
          %p133 = pneg %p69
        $region14: #{_lambda_.13} parent=11 // pred_check_branch
          %135 = sbr.rel (%p133) target = $region16
        $region15: #{_lambda_.13} parent=11 // pred_region
          %s137 = ssub.s32 256, 256
          %138 = vsyncadd [#allocation3], %s137
          %s139 = sshll.u32 [#allocation2], 4
          %s140 = int_to_ptr.vmem [resolvable:$true] %s139
          %145 = dma.hbm_to_vmem [thread:$0]  %s1, 256, %s140, [#allocation3], 64, 64, 4
        $region16: #{_lambda_.13} parent=11 // pred_fallthru
          _
        // Predicated region
        $region17: #{_lambda_.13} parent=11 // pred_check
          %p146 = pneg %p90
        $region18: #{_lambda_.13} parent=11 // pred_check_branch
          %148 = sbr.rel (%p146) target = $region20
        $region19: #{_lambda_.13} parent=11 // pred_region
          _
        $region20: #{_lambda_.13} parent=11 // pred_fallthru
          _
      $region12: #{_lambda_.13} parent=5 // pred_fallthru
        _
      %p149 = scmp.lt.s32.totalorder %s10, 2
      // Predicated region
      $region21: #{_lambda_.13} parent=5 // pred_check
        %p150 = pneg %p149
      $region22: #{_lambda_.13} parent=5 // pred_check_branch
        %152 = sbr.rel (%p150) target = $region24
      $region23: #{_lambda_.13} parent=5 // pred_region
        // Predicated region
        $region25: #{_lambda_.13} parent=23 // pred_check
          %p153 = pneg %p42
        $region26: #{_lambda_.13} parent=23 // pred_check_branch
          %155 = sbr.rel (%p153) target = $region28
        $region27: #{_lambda_.13} parent=23 // pred_region
          %p156 = scmp.lt.s32.totalorder %s17, 1
          %s157 = scalar_select %p156, %s17, 1
          %s158 = smul.addr %s157, 12
          %s159 = smul.addr %s158, 8
          %s160 = scalar_lea.vmem %s0, %s159
        $region28: #{_lambda_.13} parent=23 // pred_fallthru
          _
      $region24: #{_lambda_.13} parent=5 // pred_fallthru
        _
      %p161 = scmp.le.s32.totalorder 1, %s10
      %p162 = scmp.lt.s32.totalorder %s10, 3
      %p163 = pnand %p161, %p162
      %p164 = pneg %p163
      // Predicated region
      $region29: #{_lambda_.13} parent=5 // pred_check
        _
      $region30: #{_lambda_.13} parent=5 // pred_check_branch
        %166 = sbr.rel (%p163) target = $region32
      $region31: #{_lambda_.13} parent=5 // pred_region
        %s167 = ssub.s32 %s10, 1
        // Predicated region
        $region33: #{_lambda_.13} parent=31 // pred_check
          %p168 = pneg %p69
        $region34: #{_lambda_.13} parent=31 // pred_check_branch
          %170 = sbr.rel (%p168) target = $region36
        $region35: #{_lambda_.13} parent=31 // pred_region
          %171 = dma.done [#allocation3], 256
        $region36: #{_lambda_.13} parent=31 // pred_fallthru
          _
        %p172 = scmp.lt.s32.totalorder %s19, 1
        %s173 = scalar_select %p172, %s19, 1
        %s174 = smul.addr %s173, 12
        %s175 = smul.addr %s174, 8
        %s176 = scalar_lea.vmem %s0, %s175
        %p177 = pneg %p48
        %p178 = pneg %p45
        %p179 = pneg %p69
        %p180 = pneg %p66
        %p181 = pneg %p90
        %p182 = pneg %p87
        %p183 = pneg %p118
        %p184 = pneg %p115
        %s185 = smul.u32 3, %s20
        %p186 = scmp.lt.s32.totalorder %s19, 1
        %s187 = scalar_select %p186, %s19, 1
        %p188 = scmp.lt.s32.totalorder %s185, 2
        %s189 = scalar_select %p188, %s185, 2
        %s190 = smul.addr %s187, 12
        %s191 = sadd.s32 %s189, %s190
        %s192 = smul.addr %s191, 8
        %s193 = scalar_lea.vmem %s3, %s192
        %p194 = scmp.lt.s32.totalorder %s19, 1
        %s195 = scalar_select %p194, %s19, 1
        %s196 = smul.addr %s195, 12
        %s197 = smul.addr %s196, 8
        %s198 = scalar_lea.vmem %s0, %s197
        %s199 = smul.u32 3, %s20
        %p200 = scmp.lt.s32.totalorder %s19, 1
        %s201 = scalar_select %p200, %s19, 1
        %p202 = scmp.lt.s32.totalorder %s199, 2
        %s203 = scalar_select %p202, %s199, 2
        %s204 = smul.addr %s201, 12
        %s205 = sadd.s32 %s203, %s204
        %s206 = smul.addr %s205, 8
        %s207 = scalar_lea.vmem %s3, %s206
        %s208 = smul.u32 3, %s20
        %v210 = vld [vmem:[%s198] sm:$0xff]
        %v211 = vld [vmem:[%s198 + $0x8] sm:$0xff]
        %v212 = vld [vmem:[%s198 + $0x10] sm:$0xff]
        %v213 = vld [vmem:[%s198 + $0x18] sm:$0xff]
        %v214 = vld [vmem:[%s198 + $0x20] sm:$0xff]
        %v215 = vld [vmem:[%s198 + $0x28] sm:$0xff]
        %v216 = vld [vmem:[%s198 + $0x30] sm:$0xff]
        %v217 = vld [vmem:[%s198 + $0x38] sm:$0xff]
        %v218 = vld [vmem:[%s198 + $0x40] sm:$0xff]
        %v219 = vld [vmem:[%s198 + $0x48] sm:$0xff]
        %v220 = vld [vmem:[%s198 + $0x50] sm:$0xff]
        %v221 = vld [vmem:[%s198 + $0x58] sm:$0xff]
        %vm222 = vcmp.gt.f32.partialorder %v210, 0.0
        %vm223 = vcmp.gt.f32.partialorder %v211, 0.0
        %vm224 = vcmp.gt.f32.partialorder %v212, 0.0
        %vm225 = vcmp.gt.f32.partialorder %v213, 0.0
        %vm226 = vcmp.gt.f32.partialorder %v214, 0.0
        %vm227 = vcmp.gt.f32.partialorder %v215, 0.0
        %vm228 = vcmp.gt.f32.partialorder %v216, 0.0
        %vm229 = vcmp.gt.f32.partialorder %v217, 0.0
        %vm230 = vcmp.gt.f32.partialorder %v218, 0.0
        %vm231 = vcmp.gt.f32.partialorder %v219, 0.0
        %vm232 = vcmp.gt.f32.partialorder %v220, 0.0
        %vm233 = vcmp.gt.f32.partialorder %v221, 0.0
        %v234 = vmul.f32 %v210, 0.01
        %v235 = vmul.f32 %v211, 0.01
        %v236 = vmul.f32 %v212, 0.01
        %v237 = vmul.f32 %v213, 0.01
        %v238 = vmul.f32 %v214, 0.01
        %v239 = vmul.f32 %v215, 0.01
        %v240 = vmul.f32 %v216, 0.01
        %v241 = vmul.f32 %v217, 0.01
        %v242 = vmul.f32 %v218, 0.01
        %v243 = vmul.f32 %v219, 0.01
        %v244 = vmul.f32 %v220, 0.01
        %v245 = vmul.f32 %v221, 0.01
        %v246 = vsel %vm222, %v210, %v234
        %v247 = vsel %vm223, %v211, %v235
        %v248 = vsel %vm224, %v212, %v236
        %v249 = vsel %vm225, %v213, %v237
        %v250 = vsel %vm226, %v214, %v238
        %v251 = vsel %vm227, %v215, %v239
        %v252 = vsel %vm228, %v216, %v240
        %v253 = vsel %vm229, %v217, %v241
        %v254 = vsel %vm230, %v218, %v242
        %v255 = vsel %vm231, %v219, %v243
        %v256 = vsel %vm232, %v220, %v244
        %v257 = vsel %vm233, %v221, %v245
        %v258 = vld [vmem:[%s2] sm:$0xff]
        %v259 = vld [vmem:[%s2 + $0x8] sm:$0xff]
        %272 = vrot.lane.b32.xlu0 %v246, 127
        %v273 = vpop.permute.xlu0 %272
        %274 = vrot.lane.b32.xlu0 %v247, 127
        %v275 = vpop.permute.xlu0 %274
        %276 = vrot.lane.b32.xlu0 %v248, 127
        %v277 = vpop.permute.xlu0 %276
        %278 = vrot.lane.b32.xlu0 %v249, 127
        %v279 = vpop.permute.xlu0 %278
        %280 = vrot.lane.b32.xlu0 %v250, 127
        %v281 = vpop.permute.xlu0 %280
        %282 = vrot.lane.b32.xlu0 %v251, 127
        %v283 = vpop.permute.xlu0 %282
        %284 = vrot.lane.b32.xlu0 %v252, 127
        %v285 = vpop.permute.xlu0 %284
        %286 = vrot.lane.b32.xlu0 %v253, 127
        %v287 = vpop.permute.xlu0 %286
        %288 = vrot.lane.b32.xlu0 %v254, 127
        %v289 = vpop.permute.xlu0 %288
        %290 = vrot.lane.b32.xlu0 %v255, 127
        %v291 = vpop.permute.xlu0 %290
        %292 = vrot.lane.b32.xlu0 %v256, 127
        %v293 = vpop.permute.xlu0 %292
        %294 = vrot.lane.b32.xlu0 %v257, 127
        %v295 = vpop.permute.xlu0 %294
        %vm296 = vcmask 1039360
        %v297 = vsel %vm296, %v273, %v275
        %v298 = vsel %vm296, %v275, %v277
        %v299 = vsel %vm296, %v279, %v281
        %v300 = vsel %vm296, %v281, %v283
        %v301 = vsel %vm296, %v285, %v287
        %v302 = vsel %vm296, %v287, %v289
        %v303 = vsel %vm296, %v291, %v293
        %v304 = vsel %vm296, %v293, %v295
        %v317 = vpack.c.bf16 %v249, %v246
        %v318 = vpack.c.bf16 %v250, %v247
        %v319 = vpack.c.bf16 %v251, %v248
        %v320 = vpack.c.bf16 %v255, %v252
        %v321 = vpack.c.bf16 %v256, %v253
        %v322 = vpack.c.bf16 %v257, %v254
        %v323 = vpack.c.bf16 %v299, %v297
        %v324 = vpack.c.bf16 %v300, %v298
        %v325 = vpack.c.bf16 %v283, %v277
        %v326 = vpack.c.bf16 %v303, %v301
        %v327 = vpack.c.bf16 %v304, %v302
        %v328 = vpack.c.bf16 %v295, %v289
        %v329 = vld [vmem:[#allocation2] sm:$0xf]
        %v330 = vld [vmem:[#allocation2 + $0x4] sm:$0xf]
        %332 = vset.pattern.permute.xlu0 0
        %333 = vperm.xlu0 %332, %v258
        %v334 = vpop.permute.xlu0 %333
        %337 = vset.pattern.permute.xlu0 0
        %338 = vperm.xlu0 %337, %v259
        %v339 = vpop.permute.xlu0 %338
        %v343 = vunpack.c.l.b16 %v329
        %v344 = vunpack.c.l.b16 %v330
        %v345 = vpack.c.b16 %v344, %v343
        %vm346 = vcmask 523264
        %v348 = vsel %vm346, %v345, 0
        %350 = vmatprep.subr.bf16.mxu0 0
        %351 = vmatpush1.bf16.msra.mxu0 0
        %352 = vmatprep.subr.bf16.mxu0 0
        %353 = vmatpush1.bf16.msra.mxu0 0
        %354 = vmatprep.subr.bf16.mxu0 0
        %355 = vmatpush1.bf16.msra.mxu0 0
        %356 = vmatprep.subr.bf16.mxu0 0
        %357 = vmatpush1.bf16.msra.mxu0 0
        %358 = vmatprep.subr.bf16.mxu0 %v327
        %359 = vmatpush1.bf16.msra.mxu0 %v326
        %360 = vmatprep.subr.bf16.mxu0 %v324
        %361 = vmatpush1.bf16.msra.mxu0 %v323
        %362 = vmatprep.subr.bf16.mxu0 %v321
        %363 = vmatpush1.bf16.msra.mxu0 %v320
        %364 = vmatprep.subr.bf16.mxu0 %v318
        %365 = vmatpush1.bf16.msra.mxu0 %v317
        %366 = vmatprep.subr.bf16.mxu0 0
        %367 = vmatpush2.bf16.msra.mxu0 0
        %368 = vmatprep.subr.bf16.mxu0 0
        %369 = vmatpush2.bf16.msra.mxu0 0
        %370 = vmatprep.subr.bf16.mxu0 0
        %371 = vmatpush2.bf16.msra.mxu0 0
        %372 = vmatprep.subr.bf16.mxu0 0
        %373 = vmatpush2.bf16.msra.mxu0 0
        %374 = vmatprep.subr.bf16.mxu0 0
        %375 = vmatpush2.bf16.msra.mxu0 0
        %376 = vmatprep.subr.bf16.mxu0 0
        %377 = vmatpush2.bf16.msra.mxu0 0
        %378 = vmatprep.subr.bf16.mxu0 0
        %379 = vmatpush2.bf16.msra.mxu0 0
        %380 = vmatprep.subr.bf16.mxu0 0
        %381 = vmatpush2.bf16.msra.mxu0 0
        %382 = vmatprep.mubr.bf16.mxu0 0
        %383 = vmatmul.mubr.bf16.gmra.mxu0 %v348
        %v384 = vpop.f32.mrf.mxu0
        %v385 = vadd.f32 %v334, %v384
        %v386 = vpop.f32.mrf.mxu0
        %v387 = vadd.f32 %v334, %v386
        %v388 = vpop.f32.mrf.mxu0
        %v389 = vadd.f32 %v339, %v388
        %v390 = vpop.f32.mrf.mxu0
        %v391 = vadd.f32 %v339, %v390
        %392 = vdwg.mxu0
        %393 = vmatprep.subr.bf16.mxu0 0
        %394 = vmatpush1.bf16.msra.mxu0 0
        %395 = vmatprep.subr.bf16.mxu0 0
        %396 = vmatpush1.bf16.msra.mxu0 0
        %397 = vmatprep.subr.bf16.mxu0 0
        %398 = vmatpush1.bf16.msra.mxu0 0
        %399 = vmatprep.subr.bf16.mxu0 0
        %400 = vmatpush1.bf16.msra.mxu0 0
        %401 = vmatprep.subr.bf16.mxu0 0
        %402 = vmatpush1.bf16.msra.mxu0 %v328
        %403 = vmatprep.subr.bf16.mxu0 0
        %404 = vmatpush1.bf16.msra.mxu0 %v325
        %405 = vmatprep.subr.bf16.mxu0 0
        %406 = vmatpush1.bf16.msra.mxu0 %v322
        %407 = vmatprep.subr.bf16.mxu0 0
        %408 = vmatpush1.bf16.msra.mxu0 %v319
        %409 = vmatprep.subr.bf16.mxu0 0
        %410 = vmatpush2.bf16.msra.mxu0 0
        %411 = vmatprep.subr.bf16.mxu0 0
        %412 = vmatpush2.bf16.msra.mxu0 0
        %413 = vmatprep.subr.bf16.mxu0 0
        %414 = vmatpush2.bf16.msra.mxu0 0
        %415 = vmatprep.subr.bf16.mxu0 0
        %416 = vmatpush2.bf16.msra.mxu0 0
        %417 = vmatprep.subr.bf16.mxu0 0
        %418 = vmatpush2.bf16.msra.mxu0 0
        %419 = vmatprep.subr.bf16.mxu0 0
        %420 = vmatpush2.bf16.msra.mxu0 0
        %421 = vmatprep.subr.bf16.mxu0 0
        %422 = vmatpush2.bf16.msra.mxu0 0
        %423 = vmatprep.subr.bf16.mxu0 0
        %424 = vmatpush2.bf16.msra.mxu0 0
        %425 = vmatprep.mubr.bf16.mxu0 0
        %426 = vmatmul.mubr.bf16.gmra.mxu0 %v348
        %v427 = vpop.f32.mrf.mxu0
        %v428 = vadd.f32 %v334, %v427
        %v429 = vpop.f32.mrf.mxu0
        %v430 = vpop.f32.mrf.mxu0
        %v431 = vadd.f32 %v339, %v430
        %v432 = vpop.f32.mrf.mxu0
        %433 = vdwg.mxu0
        %434 = vst [vmem:[%s207] sm:$0xff] %v385
        %435 = vst [vmem:[%s207 + $0x8] sm:$0xff] %v387
        %436 = vst.msk [vmem:[%s207 + $0x10] sm:$0xff] %vm346, %v428
        %437 = vst [vmem:[%s207 + $0x18] sm:$0xff] %v389
        %438 = vst [vmem:[%s207 + $0x20] sm:$0xff] %v391
        %439 = vst.msk [vmem:[%s207 + $0x28] sm:$0xff] %vm346, %v431
        %s440 = scalar_lea.vmem [#allocation2], 8
        %v441 = vld [vmem:[%s440] sm:$0xf]
        %v442 = vld [vmem:[%s440 + $0x4] sm:$0xf]
        %v445 = vunpack.c.l.b16 %v441
        %v446 = vunpack.c.l.b16 %v442
        %v447 = vpack.c.b16 %v446, %v445
        %460 = vrot.lane.b32.xlu0 %v317, 127
        %v461 = vpop.permute.xlu0 %460
        %462 = vrot.lane.b32.xlu0 %v318, 127
        %v463 = vpop.permute.xlu0 %462
        %464 = vrot.lane.b32.xlu0 %v319, 127
        %v465 = vpop.permute.xlu0 %464
        %466 = vrot.lane.b32.xlu0 %v320, 127
        %v467 = vpop.permute.xlu0 %466
        %468 = vrot.lane.b32.xlu0 %v321, 127
        %v469 = vpop.permute.xlu0 %468
        %470 = vrot.lane.b32.xlu0 %v322, 127
        %v471 = vpop.permute.xlu0 %470
        %472 = vrot.lane.b32.xlu0 %v323, 127
        %v473 = vpop.permute.xlu0 %472
        %474 = vrot.lane.b32.xlu0 %v324, 127
        %v475 = vpop.permute.xlu0 %474
        %476 = vrot.lane.b32.xlu0 %v325, 127
        %v477 = vpop.permute.xlu0 %476
        %478 = vrot.lane.b32.xlu0 %v326, 127
        %v479 = vpop.permute.xlu0 %478
        %480 = vrot.lane.b32.xlu0 %v327, 127
        %v481 = vpop.permute.xlu0 %480
        %482 = vrot.lane.b32.xlu0 %v328, 127
        %v483 = vpop.permute.xlu0 %482
        %vm484 = vcmask 1039360
        %v485 = vsel %vm484, %v461, %v463
        %v486 = vsel %vm484, %v463, %v465
        %v487 = vsel %vm484, %v467, %v469
        %v488 = vsel %vm484, %v469, %v471
        %v489 = vsel %vm484, %v473, %v475
        %v490 = vsel %vm484, %v475, %v477
        %v491 = vsel %vm484, %v479, %v481
        %v492 = vsel %vm484, %v481, %v483
        %v506 = vsel %vm346, %v447, 0
        %508 = vmatprep.subr.bf16.mxu0 0
        %509 = vmatpush1.bf16.msra.mxu0 0
        %510 = vmatprep.subr.bf16.mxu0 0
        %511 = vmatpush1.bf16.msra.mxu0 0
        %512 = vmatprep.subr.bf16.mxu0 0
        %513 = vmatpush1.bf16.msra.mxu0 0
        %514 = vmatprep.subr.bf16.mxu0 0
        %515 = vmatpush1.bf16.msra.mxu0 0
        %516 = vmatprep.subr.bf16.mxu0 %v492
        %517 = vmatpush1.bf16.msra.mxu0 %v491
        %518 = vmatprep.subr.bf16.mxu0 %v490
        %519 = vmatpush1.bf16.msra.mxu0 %v489
        %520 = vmatprep.subr.bf16.mxu0 %v488
        %521 = vmatpush1.bf16.msra.mxu0 %v487
        %522 = vmatprep.subr.bf16.mxu0 %v486
        %523 = vmatpush1.bf16.msra.mxu0 %v485
        %524 = vmatprep.subr.bf16.mxu0 0
        %525 = vmatpush2.bf16.msra.mxu0 0
        %526 = vmatprep.subr.bf16.mxu0 0
        %527 = vmatpush2.bf16.msra.mxu0 0
        %528 = vmatprep.subr.bf16.mxu0 0
        %529 = vmatpush2.bf16.msra.mxu0 0
        %530 = vmatprep.subr.bf16.mxu0 0
        %531 = vmatpush2.bf16.msra.mxu0 0
        %532 = vmatprep.subr.bf16.mxu0 0
        %533 = vmatpush2.bf16.msra.mxu0 0
        %534 = vmatprep.subr.bf16.mxu0 0
        %535 = vmatpush2.bf16.msra.mxu0 0
        %536 = vmatprep.subr.bf16.mxu0 0
        %537 = vmatpush2.bf16.msra.mxu0 0
        %538 = vmatprep.subr.bf16.mxu0 0
        %539 = vmatpush2.bf16.msra.mxu0 0
        %540 = vmatprep.mubr.bf16.mxu0 0
        %541 = vmatmul.mubr.bf16.gmra.mxu0 %v506
        %v542 = vpop.f32.mrf.mxu0
        %v543 = vadd.f32 %v334, %v542
        %v544 = vpop.f32.mrf.mxu0
        %v545 = vadd.f32 %v334, %v544
        %v546 = vpop.f32.mrf.mxu0
        %v547 = vadd.f32 %v339, %v546
        %v548 = vpop.f32.mrf.mxu0
        %v549 = vadd.f32 %v339, %v548
        %550 = vdwg.mxu0
        %551 = vmatprep.subr.bf16.mxu0 0
        %552 = vmatpush1.bf16.msra.mxu0 0
        %553 = vmatprep.subr.bf16.mxu0 0
        %554 = vmatpush1.bf16.msra.mxu0 0
        %555 = vmatprep.subr.bf16.mxu0 0
        %556 = vmatpush1.bf16.msra.mxu0 0
        %557 = vmatprep.subr.bf16.mxu0 0
        %558 = vmatpush1.bf16.msra.mxu0 0
        %559 = vmatprep.subr.bf16.mxu0 0
        %560 = vmatpush1.bf16.msra.mxu0 %v483
        %561 = vmatprep.subr.bf16.mxu0 0
        %562 = vmatpush1.bf16.msra.mxu0 %v477
        %563 = vmatprep.subr.bf16.mxu0 0
        %564 = vmatpush1.bf16.msra.mxu0 %v471
        %565 = vmatprep.subr.bf16.mxu0 0
        %566 = vmatpush1.bf16.msra.mxu0 %v465
        %567 = vmatprep.subr.bf16.mxu0 0
        %568 = vmatpush2.bf16.msra.mxu0 0
        %569 = vmatprep.subr.bf16.mxu0 0
        %570 = vmatpush2.bf16.msra.mxu0 0
        %571 = vmatprep.subr.bf16.mxu0 0
        %572 = vmatpush2.bf16.msra.mxu0 0
        %573 = vmatprep.subr.bf16.mxu0 0
        %574 = vmatpush2.bf16.msra.mxu0 0
        %575 = vmatprep.subr.bf16.mxu0 0
        %576 = vmatpush2.bf16.msra.mxu0 0
        %577 = vmatprep.subr.bf16.mxu0 0
        %578 = vmatpush2.bf16.msra.mxu0 0
        %579 = vmatprep.subr.bf16.mxu0 0
        %580 = vmatpush2.bf16.msra.mxu0 0
        %581 = vmatprep.subr.bf16.mxu0 0
        %582 = vmatpush2.bf16.msra.mxu0 0
        %583 = vmatprep.mubr.bf16.mxu0 0
        %584 = vmatmul.mubr.bf16.gmra.mxu0 %v506
        %v585 = vpop.f32.mrf.mxu0
        %v586 = vadd.f32 %v334, %v585
        %v587 = vpop.f32.mrf.mxu0
        %v588 = vpop.f32.mrf.mxu0
        %v589 = vadd.f32 %v339, %v588
        %v590 = vpop.f32.mrf.mxu0
        %591 = vdwg.mxu0
        %s592 = scalar_lea.vmem %s207, 48
        %593 = vst [vmem:[%s592] sm:$0xff] %v543
        %594 = vst [vmem:[%s592 + $0x8] sm:$0xff] %v545
        %595 = vst.msk [vmem:[%s592 + $0x10] sm:$0xff] %vm346, %v586
        %596 = vst [vmem:[%s592 + $0x18] sm:$0xff] %v547
        %597 = vst [vmem:[%s592 + $0x20] sm:$0xff] %v549
        %598 = vst.msk [vmem:[%s592 + $0x28] sm:$0xff] %vm346, %v589
        %s599 = smul.u32 3, %s20
        %p600 = scmp.lt.s32.totalorder %s19, 1
        %s601 = scalar_select %p600, %s19, 1
        %p602 = scmp.lt.s32.totalorder %s599, 2
        %s603 = scalar_select %p602, %s599, 2
        %s604 = smul.addr %s601, 12
        %s605 = sadd.s32 %s603, %s604
        %s606 = smul.addr %s605, 8
        %s607 = scalar_lea.vmem %s3, %s606
        // Predicated region
        $region37: #{_lambda_.13} parent=31 // pred_check
          %p608 = pneg %p115
        $region38: #{_lambda_.13} parent=31 // pred_check_branch
          %610 = sbr.rel (%p608) target = $region40
        $region39: #{_lambda_.13} parent=31 // pred_region
          %s611 = smul.u32 3, %s20
        $region40: #{_lambda_.13} parent=31 // pred_fallthru
          _
      $region32: #{_lambda_.13} parent=5 // pred_fallthru
        _
      %p612 = scmp.le.s32.totalorder 2, %s10
      // Predicated region
      $region41: #{_lambda_.13} parent=5 // pred_check
        %p613 = pneg %p612
      $region42: #{_lambda_.13} parent=5 // pred_check_branch
        %615 = sbr.rel (%p613) target = $region44
      $region43: #{_lambda_.13} parent=5 // pred_region
        %s616 = ssub.s32 %s10, 2
        // Predicated region
        $region45: #{_lambda_.13} parent=43 // pred_check
          %p617 = pneg %p121
        $region46: #{_lambda_.13} parent=43 // pred_check_branch
          %619 = sbr.rel (%p617) target = $region48
        $region47: #{_lambda_.13} parent=43 // pred_region
          %s620 = smul.u32 3, %s22
          %p621 = scmp.lt.s32.totalorder %s21, 1
          %s622 = scalar_select %p621, %s21, 1
          %p623 = scmp.lt.s32.totalorder %s620, 2
          %s624 = scalar_select %p623, %s620, 2
          %s625 = smul.addr %s622, 12
          %s626 = sadd.s32 %s624, %s625
          %s627 = smul.addr %s626, 8
          %s628 = scalar_lea.vmem %s3, %s627
        $region48: #{_lambda_.13} parent=43 // pred_fallthru
          _
      $region44: #{_lambda_.13} parent=5 // pred_fallthru
        _
    $region6: #{_lambda_.13} parent=1 // loop_footer
      %s14 = sadd.s32 1, %s10
    $region7: #{_lambda_.13} parent=1 // loop_footer_branch
      %9 = sbr.rel target = $region3
    $region8: #{_lambda_.13} parent=1 // loop_exit
      _
    %629 = vsyncpa [#allocation3], 1
    %s630 = scalar_lea.sflag [#allocation3], 1
    %631 = vsyncpa %s630, 1

// kernel: _lambda_.15
$region0: #{_lambda_.15}
  #allocation0 [shape = 'u32[]', space=smem, size = 0x4, offset = 0x4, fixed_abs, tag = 'smem constant byte address 0x4 - core index']
  #allocation1 [shape = 'u32[144,128]{1,0:T(1,128)}', space=vmem, size = 0x12000, scoped, tag = 'internal scratch']
  %s0 = inlined_call_operand.vmem [shape: f32[2,16,768], index: 0, kind: input, shape index: {}, may-alias: {0,1}]
  %s1 = inlined_call_operand.vmem [shape: f32[2,16,768], index: 1, kind: input, shape index: {}, may-alias: {0,1}]
  %s2 = inlined_call_operand.vmem [shape: bf16[16,48], index: 2, kind: input, shape index: {}]
  %s3 = inlined_call_operand.vmem [shape: f32[16,1], index: 3, kind: input, shape index: {}]
  %s4 = inlined_call_operand.vmem [shape: f32[2,16,640], index: 4, kind: output, shape index: {}]
  %s5 = sld [smem:[#allocation0]]
  $region159: #{_lambda_.15} parent=0
    _
  %s7 = ssub.s32 1, %s5
  %s8 = scalar_select 0, %s7, %s5
  $region1: #{_lambda_.15} parent=0
    #allocation2 [shape = 'u8[16384]{0}', space=vmem, size = 0x4000, scoped, tag = 'input window, operand 0']
    #allocation3 [shape = 'u8[16384]{0}', space=vmem, size = 0x4000, scoped, tag = 'input window, operand 1']
    #allocation4 [shape = 'u8[16384]{0}', space=vmem, size = 0x4000, scoped, tag = 'output window, operand 0']
    loop: start=0, step=1, limit=12
    $region2: #{_lambda_.15} parent=1 // loop_pre_header
      _
    $region3: #{_lambda_.15} parent=1 // loop_header
      %s10 = sphi 0, %s14
      %p11 = scmp.ge.s32.totalorder %s10, 12
      %s17 = sphi 0, %s29
      %s18 = sphi 0, %s25
      %s19 = sphi 0, %s17
      %s20 = sphi 0, %s18
      %s21 = sphi 0, %s19
      %s22 = sphi 0, %s20
      %s34 = sphi 0, %s36
      %s37 = sphi 0, %s34
      %s38 = sphi 0, %s37
      %s54 = sphi 0, %s38
      %s64 = sphi 0, %s66
      %s67 = sphi 0, %s64
      %s68 = sphi 0, %s67
      %s84 = sphi 0, %s68
      %s88 = sphi 0, %s88
      %s90 = sphi 0, %s88
      %s91 = sphi 0, %s90
      %s105 = sphi 0, %s91
      %s109 = sphi 0, %s109
      %s111 = sphi 0, %s109
      %s112 = sphi 0, %s111
      %s126 = sphi 0, %s112
      %s134 = sphi 0, %s136
      %s137 = sphi 0, %s134
      %s138 = sphi 0, %s137
      %s154 = sphi 0, %s138
    $region4: #{_lambda_.15} parent=1 // loop_header_branch
      %13 = sbr.rel (%p11) target = $region8
    $region5: #{_lambda_.15} parent=1 // loop_body
      %s15 = ssub.s32 %s10, 1
      %s16 = ssub.s32 %s10, 2
      %s23 = sadd.s32 1, %s18
      %p24 = scmp.ge.s32.totalorder %s23, 5
      %s25 = scalar_select %p24, 0, %s23
      %s26 = sadd.s32 1, %s17
      %s27 = scalar_select %p24, %s26, %s17
      %p28 = scmp.ge.s32.totalorder %s27, 2
      %s29 = scalar_select %p28, 0, %s27
      %s30 = ssub.s32 %s17, %s29
      %s31 = ssub.s32 %s18, %s25
      %s32 = sor.u32 %s30, %s31
      %p33 = scmp.eq.s32.totalorder %s32, 0
      %s35 = sadd.s32 %s34, 1
      %s36 = scalar_select %p33, %s34, %s35
      %p39 = pneg %p33
      %p40 = scmp.eq.s32.totalorder %s10, 9
      %p41 = por %p39, %p40
      %p42 = scmp.ne.s32.totalorder %s34, %s37
      %p43 = scmp.eq.s32.totalorder %s10, 0
      %p44 = por %p42, %p43
      %p45 = scmp.ne.s32.totalorder %s34, %s37
      %p46 = scmp.eq.s32.totalorder %s15, 9
      %p47 = por %p45, %p46
      %p48 = scmp.ne.s32.totalorder %s37, %s38
      %p49 = scmp.eq.s32.totalorder %s15, 0
      %p50 = por %p48, %p49
      %p51 = scmp.ne.s32.totalorder %s37, %s38
      %p52 = scmp.eq.s32.totalorder %s16, 9
      %p53 = por %p51, %p52
      %p55 = scmp.ne.s32.totalorder %s38, %s54
      %p56 = scmp.eq.s32.totalorder %s16, 0
      %p57 = por %p55, %p56
      %s58 = sadd.s32 %s18, 1
      %s59 = sadd.s32 %s25, 1
      %s60 = ssub.s32 %s17, %s29
      %s61 = ssub.s32 %s58, %s59
      %s62 = sor.u32 %s60, %s61
      %p63 = scmp.eq.s32.totalorder %s62, 0
      %s65 = sadd.s32 %s64, 1
      %s66 = scalar_select %p63, %s64, %s65
      %p69 = pneg %p63
      %p70 = scmp.eq.s32.totalorder %s10, 9
      %p71 = por %p69, %p70
      %p72 = scmp.ne.s32.totalorder %s64, %s67
      %p73 = scmp.eq.s32.totalorder %s10, 0
      %p74 = por %p72, %p73
      %p75 = scmp.ne.s32.totalorder %s64, %s67
      %p76 = scmp.eq.s32.totalorder %s15, 9
      %p77 = por %p75, %p76
      %p78 = scmp.ne.s32.totalorder %s67, %s68
      %p79 = scmp.eq.s32.totalorder %s15, 0
      %p80 = por %p78, %p79
      %p81 = scmp.ne.s32.totalorder %s67, %s68
      %p82 = scmp.eq.s32.totalorder %s16, 9
      %p83 = por %p81, %p82
      %p85 = scmp.ne.s32.totalorder %s68, %s84
      %p86 = scmp.eq.s32.totalorder %s16, 0
      %p87 = por %p85, %p86
      %s89 = sadd.s32 %s88, 1
      %p92 = scmp.eq.s32.totalorder %s10, 9
      %p93 = scmp.ne.s32.totalorder %s88, %s90
      %p94 = scmp.eq.s32.totalorder %s10, 0
      %p95 = por %p93, %p94
      %p96 = scmp.ne.s32.totalorder %s88, %s90
      %p97 = scmp.eq.s32.totalorder %s15, 9
      %p98 = por %p96, %p97
      %p99 = scmp.ne.s32.totalorder %s90, %s91
      %p100 = scmp.eq.s32.totalorder %s15, 0
      %p101 = por %p99, %p100
      %p102 = scmp.ne.s32.totalorder %s90, %s91
      %p103 = scmp.eq.s32.totalorder %s16, 9
      %p104 = por %p102, %p103
      %p106 = scmp.ne.s32.totalorder %s91, %s105
      %p107 = scmp.eq.s32.totalorder %s16, 0
      %p108 = por %p106, %p107
      %s110 = sadd.s32 %s109, 1
      %p113 = scmp.eq.s32.totalorder %s10, 9
      %p114 = scmp.ne.s32.totalorder %s109, %s111
      %p115 = scmp.eq.s32.totalorder %s10, 0
      %p116 = por %p114, %p115
      %p117 = scmp.ne.s32.totalorder %s109, %s111
      %p118 = scmp.eq.s32.totalorder %s15, 9
      %p119 = por %p117, %p118
      %p120 = scmp.ne.s32.totalorder %s111, %s112
      %p121 = scmp.eq.s32.totalorder %s15, 0
      %p122 = por %p120, %p121
      %p123 = scmp.ne.s32.totalorder %s111, %s112
      %p124 = scmp.eq.s32.totalorder %s16, 9
      %p125 = por %p123, %p124
      %p127 = scmp.ne.s32.totalorder %s112, %s126
      %p128 = scmp.eq.s32.totalorder %s16, 0
      %p129 = por %p127, %p128
      %s130 = ssub.s32 %s17, %s29
      %s131 = ssub.s32 %s18, %s25
      %s132 = sor.u32 %s130, %s131
      %p133 = scmp.eq.s32.totalorder %s132, 0
      %s135 = sadd.s32 %s134, 1
      %s136 = scalar_select %p133, %s134, %s135
      %p139 = pneg %p133
      %p140 = scmp.eq.s32.totalorder %s10, 9
      %p141 = por %p139, %p140
      %p142 = scmp.ne.s32.totalorder %s134, %s137
      %p143 = scmp.eq.s32.totalorder %s10, 0
      %p144 = por %p142, %p143
      %p145 = scmp.ne.s32.totalorder %s134, %s137
      %p146 = scmp.eq.s32.totalorder %s15, 9
      %p147 = por %p145, %p146
      %p148 = scmp.ne.s32.totalorder %s137, %s138
      %p149 = scmp.eq.s32.totalorder %s15, 0
      %p150 = por %p148, %p149
      %p151 = scmp.ne.s32.totalorder %s137, %s138
      %p152 = scmp.eq.s32.totalorder %s16, 9
      %p153 = por %p151, %p152
      %p155 = scmp.ne.s32.totalorder %s138, %s154
      %p156 = scmp.eq.s32.totalorder %s16, 0
      %p157 = por %p155, %p156
      %p158 = scmp.le.s32.totalorder 1, %s10
      %p159 = scmp.lt.s32.totalorder %s10, 11
      %p160 = pnand %p158, %p159
      %p161 = pneg %p160
      // Predicated region
      $region9: #{_lambda_.15} parent=5 // pred_check
        _
      $region10: #{_lambda_.15} parent=5 // pred_check_branch
        %163 = sbr.rel (%p160) target = $region12
      $region11: #{_lambda_.15} parent=5 // pred_region
        %s164 = ssub.s32 %s10, 1
        // Predicated region
        $region13: #{_lambda_.15} parent=11 // pred_check
          %p165 = pneg %p101
        $region14: #{_lambda_.15} parent=11 // pred_check_branch
          %167 = sbr.rel (%p165) target = $region16
        $region15: #{_lambda_.15} parent=11 // pred_region
          _
        $region16: #{_lambda_.15} parent=11 // pred_fallthru
          _
        // Predicated region
        $region17: #{_lambda_.15} parent=11 // pred_check
          %p168 = pneg %p122
        $region18: #{_lambda_.15} parent=11 // pred_check_branch
          %170 = sbr.rel (%p168) target = $region20
        $region19: #{_lambda_.15} parent=11 // pred_region
          _
        $region20: #{_lambda_.15} parent=11 // pred_fallthru
          _
      $region12: #{_lambda_.15} parent=5 // pred_fallthru
        _
      %p171 = scmp.lt.s32.totalorder %s10, 10
      // Predicated region
      $region21: #{_lambda_.15} parent=5 // pred_check
        %p172 = pneg %p171
      $region22: #{_lambda_.15} parent=5 // pred_check_branch
        %174 = sbr.rel (%p172) target = $region24
      $region23: #{_lambda_.15} parent=5 // pred_region
        // Predicated region
        $region25: #{_lambda_.15} parent=23 // pred_check
          %p175 = pneg %p44
        $region26: #{_lambda_.15} parent=23 // pred_check_branch
          %177 = sbr.rel (%p175) target = $region28
        $region27: #{_lambda_.15} parent=23 // pred_region
          %s178 = sand.u32 %s34, 1
          %s179 = sand.u32 %s34, 1
          %s180 = smul.addr %s179, 16
          %s181 = scalar_lea.vmem [#allocation2], %s180
          %s182 = smul.addr %s17, 12
          %s183 = sadd.s32 %s18, %s182
          %s184 = smul.addr %s183, 8
          %s185 = scalar_lea.vmem %s0, %s184
          // Predicated region
          $region29: #{_lambda_.15} parent=27 // pred_check
            _
          $region30: #{_lambda_.15} parent=27 // pred_check_branch
            %187 = sbr.rel (0) target = $region32
          $region31: #{_lambda_.15} parent=27 // pred_region
            // Predicated region
            $region33: #{_lambda_.15} parent=31 // pred_check
              _
            $region34: #{_lambda_.15} parent=31 // pred_check_branch
              %189 = sbr.rel (0) target = $region36
            $region35: #{_lambda_.15} parent=31 // pred_region
              // Predicated region
              $region48: #{_lambda_.15} parent=35 // pred_check
                _
              $region49: #{_lambda_.15} parent=35 // pred_check_branch
                %207 = sbr.rel (0) target = $region51
              $region50: #{_lambda_.15} parent=35 // pred_region
                loop: start=0, step=1, limit=1
                $region52: #{_lambda_.15} parent=50 // loop_pre_header
                  _
                $region53: #{_lambda_.15} parent=50 // loop_header
                  %s209 = sphi 0, %s213
                  %p210 = scmp.ge.s32.totalorder %s209, 1
                  %s214 = sphi %s185, %s185
                  %s215 = sphi %s181, %s181
                $region54: #{_lambda_.15} parent=50 // loop_header_branch
                  %212 = sbr.rel (%p210) target = $region58
                $region55: #{_lambda_.15} parent=50 // loop_body
                  %v216 = vld [vmem:[%s214] sm:$0xff]
                  %217 = vst [vmem:[%s215] sm:$0xff] %v216
                  %v218 = vld [vmem:[%s214 + $0x30] sm:$0xff]
                  %219 = vst [vmem:[%s215 + $0x8] sm:$0xff] %v218
                $region56: #{_lambda_.15} parent=50 // loop_footer
                  %s213 = sadd.s32 1, %s209
                $region57: #{_lambda_.15} parent=50 // loop_footer_branch
                  %208 = sbr.rel target = $region53
                $region58: #{_lambda_.15} parent=50 // loop_exit
                  _
              $region51: #{_lambda_.15} parent=35 // pred_fallthru
                _
              // Predicated region
              $region59: #{_lambda_.15} parent=35 // pred_check
                _
              $region60: #{_lambda_.15} parent=35 // pred_check_branch
                %221 = sbr.rel target = $region62
              $region61: #{_lambda_.15} parent=35 // pred_region
                _
              $region62: #{_lambda_.15} parent=35 // pred_fallthru
                _
            $region36: #{_lambda_.15} parent=31 // pred_fallthru
              _
            // Predicated region
            $region37: #{_lambda_.15} parent=31 // pred_check
              _
            $region38: #{_lambda_.15} parent=31 // pred_check_branch
              %191 = sbr.rel target = $region40
            $region39: #{_lambda_.15} parent=31 // pred_region
              %s193 = ssub.s32 256, 1
              loop: start=0, step=1, limit=1
              $region41: #{_lambda_.15} parent=39 // loop_pre_header
                _
              $region42: #{_lambda_.15} parent=39 // loop_header
                %s195 = sphi 0, %s199
                %p196 = scmp.ge.s32.totalorder %s195, 1
                %s200 = sphi %s185, %s185
                %s201 = sphi %s181, %s181
              $region43: #{_lambda_.15} parent=39 // loop_header_branch
                %198 = sbr.rel (%p196) target = $region47
              $region44: #{_lambda_.15} parent=39 // loop_body
                %v202 = vld [vmem:[%s200] sm:%s193]
                %203 = vst [vmem:[%s201] sm:%s193] %v202
                %v204 = vld [vmem:[%s200 + $0x30] sm:%s193]
                %205 = vst [vmem:[%s201 + $0x8] sm:%s193] %v204
              $region45: #{_lambda_.15} parent=39 // loop_footer
                %s199 = sadd.s32 1, %s195
              $region46: #{_lambda_.15} parent=39 // loop_footer_branch
                %194 = sbr.rel target = $region42
              $region47: #{_lambda_.15} parent=39 // loop_exit
                _
            $region40: #{_lambda_.15} parent=31 // pred_fallthru
              _
          $region32: #{_lambda_.15} parent=27 // pred_fallthru
            _
          %222 = vnop
        $region28: #{_lambda_.15} parent=23 // pred_fallthru
          _
        // Predicated region
        $region63: #{_lambda_.15} parent=23 // pred_check
          %p223 = pneg %p74
        $region64: #{_lambda_.15} parent=23 // pred_check_branch
          %225 = sbr.rel (%p223) target = $region66
        $region65: #{_lambda_.15} parent=23 // pred_region
          %s226 = sand.u32 %s64, 1
          %s227 = sand.u32 %s64, 1
          %s228 = smul.addr %s227, 16
          %s229 = scalar_lea.vmem [#allocation3], %s228
          %s230 = sadd.s32 %s18, 1
          %s231 = smul.addr %s17, 12
          %s232 = sadd.s32 %s230, %s231
          %s233 = smul.addr %s232, 8
          %s234 = scalar_lea.vmem %s1, %s233
          // Predicated region
          $region67: #{_lambda_.15} parent=65 // pred_check
            _
          $region68: #{_lambda_.15} parent=65 // pred_check_branch
            %236 = sbr.rel (0) target = $region70
          $region69: #{_lambda_.15} parent=65 // pred_region
            // Predicated region
            $region71: #{_lambda_.15} parent=69 // pred_check
              _
            $region72: #{_lambda_.15} parent=69 // pred_check_branch
              %238 = sbr.rel (0) target = $region74
            $region73: #{_lambda_.15} parent=69 // pred_region
              // Predicated region
              $region86: #{_lambda_.15} parent=73 // pred_check
                _
              $region87: #{_lambda_.15} parent=73 // pred_check_branch
                %256 = sbr.rel (0) target = $region89
              $region88: #{_lambda_.15} parent=73 // pred_region
                loop: start=0, step=1, limit=1
                $region90: #{_lambda_.15} parent=88 // loop_pre_header
                  _
                $region91: #{_lambda_.15} parent=88 // loop_header
                  %s258 = sphi 0, %s262
                  %p259 = scmp.ge.s32.totalorder %s258, 1
                  %s263 = sphi %s234, %s234
                  %s264 = sphi %s229, %s229
                $region92: #{_lambda_.15} parent=88 // loop_header_branch
                  %261 = sbr.rel (%p259) target = $region96
                $region93: #{_lambda_.15} parent=88 // loop_body
                  %v265 = vld [vmem:[%s263] sm:$0xff]
                  %266 = vst [vmem:[%s264] sm:$0xff] %v265
                  %v267 = vld [vmem:[%s263 + $0x30] sm:$0xff]
                  %268 = vst [vmem:[%s264 + $0x8] sm:$0xff] %v267
                $region94: #{_lambda_.15} parent=88 // loop_footer
                  %s262 = sadd.s32 1, %s258
                $region95: #{_lambda_.15} parent=88 // loop_footer_branch
                  %257 = sbr.rel target = $region91
                $region96: #{_lambda_.15} parent=88 // loop_exit
                  _
              $region89: #{_lambda_.15} parent=73 // pred_fallthru
                _
              // Predicated region
              $region97: #{_lambda_.15} parent=73 // pred_check
                _
              $region98: #{_lambda_.15} parent=73 // pred_check_branch
                %270 = sbr.rel target = $region100
              $region99: #{_lambda_.15} parent=73 // pred_region
                _
              $region100: #{_lambda_.15} parent=73 // pred_fallthru
                _
            $region74: #{_lambda_.15} parent=69 // pred_fallthru
              _
            // Predicated region
            $region75: #{_lambda_.15} parent=69 // pred_check
              _
            $region76: #{_lambda_.15} parent=69 // pred_check_branch
              %240 = sbr.rel target = $region78
            $region77: #{_lambda_.15} parent=69 // pred_region
              %s242 = ssub.s32 256, 1
              loop: start=0, step=1, limit=1
              $region79: #{_lambda_.15} parent=77 // loop_pre_header
                _
              $region80: #{_lambda_.15} parent=77 // loop_header
                %s244 = sphi 0, %s248
                %p245 = scmp.ge.s32.totalorder %s244, 1
                %s249 = sphi %s234, %s234
                %s250 = sphi %s229, %s229
              $region81: #{_lambda_.15} parent=77 // loop_header_branch
                %247 = sbr.rel (%p245) target = $region85
              $region82: #{_lambda_.15} parent=77 // loop_body
                %v251 = vld [vmem:[%s249] sm:%s242]
                %252 = vst [vmem:[%s250] sm:%s242] %v251
                %v253 = vld [vmem:[%s249 + $0x30] sm:%s242]
                %254 = vst [vmem:[%s250 + $0x8] sm:%s242] %v253
              $region83: #{_lambda_.15} parent=77 // loop_footer
                %s248 = sadd.s32 1, %s244
              $region84: #{_lambda_.15} parent=77 // loop_footer_branch
                %243 = sbr.rel target = $region80
              $region85: #{_lambda_.15} parent=77 // loop_exit
                _
            $region78: #{_lambda_.15} parent=69 // pred_fallthru
              _
          $region70: #{_lambda_.15} parent=65 // pred_fallthru
            _
          %271 = vnop
        $region66: #{_lambda_.15} parent=23 // pred_fallthru
          _
      $region24: #{_lambda_.15} parent=5 // pred_fallthru
        _
      %p272 = scmp.le.s32.totalorder 1, %s10
      %p273 = scmp.lt.s32.totalorder %s10, 11
      %p274 = pnand %p272, %p273
      %p275 = pneg %p274
      // Predicated region
      $region101: #{_lambda_.15} parent=5 // pred_check
        _
      $region102: #{_lambda_.15} parent=5 // pred_check_branch
        %277 = sbr.rel (%p274) target = $region104
      $region103: #{_lambda_.15} parent=5 // pred_region
        %s278 = ssub.s32 %s10, 1
        %s279 = sand.u32 %s37, 1
        %s280 = sand.u32 %s37, 1
        %s281 = smul.addr %s280, 16
        %s282 = scalar_lea.vmem [#allocation2], %s281
        // Predicated region
        $region105: #{_lambda_.15} parent=103 // pred_check
          %p283 = pneg %p50
        $region106: #{_lambda_.15} parent=103 // pred_check_branch
          %285 = sbr.rel (%p283) target = $region108
        $region107: #{_lambda_.15} parent=103 // pred_region
          _
        $region108: #{_lambda_.15} parent=103 // pred_fallthru
          _
        %s286 = sand.u32 %s67, 1
        %s287 = sand.u32 %s67, 1
        %s288 = smul.addr %s287, 16
        %s289 = scalar_lea.vmem [#allocation3], %s288
        // Predicated region
        $region109: #{_lambda_.15} parent=103 // pred_check
          %p290 = pneg %p80
        $region110: #{_lambda_.15} parent=103 // pred_check_branch
          %292 = sbr.rel (%p290) target = $region112
        $region111: #{_lambda_.15} parent=103 // pred_region
          _
        $region112: #{_lambda_.15} parent=103 // pred_fallthru
          _
        %s293 = sand.u32 %s37, 1
        %s294 = sand.u32 %s37, 1
        %s295 = smul.addr %s294, 16
        %s296 = scalar_lea.vmem [#allocation2], %s295
        %p297 = pneg %p50
        %p298 = pneg %p47
        %s299 = sand.u32 %s67, 1
        %s300 = sand.u32 %s67, 1
        %s301 = smul.addr %s300, 16
        %s302 = scalar_lea.vmem [#allocation3], %s301
        %p303 = pneg %p80
        %p304 = pneg %p77
        %p305 = pneg %p101
        %p306 = pneg %p98
        %p307 = pneg %p122
        %p308 = pneg %p119
        %p309 = pneg %p150
        %p310 = pneg %p147
        %s311 = sand.u32 %s137, 1
        %s312 = sand.u32 %s137, 1
        %s313 = smul.addr %s312, 16
        %s314 = scalar_lea.vmem [#allocation4], %s313
        %s315 = sadd.s32 %s20, 1
        %v317 = vld [vmem:[%s282] sm:$0xff]
        %v318 = vld [vmem:[%s282 + $0x8] sm:$0xff]
        %v319 = vld [vmem:[%s289] sm:$0xff]
        %v320 = vld [vmem:[%s289 + $0x8] sm:$0xff]
        %vm321 = vcmp.gt.f32.partialorder %v317, 0.0
        %vm322 = vcmp.gt.f32.partialorder %v319, 0.0
        %vm323 = vcmp.gt.f32.partialorder %v318, 0.0
        %vm324 = vcmp.gt.f32.partialorder %v320, 0.0
        %v325 = vmul.f32 %v317, 0.01
        %v326 = vmul.f32 %v319, 0.01
        %v327 = vmul.f32 %v318, 0.01
        %v328 = vmul.f32 %v320, 0.01
        %v329 = vsel %vm321, %v317, %v325
        %v330 = vsel %vm322, %v319, %v326
        %v331 = vsel %vm323, %v318, %v327
        %v332 = vsel %vm324, %v320, %v328
        %337 = vrot.lane.b32.xlu0 %v329, 125
        %v338 = vpop.permute.xlu0 %337
        %339 = vrot.lane.b32.xlu0 %v330, 125
        %v340 = vpop.permute.xlu0 %339
        %341 = vrot.lane.b32.xlu0 %v331, 125
        %v342 = vpop.permute.xlu0 %341
        %343 = vrot.lane.b32.xlu0 %v332, 125
        %v344 = vpop.permute.xlu0 %343
        %vm345 = vcmask 1022976
        %v346 = vsel %vm345, %v338, %v340
        %v347 = vsel %vm345, %v342, %v344
        %350 = vrot.lane.b32.xlu0 %v329, 122
        %v351 = vpop.permute.xlu0 %350
        %352 = vrot.lane.b32.xlu0 %v330, 122
        %v353 = vpop.permute.xlu0 %352
        %354 = vrot.lane.b32.xlu0 %v331, 122
        %v355 = vpop.permute.xlu0 %354
        %356 = vrot.lane.b32.xlu0 %v332, 122
        %v357 = vpop.permute.xlu0 %356
        %vm358 = vcmask 998400
        %v359 = vsel %vm358, %v351, %v353
        %v360 = vsel %vm358, %v355, %v357
        %v363 = vpack.c.bf16 %v331, %v329
        %v364 = vpack.c.bf16 %v347, %v346
        %v365 = vpack.c.bf16 %v360, %v359
        %v366 = vld [vmem:[%s2] sm:$0xf]
        %v367 = vld [vmem:[%s2 + $0x4] sm:$0xf]
        %v368 = vld [vmem:[%s3] sm:$0xff]
        %v369 = vld [vmem:[%s3 + $0x8] sm:$0xff]
        %371 = vset.pattern.permute.xlu0 0
        %372 = vperm.xlu0 %371, %v368
        %v373 = vpop.permute.xlu0 %372
        %376 = vset.pattern.permute.xlu0 0
        %377 = vperm.xlu0 %376, %v369
        %v378 = vpop.permute.xlu0 %377
        %v382 = vunpack.c.l.b16 %v366
        %v383 = vunpack.c.l.b16 %v367
        %v384 = vpack.c.b16 %v383, %v382
        %vm385 = vcmask 392192
        %v387 = vsel %vm385, %v384, 0
        %389 = vmatprep.subr.bf16.mxu0 0
        %390 = vmatpush1.bf16.msra.mxu0 0
        %391 = vmatprep.subr.bf16.mxu0 0
        %392 = vmatpush1.bf16.msra.mxu0 0
        %393 = vmatprep.subr.bf16.mxu0 0
        %394 = vmatpush1.bf16.msra.mxu0 0
        %395 = vmatprep.subr.bf16.mxu0 0
        %396 = vmatpush1.bf16.msra.mxu0 0
        %397 = vmatprep.subr.bf16.mxu0 0
        %398 = vmatpush1.bf16.msra.mxu0 0
        %399 = vmatprep.subr.bf16.mxu0 0
        %400 = vmatpush1.bf16.msra.mxu0 %v365
        %401 = vmatprep.subr.bf16.mxu0 0
        %402 = vmatpush1.bf16.msra.mxu0 %v364
        %403 = vmatprep.subr.bf16.mxu0 0
        %404 = vmatpush1.bf16.msra.mxu0 %v363
        %405 = vmatprep.subr.bf16.mxu0 0
        %406 = vmatpush2.bf16.msra.mxu0 0
        %407 = vmatprep.subr.bf16.mxu0 0
        %408 = vmatpush2.bf16.msra.mxu0 0
        %409 = vmatprep.subr.bf16.mxu0 0
        %410 = vmatpush2.bf16.msra.mxu0 0
        %411 = vmatprep.subr.bf16.mxu0 0
        %412 = vmatpush2.bf16.msra.mxu0 0
        %413 = vmatprep.subr.bf16.mxu0 0
        %414 = vmatpush2.bf16.msra.mxu0 0
        %415 = vmatprep.subr.bf16.mxu0 0
        %416 = vmatpush2.bf16.msra.mxu0 0
        %417 = vmatprep.subr.bf16.mxu0 0
        %418 = vmatpush2.bf16.msra.mxu0 0
        %419 = vmatprep.subr.bf16.mxu0 0
        %420 = vmatpush2.bf16.msra.mxu0 0
        %421 = vmatprep.mubr.bf16.mxu0 0
        %422 = vmatmul.mubr.bf16.gmra.mxu0 %v387
        %v423 = vpop.f32.mrf.mxu0
        %v424 = vadd.f32 %v373, %v423
        %v425 = vpop.f32.mrf.mxu0
        %v426 = vpop.f32.mrf.mxu0
        %v427 = vadd.f32 %v378, %v426
        %v428 = vpop.f32.mrf.mxu0
        %429 = vdwg.mxu0
        %434 = vrot.lane.b32.xlu0 %v317, 125
        %v435 = vpop.permute.xlu0 %434
        %436 = vrot.lane.b32.xlu0 %v319, 125
        %v437 = vpop.permute.xlu0 %436
        %438 = vrot.lane.b32.xlu0 %v318, 125
        %v439 = vpop.permute.xlu0 %438
        %440 = vrot.lane.b32.xlu0 %v320, 125
        %v441 = vpop.permute.xlu0 %440
        %v442 = vsel %vm345, %v435, %v437
        %v443 = vsel %vm345, %v439, %v441
        %v446 = vadd.f32 %v424, %v442
        %v447 = vadd.f32 %v427, %v443
        %448 = vst [vmem:[%s314] sm:$0xff] %v446
        %449 = vst [vmem:[%s314 + $0x8] sm:$0xff] %v447
        %s450 = sand.u32 %s137, 1
        %s451 = sand.u32 %s137, 1
        %s452 = smul.addr %s451, 16
        %s453 = scalar_lea.vmem [#allocation4], %s452
        // Predicated region
        $region113: #{_lambda_.15} parent=103 // pred_check
          %p454 = pneg %p147
        $region114: #{_lambda_.15} parent=103 // pred_check_branch
          %456 = sbr.rel (%p454) target = $region116
        $region115: #{_lambda_.15} parent=103 // pred_region
          %s457 = smul.addr %s19, 10
          %s458 = sadd.s32 %s20, %s457
          %s459 = smul.addr %s458, 8
          %s460 = scalar_lea.vmem %s4, %s459
          // Predicated region
          $region117: #{_lambda_.15} parent=115 // pred_check
            _
          $region118: #{_lambda_.15} parent=115 // pred_check_branch
            %462 = sbr.rel (0) target = $region120
          $region119: #{_lambda_.15} parent=115 // pred_region
            // Predicated region
            $region121: #{_lambda_.15} parent=119 // pred_check
              _
            $region122: #{_lambda_.15} parent=119 // pred_check_branch
              %464 = sbr.rel (0) target = $region124
            $region123: #{_lambda_.15} parent=119 // pred_region
              // Predicated region
              $region136: #{_lambda_.15} parent=123 // pred_check
                _
              $region137: #{_lambda_.15} parent=123 // pred_check_branch
                %482 = sbr.rel (0) target = $region139
              $region138: #{_lambda_.15} parent=123 // pred_region
                loop: start=0, step=1, limit=1
                $region140: #{_lambda_.15} parent=138 // loop_pre_header
                  _
                $region141: #{_lambda_.15} parent=138 // loop_header
                  %s484 = sphi 0, %s488
                  %p485 = scmp.ge.s32.totalorder %s484, 1
                  %s489 = sphi %s453, %s453
                  %s490 = sphi %s460, %s460
                $region142: #{_lambda_.15} parent=138 // loop_header_branch
                  %487 = sbr.rel (%p485) target = $region146
                $region143: #{_lambda_.15} parent=138 // loop_body
                  %v491 = vld [vmem:[%s489] sm:$0xff]
                  %492 = vst [vmem:[%s490] sm:$0xff] %v491
                  %v493 = vld [vmem:[%s489 + $0x8] sm:$0xff]
                  %494 = vst [vmem:[%s490 + $0x28] sm:$0xff] %v493
                $region144: #{_lambda_.15} parent=138 // loop_footer
                  %s488 = sadd.s32 1, %s484
                $region145: #{_lambda_.15} parent=138 // loop_footer_branch
                  %483 = sbr.rel target = $region141
                $region146: #{_lambda_.15} parent=138 // loop_exit
                  _
              $region139: #{_lambda_.15} parent=123 // pred_fallthru
                _
              // Predicated region
              $region147: #{_lambda_.15} parent=123 // pred_check
                _
              $region148: #{_lambda_.15} parent=123 // pred_check_branch
                %496 = sbr.rel target = $region150
              $region149: #{_lambda_.15} parent=123 // pred_region
                _
              $region150: #{_lambda_.15} parent=123 // pred_fallthru
                _
            $region124: #{_lambda_.15} parent=119 // pred_fallthru
              _
            // Predicated region
            $region125: #{_lambda_.15} parent=119 // pred_check
              _
            $region126: #{_lambda_.15} parent=119 // pred_check_branch
              %466 = sbr.rel target = $region128
            $region127: #{_lambda_.15} parent=119 // pred_region
              %s468 = ssub.s32 256, 1
              loop: start=0, step=1, limit=1
              $region129: #{_lambda_.15} parent=127 // loop_pre_header
                _
              $region130: #{_lambda_.15} parent=127 // loop_header
                %s470 = sphi 0, %s474
                %p471 = scmp.ge.s32.totalorder %s470, 1
                %s475 = sphi %s453, %s453
                %s476 = sphi %s460, %s460
              $region131: #{_lambda_.15} parent=127 // loop_header_branch
                %473 = sbr.rel (%p471) target = $region135
              $region132: #{_lambda_.15} parent=127 // loop_body
                %v477 = vld [vmem:[%s475] sm:%s468]
                %478 = vst [vmem:[%s476] sm:%s468] %v477
                %v479 = vld [vmem:[%s475 + $0x8] sm:%s468]
                %480 = vst [vmem:[%s476 + $0x28] sm:%s468] %v479
              $region133: #{_lambda_.15} parent=127 // loop_footer
                %s474 = sadd.s32 1, %s470
              $region134: #{_lambda_.15} parent=127 // loop_footer_branch
                %469 = sbr.rel target = $region130
              $region135: #{_lambda_.15} parent=127 // loop_exit
                _
            $region128: #{_lambda_.15} parent=119 // pred_fallthru
              _
          $region120: #{_lambda_.15} parent=115 // pred_fallthru
            _
          %497 = vnop
        $region116: #{_lambda_.15} parent=103 // pred_fallthru
          _
      $region104: #{_lambda_.15} parent=5 // pred_fallthru
        _
      %p498 = scmp.le.s32.totalorder 2, %s10
      // Predicated region
      $region151: #{_lambda_.15} parent=5 // pred_check
        %p499 = pneg %p498
      $region152: #{_lambda_.15} parent=5 // pred_check_branch
        %501 = sbr.rel (%p499) target = $region154
      $region153: #{_lambda_.15} parent=5 // pred_region
        %s502 = ssub.s32 %s10, 2
        // Predicated region
        $region155: #{_lambda_.15} parent=153 // pred_check
          %p503 = pneg %p153
        $region156: #{_lambda_.15} parent=153 // pred_check_branch
          %505 = sbr.rel (%p503) target = $region158
        $region157: #{_lambda_.15} parent=153 // pred_region
          %s506 = sand.u32 %s138, 1
          %s507 = sand.u32 %s138, 1
          %s508 = smul.addr %s507, 16
          %s509 = scalar_lea.vmem [#allocation4], %s508
        $region158: #{_lambda_.15} parent=153 // pred_fallthru
          _
      $region154: #{_lambda_.15} parent=5 // pred_fallthru
        _
    $region6: #{_lambda_.15} parent=1 // loop_footer
      %s14 = sadd.s32 1, %s10
    $region7: #{_lambda_.15} parent=1 // loop_footer_branch
      %9 = sbr.rel target = $region3
    $region8: #{_lambda_.15} parent=1 // loop_exit
      _

// kernel: _lambda_.16
$region0: #{_lambda_.16}
  #allocation0 [shape = 'u32[]', space=smem, size = 0x4, offset = 0x4, fixed_abs, tag = 'smem constant byte address 0x4 - core index']
  #allocation1 [shape = 'u32[144,128]{1,0:T(1,128)}', space=vmem, size = 0x12000, scoped, tag = 'internal scratch']
  %s0 = inlined_call_operand.vmem [shape: f32[2,16,768], index: 0, kind: input, shape index: {}, may-alias: {0,1}]
  %s1 = inlined_call_operand.vmem [shape: f32[2,16,768], index: 1, kind: input, shape index: {}, may-alias: {0,1}]
  %s2 = inlined_call_operand.vmem [shape: bf16[16,80], index: 2, kind: input, shape index: {}]
  %s3 = inlined_call_operand.vmem [shape: f32[16,1], index: 3, kind: input, shape index: {}]
  %s4 = inlined_call_operand.vmem [shape: f32[2,16,640], index: 4, kind: output, shape index: {}]
  %s5 = sld [smem:[#allocation0]]
  $region159: #{_lambda_.16} parent=0
    _
  %s7 = ssub.s32 1, %s5
  %s8 = scalar_select 0, %s7, %s5
  $region1: #{_lambda_.16} parent=0
    #allocation2 [shape = 'u8[16384]{0}', space=vmem, size = 0x4000, scoped, tag = 'input window, operand 0']
    #allocation3 [shape = 'u8[16384]{0}', space=vmem, size = 0x4000, scoped, tag = 'input window, operand 1']
    #allocation4 [shape = 'u8[16384]{0}', space=vmem, size = 0x4000, scoped, tag = 'output window, operand 0']
    loop: start=0, step=1, limit=12
    $region2: #{_lambda_.16} parent=1 // loop_pre_header
      _
    $region3: #{_lambda_.16} parent=1 // loop_header
      %s10 = sphi 0, %s14
      %p11 = scmp.ge.s32.totalorder %s10, 12
      %s17 = sphi 0, %s29
      %s18 = sphi 0, %s25
      %s19 = sphi 0, %s17
      %s20 = sphi 0, %s18
      %s21 = sphi 0, %s19
      %s22 = sphi 0, %s20
      %s34 = sphi 0, %s36
      %s37 = sphi 0, %s34
      %s38 = sphi 0, %s37
      %s54 = sphi 0, %s38
      %s64 = sphi 0, %s66
      %s67 = sphi 0, %s64
      %s68 = sphi 0, %s67
      %s84 = sphi 0, %s68
      %s88 = sphi 0, %s88
      %s90 = sphi 0, %s88
      %s91 = sphi 0, %s90
      %s105 = sphi 0, %s91
      %s109 = sphi 0, %s109
      %s111 = sphi 0, %s109
      %s112 = sphi 0, %s111
      %s126 = sphi 0, %s112
      %s134 = sphi 0, %s136
      %s137 = sphi 0, %s134
      %s138 = sphi 0, %s137
      %s154 = sphi 0, %s138
    $region4: #{_lambda_.16} parent=1 // loop_header_branch
      %13 = sbr.rel (%p11) target = $region8
    $region5: #{_lambda_.16} parent=1 // loop_body
      %s15 = ssub.s32 %s10, 1
      %s16 = ssub.s32 %s10, 2
      %s23 = sadd.s32 1, %s18
      %p24 = scmp.ge.s32.totalorder %s23, 5
      %s25 = scalar_select %p24, 0, %s23
      %s26 = sadd.s32 1, %s17
      %s27 = scalar_select %p24, %s26, %s17
      %p28 = scmp.ge.s32.totalorder %s27, 2
      %s29 = scalar_select %p28, 0, %s27
      %s30 = ssub.s32 %s17, %s29
      %s31 = ssub.s32 %s18, %s25
      %s32 = sor.u32 %s30, %s31
      %p33 = scmp.eq.s32.totalorder %s32, 0
      %s35 = sadd.s32 %s34, 1
      %s36 = scalar_select %p33, %s34, %s35
      %p39 = pneg %p33
      %p40 = scmp.eq.s32.totalorder %s10, 9
      %p41 = por %p39, %p40
      %p42 = scmp.ne.s32.totalorder %s34, %s37
      %p43 = scmp.eq.s32.totalorder %s10, 0
      %p44 = por %p42, %p43
      %p45 = scmp.ne.s32.totalorder %s34, %s37
      %p46 = scmp.eq.s32.totalorder %s15, 9
      %p47 = por %p45, %p46
      %p48 = scmp.ne.s32.totalorder %s37, %s38
      %p49 = scmp.eq.s32.totalorder %s15, 0
      %p50 = por %p48, %p49
      %p51 = scmp.ne.s32.totalorder %s37, %s38
      %p52 = scmp.eq.s32.totalorder %s16, 9
      %p53 = por %p51, %p52
      %p55 = scmp.ne.s32.totalorder %s38, %s54
      %p56 = scmp.eq.s32.totalorder %s16, 0
      %p57 = por %p55, %p56
      %s58 = sadd.s32 %s18, 1
      %s59 = sadd.s32 %s25, 1
      %s60 = ssub.s32 %s17, %s29
      %s61 = ssub.s32 %s58, %s59
      %s62 = sor.u32 %s60, %s61
      %p63 = scmp.eq.s32.totalorder %s62, 0
      %s65 = sadd.s32 %s64, 1
      %s66 = scalar_select %p63, %s64, %s65
      %p69 = pneg %p63
      %p70 = scmp.eq.s32.totalorder %s10, 9
      %p71 = por %p69, %p70
      %p72 = scmp.ne.s32.totalorder %s64, %s67
      %p73 = scmp.eq.s32.totalorder %s10, 0
      %p74 = por %p72, %p73
      %p75 = scmp.ne.s32.totalorder %s64, %s67
      %p76 = scmp.eq.s32.totalorder %s15, 9
      %p77 = por %p75, %p76
      %p78 = scmp.ne.s32.totalorder %s67, %s68
      %p79 = scmp.eq.s32.totalorder %s15, 0
      %p80 = por %p78, %p79
      %p81 = scmp.ne.s32.totalorder %s67, %s68
      %p82 = scmp.eq.s32.totalorder %s16, 9
      %p83 = por %p81, %p82
      %p85 = scmp.ne.s32.totalorder %s68, %s84
      %p86 = scmp.eq.s32.totalorder %s16, 0
      %p87 = por %p85, %p86
      %s89 = sadd.s32 %s88, 1
      %p92 = scmp.eq.s32.totalorder %s10, 9
      %p93 = scmp.ne.s32.totalorder %s88, %s90
      %p94 = scmp.eq.s32.totalorder %s10, 0
      %p95 = por %p93, %p94
      %p96 = scmp.ne.s32.totalorder %s88, %s90
      %p97 = scmp.eq.s32.totalorder %s15, 9
      %p98 = por %p96, %p97
      %p99 = scmp.ne.s32.totalorder %s90, %s91
      %p100 = scmp.eq.s32.totalorder %s15, 0
      %p101 = por %p99, %p100
      %p102 = scmp.ne.s32.totalorder %s90, %s91
      %p103 = scmp.eq.s32.totalorder %s16, 9
      %p104 = por %p102, %p103
      %p106 = scmp.ne.s32.totalorder %s91, %s105
      %p107 = scmp.eq.s32.totalorder %s16, 0
      %p108 = por %p106, %p107
      %s110 = sadd.s32 %s109, 1
      %p113 = scmp.eq.s32.totalorder %s10, 9
      %p114 = scmp.ne.s32.totalorder %s109, %s111
      %p115 = scmp.eq.s32.totalorder %s10, 0
      %p116 = por %p114, %p115
      %p117 = scmp.ne.s32.totalorder %s109, %s111
      %p118 = scmp.eq.s32.totalorder %s15, 9
      %p119 = por %p117, %p118
      %p120 = scmp.ne.s32.totalorder %s111, %s112
      %p121 = scmp.eq.s32.totalorder %s15, 0
      %p122 = por %p120, %p121
      %p123 = scmp.ne.s32.totalorder %s111, %s112
      %p124 = scmp.eq.s32.totalorder %s16, 9
      %p125 = por %p123, %p124
      %p127 = scmp.ne.s32.totalorder %s112, %s126
      %p128 = scmp.eq.s32.totalorder %s16, 0
      %p129 = por %p127, %p128
      %s130 = ssub.s32 %s17, %s29
      %s131 = ssub.s32 %s18, %s25
      %s132 = sor.u32 %s130, %s131
      %p133 = scmp.eq.s32.totalorder %s132, 0
      %s135 = sadd.s32 %s134, 1
      %s136 = scalar_select %p133, %s134, %s135
      %p139 = pneg %p133
      %p140 = scmp.eq.s32.totalorder %s10, 9
      %p141 = por %p139, %p140
      %p142 = scmp.ne.s32.totalorder %s134, %s137
      %p143 = scmp.eq.s32.totalorder %s10, 0
      %p144 = por %p142, %p143
      %p145 = scmp.ne.s32.totalorder %s134, %s137
      %p146 = scmp.eq.s32.totalorder %s15, 9
      %p147 = por %p145, %p146
      %p148 = scmp.ne.s32.totalorder %s137, %s138
      %p149 = scmp.eq.s32.totalorder %s15, 0
      %p150 = por %p148, %p149
      %p151 = scmp.ne.s32.totalorder %s137, %s138
      %p152 = scmp.eq.s32.totalorder %s16, 9
      %p153 = por %p151, %p152
      %p155 = scmp.ne.s32.totalorder %s138, %s154
      %p156 = scmp.eq.s32.totalorder %s16, 0
      %p157 = por %p155, %p156
      %p158 = scmp.le.s32.totalorder 1, %s10
      %p159 = scmp.lt.s32.totalorder %s10, 11
      %p160 = pnand %p158, %p159
      %p161 = pneg %p160
      // Predicated region
      $region9: #{_lambda_.16} parent=5 // pred_check
        _
      $region10: #{_lambda_.16} parent=5 // pred_check_branch
        %163 = sbr.rel (%p160) target = $region12
      $region11: #{_lambda_.16} parent=5 // pred_region
        %s164 = ssub.s32 %s10, 1
        // Predicated region
        $region13: #{_lambda_.16} parent=11 // pred_check
          %p165 = pneg %p101
        $region14: #{_lambda_.16} parent=11 // pred_check_branch
          %167 = sbr.rel (%p165) target = $region16
        $region15: #{_lambda_.16} parent=11 // pred_region
          _
        $region16: #{_lambda_.16} parent=11 // pred_fallthru
          _
        // Predicated region
        $region17: #{_lambda_.16} parent=11 // pred_check
          %p168 = pneg %p122
        $region18: #{_lambda_.16} parent=11 // pred_check_branch
          %170 = sbr.rel (%p168) target = $region20
        $region19: #{_lambda_.16} parent=11 // pred_region
          _
        $region20: #{_lambda_.16} parent=11 // pred_fallthru
          _
      $region12: #{_lambda_.16} parent=5 // pred_fallthru
        _
      %p171 = scmp.lt.s32.totalorder %s10, 10
      // Predicated region
      $region21: #{_lambda_.16} parent=5 // pred_check
        %p172 = pneg %p171
      $region22: #{_lambda_.16} parent=5 // pred_check_branch
        %174 = sbr.rel (%p172) target = $region24
      $region23: #{_lambda_.16} parent=5 // pred_region
        // Predicated region
        $region25: #{_lambda_.16} parent=23 // pred_check
          %p175 = pneg %p44
        $region26: #{_lambda_.16} parent=23 // pred_check_branch
          %177 = sbr.rel (%p175) target = $region28
        $region27: #{_lambda_.16} parent=23 // pred_region
          %s178 = sand.u32 %s34, 1
          %s179 = sand.u32 %s34, 1
          %s180 = smul.addr %s179, 16
          %s181 = scalar_lea.vmem [#allocation2], %s180
          %s182 = smul.addr %s17, 12
          %s183 = sadd.s32 %s18, %s182
          %s184 = smul.addr %s183, 8
          %s185 = scalar_lea.vmem %s0, %s184
          // Predicated region
          $region29: #{_lambda_.16} parent=27 // pred_check
            _
          $region30: #{_lambda_.16} parent=27 // pred_check_branch
            %187 = sbr.rel (0) target = $region32
          $region31: #{_lambda_.16} parent=27 // pred_region
            // Predicated region
            $region33: #{_lambda_.16} parent=31 // pred_check
              _
            $region34: #{_lambda_.16} parent=31 // pred_check_branch
              %189 = sbr.rel (0) target = $region36
            $region35: #{_lambda_.16} parent=31 // pred_region
              // Predicated region
              $region48: #{_lambda_.16} parent=35 // pred_check
                _
              $region49: #{_lambda_.16} parent=35 // pred_check_branch
                %207 = sbr.rel (0) target = $region51
              $region50: #{_lambda_.16} parent=35 // pred_region
                loop: start=0, step=1, limit=1
                $region52: #{_lambda_.16} parent=50 // loop_pre_header
                  _
                $region53: #{_lambda_.16} parent=50 // loop_header
                  %s209 = sphi 0, %s213
                  %p210 = scmp.ge.s32.totalorder %s209, 1
                  %s214 = sphi %s185, %s185
                  %s215 = sphi %s181, %s181
                $region54: #{_lambda_.16} parent=50 // loop_header_branch
                  %212 = sbr.rel (%p210) target = $region58
                $region55: #{_lambda_.16} parent=50 // loop_body
                  %v216 = vld [vmem:[%s214] sm:$0xff]
                  %217 = vst [vmem:[%s215] sm:$0xff] %v216
                  %v218 = vld [vmem:[%s214 + $0x30] sm:$0xff]
                  %219 = vst [vmem:[%s215 + $0x8] sm:$0xff] %v218
                $region56: #{_lambda_.16} parent=50 // loop_footer
                  %s213 = sadd.s32 1, %s209
                $region57: #{_lambda_.16} parent=50 // loop_footer_branch
                  %208 = sbr.rel target = $region53
                $region58: #{_lambda_.16} parent=50 // loop_exit
                  _
              $region51: #{_lambda_.16} parent=35 // pred_fallthru
                _
              // Predicated region
              $region59: #{_lambda_.16} parent=35 // pred_check
                _
              $region60: #{_lambda_.16} parent=35 // pred_check_branch
                %221 = sbr.rel target = $region62
              $region61: #{_lambda_.16} parent=35 // pred_region
                _
              $region62: #{_lambda_.16} parent=35 // pred_fallthru
                _
            $region36: #{_lambda_.16} parent=31 // pred_fallthru
              _
            // Predicated region
            $region37: #{_lambda_.16} parent=31 // pred_check
              _
            $region38: #{_lambda_.16} parent=31 // pred_check_branch
              %191 = sbr.rel target = $region40
            $region39: #{_lambda_.16} parent=31 // pred_region
              %s193 = ssub.s32 256, 1
              loop: start=0, step=1, limit=1
              $region41: #{_lambda_.16} parent=39 // loop_pre_header
                _
              $region42: #{_lambda_.16} parent=39 // loop_header
                %s195 = sphi 0, %s199
                %p196 = scmp.ge.s32.totalorder %s195, 1
                %s200 = sphi %s185, %s185
                %s201 = sphi %s181, %s181
              $region43: #{_lambda_.16} parent=39 // loop_header_branch
                %198 = sbr.rel (%p196) target = $region47
              $region44: #{_lambda_.16} parent=39 // loop_body
                %v202 = vld [vmem:[%s200] sm:%s193]
                %203 = vst [vmem:[%s201] sm:%s193] %v202
                %v204 = vld [vmem:[%s200 + $0x30] sm:%s193]
                %205 = vst [vmem:[%s201 + $0x8] sm:%s193] %v204
              $region45: #{_lambda_.16} parent=39 // loop_footer
                %s199 = sadd.s32 1, %s195
              $region46: #{_lambda_.16} parent=39 // loop_footer_branch
                %194 = sbr.rel target = $region42
              $region47: #{_lambda_.16} parent=39 // loop_exit
                _
            $region40: #{_lambda_.16} parent=31 // pred_fallthru
              _
          $region32: #{_lambda_.16} parent=27 // pred_fallthru
            _
          %222 = vnop
        $region28: #{_lambda_.16} parent=23 // pred_fallthru
          _
        // Predicated region
        $region63: #{_lambda_.16} parent=23 // pred_check
          %p223 = pneg %p74
        $region64: #{_lambda_.16} parent=23 // pred_check_branch
          %225 = sbr.rel (%p223) target = $region66
        $region65: #{_lambda_.16} parent=23 // pred_region
          %s226 = sand.u32 %s64, 1
          %s227 = sand.u32 %s64, 1
          %s228 = smul.addr %s227, 16
          %s229 = scalar_lea.vmem [#allocation3], %s228
          %s230 = sadd.s32 %s18, 1
          %s231 = smul.addr %s17, 12
          %s232 = sadd.s32 %s230, %s231
          %s233 = smul.addr %s232, 8
          %s234 = scalar_lea.vmem %s1, %s233
          // Predicated region
          $region67: #{_lambda_.16} parent=65 // pred_check
            _
          $region68: #{_lambda_.16} parent=65 // pred_check_branch
            %236 = sbr.rel (0) target = $region70
          $region69: #{_lambda_.16} parent=65 // pred_region
            // Predicated region
            $region71: #{_lambda_.16} parent=69 // pred_check
              _
            $region72: #{_lambda_.16} parent=69 // pred_check_branch
              %238 = sbr.rel (0) target = $region74
            $region73: #{_lambda_.16} parent=69 // pred_region
              // Predicated region
              $region86: #{_lambda_.16} parent=73 // pred_check
                _
              $region87: #{_lambda_.16} parent=73 // pred_check_branch
                %256 = sbr.rel (0) target = $region89
              $region88: #{_lambda_.16} parent=73 // pred_region
                loop: start=0, step=1, limit=1
                $region90: #{_lambda_.16} parent=88 // loop_pre_header
                  _
                $region91: #{_lambda_.16} parent=88 // loop_header
                  %s258 = sphi 0, %s262
                  %p259 = scmp.ge.s32.totalorder %s258, 1
                  %s263 = sphi %s234, %s234
                  %s264 = sphi %s229, %s229
                $region92: #{_lambda_.16} parent=88 // loop_header_branch
                  %261 = sbr.rel (%p259) target = $region96
                $region93: #{_lambda_.16} parent=88 // loop_body
                  %v265 = vld [vmem:[%s263] sm:$0xff]
                  %266 = vst [vmem:[%s264] sm:$0xff] %v265
                  %v267 = vld [vmem:[%s263 + $0x30] sm:$0xff]
                  %268 = vst [vmem:[%s264 + $0x8] sm:$0xff] %v267
                $region94: #{_lambda_.16} parent=88 // loop_footer
                  %s262 = sadd.s32 1, %s258
                $region95: #{_lambda_.16} parent=88 // loop_footer_branch
                  %257 = sbr.rel target = $region91
                $region96: #{_lambda_.16} parent=88 // loop_exit
                  _
              $region89: #{_lambda_.16} parent=73 // pred_fallthru
                _
              // Predicated region
              $region97: #{_lambda_.16} parent=73 // pred_check
                _
              $region98: #{_lambda_.16} parent=73 // pred_check_branch
                %270 = sbr.rel target = $region100
              $region99: #{_lambda_.16} parent=73 // pred_region
                _
              $region100: #{_lambda_.16} parent=73 // pred_fallthru
                _
            $region74: #{_lambda_.16} parent=69 // pred_fallthru
              _
            // Predicated region
            $region75: #{_lambda_.16} parent=69 // pred_check
              _
            $region76: #{_lambda_.16} parent=69 // pred_check_branch
              %240 = sbr.rel target = $region78
            $region77: #{_lambda_.16} parent=69 // pred_region
              %s242 = ssub.s32 256, 1
              loop: start=0, step=1, limit=1
              $region79: #{_lambda_.16} parent=77 // loop_pre_header
                _
              $region80: #{_lambda_.16} parent=77 // loop_header
                %s244 = sphi 0, %s248
                %p245 = scmp.ge.s32.totalorder %s244, 1
                %s249 = sphi %s234, %s234
                %s250 = sphi %s229, %s229
              $region81: #{_lambda_.16} parent=77 // loop_header_branch
                %247 = sbr.rel (%p245) target = $region85
              $region82: #{_lambda_.16} parent=77 // loop_body
                %v251 = vld [vmem:[%s249] sm:%s242]
                %252 = vst [vmem:[%s250] sm:%s242] %v251
                %v253 = vld [vmem:[%s249 + $0x30] sm:%s242]
                %254 = vst [vmem:[%s250 + $0x8] sm:%s242] %v253
              $region83: #{_lambda_.16} parent=77 // loop_footer
                %s248 = sadd.s32 1, %s244
              $region84: #{_lambda_.16} parent=77 // loop_footer_branch
                %243 = sbr.rel target = $region80
              $region85: #{_lambda_.16} parent=77 // loop_exit
                _
            $region78: #{_lambda_.16} parent=69 // pred_fallthru
              _
          $region70: #{_lambda_.16} parent=65 // pred_fallthru
            _
          %271 = vnop
        $region66: #{_lambda_.16} parent=23 // pred_fallthru
          _
      $region24: #{_lambda_.16} parent=5 // pred_fallthru
        _
      %p272 = scmp.le.s32.totalorder 1, %s10
      %p273 = scmp.lt.s32.totalorder %s10, 11
      %p274 = pnand %p272, %p273
      %p275 = pneg %p274
      // Predicated region
      $region101: #{_lambda_.16} parent=5 // pred_check
        _
      $region102: #{_lambda_.16} parent=5 // pred_check_branch
        %277 = sbr.rel (%p274) target = $region104
      $region103: #{_lambda_.16} parent=5 // pred_region
        %s278 = ssub.s32 %s10, 1
        %s279 = sand.u32 %s37, 1
        %s280 = sand.u32 %s37, 1
        %s281 = smul.addr %s280, 16
        %s282 = scalar_lea.vmem [#allocation2], %s281
        // Predicated region
        $region105: #{_lambda_.16} parent=103 // pred_check
          %p283 = pneg %p50
        $region106: #{_lambda_.16} parent=103 // pred_check_branch
          %285 = sbr.rel (%p283) target = $region108
        $region107: #{_lambda_.16} parent=103 // pred_region
          _
        $region108: #{_lambda_.16} parent=103 // pred_fallthru
          _
        %s286 = sand.u32 %s67, 1
        %s287 = sand.u32 %s67, 1
        %s288 = smul.addr %s287, 16
        %s289 = scalar_lea.vmem [#allocation3], %s288
        // Predicated region
        $region109: #{_lambda_.16} parent=103 // pred_check
          %p290 = pneg %p80
        $region110: #{_lambda_.16} parent=103 // pred_check_branch
          %292 = sbr.rel (%p290) target = $region112
        $region111: #{_lambda_.16} parent=103 // pred_region
          _
        $region112: #{_lambda_.16} parent=103 // pred_fallthru
          _
        %s293 = sand.u32 %s37, 1
        %s294 = sand.u32 %s37, 1
        %s295 = smul.addr %s294, 16
        %s296 = scalar_lea.vmem [#allocation2], %s295
        %p297 = pneg %p50
        %p298 = pneg %p47
        %s299 = sand.u32 %s67, 1
        %s300 = sand.u32 %s67, 1
        %s301 = smul.addr %s300, 16
        %s302 = scalar_lea.vmem [#allocation3], %s301
        %p303 = pneg %p80
        %p304 = pneg %p77
        %p305 = pneg %p101
        %p306 = pneg %p98
        %p307 = pneg %p122
        %p308 = pneg %p119
        %p309 = pneg %p150
        %p310 = pneg %p147
        %s311 = sand.u32 %s137, 1
        %s312 = sand.u32 %s137, 1
        %s313 = smul.addr %s312, 16
        %s314 = scalar_lea.vmem [#allocation4], %s313
        %s315 = sadd.s32 %s20, 1
        %v317 = vld [vmem:[%s282] sm:$0xff]
        %v318 = vld [vmem:[%s282 + $0x8] sm:$0xff]
        %v319 = vld [vmem:[%s289] sm:$0xff]
        %v320 = vld [vmem:[%s289 + $0x8] sm:$0xff]
        %vm321 = vcmp.gt.f32.partialorder %v317, 0.0
        %vm322 = vcmp.gt.f32.partialorder %v319, 0.0
        %vm323 = vcmp.gt.f32.partialorder %v318, 0.0
        %vm324 = vcmp.gt.f32.partialorder %v320, 0.0
        %v325 = vmul.f32 %v317, 0.01
        %v326 = vmul.f32 %v319, 0.01
        %v327 = vmul.f32 %v318, 0.01
        %v328 = vmul.f32 %v320, 0.01
        %v329 = vsel %vm321, %v317, %v325
        %v330 = vsel %vm322, %v319, %v326
        %v331 = vsel %vm323, %v318, %v327
        %v332 = vsel %vm324, %v320, %v328
        %337 = vrot.lane.b32.xlu0 %v329, 127
        %v338 = vpop.permute.xlu0 %337
        %339 = vrot.lane.b32.xlu0 %v330, 127
        %v340 = vpop.permute.xlu0 %339
        %341 = vrot.lane.b32.xlu0 %v331, 127
        %v342 = vpop.permute.xlu0 %341
        %343 = vrot.lane.b32.xlu0 %v332, 127
        %v344 = vpop.permute.xlu0 %343
        %vm345 = vcmask 1039360
        %v346 = vsel %vm345, %v338, %v340
        %v347 = vsel %vm345, %v342, %v344
        %350 = vrot.lane.b32.xlu0 %v329, 126
        %v351 = vpop.permute.xlu0 %350
        %352 = vrot.lane.b32.xlu0 %v330, 126
        %v353 = vpop.permute.xlu0 %352
        %354 = vrot.lane.b32.xlu0 %v331, 126
        %v355 = vpop.permute.xlu0 %354
        %356 = vrot.lane.b32.xlu0 %v332, 126
        %v357 = vpop.permute.xlu0 %356
        %vm358 = vcmask 1031168
        %v359 = vsel %vm358, %v351, %v353
        %v360 = vsel %vm358, %v355, %v357
        %363 = vrot.lane.b32.xlu0 %v329, 125
        %v364 = vpop.permute.xlu0 %363
        %365 = vrot.lane.b32.xlu0 %v330, 125
        %v366 = vpop.permute.xlu0 %365
        %367 = vrot.lane.b32.xlu0 %v331, 125
        %v368 = vpop.permute.xlu0 %367
        %369 = vrot.lane.b32.xlu0 %v332, 125
        %v370 = vpop.permute.xlu0 %369
        %vm371 = vcmask 1022976
        %v372 = vsel %vm371, %v364, %v366
        %v373 = vsel %vm371, %v368, %v370
        %376 = vrot.lane.b32.xlu0 %v329, 124
        %v377 = vpop.permute.xlu0 %376
        %378 = vrot.lane.b32.xlu0 %v330, 124
        %v379 = vpop.permute.xlu0 %378
        %380 = vrot.lane.b32.xlu0 %v331, 124
        %v381 = vpop.permute.xlu0 %380
        %382 = vrot.lane.b32.xlu0 %v332, 124
        %v383 = vpop.permute.xlu0 %382
        %vm384 = vcmask 1014784
        %v385 = vsel %vm384, %v377, %v379
        %v386 = vsel %vm384, %v381, %v383
        %v389 = vpack.c.bf16 %v331, %v329
        %v390 = vpack.c.bf16 %v347, %v346
        %v391 = vpack.c.bf16 %v360, %v359
        %v392 = vpack.c.bf16 %v373, %v372
        %v393 = vpack.c.bf16 %v386, %v385
        %v394 = vld [vmem:[%s2] sm:$0xf]
        %v395 = vld [vmem:[%s2 + $0x4] sm:$0xf]
        %v396 = vld [vmem:[%s3] sm:$0xff]
        %v397 = vld [vmem:[%s3 + $0x8] sm:$0xff]
        %399 = vset.pattern.permute.xlu0 0
        %400 = vperm.xlu0 %399, %v396
        %v401 = vpop.permute.xlu0 %400
        %404 = vset.pattern.permute.xlu0 0
        %405 = vperm.xlu0 %404, %v397
        %v406 = vpop.permute.xlu0 %405
        %v410 = vunpack.c.l.b16 %v394
        %v411 = vunpack.c.l.b16 %v395
        %v412 = vpack.c.b16 %v411, %v410
        %vm413 = vcmask 654336
        %v415 = vsel %vm413, %v412, 0
        %417 = vmatprep.subr.bf16.mxu0 0
        %418 = vmatpush1.bf16.msra.mxu0 0
        %419 = vmatprep.subr.bf16.mxu0 0
        %420 = vmatpush1.bf16.msra.mxu0 0
        %421 = vmatprep.subr.bf16.mxu0 0
        %422 = vmatpush1.bf16.msra.mxu0 0
        %423 = vmatprep.subr.bf16.mxu0 0
        %424 = vmatpush1.bf16.msra.mxu0 %v393
        %425 = vmatprep.subr.bf16.mxu0 0
        %426 = vmatpush1.bf16.msra.mxu0 %v392
        %427 = vmatprep.subr.bf16.mxu0 0
        %428 = vmatpush1.bf16.msra.mxu0 %v391
        %429 = vmatprep.subr.bf16.mxu0 0
        %430 = vmatpush1.bf16.msra.mxu0 %v390
        %431 = vmatprep.subr.bf16.mxu0 0
        %432 = vmatpush1.bf16.msra.mxu0 %v389
        %433 = vmatprep.subr.bf16.mxu0 0
        %434 = vmatpush2.bf16.msra.mxu0 0
        %435 = vmatprep.subr.bf16.mxu0 0
        %436 = vmatpush2.bf16.msra.mxu0 0
        %437 = vmatprep.subr.bf16.mxu0 0
        %438 = vmatpush2.bf16.msra.mxu0 0
        %439 = vmatprep.subr.bf16.mxu0 0
        %440 = vmatpush2.bf16.msra.mxu0 0
        %441 = vmatprep.subr.bf16.mxu0 0
        %442 = vmatpush2.bf16.msra.mxu0 0
        %443 = vmatprep.subr.bf16.mxu0 0
        %444 = vmatpush2.bf16.msra.mxu0 0
        %445 = vmatprep.subr.bf16.mxu0 0
        %446 = vmatpush2.bf16.msra.mxu0 0
        %447 = vmatprep.subr.bf16.mxu0 0
        %448 = vmatpush2.bf16.msra.mxu0 0
        %449 = vmatprep.mubr.bf16.mxu0 0
        %450 = vmatmul.mubr.bf16.gmra.mxu0 %v415
        %v451 = vpop.f32.mrf.mxu0
        %v452 = vadd.f32 %v401, %v451
        %v453 = vpop.f32.mrf.mxu0
        %v454 = vpop.f32.mrf.mxu0
        %v455 = vadd.f32 %v406, %v454
        %v456 = vpop.f32.mrf.mxu0
        %457 = vdwg.mxu0
        %462 = vrot.lane.b32.xlu0 %v317, 126
        %v463 = vpop.permute.xlu0 %462
        %464 = vrot.lane.b32.xlu0 %v319, 126
        %v465 = vpop.permute.xlu0 %464
        %466 = vrot.lane.b32.xlu0 %v318, 126
        %v467 = vpop.permute.xlu0 %466
        %468 = vrot.lane.b32.xlu0 %v320, 126
        %v469 = vpop.permute.xlu0 %468
        %v470 = vsel %vm358, %v463, %v465
        %v471 = vsel %vm358, %v467, %v469
        %v474 = vadd.f32 %v452, %v470
        %v475 = vadd.f32 %v455, %v471
        %476 = vst [vmem:[%s314] sm:$0xff] %v474
        %477 = vst [vmem:[%s314 + $0x8] sm:$0xff] %v475
        %s478 = sand.u32 %s137, 1
        %s479 = sand.u32 %s137, 1
        %s480 = smul.addr %s479, 16
        %s481 = scalar_lea.vmem [#allocation4], %s480
        // Predicated region
        $region113: #{_lambda_.16} parent=103 // pred_check
          %p482 = pneg %p147
        $region114: #{_lambda_.16} parent=103 // pred_check_branch
          %484 = sbr.rel (%p482) target = $region116
        $region115: #{_lambda_.16} parent=103 // pred_region
          %s485 = smul.addr %s19, 10
          %s486 = sadd.s32 %s20, %s485
          %s487 = smul.addr %s486, 8
          %s488 = scalar_lea.vmem %s4, %s487
          // Predicated region
          $region117: #{_lambda_.16} parent=115 // pred_check
            _
          $region118: #{_lambda_.16} parent=115 // pred_check_branch
            %490 = sbr.rel (0) target = $region120
          $region119: #{_lambda_.16} parent=115 // pred_region
            // Predicated region
            $region121: #{_lambda_.16} parent=119 // pred_check
              _
            $region122: #{_lambda_.16} parent=119 // pred_check_branch
              %492 = sbr.rel (0) target = $region124
            $region123: #{_lambda_.16} parent=119 // pred_region
              // Predicated region
              $region136: #{_lambda_.16} parent=123 // pred_check
                _
              $region137: #{_lambda_.16} parent=123 // pred_check_branch
                %510 = sbr.rel (0) target = $region139
              $region138: #{_lambda_.16} parent=123 // pred_region
                loop: start=0, step=1, limit=1
                $region140: #{_lambda_.16} parent=138 // loop_pre_header
                  _
                $region141: #{_lambda_.16} parent=138 // loop_header
                  %s512 = sphi 0, %s516
                  %p513 = scmp.ge.s32.totalorder %s512, 1
                  %s517 = sphi %s481, %s481
                  %s518 = sphi %s488, %s488
                $region142: #{_lambda_.16} parent=138 // loop_header_branch
                  %515 = sbr.rel (%p513) target = $region146
                $region143: #{_lambda_.16} parent=138 // loop_body
                  %v519 = vld [vmem:[%s517] sm:$0xff]
                  %520 = vst [vmem:[%s518] sm:$0xff] %v519
                  %v521 = vld [vmem:[%s517 + $0x8] sm:$0xff]
                  %522 = vst [vmem:[%s518 + $0x28] sm:$0xff] %v521
                $region144: #{_lambda_.16} parent=138 // loop_footer
                  %s516 = sadd.s32 1, %s512
                $region145: #{_lambda_.16} parent=138 // loop_footer_branch
                  %511 = sbr.rel target = $region141
                $region146: #{_lambda_.16} parent=138 // loop_exit
                  _
              $region139: #{_lambda_.16} parent=123 // pred_fallthru
                _
              // Predicated region
              $region147: #{_lambda_.16} parent=123 // pred_check
                _
              $region148: #{_lambda_.16} parent=123 // pred_check_branch
                %524 = sbr.rel target = $region150
              $region149: #{_lambda_.16} parent=123 // pred_region
                _
              $region150: #{_lambda_.16} parent=123 // pred_fallthru
                _
            $region124: #{_lambda_.16} parent=119 // pred_fallthru
              _
            // Predicated region
            $region125: #{_lambda_.16} parent=119 // pred_check
              _
            $region126: #{_lambda_.16} parent=119 // pred_check_branch
              %494 = sbr.rel target = $region128
            $region127: #{_lambda_.16} parent=119 // pred_region
              %s496 = ssub.s32 256, 1
              loop: start=0, step=1, limit=1
              $region129: #{_lambda_.16} parent=127 // loop_pre_header
                _
              $region130: #{_lambda_.16} parent=127 // loop_header
                %s498 = sphi 0, %s502
                %p499 = scmp.ge.s32.totalorder %s498, 1
                %s503 = sphi %s481, %s481
                %s504 = sphi %s488, %s488
              $region131: #{_lambda_.16} parent=127 // loop_header_branch
                %501 = sbr.rel (%p499) target = $region135
              $region132: #{_lambda_.16} parent=127 // loop_body
                %v505 = vld [vmem:[%s503] sm:%s496]
                %506 = vst [vmem:[%s504] sm:%s496] %v505
                %v507 = vld [vmem:[%s503 + $0x8] sm:%s496]
                %508 = vst [vmem:[%s504 + $0x28] sm:%s496] %v507
              $region133: #{_lambda_.16} parent=127 // loop_footer
                %s502 = sadd.s32 1, %s498
              $region134: #{_lambda_.16} parent=127 // loop_footer_branch
                %497 = sbr.rel target = $region130
              $region135: #{_lambda_.16} parent=127 // loop_exit
                _
            $region128: #{_lambda_.16} parent=119 // pred_fallthru
              _
          $region120: #{_lambda_.16} parent=115 // pred_fallthru
            _
          %525 = vnop
        $region116: #{_lambda_.16} parent=103 // pred_fallthru
          _
      $region104: #{_lambda_.16} parent=5 // pred_fallthru
        _
      %p526 = scmp.le.s32.totalorder 2, %s10
      // Predicated region
      $region151: #{_lambda_.16} parent=5 // pred_check
        %p527 = pneg %p526
      $region152: #{_lambda_.16} parent=5 // pred_check_branch
        %529 = sbr.rel (%p527) target = $region154
      $region153: #{_lambda_.16} parent=5 // pred_region
        %s530 = ssub.s32 %s10, 2
        // Predicated region
        $region155: #{_lambda_.16} parent=153 // pred_check
          %p531 = pneg %p153
        $region156: #{_lambda_.16} parent=153 // pred_check_branch
          %533 = sbr.rel (%p531) target = $region158
        $region157: #{_lambda_.16} parent=153 // pred_region
          %s534 = sand.u32 %s138, 1
          %s535 = sand.u32 %s138, 1
          %s536 = smul.addr %s535, 16
          %s537 = scalar_lea.vmem [#allocation4], %s536
        $region158: #{_lambda_.16} parent=153 // pred_fallthru
          _
      $region154: #{_lambda_.16} parent=5 // pred_fallthru
        _
    $region6: #{_lambda_.16} parent=1 // loop_footer
      %s14 = sadd.s32 1, %s10
    $region7: #{_lambda_.16} parent=1 // loop_footer_branch
      %9 = sbr.rel target = $region3
    $region8: #{_lambda_.16} parent=1 // loop_exit
      _

// kernel: _lambda_.17
$region0: #{_lambda_.17}
  #allocation0 [shape = 'u32[]', space=smem, size = 0x4, offset = 0x4, fixed_abs, tag = 'smem constant byte address 0x4 - core index']
  #allocation1 [shape = 'u32[144,128]{1,0:T(1,128)}', space=vmem, size = 0x12000, scoped, tag = 'internal scratch']
  %s0 = inlined_call_operand.vmem [shape: f32[2,16,768], index: 0, kind: input, shape index: {}, may-alias: {0,1}]
  %s1 = inlined_call_operand.vmem [shape: f32[2,16,768], index: 1, kind: input, shape index: {}, may-alias: {0,1}]
  %s2 = inlined_call_operand.vmem [shape: bf16[16,80], index: 2, kind: input, shape index: {}]
  %s3 = inlined_call_operand.vmem [shape: f32[16,1], index: 3, kind: input, shape index: {}]
  %s4 = inlined_call_operand.vmem [shape: f32[2,16,640], index: 4, kind: input, shape index: {}]
  %s5 = inlined_call_operand.vmem [shape: f32[2,16,640], index: 5, kind: output, shape index: {}]
  %s6 = sld [smem:[#allocation0]]
  $region201: #{_lambda_.17} parent=0
    _
  %s8 = ssub.s32 1, %s6
  %s9 = scalar_select 0, %s8, %s6
  $region1: #{_lambda_.17} parent=0
    #allocation2 [shape = 'u8[16384]{0}', space=vmem, size = 0x4000, scoped, tag = 'input window, operand 0']
    #allocation3 [shape = 'u8[16384]{0}', space=vmem, size = 0x4000, scoped, tag = 'input window, operand 1']
    #allocation4 [shape = 'u8[16384]{0}', space=vmem, size = 0x4000, scoped, tag = 'input window, operand 4']
    #allocation5 [shape = 'u8[16384]{0}', space=vmem, size = 0x4000, scoped, tag = 'output window, operand 0']
    loop: start=0, step=1, limit=12
    $region2: #{_lambda_.17} parent=1 // loop_pre_header
      _
    $region3: #{_lambda_.17} parent=1 // loop_header
      %s11 = sphi 0, %s15
      %p12 = scmp.ge.s32.totalorder %s11, 12
      %s18 = sphi 0, %s30
      %s19 = sphi 0, %s26
      %s20 = sphi 0, %s18
      %s21 = sphi 0, %s19
      %s22 = sphi 0, %s20
      %s23 = sphi 0, %s21
      %s35 = sphi 0, %s37
      %s38 = sphi 0, %s35
      %s39 = sphi 0, %s38
      %s55 = sphi 0, %s39
      %s65 = sphi 0, %s67
      %s68 = sphi 0, %s65
      %s69 = sphi 0, %s68
      %s85 = sphi 0, %s69
      %s89 = sphi 0, %s89
      %s91 = sphi 0, %s89
      %s92 = sphi 0, %s91
      %s106 = sphi 0, %s92
      %s110 = sphi 0, %s110
      %s112 = sphi 0, %s110
      %s113 = sphi 0, %s112
      %s127 = sphi 0, %s113
      %s135 = sphi 0, %s137
      %s138 = sphi 0, %s135
      %s139 = sphi 0, %s138
      %s155 = sphi 0, %s139
      %s163 = sphi 0, %s165
      %s166 = sphi 0, %s163
      %s167 = sphi 0, %s166
      %s183 = sphi 0, %s167
    $region4: #{_lambda_.17} parent=1 // loop_header_branch
      %14 = sbr.rel (%p12) target = $region8
    $region5: #{_lambda_.17} parent=1 // loop_body
      %s16 = ssub.s32 %s11, 1
      %s17 = ssub.s32 %s11, 2
      %s24 = sadd.s32 1, %s19
      %p25 = scmp.ge.s32.totalorder %s24, 5
      %s26 = scalar_select %p25, 0, %s24
      %s27 = sadd.s32 1, %s18
      %s28 = scalar_select %p25, %s27, %s18
      %p29 = scmp.ge.s32.totalorder %s28, 2
      %s30 = scalar_select %p29, 0, %s28
      %s31 = ssub.s32 %s18, %s30
      %s32 = ssub.s32 %s19, %s26
      %s33 = sor.u32 %s31, %s32
      %p34 = scmp.eq.s32.totalorder %s33, 0
      %s36 = sadd.s32 %s35, 1
      %s37 = scalar_select %p34, %s35, %s36
      %p40 = pneg %p34
      %p41 = scmp.eq.s32.totalorder %s11, 9
      %p42 = por %p40, %p41
      %p43 = scmp.ne.s32.totalorder %s35, %s38
      %p44 = scmp.eq.s32.totalorder %s11, 0
      %p45 = por %p43, %p44
      %p46 = scmp.ne.s32.totalorder %s35, %s38
      %p47 = scmp.eq.s32.totalorder %s16, 9
      %p48 = por %p46, %p47
      %p49 = scmp.ne.s32.totalorder %s38, %s39
      %p50 = scmp.eq.s32.totalorder %s16, 0
      %p51 = por %p49, %p50
      %p52 = scmp.ne.s32.totalorder %s38, %s39
      %p53 = scmp.eq.s32.totalorder %s17, 9
      %p54 = por %p52, %p53
      %p56 = scmp.ne.s32.totalorder %s39, %s55
      %p57 = scmp.eq.s32.totalorder %s17, 0
      %p58 = por %p56, %p57
      %s59 = sadd.s32 %s19, 1
      %s60 = sadd.s32 %s26, 1
      %s61 = ssub.s32 %s18, %s30
      %s62 = ssub.s32 %s59, %s60
      %s63 = sor.u32 %s61, %s62
      %p64 = scmp.eq.s32.totalorder %s63, 0
      %s66 = sadd.s32 %s65, 1
      %s67 = scalar_select %p64, %s65, %s66
      %p70 = pneg %p64
      %p71 = scmp.eq.s32.totalorder %s11, 9
      %p72 = por %p70, %p71
      %p73 = scmp.ne.s32.totalorder %s65, %s68
      %p74 = scmp.eq.s32.totalorder %s11, 0
      %p75 = por %p73, %p74
      %p76 = scmp.ne.s32.totalorder %s65, %s68
      %p77 = scmp.eq.s32.totalorder %s16, 9
      %p78 = por %p76, %p77
      %p79 = scmp.ne.s32.totalorder %s68, %s69
      %p80 = scmp.eq.s32.totalorder %s16, 0
      %p81 = por %p79, %p80
      %p82 = scmp.ne.s32.totalorder %s68, %s69
      %p83 = scmp.eq.s32.totalorder %s17, 9
      %p84 = por %p82, %p83
      %p86 = scmp.ne.s32.totalorder %s69, %s85
      %p87 = scmp.eq.s32.totalorder %s17, 0
      %p88 = por %p86, %p87
      %s90 = sadd.s32 %s89, 1
      %p93 = scmp.eq.s32.totalorder %s11, 9
      %p94 = scmp.ne.s32.totalorder %s89, %s91
      %p95 = scmp.eq.s32.totalorder %s11, 0
      %p96 = por %p94, %p95
      %p97 = scmp.ne.s32.totalorder %s89, %s91
      %p98 = scmp.eq.s32.totalorder %s16, 9
      %p99 = por %p97, %p98
      %p100 = scmp.ne.s32.totalorder %s91, %s92
      %p101 = scmp.eq.s32.totalorder %s16, 0
      %p102 = por %p100, %p101
      %p103 = scmp.ne.s32.totalorder %s91, %s92
      %p104 = scmp.eq.s32.totalorder %s17, 9
      %p105 = por %p103, %p104
      %p107 = scmp.ne.s32.totalorder %s92, %s106
      %p108 = scmp.eq.s32.totalorder %s17, 0
      %p109 = por %p107, %p108
      %s111 = sadd.s32 %s110, 1
      %p114 = scmp.eq.s32.totalorder %s11, 9
      %p115 = scmp.ne.s32.totalorder %s110, %s112
      %p116 = scmp.eq.s32.totalorder %s11, 0
      %p117 = por %p115, %p116
      %p118 = scmp.ne.s32.totalorder %s110, %s112
      %p119 = scmp.eq.s32.totalorder %s16, 9
      %p120 = por %p118, %p119
      %p121 = scmp.ne.s32.totalorder %s112, %s113
      %p122 = scmp.eq.s32.totalorder %s16, 0
      %p123 = por %p121, %p122
      %p124 = scmp.ne.s32.totalorder %s112, %s113
      %p125 = scmp.eq.s32.totalorder %s17, 9
      %p126 = por %p124, %p125
      %p128 = scmp.ne.s32.totalorder %s113, %s127
      %p129 = scmp.eq.s32.totalorder %s17, 0
      %p130 = por %p128, %p129
      %s131 = ssub.s32 %s18, %s30
      %s132 = ssub.s32 %s19, %s26
      %s133 = sor.u32 %s131, %s132
      %p134 = scmp.eq.s32.totalorder %s133, 0
      %s136 = sadd.s32 %s135, 1
      %s137 = scalar_select %p134, %s135, %s136
      %p140 = pneg %p134
      %p141 = scmp.eq.s32.totalorder %s11, 9
      %p142 = por %p140, %p141
      %p143 = scmp.ne.s32.totalorder %s135, %s138
      %p144 = scmp.eq.s32.totalorder %s11, 0
      %p145 = por %p143, %p144
      %p146 = scmp.ne.s32.totalorder %s135, %s138
      %p147 = scmp.eq.s32.totalorder %s16, 9
      %p148 = por %p146, %p147
      %p149 = scmp.ne.s32.totalorder %s138, %s139
      %p150 = scmp.eq.s32.totalorder %s16, 0
      %p151 = por %p149, %p150
      %p152 = scmp.ne.s32.totalorder %s138, %s139
      %p153 = scmp.eq.s32.totalorder %s17, 9
      %p154 = por %p152, %p153
      %p156 = scmp.ne.s32.totalorder %s139, %s155
      %p157 = scmp.eq.s32.totalorder %s17, 0
      %p158 = por %p156, %p157
      %s159 = ssub.s32 %s18, %s30
      %s160 = ssub.s32 %s19, %s26
      %s161 = sor.u32 %s159, %s160
      %p162 = scmp.eq.s32.totalorder %s161, 0
      %s164 = sadd.s32 %s163, 1
      %s165 = scalar_select %p162, %s163, %s164
      %p168 = pneg %p162
      %p169 = scmp.eq.s32.totalorder %s11, 9
      %p170 = por %p168, %p169
      %p171 = scmp.ne.s32.totalorder %s163, %s166
      %p172 = scmp.eq.s32.totalorder %s11, 0
      %p173 = por %p171, %p172
      %p174 = scmp.ne.s32.totalorder %s163, %s166
      %p175 = scmp.eq.s32.totalorder %s16, 9
      %p176 = por %p174, %p175
      %p177 = scmp.ne.s32.totalorder %s166, %s167
      %p178 = scmp.eq.s32.totalorder %s16, 0
      %p179 = por %p177, %p178
      %p180 = scmp.ne.s32.totalorder %s166, %s167
      %p181 = scmp.eq.s32.totalorder %s17, 9
      %p182 = por %p180, %p181
      %p184 = scmp.ne.s32.totalorder %s167, %s183
      %p185 = scmp.eq.s32.totalorder %s17, 0
      %p186 = por %p184, %p185
      %p187 = scmp.le.s32.totalorder 1, %s11
      %p188 = scmp.lt.s32.totalorder %s11, 11
      %p189 = pnand %p187, %p188
      %p190 = pneg %p189
      // Predicated region
      $region9: #{_lambda_.17} parent=5 // pred_check
        _
      $region10: #{_lambda_.17} parent=5 // pred_check_branch
        %192 = sbr.rel (%p189) target = $region12
      $region11: #{_lambda_.17} parent=5 // pred_region
        %s193 = ssub.s32 %s11, 1
        // Predicated region
        $region13: #{_lambda_.17} parent=11 // pred_check
          %p194 = pneg %p102
        $region14: #{_lambda_.17} parent=11 // pred_check_branch
          %196 = sbr.rel (%p194) target = $region16
        $region15: #{_lambda_.17} parent=11 // pred_region
          _
        $region16: #{_lambda_.17} parent=11 // pred_fallthru
          _
        // Predicated region
        $region17: #{_lambda_.17} parent=11 // pred_check
          %p197 = pneg %p123
        $region18: #{_lambda_.17} parent=11 // pred_check_branch
          %199 = sbr.rel (%p197) target = $region20
        $region19: #{_lambda_.17} parent=11 // pred_region
          _
        $region20: #{_lambda_.17} parent=11 // pred_fallthru
          _
      $region12: #{_lambda_.17} parent=5 // pred_fallthru
        _
      %p200 = scmp.lt.s32.totalorder %s11, 10
      // Predicated region
      $region21: #{_lambda_.17} parent=5 // pred_check
        %p201 = pneg %p200
      $region22: #{_lambda_.17} parent=5 // pred_check_branch
        %203 = sbr.rel (%p201) target = $region24
      $region23: #{_lambda_.17} parent=5 // pred_region
        // Predicated region
        $region25: #{_lambda_.17} parent=23 // pred_check
          %p204 = pneg %p45
        $region26: #{_lambda_.17} parent=23 // pred_check_branch
          %206 = sbr.rel (%p204) target = $region28
        $region27: #{_lambda_.17} parent=23 // pred_region
          %s207 = sand.u32 %s35, 1
          %s208 = sand.u32 %s35, 1
          %s209 = smul.addr %s208, 16
          %s210 = scalar_lea.vmem [#allocation2], %s209
          %s211 = smul.addr %s18, 12
          %s212 = sadd.s32 %s19, %s211
          %s213 = smul.addr %s212, 8
          %s214 = scalar_lea.vmem %s0, %s213
          // Predicated region
          $region29: #{_lambda_.17} parent=27 // pred_check
            _
          $region30: #{_lambda_.17} parent=27 // pred_check_branch
            %216 = sbr.rel (0) target = $region32
          $region31: #{_lambda_.17} parent=27 // pred_region
            // Predicated region
            $region33: #{_lambda_.17} parent=31 // pred_check
              _
            $region34: #{_lambda_.17} parent=31 // pred_check_branch
              %218 = sbr.rel (0) target = $region36
            $region35: #{_lambda_.17} parent=31 // pred_region
              // Predicated region
              $region48: #{_lambda_.17} parent=35 // pred_check
                _
              $region49: #{_lambda_.17} parent=35 // pred_check_branch
                %236 = sbr.rel (0) target = $region51
              $region50: #{_lambda_.17} parent=35 // pred_region
                loop: start=0, step=1, limit=1
                $region52: #{_lambda_.17} parent=50 // loop_pre_header
                  _
                $region53: #{_lambda_.17} parent=50 // loop_header
                  %s238 = sphi 0, %s242
                  %p239 = scmp.ge.s32.totalorder %s238, 1
                  %s243 = sphi %s214, %s214
                  %s244 = sphi %s210, %s210
                $region54: #{_lambda_.17} parent=50 // loop_header_branch
                  %241 = sbr.rel (%p239) target = $region58
                $region55: #{_lambda_.17} parent=50 // loop_body
                  %v245 = vld [vmem:[%s243] sm:$0xff]
                  %246 = vst [vmem:[%s244] sm:$0xff] %v245
                  %v247 = vld [vmem:[%s243 + $0x30] sm:$0xff]
                  %248 = vst [vmem:[%s244 + $0x8] sm:$0xff] %v247
                $region56: #{_lambda_.17} parent=50 // loop_footer
                  %s242 = sadd.s32 1, %s238
                $region57: #{_lambda_.17} parent=50 // loop_footer_branch
                  %237 = sbr.rel target = $region53
                $region58: #{_lambda_.17} parent=50 // loop_exit
                  _
              $region51: #{_lambda_.17} parent=35 // pred_fallthru
                _
              // Predicated region
              $region59: #{_lambda_.17} parent=35 // pred_check
                _
              $region60: #{_lambda_.17} parent=35 // pred_check_branch
                %250 = sbr.rel target = $region62
              $region61: #{_lambda_.17} parent=35 // pred_region
                _
              $region62: #{_lambda_.17} parent=35 // pred_fallthru
                _
            $region36: #{_lambda_.17} parent=31 // pred_fallthru
              _
            // Predicated region
            $region37: #{_lambda_.17} parent=31 // pred_check
              _
            $region38: #{_lambda_.17} parent=31 // pred_check_branch
              %220 = sbr.rel target = $region40
            $region39: #{_lambda_.17} parent=31 // pred_region
              %s222 = ssub.s32 256, 1
              loop: start=0, step=1, limit=1
              $region41: #{_lambda_.17} parent=39 // loop_pre_header
                _
              $region42: #{_lambda_.17} parent=39 // loop_header
                %s224 = sphi 0, %s228
                %p225 = scmp.ge.s32.totalorder %s224, 1
                %s229 = sphi %s214, %s214
                %s230 = sphi %s210, %s210
              $region43: #{_lambda_.17} parent=39 // loop_header_branch
                %227 = sbr.rel (%p225) target = $region47
              $region44: #{_lambda_.17} parent=39 // loop_body
                %v231 = vld [vmem:[%s229] sm:%s222]
                %232 = vst [vmem:[%s230] sm:%s222] %v231
                %v233 = vld [vmem:[%s229 + $0x30] sm:%s222]
                %234 = vst [vmem:[%s230 + $0x8] sm:%s222] %v233
              $region45: #{_lambda_.17} parent=39 // loop_footer
                %s228 = sadd.s32 1, %s224
              $region46: #{_lambda_.17} parent=39 // loop_footer_branch
                %223 = sbr.rel target = $region42
              $region47: #{_lambda_.17} parent=39 // loop_exit
                _
            $region40: #{_lambda_.17} parent=31 // pred_fallthru
              _
          $region32: #{_lambda_.17} parent=27 // pred_fallthru
            _
          %251 = vnop
        $region28: #{_lambda_.17} parent=23 // pred_fallthru
          _
        // Predicated region
        $region63: #{_lambda_.17} parent=23 // pred_check
          %p252 = pneg %p75
        $region64: #{_lambda_.17} parent=23 // pred_check_branch
          %254 = sbr.rel (%p252) target = $region66
        $region65: #{_lambda_.17} parent=23 // pred_region
          %s255 = sand.u32 %s65, 1
          %s256 = sand.u32 %s65, 1
          %s257 = smul.addr %s256, 16
          %s258 = scalar_lea.vmem [#allocation3], %s257
          %s259 = sadd.s32 %s19, 1
          %s260 = smul.addr %s18, 12
          %s261 = sadd.s32 %s259, %s260
          %s262 = smul.addr %s261, 8
          %s263 = scalar_lea.vmem %s1, %s262
          // Predicated region
          $region67: #{_lambda_.17} parent=65 // pred_check
            _
          $region68: #{_lambda_.17} parent=65 // pred_check_branch
            %265 = sbr.rel (0) target = $region70
          $region69: #{_lambda_.17} parent=65 // pred_region
            // Predicated region
            $region71: #{_lambda_.17} parent=69 // pred_check
              _
            $region72: #{_lambda_.17} parent=69 // pred_check_branch
              %267 = sbr.rel (0) target = $region74
            $region73: #{_lambda_.17} parent=69 // pred_region
              // Predicated region
              $region86: #{_lambda_.17} parent=73 // pred_check
                _
              $region87: #{_lambda_.17} parent=73 // pred_check_branch
                %285 = sbr.rel (0) target = $region89
              $region88: #{_lambda_.17} parent=73 // pred_region
                loop: start=0, step=1, limit=1
                $region90: #{_lambda_.17} parent=88 // loop_pre_header
                  _
                $region91: #{_lambda_.17} parent=88 // loop_header
                  %s287 = sphi 0, %s291
                  %p288 = scmp.ge.s32.totalorder %s287, 1
                  %s292 = sphi %s263, %s263
                  %s293 = sphi %s258, %s258
                $region92: #{_lambda_.17} parent=88 // loop_header_branch
                  %290 = sbr.rel (%p288) target = $region96
                $region93: #{_lambda_.17} parent=88 // loop_body
                  %v294 = vld [vmem:[%s292] sm:$0xff]
                  %295 = vst [vmem:[%s293] sm:$0xff] %v294
                  %v296 = vld [vmem:[%s292 + $0x30] sm:$0xff]
                  %297 = vst [vmem:[%s293 + $0x8] sm:$0xff] %v296
                $region94: #{_lambda_.17} parent=88 // loop_footer
                  %s291 = sadd.s32 1, %s287
                $region95: #{_lambda_.17} parent=88 // loop_footer_branch
                  %286 = sbr.rel target = $region91
                $region96: #{_lambda_.17} parent=88 // loop_exit
                  _
              $region89: #{_lambda_.17} parent=73 // pred_fallthru
                _
              // Predicated region
              $region97: #{_lambda_.17} parent=73 // pred_check
                _
              $region98: #{_lambda_.17} parent=73 // pred_check_branch
                %299 = sbr.rel target = $region100
              $region99: #{_lambda_.17} parent=73 // pred_region
                _
              $region100: #{_lambda_.17} parent=73 // pred_fallthru
                _
            $region74: #{_lambda_.17} parent=69 // pred_fallthru
              _
            // Predicated region
            $region75: #{_lambda_.17} parent=69 // pred_check
              _
            $region76: #{_lambda_.17} parent=69 // pred_check_branch
              %269 = sbr.rel target = $region78
            $region77: #{_lambda_.17} parent=69 // pred_region
              %s271 = ssub.s32 256, 1
              loop: start=0, step=1, limit=1
              $region79: #{_lambda_.17} parent=77 // loop_pre_header
                _
              $region80: #{_lambda_.17} parent=77 // loop_header
                %s273 = sphi 0, %s277
                %p274 = scmp.ge.s32.totalorder %s273, 1
                %s278 = sphi %s263, %s263
                %s279 = sphi %s258, %s258
              $region81: #{_lambda_.17} parent=77 // loop_header_branch
                %276 = sbr.rel (%p274) target = $region85
              $region82: #{_lambda_.17} parent=77 // loop_body
                %v280 = vld [vmem:[%s278] sm:%s271]
                %281 = vst [vmem:[%s279] sm:%s271] %v280
                %v282 = vld [vmem:[%s278 + $0x30] sm:%s271]
                %283 = vst [vmem:[%s279 + $0x8] sm:%s271] %v282
              $region83: #{_lambda_.17} parent=77 // loop_footer
                %s277 = sadd.s32 1, %s273
              $region84: #{_lambda_.17} parent=77 // loop_footer_branch
                %272 = sbr.rel target = $region80
              $region85: #{_lambda_.17} parent=77 // loop_exit
                _
            $region78: #{_lambda_.17} parent=69 // pred_fallthru
              _
          $region70: #{_lambda_.17} parent=65 // pred_fallthru
            _
          %300 = vnop
        $region66: #{_lambda_.17} parent=23 // pred_fallthru
          _
        // Predicated region
        $region101: #{_lambda_.17} parent=23 // pred_check
          %p301 = pneg %p145
        $region102: #{_lambda_.17} parent=23 // pred_check_branch
          %303 = sbr.rel (%p301) target = $region104
        $region103: #{_lambda_.17} parent=23 // pred_region
          %s304 = sand.u32 %s135, 1
          %s305 = sand.u32 %s135, 1
          %s306 = smul.addr %s305, 16
          %s307 = scalar_lea.vmem [#allocation4], %s306
          %s308 = smul.addr %s18, 10
          %s309 = sadd.s32 %s19, %s308
          %s310 = smul.addr %s309, 8
          %s311 = scalar_lea.vmem %s4, %s310
          // Predicated region
          $region105: #{_lambda_.17} parent=103 // pred_check
            _
          $region106: #{_lambda_.17} parent=103 // pred_check_branch
            %313 = sbr.rel (0) target = $region108
          $region107: #{_lambda_.17} parent=103 // pred_region
            // Predicated region
            $region109: #{_lambda_.17} parent=107 // pred_check
              _
            $region110: #{_lambda_.17} parent=107 // pred_check_branch
              %315 = sbr.rel (0) target = $region112
            $region111: #{_lambda_.17} parent=107 // pred_region
              // Predicated region
              $region124: #{_lambda_.17} parent=111 // pred_check
                _
              $region125: #{_lambda_.17} parent=111 // pred_check_branch
                %333 = sbr.rel (0) target = $region127
              $region126: #{_lambda_.17} parent=111 // pred_region
                loop: start=0, step=1, limit=1
                $region128: #{_lambda_.17} parent=126 // loop_pre_header
                  _
                $region129: #{_lambda_.17} parent=126 // loop_header
                  %s335 = sphi 0, %s339
                  %p336 = scmp.ge.s32.totalorder %s335, 1
                  %s340 = sphi %s311, %s311
                  %s341 = sphi %s307, %s307
                $region130: #{_lambda_.17} parent=126 // loop_header_branch
                  %338 = sbr.rel (%p336) target = $region134
                $region131: #{_lambda_.17} parent=126 // loop_body
                  %v342 = vld [vmem:[%s340] sm:$0xff]
                  %343 = vst [vmem:[%s341] sm:$0xff] %v342
                  %v344 = vld [vmem:[%s340 + $0x28] sm:$0xff]
                  %345 = vst [vmem:[%s341 + $0x8] sm:$0xff] %v344
                $region132: #{_lambda_.17} parent=126 // loop_footer
                  %s339 = sadd.s32 1, %s335
                $region133: #{_lambda_.17} parent=126 // loop_footer_branch
                  %334 = sbr.rel target = $region129
                $region134: #{_lambda_.17} parent=126 // loop_exit
                  _
              $region127: #{_lambda_.17} parent=111 // pred_fallthru
                _
              // Predicated region
              $region135: #{_lambda_.17} parent=111 // pred_check
                _
              $region136: #{_lambda_.17} parent=111 // pred_check_branch
                %347 = sbr.rel target = $region138
              $region137: #{_lambda_.17} parent=111 // pred_region
                _
              $region138: #{_lambda_.17} parent=111 // pred_fallthru
                _
            $region112: #{_lambda_.17} parent=107 // pred_fallthru
              _
            // Predicated region
            $region113: #{_lambda_.17} parent=107 // pred_check
              _
            $region114: #{_lambda_.17} parent=107 // pred_check_branch
              %317 = sbr.rel target = $region116
            $region115: #{_lambda_.17} parent=107 // pred_region
              %s319 = ssub.s32 256, 1
              loop: start=0, step=1, limit=1
              $region117: #{_lambda_.17} parent=115 // loop_pre_header
                _
              $region118: #{_lambda_.17} parent=115 // loop_header
                %s321 = sphi 0, %s325
                %p322 = scmp.ge.s32.totalorder %s321, 1
                %s326 = sphi %s311, %s311
                %s327 = sphi %s307, %s307
              $region119: #{_lambda_.17} parent=115 // loop_header_branch
                %324 = sbr.rel (%p322) target = $region123
              $region120: #{_lambda_.17} parent=115 // loop_body
                %v328 = vld [vmem:[%s326] sm:%s319]
                %329 = vst [vmem:[%s327] sm:%s319] %v328
                %v330 = vld [vmem:[%s326 + $0x28] sm:%s319]
                %331 = vst [vmem:[%s327 + $0x8] sm:%s319] %v330
              $region121: #{_lambda_.17} parent=115 // loop_footer
                %s325 = sadd.s32 1, %s321
              $region122: #{_lambda_.17} parent=115 // loop_footer_branch
                %320 = sbr.rel target = $region118
              $region123: #{_lambda_.17} parent=115 // loop_exit
                _
            $region116: #{_lambda_.17} parent=107 // pred_fallthru
              _
          $region108: #{_lambda_.17} parent=103 // pred_fallthru
            _
          %348 = vnop
        $region104: #{_lambda_.17} parent=23 // pred_fallthru
          _
      $region24: #{_lambda_.17} parent=5 // pred_fallthru
        _
      %p349 = scmp.le.s32.totalorder 1, %s11
      %p350 = scmp.lt.s32.totalorder %s11, 11
      %p351 = pnand %p349, %p350
      %p352 = pneg %p351
      // Predicated region
      $region139: #{_lambda_.17} parent=5 // pred_check
        _
      $region140: #{_lambda_.17} parent=5 // pred_check_branch
        %354 = sbr.rel (%p351) target = $region142
      $region141: #{_lambda_.17} parent=5 // pred_region
        %s355 = ssub.s32 %s11, 1
        %s356 = sand.u32 %s38, 1
        %s357 = sand.u32 %s38, 1
        %s358 = smul.addr %s357, 16
        %s359 = scalar_lea.vmem [#allocation2], %s358
        // Predicated region
        $region143: #{_lambda_.17} parent=141 // pred_check
          %p360 = pneg %p51
        $region144: #{_lambda_.17} parent=141 // pred_check_branch
          %362 = sbr.rel (%p360) target = $region146
        $region145: #{_lambda_.17} parent=141 // pred_region
          _
        $region146: #{_lambda_.17} parent=141 // pred_fallthru
          _
        %s363 = sand.u32 %s68, 1
        %s364 = sand.u32 %s68, 1
        %s365 = smul.addr %s364, 16
        %s366 = scalar_lea.vmem [#allocation3], %s365
        // Predicated region
        $region147: #{_lambda_.17} parent=141 // pred_check
          %p367 = pneg %p81
        $region148: #{_lambda_.17} parent=141 // pred_check_branch
          %369 = sbr.rel (%p367) target = $region150
        $region149: #{_lambda_.17} parent=141 // pred_region
          _
        $region150: #{_lambda_.17} parent=141 // pred_fallthru
          _
        %s370 = sand.u32 %s138, 1
        %s371 = sand.u32 %s138, 1
        %s372 = smul.addr %s371, 16
        %s373 = scalar_lea.vmem [#allocation4], %s372
        // Predicated region
        $region151: #{_lambda_.17} parent=141 // pred_check
          %p374 = pneg %p151
        $region152: #{_lambda_.17} parent=141 // pred_check_branch
          %376 = sbr.rel (%p374) target = $region154
        $region153: #{_lambda_.17} parent=141 // pred_region
          _
        $region154: #{_lambda_.17} parent=141 // pred_fallthru
          _
        %s377 = sand.u32 %s38, 1
        %s378 = sand.u32 %s38, 1
        %s379 = smul.addr %s378, 16
        %s380 = scalar_lea.vmem [#allocation2], %s379
        %p381 = pneg %p51
        %p382 = pneg %p48
        %s383 = sand.u32 %s68, 1
        %s384 = sand.u32 %s68, 1
        %s385 = smul.addr %s384, 16
        %s386 = scalar_lea.vmem [#allocation3], %s385
        %p387 = pneg %p81
        %p388 = pneg %p78
        %p389 = pneg %p102
        %p390 = pneg %p99
        %p391 = pneg %p123
        %p392 = pneg %p120
        %s393 = sand.u32 %s138, 1
        %s394 = sand.u32 %s138, 1
        %s395 = smul.addr %s394, 16
        %s396 = scalar_lea.vmem [#allocation4], %s395
        %p397 = pneg %p151
        %p398 = pneg %p148
        %p399 = pneg %p179
        %p400 = pneg %p176
        %s401 = sand.u32 %s166, 1
        %s402 = sand.u32 %s166, 1
        %s403 = smul.addr %s402, 16
        %s404 = scalar_lea.vmem [#allocation5], %s403
        %s405 = sadd.s32 %s21, 1
        %v407 = vld [vmem:[%s359] sm:$0xff]
        %v408 = vld [vmem:[%s359 + $0x8] sm:$0xff]
        %v409 = vld [vmem:[%s366] sm:$0xff]
        %v410 = vld [vmem:[%s366 + $0x8] sm:$0xff]
        %vm411 = vcmp.gt.f32.partialorder %v407, 0.0
        %vm412 = vcmp.gt.f32.partialorder %v409, 0.0
        %vm413 = vcmp.gt.f32.partialorder %v408, 0.0
        %vm414 = vcmp.gt.f32.partialorder %v410, 0.0
        %v415 = vmul.f32 %v407, 0.01
        %v416 = vmul.f32 %v409, 0.01
        %v417 = vmul.f32 %v408, 0.01
        %v418 = vmul.f32 %v410, 0.01
        %v419 = vsel %vm411, %v407, %v415
        %v420 = vsel %vm412, %v409, %v416
        %v421 = vsel %vm413, %v408, %v417
        %v422 = vsel %vm414, %v410, %v418
        %427 = vrot.lane.b32.xlu0 %v419, 125
        %v428 = vpop.permute.xlu0 %427
        %429 = vrot.lane.b32.xlu0 %v420, 125
        %v430 = vpop.permute.xlu0 %429
        %431 = vrot.lane.b32.xlu0 %v421, 125
        %v432 = vpop.permute.xlu0 %431
        %433 = vrot.lane.b32.xlu0 %v422, 125
        %v434 = vpop.permute.xlu0 %433
        %vm435 = vcmask 1022976
        %v436 = vsel %vm435, %v428, %v430
        %v437 = vsel %vm435, %v432, %v434
        %440 = vrot.lane.b32.xlu0 %v419, 122
        %v441 = vpop.permute.xlu0 %440
        %442 = vrot.lane.b32.xlu0 %v420, 122
        %v443 = vpop.permute.xlu0 %442
        %444 = vrot.lane.b32.xlu0 %v421, 122
        %v445 = vpop.permute.xlu0 %444
        %446 = vrot.lane.b32.xlu0 %v422, 122
        %v447 = vpop.permute.xlu0 %446
        %vm448 = vcmask 998400
        %v449 = vsel %vm448, %v441, %v443
        %v450 = vsel %vm448, %v445, %v447
        %453 = vrot.lane.b32.xlu0 %v419, 119
        %v454 = vpop.permute.xlu0 %453
        %455 = vrot.lane.b32.xlu0 %v420, 119
        %v456 = vpop.permute.xlu0 %455
        %457 = vrot.lane.b32.xlu0 %v421, 119
        %v458 = vpop.permute.xlu0 %457
        %459 = vrot.lane.b32.xlu0 %v422, 119
        %v460 = vpop.permute.xlu0 %459
        %vm461 = vcmask 973824
        %v462 = vsel %vm461, %v454, %v456
        %v463 = vsel %vm461, %v458, %v460
        %466 = vrot.lane.b32.xlu0 %v419, 116
        %v467 = vpop.permute.xlu0 %466
        %468 = vrot.lane.b32.xlu0 %v420, 116
        %v469 = vpop.permute.xlu0 %468
        %470 = vrot.lane.b32.xlu0 %v421, 116
        %v471 = vpop.permute.xlu0 %470
        %472 = vrot.lane.b32.xlu0 %v422, 116
        %v473 = vpop.permute.xlu0 %472
        %vm474 = vcmask 949248
        %v475 = vsel %vm474, %v467, %v469
        %v476 = vsel %vm474, %v471, %v473
        %v479 = vpack.c.bf16 %v421, %v419
        %v480 = vpack.c.bf16 %v437, %v436
        %v481 = vpack.c.bf16 %v450, %v449
        %v482 = vpack.c.bf16 %v463, %v462
        %v483 = vpack.c.bf16 %v476, %v475
        %v484 = vld [vmem:[%s2] sm:$0xf]
        %v485 = vld [vmem:[%s2 + $0x4] sm:$0xf]
        %v486 = vld [vmem:[%s3] sm:$0xff]
        %v487 = vld [vmem:[%s3 + $0x8] sm:$0xff]
        %489 = vset.pattern.permute.xlu0 0
        %490 = vperm.xlu0 %489, %v486
        %v491 = vpop.permute.xlu0 %490
        %494 = vset.pattern.permute.xlu0 0
        %495 = vperm.xlu0 %494, %v487
        %v496 = vpop.permute.xlu0 %495
        %v500 = vunpack.c.l.b16 %v484
        %v501 = vunpack.c.l.b16 %v485
        %v502 = vpack.c.b16 %v501, %v500
        %vm503 = vcmask 654336
        %v505 = vsel %vm503, %v502, 0
        %507 = vmatprep.subr.bf16.mxu0 0
        %508 = vmatpush1.bf16.msra.mxu0 0
        %509 = vmatprep.subr.bf16.mxu0 0
        %510 = vmatpush1.bf16.msra.mxu0 0
        %511 = vmatprep.subr.bf16.mxu0 0
        %512 = vmatpush1.bf16.msra.mxu0 0
        %513 = vmatprep.subr.bf16.mxu0 0
        %514 = vmatpush1.bf16.msra.mxu0 %v483
        %515 = vmatprep.subr.bf16.mxu0 0
        %516 = vmatpush1.bf16.msra.mxu0 %v482
        %517 = vmatprep.subr.bf16.mxu0 0
        %518 = vmatpush1.bf16.msra.mxu0 %v481
        %519 = vmatprep.subr.bf16.mxu0 0
        %520 = vmatpush1.bf16.msra.mxu0 %v480
        %521 = vmatprep.subr.bf16.mxu0 0
        %522 = vmatpush1.bf16.msra.mxu0 %v479
        %523 = vmatprep.subr.bf16.mxu0 0
        %524 = vmatpush2.bf16.msra.mxu0 0
        %525 = vmatprep.subr.bf16.mxu0 0
        %526 = vmatpush2.bf16.msra.mxu0 0
        %527 = vmatprep.subr.bf16.mxu0 0
        %528 = vmatpush2.bf16.msra.mxu0 0
        %529 = vmatprep.subr.bf16.mxu0 0
        %530 = vmatpush2.bf16.msra.mxu0 0
        %531 = vmatprep.subr.bf16.mxu0 0
        %532 = vmatpush2.bf16.msra.mxu0 0
        %533 = vmatprep.subr.bf16.mxu0 0
        %534 = vmatpush2.bf16.msra.mxu0 0
        %535 = vmatprep.subr.bf16.mxu0 0
        %536 = vmatpush2.bf16.msra.mxu0 0
        %537 = vmatprep.subr.bf16.mxu0 0
        %538 = vmatpush2.bf16.msra.mxu0 0
        %539 = vmatprep.mubr.bf16.mxu0 0
        %540 = vmatmul.mubr.bf16.gmra.mxu0 %v505
        %v541 = vpop.f32.mrf.mxu0
        %v542 = vadd.f32 %v491, %v541
        %v543 = vpop.f32.mrf.mxu0
        %v544 = vpop.f32.mrf.mxu0
        %v545 = vadd.f32 %v496, %v544
        %v546 = vpop.f32.mrf.mxu0
        %547 = vdwg.mxu0
        %552 = vrot.lane.b32.xlu0 %v407, 122
        %v553 = vpop.permute.xlu0 %552
        %554 = vrot.lane.b32.xlu0 %v409, 122
        %v555 = vpop.permute.xlu0 %554
        %556 = vrot.lane.b32.xlu0 %v408, 122
        %v557 = vpop.permute.xlu0 %556
        %558 = vrot.lane.b32.xlu0 %v410, 122
        %v559 = vpop.permute.xlu0 %558
        %v560 = vsel %vm448, %v553, %v555
        %v561 = vsel %vm448, %v557, %v559
        %v564 = vadd.f32 %v542, %v560
        %v565 = vadd.f32 %v545, %v561
        %v566 = vld [vmem:[%s373] sm:$0xff]
        %v567 = vld [vmem:[%s373 + $0x8] sm:$0xff]
        %v568 = vadd.f32 %v564, %v566
        %v569 = vadd.f32 %v565, %v567
        %v570 = vmul.f32 %v568, 0.5
        %v571 = vmul.f32 %v569, 0.5
        %572 = vst [vmem:[%s404] sm:$0xff] %v570
        %573 = vst [vmem:[%s404 + $0x8] sm:$0xff] %v571
        %s574 = sand.u32 %s166, 1
        %s575 = sand.u32 %s166, 1
        %s576 = smul.addr %s575, 16
        %s577 = scalar_lea.vmem [#allocation5], %s576
        // Predicated region
        $region155: #{_lambda_.17} parent=141 // pred_check
          %p578 = pneg %p176
        $region156: #{_lambda_.17} parent=141 // pred_check_branch
          %580 = sbr.rel (%p578) target = $region158
        $region157: #{_lambda_.17} parent=141 // pred_region
          %s581 = smul.addr %s20, 10
          %s582 = sadd.s32 %s21, %s581
          %s583 = smul.addr %s582, 8
          %s584 = scalar_lea.vmem %s5, %s583
          // Predicated region
          $region159: #{_lambda_.17} parent=157 // pred_check
            _
          $region160: #{_lambda_.17} parent=157 // pred_check_branch
            %586 = sbr.rel (0) target = $region162
          $region161: #{_lambda_.17} parent=157 // pred_region
            // Predicated region
            $region163: #{_lambda_.17} parent=161 // pred_check
              _
            $region164: #{_lambda_.17} parent=161 // pred_check_branch
              %588 = sbr.rel (0) target = $region166
            $region165: #{_lambda_.17} parent=161 // pred_region
              // Predicated region
              $region178: #{_lambda_.17} parent=165 // pred_check
                _
              $region179: #{_lambda_.17} parent=165 // pred_check_branch
                %606 = sbr.rel (0) target = $region181
              $region180: #{_lambda_.17} parent=165 // pred_region
                loop: start=0, step=1, limit=1
                $region182: #{_lambda_.17} parent=180 // loop_pre_header
                  _
                $region183: #{_lambda_.17} parent=180 // loop_header
                  %s608 = sphi 0, %s612
                  %p609 = scmp.ge.s32.totalorder %s608, 1
                  %s613 = sphi %s577, %s577
                  %s614 = sphi %s584, %s584
                $region184: #{_lambda_.17} parent=180 // loop_header_branch
                  %611 = sbr.rel (%p609) target = $region188
                $region185: #{_lambda_.17} parent=180 // loop_body
                  %v615 = vld [vmem:[%s613] sm:$0xff]
                  %616 = vst [vmem:[%s614] sm:$0xff] %v615
                  %v617 = vld [vmem:[%s613 + $0x8] sm:$0xff]
                  %618 = vst [vmem:[%s614 + $0x28] sm:$0xff] %v617
                $region186: #{_lambda_.17} parent=180 // loop_footer
                  %s612 = sadd.s32 1, %s608
                $region187: #{_lambda_.17} parent=180 // loop_footer_branch
                  %607 = sbr.rel target = $region183
                $region188: #{_lambda_.17} parent=180 // loop_exit
                  _
              $region181: #{_lambda_.17} parent=165 // pred_fallthru
                _
              // Predicated region
              $region189: #{_lambda_.17} parent=165 // pred_check
                _
              $region190: #{_lambda_.17} parent=165 // pred_check_branch
                %620 = sbr.rel target = $region192
              $region191: #{_lambda_.17} parent=165 // pred_region
                _
              $region192: #{_lambda_.17} parent=165 // pred_fallthru
                _
            $region166: #{_lambda_.17} parent=161 // pred_fallthru
              _
            // Predicated region
            $region167: #{_lambda_.17} parent=161 // pred_check
              _
            $region168: #{_lambda_.17} parent=161 // pred_check_branch
              %590 = sbr.rel target = $region170
            $region169: #{_lambda_.17} parent=161 // pred_region
              %s592 = ssub.s32 256, 1
              loop: start=0, step=1, limit=1
              $region171: #{_lambda_.17} parent=169 // loop_pre_header
                _
              $region172: #{_lambda_.17} parent=169 // loop_header
                %s594 = sphi 0, %s598
                %p595 = scmp.ge.s32.totalorder %s594, 1
                %s599 = sphi %s577, %s577
                %s600 = sphi %s584, %s584
              $region173: #{_lambda_.17} parent=169 // loop_header_branch
                %597 = sbr.rel (%p595) target = $region177
              $region174: #{_lambda_.17} parent=169 // loop_body
                %v601 = vld [vmem:[%s599] sm:%s592]
                %602 = vst [vmem:[%s600] sm:%s592] %v601
                %v603 = vld [vmem:[%s599 + $0x8] sm:%s592]
                %604 = vst [vmem:[%s600 + $0x28] sm:%s592] %v603
              $region175: #{_lambda_.17} parent=169 // loop_footer
                %s598 = sadd.s32 1, %s594
              $region176: #{_lambda_.17} parent=169 // loop_footer_branch
                %593 = sbr.rel target = $region172
              $region177: #{_lambda_.17} parent=169 // loop_exit
                _
            $region170: #{_lambda_.17} parent=161 // pred_fallthru
              _
          $region162: #{_lambda_.17} parent=157 // pred_fallthru
            _
          %621 = vnop
        $region158: #{_lambda_.17} parent=141 // pred_fallthru
          _
      $region142: #{_lambda_.17} parent=5 // pred_fallthru
        _
      %p622 = scmp.le.s32.totalorder 2, %s11
      // Predicated region
      $region193: #{_lambda_.17} parent=5 // pred_check
        %p623 = pneg %p622
      $region194: #{_lambda_.17} parent=5 // pred_check_branch
        %625 = sbr.rel (%p623) target = $region196
      $region195: #{_lambda_.17} parent=5 // pred_region
        %s626 = ssub.s32 %s11, 2
        // Predicated region
        $region197: #{_lambda_.17} parent=195 // pred_check
          %p627 = pneg %p182
        $region198: #{_lambda_.17} parent=195 // pred_check_branch
          %629 = sbr.rel (%p627) target = $region200
        $region199: #{_lambda_.17} parent=195 // pred_region
          %s630 = sand.u32 %s167, 1
          %s631 = sand.u32 %s167, 1
          %s632 = smul.addr %s631, 16
          %s633 = scalar_lea.vmem [#allocation5], %s632
        $region200: #{_lambda_.17} parent=195 // pred_fallthru
          _
      $region196: #{_lambda_.17} parent=5 // pred_fallthru
        _
    $region6: #{_lambda_.17} parent=1 // loop_footer
      %s15 = sadd.s32 1, %s11
    $region7: #{_lambda_.17} parent=1 // loop_footer_branch
      %10 = sbr.rel target = $region3
    $region8: #{_lambda_.17} parent=1 // loop_exit
      _

// kernel: _lambda_.14
$region0: #{_lambda_.14}
  #allocation0 [shape = 'u32[]', space=smem, size = 0x4, offset = 0x4, fixed_abs, tag = 'smem constant byte address 0x4 - core index']
  #allocation1 [shape = 'u32[144,128]{1,0:T(1,128)}', space=vmem, size = 0x12000, scoped, tag = 'internal scratch']
  %s0 = inlined_call_operand.vmem [shape: f32[2,16,768], index: 0, kind: input, shape index: {}, may-alias: {0,1}]
  %s1 = inlined_call_operand.vmem [shape: f32[2,16,768], index: 1, kind: input, shape index: {}, may-alias: {0,1}]
  %s2 = inlined_call_operand.vmem [shape: bf16[16,48], index: 2, kind: input, shape index: {}]
  %s3 = inlined_call_operand.vmem [shape: f32[16,1], index: 3, kind: input, shape index: {}]
  %s4 = inlined_call_operand.vmem [shape: f32[2,16,640], index: 4, kind: output, shape index: {}]
  %s5 = sld [smem:[#allocation0]]
  $region159: #{_lambda_.14} parent=0
    _
  %s7 = ssub.s32 1, %s5
  %s8 = scalar_select 0, %s7, %s5
  $region1: #{_lambda_.14} parent=0
    #allocation2 [shape = 'u8[16384]{0}', space=vmem, size = 0x4000, scoped, tag = 'input window, operand 0']
    #allocation3 [shape = 'u8[16384]{0}', space=vmem, size = 0x4000, scoped, tag = 'input window, operand 1']
    #allocation4 [shape = 'u8[16384]{0}', space=vmem, size = 0x4000, scoped, tag = 'output window, operand 0']
    loop: start=0, step=1, limit=12
    $region2: #{_lambda_.14} parent=1 // loop_pre_header
      _
    $region3: #{_lambda_.14} parent=1 // loop_header
      %s10 = sphi 0, %s14
      %p11 = scmp.ge.s32.totalorder %s10, 12
      %s17 = sphi 0, %s29
      %s18 = sphi 0, %s25
      %s19 = sphi 0, %s17
      %s20 = sphi 0, %s18
      %s21 = sphi 0, %s19
      %s22 = sphi 0, %s20
      %s34 = sphi 0, %s36
      %s37 = sphi 0, %s34
      %s38 = sphi 0, %s37
      %s54 = sphi 0, %s38
      %s64 = sphi 0, %s66
      %s67 = sphi 0, %s64
      %s68 = sphi 0, %s67
      %s84 = sphi 0, %s68
      %s88 = sphi 0, %s88
      %s90 = sphi 0, %s88
      %s91 = sphi 0, %s90
      %s105 = sphi 0, %s91
      %s109 = sphi 0, %s109
      %s111 = sphi 0, %s109
      %s112 = sphi 0, %s111
      %s126 = sphi 0, %s112
      %s134 = sphi 0, %s136
      %s137 = sphi 0, %s134
      %s138 = sphi 0, %s137
      %s154 = sphi 0, %s138
    $region4: #{_lambda_.14} parent=1 // loop_header_branch
      %13 = sbr.rel (%p11) target = $region8
    $region5: #{_lambda_.14} parent=1 // loop_body
      %s15 = ssub.s32 %s10, 1
      %s16 = ssub.s32 %s10, 2
      %s23 = sadd.s32 1, %s18
      %p24 = scmp.ge.s32.totalorder %s23, 5
      %s25 = scalar_select %p24, 0, %s23
      %s26 = sadd.s32 1, %s17
      %s27 = scalar_select %p24, %s26, %s17
      %p28 = scmp.ge.s32.totalorder %s27, 2
      %s29 = scalar_select %p28, 0, %s27
      %s30 = ssub.s32 %s17, %s29
      %s31 = ssub.s32 %s18, %s25
      %s32 = sor.u32 %s30, %s31
      %p33 = scmp.eq.s32.totalorder %s32, 0
      %s35 = sadd.s32 %s34, 1
      %s36 = scalar_select %p33, %s34, %s35
      %p39 = pneg %p33
      %p40 = scmp.eq.s32.totalorder %s10, 9
      %p41 = por %p39, %p40
      %p42 = scmp.ne.s32.totalorder %s34, %s37
      %p43 = scmp.eq.s32.totalorder %s10, 0
      %p44 = por %p42, %p43
      %p45 = scmp.ne.s32.totalorder %s34, %s37
      %p46 = scmp.eq.s32.totalorder %s15, 9
      %p47 = por %p45, %p46
      %p48 = scmp.ne.s32.totalorder %s37, %s38
      %p49 = scmp.eq.s32.totalorder %s15, 0
      %p50 = por %p48, %p49
      %p51 = scmp.ne.s32.totalorder %s37, %s38
      %p52 = scmp.eq.s32.totalorder %s16, 9
      %p53 = por %p51, %p52
      %p55 = scmp.ne.s32.totalorder %s38, %s54
      %p56 = scmp.eq.s32.totalorder %s16, 0
      %p57 = por %p55, %p56
      %s58 = sadd.s32 %s18, 1
      %s59 = sadd.s32 %s25, 1
      %s60 = ssub.s32 %s17, %s29
      %s61 = ssub.s32 %s58, %s59
      %s62 = sor.u32 %s60, %s61
      %p63 = scmp.eq.s32.totalorder %s62, 0
      %s65 = sadd.s32 %s64, 1
      %s66 = scalar_select %p63, %s64, %s65
      %p69 = pneg %p63
      %p70 = scmp.eq.s32.totalorder %s10, 9
      %p71 = por %p69, %p70
      %p72 = scmp.ne.s32.totalorder %s64, %s67
      %p73 = scmp.eq.s32.totalorder %s10, 0
      %p74 = por %p72, %p73
      %p75 = scmp.ne.s32.totalorder %s64, %s67
      %p76 = scmp.eq.s32.totalorder %s15, 9
      %p77 = por %p75, %p76
      %p78 = scmp.ne.s32.totalorder %s67, %s68
      %p79 = scmp.eq.s32.totalorder %s15, 0
      %p80 = por %p78, %p79
      %p81 = scmp.ne.s32.totalorder %s67, %s68
      %p82 = scmp.eq.s32.totalorder %s16, 9
      %p83 = por %p81, %p82
      %p85 = scmp.ne.s32.totalorder %s68, %s84
      %p86 = scmp.eq.s32.totalorder %s16, 0
      %p87 = por %p85, %p86
      %s89 = sadd.s32 %s88, 1
      %p92 = scmp.eq.s32.totalorder %s10, 9
      %p93 = scmp.ne.s32.totalorder %s88, %s90
      %p94 = scmp.eq.s32.totalorder %s10, 0
      %p95 = por %p93, %p94
      %p96 = scmp.ne.s32.totalorder %s88, %s90
      %p97 = scmp.eq.s32.totalorder %s15, 9
      %p98 = por %p96, %p97
      %p99 = scmp.ne.s32.totalorder %s90, %s91
      %p100 = scmp.eq.s32.totalorder %s15, 0
      %p101 = por %p99, %p100
      %p102 = scmp.ne.s32.totalorder %s90, %s91
      %p103 = scmp.eq.s32.totalorder %s16, 9
      %p104 = por %p102, %p103
      %p106 = scmp.ne.s32.totalorder %s91, %s105
      %p107 = scmp.eq.s32.totalorder %s16, 0
      %p108 = por %p106, %p107
      %s110 = sadd.s32 %s109, 1
      %p113 = scmp.eq.s32.totalorder %s10, 9
      %p114 = scmp.ne.s32.totalorder %s109, %s111
      %p115 = scmp.eq.s32.totalorder %s10, 0
      %p116 = por %p114, %p115
      %p117 = scmp.ne.s32.totalorder %s109, %s111
      %p118 = scmp.eq.s32.totalorder %s15, 9
      %p119 = por %p117, %p118
      %p120 = scmp.ne.s32.totalorder %s111, %s112
      %p121 = scmp.eq.s32.totalorder %s15, 0
      %p122 = por %p120, %p121
      %p123 = scmp.ne.s32.totalorder %s111, %s112
      %p124 = scmp.eq.s32.totalorder %s16, 9
      %p125 = por %p123, %p124
      %p127 = scmp.ne.s32.totalorder %s112, %s126
      %p128 = scmp.eq.s32.totalorder %s16, 0
      %p129 = por %p127, %p128
      %s130 = ssub.s32 %s17, %s29
      %s131 = ssub.s32 %s18, %s25
      %s132 = sor.u32 %s130, %s131
      %p133 = scmp.eq.s32.totalorder %s132, 0
      %s135 = sadd.s32 %s134, 1
      %s136 = scalar_select %p133, %s134, %s135
      %p139 = pneg %p133
      %p140 = scmp.eq.s32.totalorder %s10, 9
      %p141 = por %p139, %p140
      %p142 = scmp.ne.s32.totalorder %s134, %s137
      %p143 = scmp.eq.s32.totalorder %s10, 0
      %p144 = por %p142, %p143
      %p145 = scmp.ne.s32.totalorder %s134, %s137
      %p146 = scmp.eq.s32.totalorder %s15, 9
      %p147 = por %p145, %p146
      %p148 = scmp.ne.s32.totalorder %s137, %s138
      %p149 = scmp.eq.s32.totalorder %s15, 0
      %p150 = por %p148, %p149
      %p151 = scmp.ne.s32.totalorder %s137, %s138
      %p152 = scmp.eq.s32.totalorder %s16, 9
      %p153 = por %p151, %p152
      %p155 = scmp.ne.s32.totalorder %s138, %s154
      %p156 = scmp.eq.s32.totalorder %s16, 0
      %p157 = por %p155, %p156
      %p158 = scmp.le.s32.totalorder 1, %s10
      %p159 = scmp.lt.s32.totalorder %s10, 11
      %p160 = pnand %p158, %p159
      %p161 = pneg %p160
      // Predicated region
      $region9: #{_lambda_.14} parent=5 // pred_check
        _
      $region10: #{_lambda_.14} parent=5 // pred_check_branch
        %163 = sbr.rel (%p160) target = $region12
      $region11: #{_lambda_.14} parent=5 // pred_region
        %s164 = ssub.s32 %s10, 1
        // Predicated region
        $region13: #{_lambda_.14} parent=11 // pred_check
          %p165 = pneg %p101
        $region14: #{_lambda_.14} parent=11 // pred_check_branch
          %167 = sbr.rel (%p165) target = $region16
        $region15: #{_lambda_.14} parent=11 // pred_region
          _
        $region16: #{_lambda_.14} parent=11 // pred_fallthru
          _
        // Predicated region
        $region17: #{_lambda_.14} parent=11 // pred_check
          %p168 = pneg %p122
        $region18: #{_lambda_.14} parent=11 // pred_check_branch
          %170 = sbr.rel (%p168) target = $region20
        $region19: #{_lambda_.14} parent=11 // pred_region
          _
        $region20: #{_lambda_.14} parent=11 // pred_fallthru
          _
      $region12: #{_lambda_.14} parent=5 // pred_fallthru
        _
      %p171 = scmp.lt.s32.totalorder %s10, 10
      // Predicated region
      $region21: #{_lambda_.14} parent=5 // pred_check
        %p172 = pneg %p171
      $region22: #{_lambda_.14} parent=5 // pred_check_branch
        %174 = sbr.rel (%p172) target = $region24
      $region23: #{_lambda_.14} parent=5 // pred_region
        // Predicated region
        $region25: #{_lambda_.14} parent=23 // pred_check
          %p175 = pneg %p44
        $region26: #{_lambda_.14} parent=23 // pred_check_branch
          %177 = sbr.rel (%p175) target = $region28
        $region27: #{_lambda_.14} parent=23 // pred_region
          %s178 = sand.u32 %s34, 1
          %s179 = sand.u32 %s34, 1
          %s180 = smul.addr %s179, 16
          %s181 = scalar_lea.vmem [#allocation2], %s180
          %s182 = smul.addr %s17, 12
          %s183 = sadd.s32 %s18, %s182
          %s184 = smul.addr %s183, 8
          %s185 = scalar_lea.vmem %s0, %s184
          // Predicated region
          $region29: #{_lambda_.14} parent=27 // pred_check
            _
          $region30: #{_lambda_.14} parent=27 // pred_check_branch
            %187 = sbr.rel (0) target = $region32
          $region31: #{_lambda_.14} parent=27 // pred_region
            // Predicated region
            $region33: #{_lambda_.14} parent=31 // pred_check
              _
            $region34: #{_lambda_.14} parent=31 // pred_check_branch
              %189 = sbr.rel (0) target = $region36
            $region35: #{_lambda_.14} parent=31 // pred_region
              // Predicated region
              $region48: #{_lambda_.14} parent=35 // pred_check
                _
              $region49: #{_lambda_.14} parent=35 // pred_check_branch
                %207 = sbr.rel (0) target = $region51
              $region50: #{_lambda_.14} parent=35 // pred_region
                loop: start=0, step=1, limit=1
                $region52: #{_lambda_.14} parent=50 // loop_pre_header
                  _
                $region53: #{_lambda_.14} parent=50 // loop_header
                  %s209 = sphi 0, %s213
                  %p210 = scmp.ge.s32.totalorder %s209, 1
                  %s214 = sphi %s185, %s185
                  %s215 = sphi %s181, %s181
                $region54: #{_lambda_.14} parent=50 // loop_header_branch
                  %212 = sbr.rel (%p210) target = $region58
                $region55: #{_lambda_.14} parent=50 // loop_body
                  %v216 = vld [vmem:[%s214] sm:$0xff]
                  %217 = vst [vmem:[%s215] sm:$0xff] %v216
                  %v218 = vld [vmem:[%s214 + $0x30] sm:$0xff]
                  %219 = vst [vmem:[%s215 + $0x8] sm:$0xff] %v218
                $region56: #{_lambda_.14} parent=50 // loop_footer
                  %s213 = sadd.s32 1, %s209
                $region57: #{_lambda_.14} parent=50 // loop_footer_branch
                  %208 = sbr.rel target = $region53
                $region58: #{_lambda_.14} parent=50 // loop_exit
                  _
              $region51: #{_lambda_.14} parent=35 // pred_fallthru
                _
              // Predicated region
              $region59: #{_lambda_.14} parent=35 // pred_check
                _
              $region60: #{_lambda_.14} parent=35 // pred_check_branch
                %221 = sbr.rel target = $region62
              $region61: #{_lambda_.14} parent=35 // pred_region
                _
              $region62: #{_lambda_.14} parent=35 // pred_fallthru
                _
            $region36: #{_lambda_.14} parent=31 // pred_fallthru
              _
            // Predicated region
            $region37: #{_lambda_.14} parent=31 // pred_check
              _
            $region38: #{_lambda_.14} parent=31 // pred_check_branch
              %191 = sbr.rel target = $region40
            $region39: #{_lambda_.14} parent=31 // pred_region
              %s193 = ssub.s32 256, 1
              loop: start=0, step=1, limit=1
              $region41: #{_lambda_.14} parent=39 // loop_pre_header
                _
              $region42: #{_lambda_.14} parent=39 // loop_header
                %s195 = sphi 0, %s199
                %p196 = scmp.ge.s32.totalorder %s195, 1
                %s200 = sphi %s185, %s185
                %s201 = sphi %s181, %s181
              $region43: #{_lambda_.14} parent=39 // loop_header_branch
                %198 = sbr.rel (%p196) target = $region47
              $region44: #{_lambda_.14} parent=39 // loop_body
                %v202 = vld [vmem:[%s200] sm:%s193]
                %203 = vst [vmem:[%s201] sm:%s193] %v202
                %v204 = vld [vmem:[%s200 + $0x30] sm:%s193]
                %205 = vst [vmem:[%s201 + $0x8] sm:%s193] %v204
              $region45: #{_lambda_.14} parent=39 // loop_footer
                %s199 = sadd.s32 1, %s195
              $region46: #{_lambda_.14} parent=39 // loop_footer_branch
                %194 = sbr.rel target = $region42
              $region47: #{_lambda_.14} parent=39 // loop_exit
                _
            $region40: #{_lambda_.14} parent=31 // pred_fallthru
              _
          $region32: #{_lambda_.14} parent=27 // pred_fallthru
            _
          %222 = vnop
        $region28: #{_lambda_.14} parent=23 // pred_fallthru
          _
        // Predicated region
        $region63: #{_lambda_.14} parent=23 // pred_check
          %p223 = pneg %p74
        $region64: #{_lambda_.14} parent=23 // pred_check_branch
          %225 = sbr.rel (%p223) target = $region66
        $region65: #{_lambda_.14} parent=23 // pred_region
          %s226 = sand.u32 %s64, 1
          %s227 = sand.u32 %s64, 1
          %s228 = smul.addr %s227, 16
          %s229 = scalar_lea.vmem [#allocation3], %s228
          %s230 = sadd.s32 %s18, 1
          %s231 = smul.addr %s17, 12
          %s232 = sadd.s32 %s230, %s231
          %s233 = smul.addr %s232, 8
          %s234 = scalar_lea.vmem %s1, %s233
          // Predicated region
          $region67: #{_lambda_.14} parent=65 // pred_check
            _
          $region68: #{_lambda_.14} parent=65 // pred_check_branch
            %236 = sbr.rel (0) target = $region70
          $region69: #{_lambda_.14} parent=65 // pred_region
            // Predicated region
            $region71: #{_lambda_.14} parent=69 // pred_check
              _
            $region72: #{_lambda_.14} parent=69 // pred_check_branch
              %238 = sbr.rel (0) target = $region74
            $region73: #{_lambda_.14} parent=69 // pred_region
              // Predicated region
              $region86: #{_lambda_.14} parent=73 // pred_check
                _
              $region87: #{_lambda_.14} parent=73 // pred_check_branch
                %256 = sbr.rel (0) target = $region89
              $region88: #{_lambda_.14} parent=73 // pred_region
                loop: start=0, step=1, limit=1
                $region90: #{_lambda_.14} parent=88 // loop_pre_header
                  _
                $region91: #{_lambda_.14} parent=88 // loop_header
                  %s258 = sphi 0, %s262
                  %p259 = scmp.ge.s32.totalorder %s258, 1
                  %s263 = sphi %s234, %s234
                  %s264 = sphi %s229, %s229
                $region92: #{_lambda_.14} parent=88 // loop_header_branch
                  %261 = sbr.rel (%p259) target = $region96
                $region93: #{_lambda_.14} parent=88 // loop_body
                  %v265 = vld [vmem:[%s263] sm:$0xff]
                  %266 = vst [vmem:[%s264] sm:$0xff] %v265
                  %v267 = vld [vmem:[%s263 + $0x30] sm:$0xff]
                  %268 = vst [vmem:[%s264 + $0x8] sm:$0xff] %v267
                $region94: #{_lambda_.14} parent=88 // loop_footer
                  %s262 = sadd.s32 1, %s258
                $region95: #{_lambda_.14} parent=88 // loop_footer_branch
                  %257 = sbr.rel target = $region91
                $region96: #{_lambda_.14} parent=88 // loop_exit
                  _
              $region89: #{_lambda_.14} parent=73 // pred_fallthru
                _
              // Predicated region
              $region97: #{_lambda_.14} parent=73 // pred_check
                _
              $region98: #{_lambda_.14} parent=73 // pred_check_branch
                %270 = sbr.rel target = $region100
              $region99: #{_lambda_.14} parent=73 // pred_region
                _
              $region100: #{_lambda_.14} parent=73 // pred_fallthru
                _
            $region74: #{_lambda_.14} parent=69 // pred_fallthru
              _
            // Predicated region
            $region75: #{_lambda_.14} parent=69 // pred_check
              _
            $region76: #{_lambda_.14} parent=69 // pred_check_branch
              %240 = sbr.rel target = $region78
            $region77: #{_lambda_.14} parent=69 // pred_region
              %s242 = ssub.s32 256, 1
              loop: start=0, step=1, limit=1
              $region79: #{_lambda_.14} parent=77 // loop_pre_header
                _
              $region80: #{_lambda_.14} parent=77 // loop_header
                %s244 = sphi 0, %s248
                %p245 = scmp.ge.s32.totalorder %s244, 1
                %s249 = sphi %s234, %s234
                %s250 = sphi %s229, %s229
              $region81: #{_lambda_.14} parent=77 // loop_header_branch
                %247 = sbr.rel (%p245) target = $region85
              $region82: #{_lambda_.14} parent=77 // loop_body
                %v251 = vld [vmem:[%s249] sm:%s242]
                %252 = vst [vmem:[%s250] sm:%s242] %v251
                %v253 = vld [vmem:[%s249 + $0x30] sm:%s242]
                %254 = vst [vmem:[%s250 + $0x8] sm:%s242] %v253
              $region83: #{_lambda_.14} parent=77 // loop_footer
                %s248 = sadd.s32 1, %s244
              $region84: #{_lambda_.14} parent=77 // loop_footer_branch
                %243 = sbr.rel target = $region80
              $region85: #{_lambda_.14} parent=77 // loop_exit
                _
            $region78: #{_lambda_.14} parent=69 // pred_fallthru
              _
          $region70: #{_lambda_.14} parent=65 // pred_fallthru
            _
          %271 = vnop
        $region66: #{_lambda_.14} parent=23 // pred_fallthru
          _
      $region24: #{_lambda_.14} parent=5 // pred_fallthru
        _
      %p272 = scmp.le.s32.totalorder 1, %s10
      %p273 = scmp.lt.s32.totalorder %s10, 11
      %p274 = pnand %p272, %p273
      %p275 = pneg %p274
      // Predicated region
      $region101: #{_lambda_.14} parent=5 // pred_check
        _
      $region102: #{_lambda_.14} parent=5 // pred_check_branch
        %277 = sbr.rel (%p274) target = $region104
      $region103: #{_lambda_.14} parent=5 // pred_region
        %s278 = ssub.s32 %s10, 1
        %s279 = sand.u32 %s37, 1
        %s280 = sand.u32 %s37, 1
        %s281 = smul.addr %s280, 16
        %s282 = scalar_lea.vmem [#allocation2], %s281
        // Predicated region
        $region105: #{_lambda_.14} parent=103 // pred_check
          %p283 = pneg %p50
        $region106: #{_lambda_.14} parent=103 // pred_check_branch
          %285 = sbr.rel (%p283) target = $region108
        $region107: #{_lambda_.14} parent=103 // pred_region
          _
        $region108: #{_lambda_.14} parent=103 // pred_fallthru
          _
        %s286 = sand.u32 %s67, 1
        %s287 = sand.u32 %s67, 1
        %s288 = smul.addr %s287, 16
        %s289 = scalar_lea.vmem [#allocation3], %s288
        // Predicated region
        $region109: #{_lambda_.14} parent=103 // pred_check
          %p290 = pneg %p80
        $region110: #{_lambda_.14} parent=103 // pred_check_branch
          %292 = sbr.rel (%p290) target = $region112
        $region111: #{_lambda_.14} parent=103 // pred_region
          _
        $region112: #{_lambda_.14} parent=103 // pred_fallthru
          _
        %s293 = sand.u32 %s37, 1
        %s294 = sand.u32 %s37, 1
        %s295 = smul.addr %s294, 16
        %s296 = scalar_lea.vmem [#allocation2], %s295
        %p297 = pneg %p50
        %p298 = pneg %p47
        %s299 = sand.u32 %s67, 1
        %s300 = sand.u32 %s67, 1
        %s301 = smul.addr %s300, 16
        %s302 = scalar_lea.vmem [#allocation3], %s301
        %p303 = pneg %p80
        %p304 = pneg %p77
        %p305 = pneg %p101
        %p306 = pneg %p98
        %p307 = pneg %p122
        %p308 = pneg %p119
        %p309 = pneg %p150
        %p310 = pneg %p147
        %s311 = sand.u32 %s137, 1
        %s312 = sand.u32 %s137, 1
        %s313 = smul.addr %s312, 16
        %s314 = scalar_lea.vmem [#allocation4], %s313
        %s315 = sadd.s32 %s20, 1
        %v317 = vld [vmem:[%s282] sm:$0xff]
        %v318 = vld [vmem:[%s282 + $0x8] sm:$0xff]
        %v319 = vld [vmem:[%s289] sm:$0xff]
        %v320 = vld [vmem:[%s289 + $0x8] sm:$0xff]
        %vm321 = vcmp.gt.f32.partialorder %v317, 0.0
        %vm322 = vcmp.gt.f32.partialorder %v319, 0.0
        %vm323 = vcmp.gt.f32.partialorder %v318, 0.0
        %vm324 = vcmp.gt.f32.partialorder %v320, 0.0
        %v325 = vmul.f32 %v317, 0.01
        %v326 = vmul.f32 %v319, 0.01
        %v327 = vmul.f32 %v318, 0.01
        %v328 = vmul.f32 %v320, 0.01
        %v329 = vsel %vm321, %v317, %v325
        %v330 = vsel %vm322, %v319, %v326
        %v331 = vsel %vm323, %v318, %v327
        %v332 = vsel %vm324, %v320, %v328
        %337 = vrot.lane.b32.xlu0 %v329, 127
        %v338 = vpop.permute.xlu0 %337
        %339 = vrot.lane.b32.xlu0 %v330, 127
        %v340 = vpop.permute.xlu0 %339
        %341 = vrot.lane.b32.xlu0 %v331, 127
        %v342 = vpop.permute.xlu0 %341
        %343 = vrot.lane.b32.xlu0 %v332, 127
        %v344 = vpop.permute.xlu0 %343
        %vm345 = vcmask 1039360
        %v346 = vsel %vm345, %v338, %v340
        %v347 = vsel %vm345, %v342, %v344
        %350 = vrot.lane.b32.xlu0 %v329, 126
        %v351 = vpop.permute.xlu0 %350
        %352 = vrot.lane.b32.xlu0 %v330, 126
        %v353 = vpop.permute.xlu0 %352
        %354 = vrot.lane.b32.xlu0 %v331, 126
        %v355 = vpop.permute.xlu0 %354
        %356 = vrot.lane.b32.xlu0 %v332, 126
        %v357 = vpop.permute.xlu0 %356
        %vm358 = vcmask 1031168
        %v359 = vsel %vm358, %v351, %v353
        %v360 = vsel %vm358, %v355, %v357
        %v363 = vpack.c.bf16 %v331, %v329
        %v364 = vpack.c.bf16 %v347, %v346
        %v365 = vpack.c.bf16 %v360, %v359
        %v366 = vld [vmem:[%s2] sm:$0xf]
        %v367 = vld [vmem:[%s2 + $0x4] sm:$0xf]
        %v368 = vld [vmem:[%s3] sm:$0xff]
        %v369 = vld [vmem:[%s3 + $0x8] sm:$0xff]
        %371 = vset.pattern.permute.xlu0 0
        %372 = vperm.xlu0 %371, %v368
        %v373 = vpop.permute.xlu0 %372
        %376 = vset.pattern.permute.xlu0 0
        %377 = vperm.xlu0 %376, %v369
        %v378 = vpop.permute.xlu0 %377
        %v382 = vunpack.c.l.b16 %v366
        %v383 = vunpack.c.l.b16 %v367
        %v384 = vpack.c.b16 %v383, %v382
        %vm385 = vcmask 392192
        %v387 = vsel %vm385, %v384, 0
        %389 = vmatprep.subr.bf16.mxu0 0
        %390 = vmatpush1.bf16.msra.mxu0 0
        %391 = vmatprep.subr.bf16.mxu0 0
        %392 = vmatpush1.bf16.msra.mxu0 0
        %393 = vmatprep.subr.bf16.mxu0 0
        %394 = vmatpush1.bf16.msra.mxu0 0
        %395 = vmatprep.subr.bf16.mxu0 0
        %396 = vmatpush1.bf16.msra.mxu0 0
        %397 = vmatprep.subr.bf16.mxu0 0
        %398 = vmatpush1.bf16.msra.mxu0 0
        %399 = vmatprep.subr.bf16.mxu0 0
        %400 = vmatpush1.bf16.msra.mxu0 %v365
        %401 = vmatprep.subr.bf16.mxu0 0
        %402 = vmatpush1.bf16.msra.mxu0 %v364
        %403 = vmatprep.subr.bf16.mxu0 0
        %404 = vmatpush1.bf16.msra.mxu0 %v363
        %405 = vmatprep.subr.bf16.mxu0 0
        %406 = vmatpush2.bf16.msra.mxu0 0
        %407 = vmatprep.subr.bf16.mxu0 0
        %408 = vmatpush2.bf16.msra.mxu0 0
        %409 = vmatprep.subr.bf16.mxu0 0
        %410 = vmatpush2.bf16.msra.mxu0 0
        %411 = vmatprep.subr.bf16.mxu0 0
        %412 = vmatpush2.bf16.msra.mxu0 0
        %413 = vmatprep.subr.bf16.mxu0 0
        %414 = vmatpush2.bf16.msra.mxu0 0
        %415 = vmatprep.subr.bf16.mxu0 0
        %416 = vmatpush2.bf16.msra.mxu0 0
        %417 = vmatprep.subr.bf16.mxu0 0
        %418 = vmatpush2.bf16.msra.mxu0 0
        %419 = vmatprep.subr.bf16.mxu0 0
        %420 = vmatpush2.bf16.msra.mxu0 0
        %421 = vmatprep.mubr.bf16.mxu0 0
        %422 = vmatmul.mubr.bf16.gmra.mxu0 %v387
        %v423 = vpop.f32.mrf.mxu0
        %v424 = vadd.f32 %v373, %v423
        %v425 = vpop.f32.mrf.mxu0
        %v426 = vpop.f32.mrf.mxu0
        %v427 = vadd.f32 %v378, %v426
        %v428 = vpop.f32.mrf.mxu0
        %429 = vdwg.mxu0
        %434 = vrot.lane.b32.xlu0 %v317, 127
        %v435 = vpop.permute.xlu0 %434
        %436 = vrot.lane.b32.xlu0 %v319, 127
        %v437 = vpop.permute.xlu0 %436
        %438 = vrot.lane.b32.xlu0 %v318, 127
        %v439 = vpop.permute.xlu0 %438
        %440 = vrot.lane.b32.xlu0 %v320, 127
        %v441 = vpop.permute.xlu0 %440
        %v442 = vsel %vm345, %v435, %v437
        %v443 = vsel %vm345, %v439, %v441
        %v446 = vadd.f32 %v424, %v442
        %v447 = vadd.f32 %v427, %v443
        %448 = vst [vmem:[%s314] sm:$0xff] %v446
        %449 = vst [vmem:[%s314 + $0x8] sm:$0xff] %v447
        %s450 = sand.u32 %s137, 1
        %s451 = sand.u32 %s137, 1
        %s452 = smul.addr %s451, 16
        %s453 = scalar_lea.vmem [#allocation4], %s452
        // Predicated region
        $region113: #{_lambda_.14} parent=103 // pred_check
          %p454 = pneg %p147
        $region114: #{_lambda_.14} parent=103 // pred_check_branch
          %456 = sbr.rel (%p454) target = $region116
        $region115: #{_lambda_.14} parent=103 // pred_region
          %s457 = smul.addr %s19, 10
          %s458 = sadd.s32 %s20, %s457
          %s459 = smul.addr %s458, 8
          %s460 = scalar_lea.vmem %s4, %s459
          // Predicated region
          $region117: #{_lambda_.14} parent=115 // pred_check
            _
          $region118: #{_lambda_.14} parent=115 // pred_check_branch
            %462 = sbr.rel (0) target = $region120
          $region119: #{_lambda_.14} parent=115 // pred_region
            // Predicated region
            $region121: #{_lambda_.14} parent=119 // pred_check
              _
            $region122: #{_lambda_.14} parent=119 // pred_check_branch
              %464 = sbr.rel (0) target = $region124
            $region123: #{_lambda_.14} parent=119 // pred_region
              // Predicated region
              $region136: #{_lambda_.14} parent=123 // pred_check
                _
              $region137: #{_lambda_.14} parent=123 // pred_check_branch
                %482 = sbr.rel (0) target = $region139
              $region138: #{_lambda_.14} parent=123 // pred_region
                loop: start=0, step=1, limit=1
                $region140: #{_lambda_.14} parent=138 // loop_pre_header
                  _
                $region141: #{_lambda_.14} parent=138 // loop_header
                  %s484 = sphi 0, %s488
                  %p485 = scmp.ge.s32.totalorder %s484, 1
                  %s489 = sphi %s453, %s453
                  %s490 = sphi %s460, %s460
                $region142: #{_lambda_.14} parent=138 // loop_header_branch
                  %487 = sbr.rel (%p485) target = $region146
                $region143: #{_lambda_.14} parent=138 // loop_body
                  %v491 = vld [vmem:[%s489] sm:$0xff]
                  %492 = vst [vmem:[%s490] sm:$0xff] %v491
                  %v493 = vld [vmem:[%s489 + $0x8] sm:$0xff]
                  %494 = vst [vmem:[%s490 + $0x28] sm:$0xff] %v493
                $region144: #{_lambda_.14} parent=138 // loop_footer
                  %s488 = sadd.s32 1, %s484
                $region145: #{_lambda_.14} parent=138 // loop_footer_branch
                  %483 = sbr.rel target = $region141
                $region146: #{_lambda_.14} parent=138 // loop_exit
                  _
              $region139: #{_lambda_.14} parent=123 // pred_fallthru
                _
              // Predicated region
              $region147: #{_lambda_.14} parent=123 // pred_check
                _
              $region148: #{_lambda_.14} parent=123 // pred_check_branch
                %496 = sbr.rel target = $region150
              $region149: #{_lambda_.14} parent=123 // pred_region
                _
              $region150: #{_lambda_.14} parent=123 // pred_fallthru
                _
            $region124: #{_lambda_.14} parent=119 // pred_fallthru
              _
            // Predicated region
            $region125: #{_lambda_.14} parent=119 // pred_check
              _
            $region126: #{_lambda_.14} parent=119 // pred_check_branch
              %466 = sbr.rel target = $region128
            $region127: #{_lambda_.14} parent=119 // pred_region
              %s468 = ssub.s32 256, 1
              loop: start=0, step=1, limit=1
              $region129: #{_lambda_.14} parent=127 // loop_pre_header
                _
              $region130: #{_lambda_.14} parent=127 // loop_header
                %s470 = sphi 0, %s474
                %p471 = scmp.ge.s32.totalorder %s470, 1
                %s475 = sphi %s453, %s453
                %s476 = sphi %s460, %s460
              $region131: #{_lambda_.14} parent=127 // loop_header_branch
                %473 = sbr.rel (%p471) target = $region135
              $region132: #{_lambda_.14} parent=127 // loop_body
                %v477 = vld [vmem:[%s475] sm:%s468]
                %478 = vst [vmem:[%s476] sm:%s468] %v477
                %v479 = vld [vmem:[%s475 + $0x8] sm:%s468]
                %480 = vst [vmem:[%s476 + $0x28] sm:%s468] %v479
              $region133: #{_lambda_.14} parent=127 // loop_footer
                %s474 = sadd.s32 1, %s470
              $region134: #{_lambda_.14} parent=127 // loop_footer_branch
                %469 = sbr.rel target = $region130
              $region135: #{_lambda_.14} parent=127 // loop_exit
                _
            $region128: #{_lambda_.14} parent=119 // pred_fallthru
              _
          $region120: #{_lambda_.14} parent=115 // pred_fallthru
            _
          %497 = vnop
        $region116: #{_lambda_.14} parent=103 // pred_fallthru
          _
      $region104: #{_lambda_.14} parent=5 // pred_fallthru
        _
      %p498 = scmp.le.s32.totalorder 2, %s10
      // Predicated region
      $region151: #{_lambda_.14} parent=5 // pred_check
        %p499 = pneg %p498
      $region152: #{_lambda_.14} parent=5 // pred_check_branch
        %501 = sbr.rel (%p499) target = $region154
      $region153: #{_lambda_.14} parent=5 // pred_region
        %s502 = ssub.s32 %s10, 2
        // Predicated region
        $region155: #{_lambda_.14} parent=153 // pred_check
          %p503 = pneg %p153
        $region156: #{_lambda_.14} parent=153 // pred_check_branch
          %505 = sbr.rel (%p503) target = $region158
        $region157: #{_lambda_.14} parent=153 // pred_region
          %s506 = sand.u32 %s138, 1
          %s507 = sand.u32 %s138, 1
          %s508 = smul.addr %s507, 16
          %s509 = scalar_lea.vmem [#allocation4], %s508
        $region158: #{_lambda_.14} parent=153 // pred_fallthru
          _
      $region154: #{_lambda_.14} parent=5 // pred_fallthru
        _
    $region6: #{_lambda_.14} parent=1 // loop_footer
      %s14 = sadd.s32 1, %s10
    $region7: #{_lambda_.14} parent=1 // loop_footer_branch
      %9 = sbr.rel target = $region3
    $region8: #{_lambda_.14} parent=1 // loop_exit
      _

// kernel: _lambda_.18
$region0: #{_lambda_.18}
  #allocation0 [shape = 'u32[]', space=smem, size = 0x4, offset = 0x4, fixed_abs, tag = 'smem constant byte address 0x4 - core index']
  #allocation1 [shape = 'u32[144,128]{1,0:T(1,128)}', space=vmem, size = 0x12000, scoped, tag = 'internal scratch']
  %s0 = inlined_call_operand.vmem [shape: f32[2,16,768], index: 0, kind: input, shape index: {}, may-alias: {0,1}]
  %s1 = inlined_call_operand.vmem [shape: f32[2,16,768], index: 1, kind: input, shape index: {}, may-alias: {0,1}]
  %s2 = inlined_call_operand.vmem [shape: bf16[2,8,32], index: 2, kind: input, shape index: {}]
  %s3 = inlined_call_operand.vmem [shape: f32[8,1], index: 3, kind: input, shape index: {}]
  %s4 = inlined_call_operand.vmem [shape: f32[2,2,8,640], index: 4, kind: output, shape index: {}]
  %s5 = sld [smem:[#allocation0]]
  $region159: #{_lambda_.18} parent=0
    _
  %s7 = ssub.s32 1, %s5
  %s8 = scalar_select 0, %s7, %s5
  $region1: #{_lambda_.18} parent=0
    #allocation2 [shape = 'u8[16384]{0}', space=vmem, size = 0x4000, scoped, tag = 'input window, operand 0']
    #allocation3 [shape = 'u8[16384]{0}', space=vmem, size = 0x4000, scoped, tag = 'input window, operand 1']
    #allocation4 [shape = 'u8[16384]{0}', space=vmem, size = 0x4000, scoped, tag = 'output window, operand 0']
    loop: start=0, step=1, limit=12
    $region2: #{_lambda_.18} parent=1 // loop_pre_header
      _
    $region3: #{_lambda_.18} parent=1 // loop_header
      %s10 = sphi 0, %s14
      %p11 = scmp.ge.s32.totalorder %s10, 12
      %s17 = sphi 0, %s29
      %s18 = sphi 0, %s25
      %s19 = sphi 0, %s17
      %s20 = sphi 0, %s18
      %s21 = sphi 0, %s19
      %s22 = sphi 0, %s20
      %s34 = sphi 0, %s36
      %s37 = sphi 0, %s34
      %s38 = sphi 0, %s37
      %s54 = sphi 0, %s38
      %s64 = sphi 0, %s66
      %s67 = sphi 0, %s64
      %s68 = sphi 0, %s67
      %s84 = sphi 0, %s68
      %s88 = sphi 0, %s88
      %s90 = sphi 0, %s88
      %s91 = sphi 0, %s90
      %s105 = sphi 0, %s91
      %s109 = sphi 0, %s109
      %s111 = sphi 0, %s109
      %s112 = sphi 0, %s111
      %s126 = sphi 0, %s112
      %s134 = sphi 0, %s136
      %s137 = sphi 0, %s134
      %s138 = sphi 0, %s137
      %s154 = sphi 0, %s138
    $region4: #{_lambda_.18} parent=1 // loop_header_branch
      %13 = sbr.rel (%p11) target = $region8
    $region5: #{_lambda_.18} parent=1 // loop_body
      %s15 = ssub.s32 %s10, 1
      %s16 = ssub.s32 %s10, 2
      %s23 = sadd.s32 1, %s18
      %p24 = scmp.ge.s32.totalorder %s23, 5
      %s25 = scalar_select %p24, 0, %s23
      %s26 = sadd.s32 1, %s17
      %s27 = scalar_select %p24, %s26, %s17
      %p28 = scmp.ge.s32.totalorder %s27, 2
      %s29 = scalar_select %p28, 0, %s27
      %s30 = ssub.s32 %s17, %s29
      %s31 = ssub.s32 %s18, %s25
      %s32 = sor.u32 %s30, %s31
      %p33 = scmp.eq.s32.totalorder %s32, 0
      %s35 = sadd.s32 %s34, 1
      %s36 = scalar_select %p33, %s34, %s35
      %p39 = pneg %p33
      %p40 = scmp.eq.s32.totalorder %s10, 9
      %p41 = por %p39, %p40
      %p42 = scmp.ne.s32.totalorder %s34, %s37
      %p43 = scmp.eq.s32.totalorder %s10, 0
      %p44 = por %p42, %p43
      %p45 = scmp.ne.s32.totalorder %s34, %s37
      %p46 = scmp.eq.s32.totalorder %s15, 9
      %p47 = por %p45, %p46
      %p48 = scmp.ne.s32.totalorder %s37, %s38
      %p49 = scmp.eq.s32.totalorder %s15, 0
      %p50 = por %p48, %p49
      %p51 = scmp.ne.s32.totalorder %s37, %s38
      %p52 = scmp.eq.s32.totalorder %s16, 9
      %p53 = por %p51, %p52
      %p55 = scmp.ne.s32.totalorder %s38, %s54
      %p56 = scmp.eq.s32.totalorder %s16, 0
      %p57 = por %p55, %p56
      %s58 = sadd.s32 %s18, 1
      %s59 = sadd.s32 %s25, 1
      %s60 = ssub.s32 %s17, %s29
      %s61 = ssub.s32 %s58, %s59
      %s62 = sor.u32 %s60, %s61
      %p63 = scmp.eq.s32.totalorder %s62, 0
      %s65 = sadd.s32 %s64, 1
      %s66 = scalar_select %p63, %s64, %s65
      %p69 = pneg %p63
      %p70 = scmp.eq.s32.totalorder %s10, 9
      %p71 = por %p69, %p70
      %p72 = scmp.ne.s32.totalorder %s64, %s67
      %p73 = scmp.eq.s32.totalorder %s10, 0
      %p74 = por %p72, %p73
      %p75 = scmp.ne.s32.totalorder %s64, %s67
      %p76 = scmp.eq.s32.totalorder %s15, 9
      %p77 = por %p75, %p76
      %p78 = scmp.ne.s32.totalorder %s67, %s68
      %p79 = scmp.eq.s32.totalorder %s15, 0
      %p80 = por %p78, %p79
      %p81 = scmp.ne.s32.totalorder %s67, %s68
      %p82 = scmp.eq.s32.totalorder %s16, 9
      %p83 = por %p81, %p82
      %p85 = scmp.ne.s32.totalorder %s68, %s84
      %p86 = scmp.eq.s32.totalorder %s16, 0
      %p87 = por %p85, %p86
      %s89 = sadd.s32 %s88, 1
      %p92 = scmp.eq.s32.totalorder %s10, 9
      %p93 = scmp.ne.s32.totalorder %s88, %s90
      %p94 = scmp.eq.s32.totalorder %s10, 0
      %p95 = por %p93, %p94
      %p96 = scmp.ne.s32.totalorder %s88, %s90
      %p97 = scmp.eq.s32.totalorder %s15, 9
      %p98 = por %p96, %p97
      %p99 = scmp.ne.s32.totalorder %s90, %s91
      %p100 = scmp.eq.s32.totalorder %s15, 0
      %p101 = por %p99, %p100
      %p102 = scmp.ne.s32.totalorder %s90, %s91
      %p103 = scmp.eq.s32.totalorder %s16, 9
      %p104 = por %p102, %p103
      %p106 = scmp.ne.s32.totalorder %s91, %s105
      %p107 = scmp.eq.s32.totalorder %s16, 0
      %p108 = por %p106, %p107
      %s110 = sadd.s32 %s109, 1
      %p113 = scmp.eq.s32.totalorder %s10, 9
      %p114 = scmp.ne.s32.totalorder %s109, %s111
      %p115 = scmp.eq.s32.totalorder %s10, 0
      %p116 = por %p114, %p115
      %p117 = scmp.ne.s32.totalorder %s109, %s111
      %p118 = scmp.eq.s32.totalorder %s15, 9
      %p119 = por %p117, %p118
      %p120 = scmp.ne.s32.totalorder %s111, %s112
      %p121 = scmp.eq.s32.totalorder %s15, 0
      %p122 = por %p120, %p121
      %p123 = scmp.ne.s32.totalorder %s111, %s112
      %p124 = scmp.eq.s32.totalorder %s16, 9
      %p125 = por %p123, %p124
      %p127 = scmp.ne.s32.totalorder %s112, %s126
      %p128 = scmp.eq.s32.totalorder %s16, 0
      %p129 = por %p127, %p128
      %s130 = ssub.s32 %s17, %s29
      %s131 = ssub.s32 %s18, %s25
      %s132 = sor.u32 %s130, %s131
      %p133 = scmp.eq.s32.totalorder %s132, 0
      %s135 = sadd.s32 %s134, 1
      %s136 = scalar_select %p133, %s134, %s135
      %p139 = pneg %p133
      %p140 = scmp.eq.s32.totalorder %s10, 9
      %p141 = por %p139, %p140
      %p142 = scmp.ne.s32.totalorder %s134, %s137
      %p143 = scmp.eq.s32.totalorder %s10, 0
      %p144 = por %p142, %p143
      %p145 = scmp.ne.s32.totalorder %s134, %s137
      %p146 = scmp.eq.s32.totalorder %s15, 9
      %p147 = por %p145, %p146
      %p148 = scmp.ne.s32.totalorder %s137, %s138
      %p149 = scmp.eq.s32.totalorder %s15, 0
      %p150 = por %p148, %p149
      %p151 = scmp.ne.s32.totalorder %s137, %s138
      %p152 = scmp.eq.s32.totalorder %s16, 9
      %p153 = por %p151, %p152
      %p155 = scmp.ne.s32.totalorder %s138, %s154
      %p156 = scmp.eq.s32.totalorder %s16, 0
      %p157 = por %p155, %p156
      %p158 = scmp.le.s32.totalorder 1, %s10
      %p159 = scmp.lt.s32.totalorder %s10, 11
      %p160 = pnand %p158, %p159
      %p161 = pneg %p160
      // Predicated region
      $region9: #{_lambda_.18} parent=5 // pred_check
        _
      $region10: #{_lambda_.18} parent=5 // pred_check_branch
        %163 = sbr.rel (%p160) target = $region12
      $region11: #{_lambda_.18} parent=5 // pred_region
        %s164 = ssub.s32 %s10, 1
        // Predicated region
        $region13: #{_lambda_.18} parent=11 // pred_check
          %p165 = pneg %p101
        $region14: #{_lambda_.18} parent=11 // pred_check_branch
          %167 = sbr.rel (%p165) target = $region16
        $region15: #{_lambda_.18} parent=11 // pred_region
          _
        $region16: #{_lambda_.18} parent=11 // pred_fallthru
          _
        // Predicated region
        $region17: #{_lambda_.18} parent=11 // pred_check
          %p168 = pneg %p122
        $region18: #{_lambda_.18} parent=11 // pred_check_branch
          %170 = sbr.rel (%p168) target = $region20
        $region19: #{_lambda_.18} parent=11 // pred_region
          _
        $region20: #{_lambda_.18} parent=11 // pred_fallthru
          _
      $region12: #{_lambda_.18} parent=5 // pred_fallthru
        _
      %p171 = scmp.lt.s32.totalorder %s10, 10
      // Predicated region
      $region21: #{_lambda_.18} parent=5 // pred_check
        %p172 = pneg %p171
      $region22: #{_lambda_.18} parent=5 // pred_check_branch
        %174 = sbr.rel (%p172) target = $region24
      $region23: #{_lambda_.18} parent=5 // pred_region
        // Predicated region
        $region25: #{_lambda_.18} parent=23 // pred_check
          %p175 = pneg %p44
        $region26: #{_lambda_.18} parent=23 // pred_check_branch
          %177 = sbr.rel (%p175) target = $region28
        $region27: #{_lambda_.18} parent=23 // pred_region
          %s178 = sand.u32 %s34, 1
          %s179 = sand.u32 %s34, 1
          %s180 = smul.addr %s179, 16
          %s181 = scalar_lea.vmem [#allocation2], %s180
          %s182 = smul.addr %s17, 12
          %s183 = sadd.s32 %s18, %s182
          %s184 = smul.addr %s183, 8
          %s185 = scalar_lea.vmem %s0, %s184
          // Predicated region
          $region29: #{_lambda_.18} parent=27 // pred_check
            _
          $region30: #{_lambda_.18} parent=27 // pred_check_branch
            %187 = sbr.rel (0) target = $region32
          $region31: #{_lambda_.18} parent=27 // pred_region
            // Predicated region
            $region33: #{_lambda_.18} parent=31 // pred_check
              _
            $region34: #{_lambda_.18} parent=31 // pred_check_branch
              %189 = sbr.rel (0) target = $region36
            $region35: #{_lambda_.18} parent=31 // pred_region
              // Predicated region
              $region48: #{_lambda_.18} parent=35 // pred_check
                _
              $region49: #{_lambda_.18} parent=35 // pred_check_branch
                %207 = sbr.rel (0) target = $region51
              $region50: #{_lambda_.18} parent=35 // pred_region
                loop: start=0, step=1, limit=1
                $region52: #{_lambda_.18} parent=50 // loop_pre_header
                  _
                $region53: #{_lambda_.18} parent=50 // loop_header
                  %s209 = sphi 0, %s213
                  %p210 = scmp.ge.s32.totalorder %s209, 1
                  %s214 = sphi %s185, %s185
                  %s215 = sphi %s181, %s181
                $region54: #{_lambda_.18} parent=50 // loop_header_branch
                  %212 = sbr.rel (%p210) target = $region58
                $region55: #{_lambda_.18} parent=50 // loop_body
                  %v216 = vld [vmem:[%s214] sm:$0xff]
                  %217 = vst [vmem:[%s215] sm:$0xff] %v216
                  %v218 = vld [vmem:[%s214 + $0x30] sm:$0xff]
                  %219 = vst [vmem:[%s215 + $0x8] sm:$0xff] %v218
                $region56: #{_lambda_.18} parent=50 // loop_footer
                  %s213 = sadd.s32 1, %s209
                $region57: #{_lambda_.18} parent=50 // loop_footer_branch
                  %208 = sbr.rel target = $region53
                $region58: #{_lambda_.18} parent=50 // loop_exit
                  _
              $region51: #{_lambda_.18} parent=35 // pred_fallthru
                _
              // Predicated region
              $region59: #{_lambda_.18} parent=35 // pred_check
                _
              $region60: #{_lambda_.18} parent=35 // pred_check_branch
                %221 = sbr.rel target = $region62
              $region61: #{_lambda_.18} parent=35 // pred_region
                _
              $region62: #{_lambda_.18} parent=35 // pred_fallthru
                _
            $region36: #{_lambda_.18} parent=31 // pred_fallthru
              _
            // Predicated region
            $region37: #{_lambda_.18} parent=31 // pred_check
              _
            $region38: #{_lambda_.18} parent=31 // pred_check_branch
              %191 = sbr.rel target = $region40
            $region39: #{_lambda_.18} parent=31 // pred_region
              %s193 = ssub.s32 256, 1
              loop: start=0, step=1, limit=1
              $region41: #{_lambda_.18} parent=39 // loop_pre_header
                _
              $region42: #{_lambda_.18} parent=39 // loop_header
                %s195 = sphi 0, %s199
                %p196 = scmp.ge.s32.totalorder %s195, 1
                %s200 = sphi %s185, %s185
                %s201 = sphi %s181, %s181
              $region43: #{_lambda_.18} parent=39 // loop_header_branch
                %198 = sbr.rel (%p196) target = $region47
              $region44: #{_lambda_.18} parent=39 // loop_body
                %v202 = vld [vmem:[%s200] sm:%s193]
                %203 = vst [vmem:[%s201] sm:%s193] %v202
                %v204 = vld [vmem:[%s200 + $0x30] sm:%s193]
                %205 = vst [vmem:[%s201 + $0x8] sm:%s193] %v204
              $region45: #{_lambda_.18} parent=39 // loop_footer
                %s199 = sadd.s32 1, %s195
              $region46: #{_lambda_.18} parent=39 // loop_footer_branch
                %194 = sbr.rel target = $region42
              $region47: #{_lambda_.18} parent=39 // loop_exit
                _
            $region40: #{_lambda_.18} parent=31 // pred_fallthru
              _
          $region32: #{_lambda_.18} parent=27 // pred_fallthru
            _
          %222 = vnop
        $region28: #{_lambda_.18} parent=23 // pred_fallthru
          _
        // Predicated region
        $region63: #{_lambda_.18} parent=23 // pred_check
          %p223 = pneg %p74
        $region64: #{_lambda_.18} parent=23 // pred_check_branch
          %225 = sbr.rel (%p223) target = $region66
        $region65: #{_lambda_.18} parent=23 // pred_region
          %s226 = sand.u32 %s64, 1
          %s227 = sand.u32 %s64, 1
          %s228 = smul.addr %s227, 16
          %s229 = scalar_lea.vmem [#allocation3], %s228
          %s230 = sadd.s32 %s18, 1
          %s231 = smul.addr %s17, 12
          %s232 = sadd.s32 %s230, %s231
          %s233 = smul.addr %s232, 8
          %s234 = scalar_lea.vmem %s1, %s233
          // Predicated region
          $region67: #{_lambda_.18} parent=65 // pred_check
            _
          $region68: #{_lambda_.18} parent=65 // pred_check_branch
            %236 = sbr.rel (0) target = $region70
          $region69: #{_lambda_.18} parent=65 // pred_region
            // Predicated region
            $region71: #{_lambda_.18} parent=69 // pred_check
              _
            $region72: #{_lambda_.18} parent=69 // pred_check_branch
              %238 = sbr.rel (0) target = $region74
            $region73: #{_lambda_.18} parent=69 // pred_region
              // Predicated region
              $region86: #{_lambda_.18} parent=73 // pred_check
                _
              $region87: #{_lambda_.18} parent=73 // pred_check_branch
                %256 = sbr.rel (0) target = $region89
              $region88: #{_lambda_.18} parent=73 // pred_region
                loop: start=0, step=1, limit=1
                $region90: #{_lambda_.18} parent=88 // loop_pre_header
                  _
                $region91: #{_lambda_.18} parent=88 // loop_header
                  %s258 = sphi 0, %s262
                  %p259 = scmp.ge.s32.totalorder %s258, 1
                  %s263 = sphi %s234, %s234
                  %s264 = sphi %s229, %s229
                $region92: #{_lambda_.18} parent=88 // loop_header_branch
                  %261 = sbr.rel (%p259) target = $region96
                $region93: #{_lambda_.18} parent=88 // loop_body
                  %v265 = vld [vmem:[%s263] sm:$0xff]
                  %266 = vst [vmem:[%s264] sm:$0xff] %v265
                  %v267 = vld [vmem:[%s263 + $0x30] sm:$0xff]
                  %268 = vst [vmem:[%s264 + $0x8] sm:$0xff] %v267
                $region94: #{_lambda_.18} parent=88 // loop_footer
                  %s262 = sadd.s32 1, %s258
                $region95: #{_lambda_.18} parent=88 // loop_footer_branch
                  %257 = sbr.rel target = $region91
                $region96: #{_lambda_.18} parent=88 // loop_exit
                  _
              $region89: #{_lambda_.18} parent=73 // pred_fallthru
                _
              // Predicated region
              $region97: #{_lambda_.18} parent=73 // pred_check
                _
              $region98: #{_lambda_.18} parent=73 // pred_check_branch
                %270 = sbr.rel target = $region100
              $region99: #{_lambda_.18} parent=73 // pred_region
                _
              $region100: #{_lambda_.18} parent=73 // pred_fallthru
                _
            $region74: #{_lambda_.18} parent=69 // pred_fallthru
              _
            // Predicated region
            $region75: #{_lambda_.18} parent=69 // pred_check
              _
            $region76: #{_lambda_.18} parent=69 // pred_check_branch
              %240 = sbr.rel target = $region78
            $region77: #{_lambda_.18} parent=69 // pred_region
              %s242 = ssub.s32 256, 1
              loop: start=0, step=1, limit=1
              $region79: #{_lambda_.18} parent=77 // loop_pre_header
                _
              $region80: #{_lambda_.18} parent=77 // loop_header
                %s244 = sphi 0, %s248
                %p245 = scmp.ge.s32.totalorder %s244, 1
                %s249 = sphi %s234, %s234
                %s250 = sphi %s229, %s229
              $region81: #{_lambda_.18} parent=77 // loop_header_branch
                %247 = sbr.rel (%p245) target = $region85
              $region82: #{_lambda_.18} parent=77 // loop_body
                %v251 = vld [vmem:[%s249] sm:%s242]
                %252 = vst [vmem:[%s250] sm:%s242] %v251
                %v253 = vld [vmem:[%s249 + $0x30] sm:%s242]
                %254 = vst [vmem:[%s250 + $0x8] sm:%s242] %v253
              $region83: #{_lambda_.18} parent=77 // loop_footer
                %s248 = sadd.s32 1, %s244
              $region84: #{_lambda_.18} parent=77 // loop_footer_branch
                %243 = sbr.rel target = $region80
              $region85: #{_lambda_.18} parent=77 // loop_exit
                _
            $region78: #{_lambda_.18} parent=69 // pred_fallthru
              _
          $region70: #{_lambda_.18} parent=65 // pred_fallthru
            _
          %271 = vnop
        $region66: #{_lambda_.18} parent=23 // pred_fallthru
          _
      $region24: #{_lambda_.18} parent=5 // pred_fallthru
        _
      %p272 = scmp.le.s32.totalorder 1, %s10
      %p273 = scmp.lt.s32.totalorder %s10, 11
      %p274 = pnand %p272, %p273
      %p275 = pneg %p274
      // Predicated region
      $region101: #{_lambda_.18} parent=5 // pred_check
        _
      $region102: #{_lambda_.18} parent=5 // pred_check_branch
        %277 = sbr.rel (%p274) target = $region104
      $region103: #{_lambda_.18} parent=5 // pred_region
        %s278 = ssub.s32 %s10, 1
        %s279 = sand.u32 %s37, 1
        %s280 = sand.u32 %s37, 1
        %s281 = smul.addr %s280, 16
        %s282 = scalar_lea.vmem [#allocation2], %s281
        // Predicated region
        $region105: #{_lambda_.18} parent=103 // pred_check
          %p283 = pneg %p50
        $region106: #{_lambda_.18} parent=103 // pred_check_branch
          %285 = sbr.rel (%p283) target = $region108
        $region107: #{_lambda_.18} parent=103 // pred_region
          _
        $region108: #{_lambda_.18} parent=103 // pred_fallthru
          _
        %s286 = sand.u32 %s67, 1
        %s287 = sand.u32 %s67, 1
        %s288 = smul.addr %s287, 16
        %s289 = scalar_lea.vmem [#allocation3], %s288
        // Predicated region
        $region109: #{_lambda_.18} parent=103 // pred_check
          %p290 = pneg %p80
        $region110: #{_lambda_.18} parent=103 // pred_check_branch
          %292 = sbr.rel (%p290) target = $region112
        $region111: #{_lambda_.18} parent=103 // pred_region
          _
        $region112: #{_lambda_.18} parent=103 // pred_fallthru
          _
        %s293 = sand.u32 %s37, 1
        %s294 = sand.u32 %s37, 1
        %s295 = smul.addr %s294, 16
        %s296 = scalar_lea.vmem [#allocation2], %s295
        %p297 = pneg %p50
        %p298 = pneg %p47
        %s299 = sand.u32 %s67, 1
        %s300 = sand.u32 %s67, 1
        %s301 = smul.addr %s300, 16
        %s302 = scalar_lea.vmem [#allocation3], %s301
        %p303 = pneg %p80
        %p304 = pneg %p77
        %p305 = pneg %p101
        %p306 = pneg %p98
        %p307 = pneg %p122
        %p308 = pneg %p119
        %p309 = pneg %p150
        %p310 = pneg %p147
        %s311 = sand.u32 %s137, 1
        %s312 = sand.u32 %s137, 1
        %s313 = smul.addr %s312, 16
        %s314 = scalar_lea.vmem [#allocation4], %s313
        %s315 = sadd.s32 %s20, 1
        %v317 = vld [vmem:[%s282] sm:$0xff]
        %v318 = vld [vmem:[%s282 + $0x8] sm:$0xff]
        %v319 = vld [vmem:[%s289] sm:$0xff]
        %v320 = vld [vmem:[%s289 + $0x8] sm:$0xff]
        %vm321 = vcmp.gt.f32.partialorder %v317, 0.0
        %vm322 = vcmp.gt.f32.partialorder %v319, 0.0
        %vm323 = vcmp.gt.f32.partialorder %v318, 0.0
        %vm324 = vcmp.gt.f32.partialorder %v320, 0.0
        %v325 = vmul.f32 %v317, 0.01
        %v326 = vmul.f32 %v319, 0.01
        %v327 = vmul.f32 %v318, 0.01
        %v328 = vmul.f32 %v320, 0.01
        %v329 = vsel %vm321, %v317, %v325
        %v330 = vsel %vm322, %v319, %v326
        %v331 = vsel %vm323, %v318, %v327
        %v332 = vsel %vm324, %v320, %v328
        %v333 = vld [vmem:[%s3] sm:$0xff]
        %338 = vrot.lane.b32.xlu0 %v329, 127
        %v339 = vpop.permute.xlu0 %338
        %340 = vrot.lane.b32.xlu0 %v330, 127
        %v341 = vpop.permute.xlu0 %340
        %342 = vrot.lane.b32.xlu0 %v331, 127
        %v343 = vpop.permute.xlu0 %342
        %344 = vrot.lane.b32.xlu0 %v332, 127
        %v345 = vpop.permute.xlu0 %344
        %vm346 = vcmask 1039360
        %v347 = vsel %vm346, %v339, %v341
        %v348 = vsel %vm346, %v343, %v345
        %v351 = vpack.c.bf16 %v331, %v329
        %v352 = vpack.c.bf16 %v348, %v347
        %v353 = vld [vmem:[%s2] sm:$0xf]
        %355 = vset.pattern.permute.xlu0 0
        %356 = vperm.xlu0 %355, %v333
        %v357 = vpop.permute.xlu0 %356
        %vm359 = vcmask 261120
        %v361 = vsel %vm359, %v353, 0
        %363 = vmatprep.subr.bf16.mxu0 0
        %364 = vmatpush1.bf16.msra.mxu0 0
        %365 = vmatprep.subr.bf16.mxu0 0
        %366 = vmatpush1.bf16.msra.mxu0 0
        %367 = vmatprep.subr.bf16.mxu0 0
        %368 = vmatpush1.bf16.msra.mxu0 0
        %369 = vmatprep.subr.bf16.mxu0 0
        %370 = vmatpush1.bf16.msra.mxu0 0
        %371 = vmatprep.subr.bf16.mxu0 0
        %372 = vmatpush1.bf16.msra.mxu0 0
        %373 = vmatprep.subr.bf16.mxu0 0
        %374 = vmatpush1.bf16.msra.mxu0 0
        %375 = vmatprep.subr.bf16.mxu0 0
        %376 = vmatpush1.bf16.msra.mxu0 %v352
        %377 = vmatprep.subr.bf16.mxu0 0
        %378 = vmatpush1.bf16.msra.mxu0 %v351
        %379 = vmatprep.subr.bf16.mxu0 0
        %380 = vmatpush2.bf16.msra.mxu0 0
        %381 = vmatprep.subr.bf16.mxu0 0
        %382 = vmatpush2.bf16.msra.mxu0 0
        %383 = vmatprep.subr.bf16.mxu0 0
        %384 = vmatpush2.bf16.msra.mxu0 0
        %385 = vmatprep.subr.bf16.mxu0 0
        %386 = vmatpush2.bf16.msra.mxu0 0
        %387 = vmatprep.subr.bf16.mxu0 0
        %388 = vmatpush2.bf16.msra.mxu0 0
        %389 = vmatprep.subr.bf16.mxu0 0
        %390 = vmatpush2.bf16.msra.mxu0 0
        %391 = vmatprep.subr.bf16.mxu0 0
        %392 = vmatpush2.bf16.msra.mxu0 0
        %393 = vmatprep.subr.bf16.mxu0 0
        %394 = vmatpush2.bf16.msra.mxu0 0
        %395 = vmatprep.mubr.bf16.mxu0 0
        %396 = vmatmul.mubr.bf16.gmra.mxu0 %v361
        %v397 = vpop.f32.mrf.mxu0
        %v398 = vadd.f32 %v357, %v397
        %v399 = vpop.f32.mrf.mxu0
        %v400 = vpop.f32.mrf.mxu0
        %v401 = vpop.f32.mrf.mxu0
        %402 = vdwg.mxu0
        %403 = vst [vmem:[%s314] sm:$0xff] %v398
        %v406 = vpack.c.bf16 %v332, %v330
        %v407 = vpack.c.bf16 %v345, %v341
        %s408 = scalar_lea.vmem %s2, 4
        %v409 = vld [vmem:[%s408] sm:$0xf]
        %414 = vrot.lane.b32.xlu0 %v351, 127
        %v415 = vpop.permute.xlu0 %414
        %416 = vrot.lane.b32.xlu0 %v406, 127
        %v417 = vpop.permute.xlu0 %416
        %418 = vrot.lane.b32.xlu0 %v352, 127
        %v419 = vpop.permute.xlu0 %418
        %420 = vrot.lane.b32.xlu0 %v407, 127
        %v421 = vpop.permute.xlu0 %420
        %vm422 = vcmask 1039360
        %v423 = vsel %vm422, %v415, %v417
        %v424 = vsel %vm422, %v419, %v421
        %v428 = vsel %vm359, %v409, 0
        %430 = vmatprep.subr.bf16.mxu0 0
        %431 = vmatpush1.bf16.msra.mxu0 0
        %432 = vmatprep.subr.bf16.mxu0 0
        %433 = vmatpush1.bf16.msra.mxu0 0
        %434 = vmatprep.subr.bf16.mxu0 0
        %435 = vmatpush1.bf16.msra.mxu0 0
        %436 = vmatprep.subr.bf16.mxu0 0
        %437 = vmatpush1.bf16.msra.mxu0 0
        %438 = vmatprep.subr.bf16.mxu0 0
        %439 = vmatpush1.bf16.msra.mxu0 0
        %440 = vmatprep.subr.bf16.mxu0 0
        %441 = vmatpush1.bf16.msra.mxu0 0
        %442 = vmatprep.subr.bf16.mxu0 0
        %443 = vmatpush1.bf16.msra.mxu0 %v424
        %444 = vmatprep.subr.bf16.mxu0 0
        %445 = vmatpush1.bf16.msra.mxu0 %v423
        %446 = vmatprep.subr.bf16.mxu0 0
        %447 = vmatpush2.bf16.msra.mxu0 0
        %448 = vmatprep.subr.bf16.mxu0 0
        %449 = vmatpush2.bf16.msra.mxu0 0
        %450 = vmatprep.subr.bf16.mxu0 0
        %451 = vmatpush2.bf16.msra.mxu0 0
        %452 = vmatprep.subr.bf16.mxu0 0
        %453 = vmatpush2.bf16.msra.mxu0 0
        %454 = vmatprep.subr.bf16.mxu0 0
        %455 = vmatpush2.bf16.msra.mxu0 0
        %456 = vmatprep.subr.bf16.mxu0 0
        %457 = vmatpush2.bf16.msra.mxu0 0
        %458 = vmatprep.subr.bf16.mxu0 0
        %459 = vmatpush2.bf16.msra.mxu0 0
        %460 = vmatprep.subr.bf16.mxu0 0
        %461 = vmatpush2.bf16.msra.mxu0 0
        %462 = vmatprep.mubr.bf16.mxu0 0
        %463 = vmatmul.mubr.bf16.gmra.mxu0 %v428
        %v464 = vpop.f32.mrf.mxu0
        %v465 = vadd.f32 %v357, %v464
        %v466 = vpop.f32.mrf.mxu0
        %v467 = vpop.f32.mrf.mxu0
        %v468 = vpop.f32.mrf.mxu0
        %469 = vdwg.mxu0
        %s470 = scalar_lea.vmem %s314, 8 [#allocation4]
        %471 = vst [vmem:[%s470] sm:$0xff] %v465
        %s472 = sand.u32 %s137, 1
        %s473 = sand.u32 %s137, 1
        %s474 = smul.addr %s473, 16
        %s475 = scalar_lea.vmem [#allocation4], %s474
        // Predicated region
        $region113: #{_lambda_.18} parent=103 // pred_check
          %p476 = pneg %p147
        $region114: #{_lambda_.18} parent=103 // pred_check_branch
          %478 = sbr.rel (%p476) target = $region116
        $region115: #{_lambda_.18} parent=103 // pred_region
          %s479 = smul.addr %s19, 10
          %s480 = sadd.s32 %s20, %s479
          %s481 = smul.addr %s480, 8
          %s482 = scalar_lea.vmem %s4, %s481
          // Predicated region
          $region117: #{_lambda_.18} parent=115 // pred_check
            _
          $region118: #{_lambda_.18} parent=115 // pred_check_branch
            %484 = sbr.rel (0) target = $region120
          $region119: #{_lambda_.18} parent=115 // pred_region
            // Predicated region
            $region121: #{_lambda_.18} parent=119 // pred_check
              _
            $region122: #{_lambda_.18} parent=119 // pred_check_branch
              %486 = sbr.rel (0) target = $region124
            $region123: #{_lambda_.18} parent=119 // pred_region
              // Predicated region
              $region136: #{_lambda_.18} parent=123 // pred_check
                _
              $region137: #{_lambda_.18} parent=123 // pred_check_branch
                %504 = sbr.rel (0) target = $region139
              $region138: #{_lambda_.18} parent=123 // pred_region
                loop: start=0, step=1, limit=1
                $region140: #{_lambda_.18} parent=138 // loop_pre_header
                  _
                $region141: #{_lambda_.18} parent=138 // loop_header
                  %s506 = sphi 0, %s510
                  %p507 = scmp.ge.s32.totalorder %s506, 1
                  %s511 = sphi %s475, %s475
                  %s512 = sphi %s482, %s482
                $region142: #{_lambda_.18} parent=138 // loop_header_branch
                  %509 = sbr.rel (%p507) target = $region146
                $region143: #{_lambda_.18} parent=138 // loop_body
                  %v513 = vld [vmem:[%s511] sm:$0xff]
                  %514 = vst [vmem:[%s512] sm:$0xff] %v513
                  %v515 = vld [vmem:[%s511 + $0x8] sm:$0xff]
                  %516 = vst [vmem:[%s512 + $0x28] sm:$0xff] %v515
                $region144: #{_lambda_.18} parent=138 // loop_footer
                  %s510 = sadd.s32 1, %s506
                $region145: #{_lambda_.18} parent=138 // loop_footer_branch
                  %505 = sbr.rel target = $region141
                $region146: #{_lambda_.18} parent=138 // loop_exit
                  _
              $region139: #{_lambda_.18} parent=123 // pred_fallthru
                _
              // Predicated region
              $region147: #{_lambda_.18} parent=123 // pred_check
                _
              $region148: #{_lambda_.18} parent=123 // pred_check_branch
                %518 = sbr.rel target = $region150
              $region149: #{_lambda_.18} parent=123 // pred_region
                _
              $region150: #{_lambda_.18} parent=123 // pred_fallthru
                _
            $region124: #{_lambda_.18} parent=119 // pred_fallthru
              _
            // Predicated region
            $region125: #{_lambda_.18} parent=119 // pred_check
              _
            $region126: #{_lambda_.18} parent=119 // pred_check_branch
              %488 = sbr.rel target = $region128
            $region127: #{_lambda_.18} parent=119 // pred_region
              %s490 = ssub.s32 256, 1
              loop: start=0, step=1, limit=1
              $region129: #{_lambda_.18} parent=127 // loop_pre_header
                _
              $region130: #{_lambda_.18} parent=127 // loop_header
                %s492 = sphi 0, %s496
                %p493 = scmp.ge.s32.totalorder %s492, 1
                %s497 = sphi %s475, %s475
                %s498 = sphi %s482, %s482
              $region131: #{_lambda_.18} parent=127 // loop_header_branch
                %495 = sbr.rel (%p493) target = $region135
              $region132: #{_lambda_.18} parent=127 // loop_body
                %v499 = vld [vmem:[%s497] sm:%s490]
                %500 = vst [vmem:[%s498] sm:%s490] %v499
                %v501 = vld [vmem:[%s497 + $0x8] sm:%s490]
                %502 = vst [vmem:[%s498 + $0x28] sm:%s490] %v501
              $region133: #{_lambda_.18} parent=127 // loop_footer
                %s496 = sadd.s32 1, %s492
              $region134: #{_lambda_.18} parent=127 // loop_footer_branch
                %491 = sbr.rel target = $region130
              $region135: #{_lambda_.18} parent=127 // loop_exit
                _
            $region128: #{_lambda_.18} parent=119 // pred_fallthru
              _
          $region120: #{_lambda_.18} parent=115 // pred_fallthru
            _
          %519 = vnop
        $region116: #{_lambda_.18} parent=103 // pred_fallthru
          _
      $region104: #{_lambda_.18} parent=5 // pred_fallthru
        _
      %p520 = scmp.le.s32.totalorder 2, %s10
      // Predicated region
      $region151: #{_lambda_.18} parent=5 // pred_check
        %p521 = pneg %p520
      $region152: #{_lambda_.18} parent=5 // pred_check_branch
        %523 = sbr.rel (%p521) target = $region154
      $region153: #{_lambda_.18} parent=5 // pred_region
        %s524 = ssub.s32 %s10, 2
        // Predicated region
        $region155: #{_lambda_.18} parent=153 // pred_check
          %p525 = pneg %p153
        $region156: #{_lambda_.18} parent=153 // pred_check_branch
          %527 = sbr.rel (%p525) target = $region158
        $region157: #{_lambda_.18} parent=153 // pred_region
          %s528 = sand.u32 %s138, 1
          %s529 = sand.u32 %s138, 1
          %s530 = smul.addr %s529, 16
          %s531 = scalar_lea.vmem [#allocation4], %s530
        $region158: #{_lambda_.18} parent=153 // pred_fallthru
          _
      $region154: #{_lambda_.18} parent=5 // pred_fallthru
        _
    $region6: #{_lambda_.18} parent=1 // loop_footer
      %s14 = sadd.s32 1, %s10
    $region7: #{_lambda_.18} parent=1 // loop_footer_branch
      %9 = sbr.rel target = $region3
    $region8: #{_lambda_.18} parent=1 // loop_exit
      _

// kernel: _lambda_.19
$region0: #{_lambda_.19}
  #allocation0 [shape = 'u32[]', space=smem, size = 0x4, offset = 0x4, fixed_abs, tag = 'smem constant byte address 0x4 - core index']
  #allocation1 [shape = 'u32[144,128]{1,0:T(1,128)}', space=vmem, size = 0x12000, scoped, tag = 'internal scratch']
  %s0 = inlined_call_operand.vmem [shape: f32[2,8,1408], index: 0, kind: input, shape index: {}, may-alias: {0,1}]
  %s1 = inlined_call_operand.vmem [shape: f32[2,8,1408], index: 1, kind: input, shape index: {}, may-alias: {0,1}]
  %s2 = inlined_call_operand.vmem [shape: bf16[8,24], index: 2, kind: input, shape index: {}]
  %s3 = inlined_call_operand.vmem [shape: f32[8,1], index: 3, kind: input, shape index: {}]
  %s4 = inlined_call_operand.vmem [shape: f32[2,8,1280], index: 4, kind: output, shape index: {}]
  %s5 = sld [smem:[#allocation0]]
  $region49: #{_lambda_.19} parent=0
    _
  %s7 = ssub.s32 1, %s5
  %s8 = scalar_select 0, %s7, %s5
  loop: start=0, step=1, limit=12
  $region2: #{_lambda_.19} parent=0 // loop_pre_header
    _
  $region3: #{_lambda_.19} parent=0 // loop_header
    %s10 = sphi 0, %s14
    %p11 = scmp.ge.s32.totalorder %s10, 12
    %s17 = sphi 0, %s29
    %s18 = sphi 0, %s25
    %s19 = sphi 0, %s17
    %s20 = sphi 0, %s18
    %s21 = sphi 0, %s19
    %s22 = sphi 0, %s20
    %s34 = sphi 0, %s36
    %s37 = sphi 0, %s34
    %s38 = sphi 0, %s37
    %s54 = sphi 0, %s38
    %s66 = sphi 0, %s68
    %s69 = sphi 0, %s66
    %s70 = sphi 0, %s69
    %s86 = sphi 0, %s70
    %s90 = sphi 0, %s90
    %s92 = sphi 0, %s90
    %s93 = sphi 0, %s92
    %s107 = sphi 0, %s93
    %s111 = sphi 0, %s111
    %s113 = sphi 0, %s111
    %s114 = sphi 0, %s113
    %s128 = sphi 0, %s114
    %s136 = sphi 0, %s138
    %s139 = sphi 0, %s136
    %s140 = sphi 0, %s139
    %s156 = sphi 0, %s140
  $region4: #{_lambda_.19} parent=0 // loop_header_branch
    %13 = sbr.rel (%p11) target = $region8
  $region5: #{_lambda_.19} parent=0 // loop_body
    %s15 = ssub.s32 %s10, 1
    %s16 = ssub.s32 %s10, 2
    %s23 = sadd.s32 1, %s18
    %p24 = scmp.ge.s32.totalorder %s23, 5
    %s25 = scalar_select %p24, 0, %s23
    %s26 = sadd.s32 1, %s17
    %s27 = scalar_select %p24, %s26, %s17
    %p28 = scmp.ge.s32.totalorder %s27, 2
    %s29 = scalar_select %p28, 0, %s27
    %s30 = ssub.s32 %s17, %s29
    %s31 = ssub.s32 %s18, %s25
    %s32 = sor.u32 %s30, %s31
    %p33 = scmp.eq.s32.totalorder %s32, 0
    %s35 = sadd.s32 %s34, 1
    %s36 = scalar_select %p33, %s34, %s35
    %p39 = pneg %p33
    %p40 = scmp.eq.s32.totalorder %s10, 9
    %p41 = por %p39, %p40
    %p42 = scmp.ne.s32.totalorder %s34, %s37
    %p43 = scmp.eq.s32.totalorder %s10, 0
    %p44 = por %p42, %p43
    %p45 = scmp.ne.s32.totalorder %s34, %s37
    %p46 = scmp.eq.s32.totalorder %s15, 9
    %p47 = por %p45, %p46
    %p48 = scmp.ne.s32.totalorder %s37, %s38
    %p49 = scmp.eq.s32.totalorder %s15, 0
    %p50 = por %p48, %p49
    %p51 = scmp.ne.s32.totalorder %s37, %s38
    %p52 = scmp.eq.s32.totalorder %s16, 9
    %p53 = por %p51, %p52
    %p55 = scmp.ne.s32.totalorder %s38, %s54
    %p56 = scmp.eq.s32.totalorder %s16, 0
    %p57 = por %p55, %p56
    %s58 = sadd.s32 %s18, 1
    %s59 = smul.u32 %s58, 2
    %s60 = sadd.s32 %s25, 1
    %s61 = smul.u32 %s60, 2
    %s62 = ssub.s32 %s17, %s29
    %s63 = ssub.s32 %s59, %s61
    %s64 = sor.u32 %s62, %s63
    %p65 = scmp.eq.s32.totalorder %s64, 0
    %s67 = sadd.s32 %s66, 1
    %s68 = scalar_select %p65, %s66, %s67
    %p71 = pneg %p65
    %p72 = scmp.eq.s32.totalorder %s10, 9
    %p73 = por %p71, %p72
    %p74 = scmp.ne.s32.totalorder %s66, %s69
    %p75 = scmp.eq.s32.totalorder %s10, 0
    %p76 = por %p74, %p75
    %p77 = scmp.ne.s32.totalorder %s66, %s69
    %p78 = scmp.eq.s32.totalorder %s15, 9
    %p79 = por %p77, %p78
    %p80 = scmp.ne.s32.totalorder %s69, %s70
    %p81 = scmp.eq.s32.totalorder %s15, 0
    %p82 = por %p80, %p81
    %p83 = scmp.ne.s32.totalorder %s69, %s70
    %p84 = scmp.eq.s32.totalorder %s16, 9
    %p85 = por %p83, %p84
    %p87 = scmp.ne.s32.totalorder %s70, %s86
    %p88 = scmp.eq.s32.totalorder %s16, 0
    %p89 = por %p87, %p88
    %s91 = sadd.s32 %s90, 1
    %p94 = scmp.eq.s32.totalorder %s10, 9
    %p95 = scmp.ne.s32.totalorder %s90, %s92
    %p96 = scmp.eq.s32.totalorder %s10, 0
    %p97 = por %p95, %p96
    %p98 = scmp.ne.s32.totalorder %s90, %s92
    %p99 = scmp.eq.s32.totalorder %s15, 9
    %p100 = por %p98, %p99
    %p101 = scmp.ne.s32.totalorder %s92, %s93
    %p102 = scmp.eq.s32.totalorder %s15, 0
    %p103 = por %p101, %p102
    %p104 = scmp.ne.s32.totalorder %s92, %s93
    %p105 = scmp.eq.s32.totalorder %s16, 9
    %p106 = por %p104, %p105
    %p108 = scmp.ne.s32.totalorder %s93, %s107
    %p109 = scmp.eq.s32.totalorder %s16, 0
    %p110 = por %p108, %p109
    %s112 = sadd.s32 %s111, 1
    %p115 = scmp.eq.s32.totalorder %s10, 9
    %p116 = scmp.ne.s32.totalorder %s111, %s113
    %p117 = scmp.eq.s32.totalorder %s10, 0
    %p118 = por %p116, %p117
    %p119 = scmp.ne.s32.totalorder %s111, %s113
    %p120 = scmp.eq.s32.totalorder %s15, 9
    %p121 = por %p119, %p120
    %p122 = scmp.ne.s32.totalorder %s113, %s114
    %p123 = scmp.eq.s32.totalorder %s15, 0
    %p124 = por %p122, %p123
    %p125 = scmp.ne.s32.totalorder %s113, %s114
    %p126 = scmp.eq.s32.totalorder %s16, 9
    %p127 = por %p125, %p126
    %p129 = scmp.ne.s32.totalorder %s114, %s128
    %p130 = scmp.eq.s32.totalorder %s16, 0
    %p131 = por %p129, %p130
    %s132 = ssub.s32 %s17, %s29
    %s133 = ssub.s32 %s18, %s25
    %s134 = sor.u32 %s132, %s133
    %p135 = scmp.eq.s32.totalorder %s134, 0
    %s137 = sadd.s32 %s136, 1
    %s138 = scalar_select %p135, %s136, %s137
    %p141 = pneg %p135
    %p142 = scmp.eq.s32.totalorder %s10, 9
    %p143 = por %p141, %p142
    %p144 = scmp.ne.s32.totalorder %s136, %s139
    %p145 = scmp.eq.s32.totalorder %s10, 0
    %p146 = por %p144, %p145
    %p147 = scmp.ne.s32.totalorder %s136, %s139
    %p148 = scmp.eq.s32.totalorder %s15, 9
    %p149 = por %p147, %p148
    %p150 = scmp.ne.s32.totalorder %s139, %s140
    %p151 = scmp.eq.s32.totalorder %s15, 0
    %p152 = por %p150, %p151
    %p153 = scmp.ne.s32.totalorder %s139, %s140
    %p154 = scmp.eq.s32.totalorder %s16, 9
    %p155 = por %p153, %p154
    %p157 = scmp.ne.s32.totalorder %s140, %s156
    %p158 = scmp.eq.s32.totalorder %s16, 0
    %p159 = por %p157, %p158
    %p160 = scmp.le.s32.totalorder 1, %s10
    %p161 = scmp.lt.s32.totalorder %s10, 11
    %p162 = pnand %p160, %p161
    %p163 = pneg %p162
    // Predicated region
    $region9: #{_lambda_.19} parent=5 // pred_check
      _
    $region10: #{_lambda_.19} parent=5 // pred_check_branch
      %165 = sbr.rel (%p162) target = $region12
    $region11: #{_lambda_.19} parent=5 // pred_region
      %s166 = ssub.s32 %s10, 1
      // Predicated region
      $region13: #{_lambda_.19} parent=11 // pred_check
        %p167 = pneg %p103
      $region14: #{_lambda_.19} parent=11 // pred_check_branch
        %169 = sbr.rel (%p167) target = $region16
      $region15: #{_lambda_.19} parent=11 // pred_region
        _
      $region16: #{_lambda_.19} parent=11 // pred_fallthru
        _
      // Predicated region
      $region17: #{_lambda_.19} parent=11 // pred_check
        %p170 = pneg %p124
      $region18: #{_lambda_.19} parent=11 // pred_check_branch
        %172 = sbr.rel (%p170) target = $region20
      $region19: #{_lambda_.19} parent=11 // pred_region
        _
      $region20: #{_lambda_.19} parent=11 // pred_fallthru
        _
    $region12: #{_lambda_.19} parent=5 // pred_fallthru
      _
    %p173 = scmp.lt.s32.totalorder %s10, 10
    // Predicated region
    $region21: #{_lambda_.19} parent=5 // pred_check
      %p174 = pneg %p173
    $region22: #{_lambda_.19} parent=5 // pred_check_branch
      %176 = sbr.rel (%p174) target = $region24
    $region23: #{_lambda_.19} parent=5 // pred_region
      // Predicated region
      $region25: #{_lambda_.19} parent=23 // pred_check
        %p177 = pneg %p44
      $region26: #{_lambda_.19} parent=23 // pred_check_branch
        %179 = sbr.rel (%p177) target = $region28
      $region27: #{_lambda_.19} parent=23 // pred_region
        %s180 = smul.u32 2, %s18
        %s181 = ssub.s32 11, %s180
        %p182 = scmp.lt.s32.totalorder %s181, 2
        %s183 = scalar_select %p182, %s181, 2
        %s184 = smul.u32 128, %s183
        %p185 = scmp.lt.s32.totalorder %s17, 1
        %s186 = scalar_select %p185, %s17, 1
        %p187 = scmp.lt.s32.totalorder %s180, 10
        %s188 = scalar_select %p187, %s180, 10
        %s189 = smul.addr %s186, 11
        %s190 = sadd.s32 %s188, %s189
        %s191 = smul.addr %s190, 8
        %s192 = scalar_lea.vmem %s0, %s191
        %s193 = smul.u32 2, %s18
        %s194 = ssub.s32 11, %s193
        %p195 = scmp.lt.s32.totalorder %s194, 2
        %s196 = scalar_select %p195, %s194, 2
        %s197 = smul.u32 128, %s196
      $region28: #{_lambda_.19} parent=23 // pred_fallthru
        _
      // Predicated region
      $region29: #{_lambda_.19} parent=23 // pred_check
        %p198 = pneg %p76
      $region30: #{_lambda_.19} parent=23 // pred_check_branch
        %200 = sbr.rel (%p198) target = $region32
      $region31: #{_lambda_.19} parent=23 // pred_region
        %s201 = sadd.s32 %s18, 1
        %s202 = smul.u32 %s201, 2
        %p203 = scmp.lt.s32.totalorder %s17, 1
        %s204 = scalar_select %p203, %s17, 1
        %p205 = scmp.lt.s32.totalorder %s202, 10
        %s206 = scalar_select %p205, %s202, 10
        %s207 = smul.addr %s204, 11
        %s208 = sadd.s32 %s206, %s207
        %s209 = smul.addr %s208, 8
        %s210 = scalar_lea.vmem %s1, %s209
        %s211 = sadd.s32 %s18, 1
        %s212 = smul.u32 %s211, 2
      $region32: #{_lambda_.19} parent=23 // pred_fallthru
        _
    $region24: #{_lambda_.19} parent=5 // pred_fallthru
      _
    %p213 = scmp.le.s32.totalorder 1, %s10
    %p214 = scmp.lt.s32.totalorder %s10, 11
    %p215 = pnand %p213, %p214
    %p216 = pneg %p215
    // Predicated region
    $region33: #{_lambda_.19} parent=5 // pred_check
      _
    $region34: #{_lambda_.19} parent=5 // pred_check_branch
      %218 = sbr.rel (%p215) target = $region36
    $region35: #{_lambda_.19} parent=5 // pred_region
      %s219 = ssub.s32 %s10, 1
      %s220 = smul.u32 2, %s20
      %s221 = ssub.s32 11, %s220
      %p222 = scmp.lt.s32.totalorder %s221, 2
      %s223 = scalar_select %p222, %s221, 2
      %s224 = smul.u32 128, %s223
      %p225 = scmp.lt.s32.totalorder %s19, 1
      %s226 = scalar_select %p225, %s19, 1
      %p227 = scmp.lt.s32.totalorder %s220, 10
      %s228 = scalar_select %p227, %s220, 10
      %s229 = smul.addr %s226, 11
      %s230 = sadd.s32 %s228, %s229
      %s231 = smul.addr %s230, 8
      %s232 = scalar_lea.vmem %s0, %s231
      %p233 = pneg %p50
      %p234 = pneg %p47
      %s235 = sadd.s32 %s20, 1
      %s236 = smul.u32 %s235, 2
      %p237 = scmp.lt.s32.totalorder %s19, 1
      %s238 = scalar_select %p237, %s19, 1
      %p239 = scmp.lt.s32.totalorder %s236, 10
      %s240 = scalar_select %p239, %s236, 10
      %s241 = smul.addr %s238, 11
      %s242 = sadd.s32 %s240, %s241
      %s243 = smul.addr %s242, 8
      %s244 = scalar_lea.vmem %s1, %s243
      %p245 = pneg %p82
      %p246 = pneg %p79
      %p247 = pneg %p103
      %p248 = pneg %p100
      %p249 = pneg %p124
      %p250 = pneg %p121
      %p251 = pneg %p152
      %p252 = pneg %p149
      %s253 = smul.u32 2, %s20
      %p254 = scmp.lt.s32.totalorder %s19, 1
      %s255 = scalar_select %p254, %s19, 1
      %p256 = scmp.lt.s32.totalorder %s253, 9
      %s257 = scalar_select %p256, %s253, 9
      %s258 = smul.addr %s255, 10
      %s259 = sadd.s32 %s257, %s258
      %s260 = smul.addr %s259, 8
      %s261 = scalar_lea.vmem %s4, %s260
      %s262 = smul.u32 2, %s20
      %s263 = ssub.s32 11, %s262
      %p264 = scmp.lt.s32.totalorder %s263, 2
      %s265 = scalar_select %p264, %s263, 2
      %s266 = smul.u32 128, %s265
      %p267 = scmp.lt.s32.totalorder %s19, 1
      %s268 = scalar_select %p267, %s19, 1
      %p269 = scmp.lt.s32.totalorder %s262, 10
      %s270 = scalar_select %p269, %s262, 10
      %s271 = smul.addr %s268, 11
      %s272 = sadd.s32 %s270, %s271
      %s273 = smul.addr %s272, 8
      %s274 = scalar_lea.vmem %s0, %s273
      %s275 = smul.u32 2, %s20
      %s276 = ssub.s32 11, %s275
      %p277 = scmp.lt.s32.totalorder %s276, 2
      %s278 = scalar_select %p277, %s276, 2
      %s279 = smul.u32 128, %s278
      %s280 = sadd.s32 %s20, 1
      %s281 = smul.u32 %s280, 2
      %p282 = scmp.lt.s32.totalorder %s19, 1
      %s283 = scalar_select %p282, %s19, 1
      %p284 = scmp.lt.s32.totalorder %s281, 10
      %s285 = scalar_select %p284, %s281, 10
      %s286 = smul.addr %s283, 11
      %s287 = sadd.s32 %s285, %s286
      %s288 = smul.addr %s287, 8
      %s289 = scalar_lea.vmem %s1, %s288
      %s290 = sadd.s32 %s20, 1
      %s291 = smul.u32 %s290, 2
      %s292 = smul.u32 2, %s20
      %p293 = scmp.lt.s32.totalorder %s19, 1
      %s294 = scalar_select %p293, %s19, 1
      %p295 = scmp.lt.s32.totalorder %s292, 9
      %s296 = scalar_select %p295, %s292, 9
      %s297 = smul.addr %s294, 10
      %s298 = sadd.s32 %s296, %s297
      %s299 = smul.addr %s298, 8
      %s300 = scalar_lea.vmem %s4, %s299
      %s301 = smul.u32 2, %s20
      %v303 = vld [vmem:[%s274] sm:$0xff]
      %v304 = vld [vmem:[%s274 + $0x8] sm:$0xff]
      %v305 = vld [vmem:[%s289] sm:$0xff]
      %vm306 = vcmp.gt.f32.partialorder %v303, 0.0
      %vm307 = vcmp.gt.f32.partialorder %v304, 0.0
      %vm308 = vcmp.gt.f32.partialorder %v305, 0.0
      %v309 = vmul.f32 %v303, 0.01
      %v310 = vmul.f32 %v304, 0.01
      %v311 = vmul.f32 %v305, 0.01
      %v312 = vsel %vm306, %v303, %v309
      %v313 = vsel %vm307, %v304, %v310
      %v314 = vsel %vm308, %v305, %v311
      %318 = vrot.lane.b32.xlu0 %v312, 127
      %v319 = vpop.permute.xlu0 %318
      %320 = vrot.lane.b32.xlu0 %v313, 127
      %v321 = vpop.permute.xlu0 %320
      %322 = vrot.lane.b32.xlu0 %v314, 127
      %v323 = vpop.permute.xlu0 %322
      %vm324 = vcmask 1039360
      %v325 = vsel %vm324, %v319, %v321
      %v326 = vsel %vm324, %v321, %v323
      %329 = vrot.lane.b32.xlu0 %v312, 126
      %v330 = vpop.permute.xlu0 %329
      %331 = vrot.lane.b32.xlu0 %v313, 126
      %v332 = vpop.permute.xlu0 %331
      %333 = vrot.lane.b32.xlu0 %v314, 126
      %v334 = vpop.permute.xlu0 %333
      %vm335 = vcmask 1031168
      %v336 = vsel %vm335, %v330, %v332
      %v337 = vsel %vm335, %v332, %v334
      %v340 = vpack.c.bf16 %v325, %v312
      %v341 = vpack.c.bf16 %v326, %v313
      %v342 = vpack.c.bf16 %v336, %v336
      %v343 = vpack.c.bf16 %v337, %v337
      %v344 = vld [vmem:[%s2] sm:$0xf]
      %v345 = vld [vmem:[%s3] sm:$0xff]
      %347 = vset.pattern.permute.xlu0 0
      %348 = vperm.xlu0 %347, %v345
      %v349 = vpop.permute.xlu0 %348
      %vm351 = vcmask 195584
      %v353 = vsel %vm351, %v344, 0
      %vm355 = vcmask 1043456
      %v357 = vsel %vm355, %v342, 0
      %v360 = vsel %vm355, %v343, 0
      %362 = vmatprep.subr.bf16.mxu0 0
      %363 = vmatpush1.bf16.msra.mxu0 0
      %364 = vmatprep.subr.bf16.mxu0 0
      %365 = vmatpush1.bf16.msra.mxu0 0
      %366 = vmatprep.subr.bf16.mxu0 0
      %367 = vmatpush1.bf16.msra.mxu0 0
      %368 = vmatprep.subr.bf16.mxu0 0
      %369 = vmatpush1.bf16.msra.mxu0 0
      %370 = vmatprep.subr.bf16.mxu0 0
      %371 = vmatpush1.bf16.msra.mxu0 0
      %372 = vmatprep.subr.bf16.mxu0 0
      %373 = vmatpush1.bf16.msra.mxu0 0
      %374 = vmatprep.subr.bf16.mxu0 %v360
      %375 = vmatpush1.bf16.msra.mxu0 %v357
      %376 = vmatprep.subr.bf16.mxu0 %v341
      %377 = vmatpush1.bf16.msra.mxu0 %v340
      %378 = vmatprep.subr.bf16.mxu0 0
      %379 = vmatpush2.bf16.msra.mxu0 0
      %380 = vmatprep.subr.bf16.mxu0 0
      %381 = vmatpush2.bf16.msra.mxu0 0
      %382 = vmatprep.subr.bf16.mxu0 0
      %383 = vmatpush2.bf16.msra.mxu0 0
      %384 = vmatprep.subr.bf16.mxu0 0
      %385 = vmatpush2.bf16.msra.mxu0 0
      %386 = vmatprep.subr.bf16.mxu0 0
      %387 = vmatpush2.bf16.msra.mxu0 0
      %388 = vmatprep.subr.bf16.mxu0 0
      %389 = vmatpush2.bf16.msra.mxu0 0
      %390 = vmatprep.subr.bf16.mxu0 0
      %391 = vmatpush2.bf16.msra.mxu0 0
      %392 = vmatprep.subr.bf16.mxu0 0
      %393 = vmatpush2.bf16.msra.mxu0 0
      %394 = vmatprep.mubr.bf16.mxu0 0
      %395 = vmatmul.mubr.bf16.gmra.mxu0 %v353
      %v396 = vpop.f32.mrf.mxu0
      %v397 = vadd.f32 %v349, %v396
      %v398 = vpop.f32.mrf.mxu0
      %v399 = vadd.f32 %v349, %v398
      %v400 = vpop.f32.mrf.mxu0
      %v401 = vpop.f32.mrf.mxu0
      %402 = vdwg.mxu0
      %406 = vrot.lane.b32.xlu0 %v303, 127
      %v407 = vpop.permute.xlu0 %406
      %408 = vrot.lane.b32.xlu0 %v304, 127
      %v409 = vpop.permute.xlu0 %408
      %410 = vrot.lane.b32.xlu0 %v305, 127
      %v411 = vpop.permute.xlu0 %410
      %v412 = vsel %vm324, %v407, %v409
      %v413 = vsel %vm324, %v409, %v411
      %v416 = vadd.f32 %v397, %v412
      %v417 = vadd.f32 %v399, %v413
      %418 = vst [vmem:[%s300] sm:$0xff] %v416
      %419 = vst [vmem:[%s300 + $0x8] sm:$0xff] %v417
      %s420 = smul.u32 2, %s20
      %p421 = scmp.lt.s32.totalorder %s19, 1
      %s422 = scalar_select %p421, %s19, 1
      %p423 = scmp.lt.s32.totalorder %s420, 9
      %s424 = scalar_select %p423, %s420, 9
      %s425 = smul.addr %s422, 10
      %s426 = sadd.s32 %s424, %s425
      %s427 = smul.addr %s426, 8
      %s428 = scalar_lea.vmem %s4, %s427
      // Predicated region
      $region37: #{_lambda_.19} parent=35 // pred_check
        %p429 = pneg %p149
      $region38: #{_lambda_.19} parent=35 // pred_check_branch
        %431 = sbr.rel (%p429) target = $region40
      $region39: #{_lambda_.19} parent=35 // pred_region
        %s432 = smul.u32 2, %s20
      $region40: #{_lambda_.19} parent=35 // pred_fallthru
        _
    $region36: #{_lambda_.19} parent=5 // pred_fallthru
      _
    %p433 = scmp.le.s32.totalorder 2, %s10
    // Predicated region
    $region41: #{_lambda_.19} parent=5 // pred_check
      %p434 = pneg %p433
    $region42: #{_lambda_.19} parent=5 // pred_check_branch
      %436 = sbr.rel (%p434) target = $region44
    $region43: #{_lambda_.19} parent=5 // pred_region
      %s437 = ssub.s32 %s10, 2
      // Predicated region
      $region45: #{_lambda_.19} parent=43 // pred_check
        %p438 = pneg %p155
      $region46: #{_lambda_.19} parent=43 // pred_check_branch
        %440 = sbr.rel (%p438) target = $region48
      $region47: #{_lambda_.19} parent=43 // pred_region
        %s441 = smul.u32 2, %s22
        %p442 = scmp.lt.s32.totalorder %s21, 1
        %s443 = scalar_select %p442, %s21, 1
        %p444 = scmp.lt.s32.totalorder %s441, 9
        %s445 = scalar_select %p444, %s441, 9
        %s446 = smul.addr %s443, 10
        %s447 = sadd.s32 %s445, %s446
        %s448 = smul.addr %s447, 8
        %s449 = scalar_lea.vmem %s4, %s448
      $region48: #{_lambda_.19} parent=43 // pred_fallthru
        _
    $region44: #{_lambda_.19} parent=5 // pred_fallthru
      _
  $region6: #{_lambda_.19} parent=0 // loop_footer
    %s14 = sadd.s32 1, %s10
  $region7: #{_lambda_.19} parent=0 // loop_footer_branch
    %9 = sbr.rel target = $region3
  $region8: #{_lambda_.19} parent=0 // loop_exit
    _

// kernel: _lambda_.20
$region0: #{_lambda_.20}
  #allocation0 [shape = 'u32[]', space=smem, size = 0x4, offset = 0x4, fixed_abs, tag = 'smem constant byte address 0x4 - core index']
  #allocation1 [shape = 'u32[144,128]{1,0:T(1,128)}', space=vmem, size = 0x12000, scoped, tag = 'internal scratch']
  %s0 = inlined_call_operand.vmem [shape: f32[2,8,1408], index: 0, kind: input, shape index: {}, may-alias: {0,1}]
  %s1 = inlined_call_operand.vmem [shape: f32[2,8,1408], index: 1, kind: input, shape index: {}, may-alias: {0,1}]
  %s2 = inlined_call_operand.vmem [shape: bf16[8,24], index: 2, kind: input, shape index: {}]
  %s3 = inlined_call_operand.vmem [shape: f32[8,1], index: 3, kind: input, shape index: {}]
  %s4 = inlined_call_operand.vmem [shape: f32[2,8,1280], index: 4, kind: output, shape index: {}]
  %s5 = sld [smem:[#allocation0]]
  $region49: #{_lambda_.20} parent=0
    _
  %s7 = ssub.s32 1, %s5
  %s8 = scalar_select 0, %s7, %s5
  loop: start=0, step=1, limit=12
  $region2: #{_lambda_.20} parent=0 // loop_pre_header
    _
  $region3: #{_lambda_.20} parent=0 // loop_header
    %s10 = sphi 0, %s14
    %p11 = scmp.ge.s32.totalorder %s10, 12
    %s17 = sphi 0, %s29
    %s18 = sphi 0, %s25
    %s19 = sphi 0, %s17
    %s20 = sphi 0, %s18
    %s21 = sphi 0, %s19
    %s22 = sphi 0, %s20
    %s34 = sphi 0, %s36
    %s37 = sphi 0, %s34
    %s38 = sphi 0, %s37
    %s54 = sphi 0, %s38
    %s66 = sphi 0, %s68
    %s69 = sphi 0, %s66
    %s70 = sphi 0, %s69
    %s86 = sphi 0, %s70
    %s90 = sphi 0, %s90
    %s92 = sphi 0, %s90
    %s93 = sphi 0, %s92
    %s107 = sphi 0, %s93
    %s111 = sphi 0, %s111
    %s113 = sphi 0, %s111
    %s114 = sphi 0, %s113
    %s128 = sphi 0, %s114
    %s136 = sphi 0, %s138
    %s139 = sphi 0, %s136
    %s140 = sphi 0, %s139
    %s156 = sphi 0, %s140
  $region4: #{_lambda_.20} parent=0 // loop_header_branch
    %13 = sbr.rel (%p11) target = $region8
  $region5: #{_lambda_.20} parent=0 // loop_body
    %s15 = ssub.s32 %s10, 1
    %s16 = ssub.s32 %s10, 2
    %s23 = sadd.s32 1, %s18
    %p24 = scmp.ge.s32.totalorder %s23, 5
    %s25 = scalar_select %p24, 0, %s23
    %s26 = sadd.s32 1, %s17
    %s27 = scalar_select %p24, %s26, %s17
    %p28 = scmp.ge.s32.totalorder %s27, 2
    %s29 = scalar_select %p28, 0, %s27
    %s30 = ssub.s32 %s17, %s29
    %s31 = ssub.s32 %s18, %s25
    %s32 = sor.u32 %s30, %s31
    %p33 = scmp.eq.s32.totalorder %s32, 0
    %s35 = sadd.s32 %s34, 1
    %s36 = scalar_select %p33, %s34, %s35
    %p39 = pneg %p33
    %p40 = scmp.eq.s32.totalorder %s10, 9
    %p41 = por %p39, %p40
    %p42 = scmp.ne.s32.totalorder %s34, %s37
    %p43 = scmp.eq.s32.totalorder %s10, 0
    %p44 = por %p42, %p43
    %p45 = scmp.ne.s32.totalorder %s34, %s37
    %p46 = scmp.eq.s32.totalorder %s15, 9
    %p47 = por %p45, %p46
    %p48 = scmp.ne.s32.totalorder %s37, %s38
    %p49 = scmp.eq.s32.totalorder %s15, 0
    %p50 = por %p48, %p49
    %p51 = scmp.ne.s32.totalorder %s37, %s38
    %p52 = scmp.eq.s32.totalorder %s16, 9
    %p53 = por %p51, %p52
    %p55 = scmp.ne.s32.totalorder %s38, %s54
    %p56 = scmp.eq.s32.totalorder %s16, 0
    %p57 = por %p55, %p56
    %s58 = sadd.s32 %s18, 1
    %s59 = smul.u32 %s58, 2
    %s60 = sadd.s32 %s25, 1
    %s61 = smul.u32 %s60, 2
    %s62 = ssub.s32 %s17, %s29
    %s63 = ssub.s32 %s59, %s61
    %s64 = sor.u32 %s62, %s63
    %p65 = scmp.eq.s32.totalorder %s64, 0
    %s67 = sadd.s32 %s66, 1
    %s68 = scalar_select %p65, %s66, %s67
    %p71 = pneg %p65
    %p72 = scmp.eq.s32.totalorder %s10, 9
    %p73 = por %p71, %p72
    %p74 = scmp.ne.s32.totalorder %s66, %s69
    %p75 = scmp.eq.s32.totalorder %s10, 0
    %p76 = por %p74, %p75
    %p77 = scmp.ne.s32.totalorder %s66, %s69
    %p78 = scmp.eq.s32.totalorder %s15, 9
    %p79 = por %p77, %p78
    %p80 = scmp.ne.s32.totalorder %s69, %s70
    %p81 = scmp.eq.s32.totalorder %s15, 0
    %p82 = por %p80, %p81
    %p83 = scmp.ne.s32.totalorder %s69, %s70
    %p84 = scmp.eq.s32.totalorder %s16, 9
    %p85 = por %p83, %p84
    %p87 = scmp.ne.s32.totalorder %s70, %s86
    %p88 = scmp.eq.s32.totalorder %s16, 0
    %p89 = por %p87, %p88
    %s91 = sadd.s32 %s90, 1
    %p94 = scmp.eq.s32.totalorder %s10, 9
    %p95 = scmp.ne.s32.totalorder %s90, %s92
    %p96 = scmp.eq.s32.totalorder %s10, 0
    %p97 = por %p95, %p96
    %p98 = scmp.ne.s32.totalorder %s90, %s92
    %p99 = scmp.eq.s32.totalorder %s15, 9
    %p100 = por %p98, %p99
    %p101 = scmp.ne.s32.totalorder %s92, %s93
    %p102 = scmp.eq.s32.totalorder %s15, 0
    %p103 = por %p101, %p102
    %p104 = scmp.ne.s32.totalorder %s92, %s93
    %p105 = scmp.eq.s32.totalorder %s16, 9
    %p106 = por %p104, %p105
    %p108 = scmp.ne.s32.totalorder %s93, %s107
    %p109 = scmp.eq.s32.totalorder %s16, 0
    %p110 = por %p108, %p109
    %s112 = sadd.s32 %s111, 1
    %p115 = scmp.eq.s32.totalorder %s10, 9
    %p116 = scmp.ne.s32.totalorder %s111, %s113
    %p117 = scmp.eq.s32.totalorder %s10, 0
    %p118 = por %p116, %p117
    %p119 = scmp.ne.s32.totalorder %s111, %s113
    %p120 = scmp.eq.s32.totalorder %s15, 9
    %p121 = por %p119, %p120
    %p122 = scmp.ne.s32.totalorder %s113, %s114
    %p123 = scmp.eq.s32.totalorder %s15, 0
    %p124 = por %p122, %p123
    %p125 = scmp.ne.s32.totalorder %s113, %s114
    %p126 = scmp.eq.s32.totalorder %s16, 9
    %p127 = por %p125, %p126
    %p129 = scmp.ne.s32.totalorder %s114, %s128
    %p130 = scmp.eq.s32.totalorder %s16, 0
    %p131 = por %p129, %p130
    %s132 = ssub.s32 %s17, %s29
    %s133 = ssub.s32 %s18, %s25
    %s134 = sor.u32 %s132, %s133
    %p135 = scmp.eq.s32.totalorder %s134, 0
    %s137 = sadd.s32 %s136, 1
    %s138 = scalar_select %p135, %s136, %s137
    %p141 = pneg %p135
    %p142 = scmp.eq.s32.totalorder %s10, 9
    %p143 = por %p141, %p142
    %p144 = scmp.ne.s32.totalorder %s136, %s139
    %p145 = scmp.eq.s32.totalorder %s10, 0
    %p146 = por %p144, %p145
    %p147 = scmp.ne.s32.totalorder %s136, %s139
    %p148 = scmp.eq.s32.totalorder %s15, 9
    %p149 = por %p147, %p148
    %p150 = scmp.ne.s32.totalorder %s139, %s140
    %p151 = scmp.eq.s32.totalorder %s15, 0
    %p152 = por %p150, %p151
    %p153 = scmp.ne.s32.totalorder %s139, %s140
    %p154 = scmp.eq.s32.totalorder %s16, 9
    %p155 = por %p153, %p154
    %p157 = scmp.ne.s32.totalorder %s140, %s156
    %p158 = scmp.eq.s32.totalorder %s16, 0
    %p159 = por %p157, %p158
    %p160 = scmp.le.s32.totalorder 1, %s10
    %p161 = scmp.lt.s32.totalorder %s10, 11
    %p162 = pnand %p160, %p161
    %p163 = pneg %p162
    // Predicated region
    $region9: #{_lambda_.20} parent=5 // pred_check
      _
    $region10: #{_lambda_.20} parent=5 // pred_check_branch
      %165 = sbr.rel (%p162) target = $region12
    $region11: #{_lambda_.20} parent=5 // pred_region
      %s166 = ssub.s32 %s10, 1
      // Predicated region
      $region13: #{_lambda_.20} parent=11 // pred_check
        %p167 = pneg %p103
      $region14: #{_lambda_.20} parent=11 // pred_check_branch
        %169 = sbr.rel (%p167) target = $region16
      $region15: #{_lambda_.20} parent=11 // pred_region
        _
      $region16: #{_lambda_.20} parent=11 // pred_fallthru
        _
      // Predicated region
      $region17: #{_lambda_.20} parent=11 // pred_check
        %p170 = pneg %p124
      $region18: #{_lambda_.20} parent=11 // pred_check_branch
        %172 = sbr.rel (%p170) target = $region20
      $region19: #{_lambda_.20} parent=11 // pred_region
        _
      $region20: #{_lambda_.20} parent=11 // pred_fallthru
        _
    $region12: #{_lambda_.20} parent=5 // pred_fallthru
      _
    %p173 = scmp.lt.s32.totalorder %s10, 10
    // Predicated region
    $region21: #{_lambda_.20} parent=5 // pred_check
      %p174 = pneg %p173
    $region22: #{_lambda_.20} parent=5 // pred_check_branch
      %176 = sbr.rel (%p174) target = $region24
    $region23: #{_lambda_.20} parent=5 // pred_region
      // Predicated region
      $region25: #{_lambda_.20} parent=23 // pred_check
        %p177 = pneg %p44
      $region26: #{_lambda_.20} parent=23 // pred_check_branch
        %179 = sbr.rel (%p177) target = $region28
      $region27: #{_lambda_.20} parent=23 // pred_region
        %s180 = smul.u32 2, %s18
        %s181 = ssub.s32 11, %s180
        %p182 = scmp.lt.s32.totalorder %s181, 2
        %s183 = scalar_select %p182, %s181, 2
        %s184 = smul.u32 128, %s183
        %p185 = scmp.lt.s32.totalorder %s17, 1
        %s186 = scalar_select %p185, %s17, 1
        %p187 = scmp.lt.s32.totalorder %s180, 10
        %s188 = scalar_select %p187, %s180, 10
        %s189 = smul.addr %s186, 11
        %s190 = sadd.s32 %s188, %s189
        %s191 = smul.addr %s190, 8
        %s192 = scalar_lea.vmem %s0, %s191
        %s193 = smul.u32 2, %s18
        %s194 = ssub.s32 11, %s193
        %p195 = scmp.lt.s32.totalorder %s194, 2
        %s196 = scalar_select %p195, %s194, 2
        %s197 = smul.u32 128, %s196
      $region28: #{_lambda_.20} parent=23 // pred_fallthru
        _
      // Predicated region
      $region29: #{_lambda_.20} parent=23 // pred_check
        %p198 = pneg %p76
      $region30: #{_lambda_.20} parent=23 // pred_check_branch
        %200 = sbr.rel (%p198) target = $region32
      $region31: #{_lambda_.20} parent=23 // pred_region
        %s201 = sadd.s32 %s18, 1
        %s202 = smul.u32 %s201, 2
        %p203 = scmp.lt.s32.totalorder %s17, 1
        %s204 = scalar_select %p203, %s17, 1
        %p205 = scmp.lt.s32.totalorder %s202, 10
        %s206 = scalar_select %p205, %s202, 10
        %s207 = smul.addr %s204, 11
        %s208 = sadd.s32 %s206, %s207
        %s209 = smul.addr %s208, 8
        %s210 = scalar_lea.vmem %s1, %s209
        %s211 = sadd.s32 %s18, 1
        %s212 = smul.u32 %s211, 2
      $region32: #{_lambda_.20} parent=23 // pred_fallthru
        _
    $region24: #{_lambda_.20} parent=5 // pred_fallthru
      _
    %p213 = scmp.le.s32.totalorder 1, %s10
    %p214 = scmp.lt.s32.totalorder %s10, 11
    %p215 = pnand %p213, %p214
    %p216 = pneg %p215
    // Predicated region
    $region33: #{_lambda_.20} parent=5 // pred_check
      _
    $region34: #{_lambda_.20} parent=5 // pred_check_branch
      %218 = sbr.rel (%p215) target = $region36
    $region35: #{_lambda_.20} parent=5 // pred_region
      %s219 = ssub.s32 %s10, 1
      %s220 = smul.u32 2, %s20
      %s221 = ssub.s32 11, %s220
      %p222 = scmp.lt.s32.totalorder %s221, 2
      %s223 = scalar_select %p222, %s221, 2
      %s224 = smul.u32 128, %s223
      %p225 = scmp.lt.s32.totalorder %s19, 1
      %s226 = scalar_select %p225, %s19, 1
      %p227 = scmp.lt.s32.totalorder %s220, 10
      %s228 = scalar_select %p227, %s220, 10
      %s229 = smul.addr %s226, 11
      %s230 = sadd.s32 %s228, %s229
      %s231 = smul.addr %s230, 8
      %s232 = scalar_lea.vmem %s0, %s231
      %p233 = pneg %p50
      %p234 = pneg %p47
      %s235 = sadd.s32 %s20, 1
      %s236 = smul.u32 %s235, 2
      %p237 = scmp.lt.s32.totalorder %s19, 1
      %s238 = scalar_select %p237, %s19, 1
      %p239 = scmp.lt.s32.totalorder %s236, 10
      %s240 = scalar_select %p239, %s236, 10
      %s241 = smul.addr %s238, 11
      %s242 = sadd.s32 %s240, %s241
      %s243 = smul.addr %s242, 8
      %s244 = scalar_lea.vmem %s1, %s243
      %p245 = pneg %p82
      %p246 = pneg %p79
      %p247 = pneg %p103
      %p248 = pneg %p100
      %p249 = pneg %p124
      %p250 = pneg %p121
      %p251 = pneg %p152
      %p252 = pneg %p149
      %s253 = smul.u32 2, %s20
      %p254 = scmp.lt.s32.totalorder %s19, 1
      %s255 = scalar_select %p254, %s19, 1
      %p256 = scmp.lt.s32.totalorder %s253, 9
      %s257 = scalar_select %p256, %s253, 9
      %s258 = smul.addr %s255, 10
      %s259 = sadd.s32 %s257, %s258
      %s260 = smul.addr %s259, 8
      %s261 = scalar_lea.vmem %s4, %s260
      %s262 = smul.u32 2, %s20
      %s263 = ssub.s32 11, %s262
      %p264 = scmp.lt.s32.totalorder %s263, 2
      %s265 = scalar_select %p264, %s263, 2
      %s266 = smul.u32 128, %s265
      %p267 = scmp.lt.s32.totalorder %s19, 1
      %s268 = scalar_select %p267, %s19, 1
      %p269 = scmp.lt.s32.totalorder %s262, 10
      %s270 = scalar_select %p269, %s262, 10
      %s271 = smul.addr %s268, 11
      %s272 = sadd.s32 %s270, %s271
      %s273 = smul.addr %s272, 8
      %s274 = scalar_lea.vmem %s0, %s273
      %s275 = smul.u32 2, %s20
      %s276 = ssub.s32 11, %s275
      %p277 = scmp.lt.s32.totalorder %s276, 2
      %s278 = scalar_select %p277, %s276, 2
      %s279 = smul.u32 128, %s278
      %s280 = sadd.s32 %s20, 1
      %s281 = smul.u32 %s280, 2
      %p282 = scmp.lt.s32.totalorder %s19, 1
      %s283 = scalar_select %p282, %s19, 1
      %p284 = scmp.lt.s32.totalorder %s281, 10
      %s285 = scalar_select %p284, %s281, 10
      %s286 = smul.addr %s283, 11
      %s287 = sadd.s32 %s285, %s286
      %s288 = smul.addr %s287, 8
      %s289 = scalar_lea.vmem %s1, %s288
      %s290 = sadd.s32 %s20, 1
      %s291 = smul.u32 %s290, 2
      %s292 = smul.u32 2, %s20
      %p293 = scmp.lt.s32.totalorder %s19, 1
      %s294 = scalar_select %p293, %s19, 1
      %p295 = scmp.lt.s32.totalorder %s292, 9
      %s296 = scalar_select %p295, %s292, 9
      %s297 = smul.addr %s294, 10
      %s298 = sadd.s32 %s296, %s297
      %s299 = smul.addr %s298, 8
      %s300 = scalar_lea.vmem %s4, %s299
      %s301 = smul.u32 2, %s20
      %v303 = vld [vmem:[%s274] sm:$0xff]
      %v304 = vld [vmem:[%s274 + $0x8] sm:$0xff]
      %v305 = vld [vmem:[%s289] sm:$0xff]
      %vm306 = vcmp.gt.f32.partialorder %v303, 0.0
      %vm307 = vcmp.gt.f32.partialorder %v304, 0.0
      %vm308 = vcmp.gt.f32.partialorder %v305, 0.0
      %v309 = vmul.f32 %v303, 0.01
      %v310 = vmul.f32 %v304, 0.01
      %v311 = vmul.f32 %v305, 0.01
      %v312 = vsel %vm306, %v303, %v309
      %v313 = vsel %vm307, %v304, %v310
      %v314 = vsel %vm308, %v305, %v311
      %318 = vrot.lane.b32.xlu0 %v312, 125
      %v319 = vpop.permute.xlu0 %318
      %320 = vrot.lane.b32.xlu0 %v313, 125
      %v321 = vpop.permute.xlu0 %320
      %322 = vrot.lane.b32.xlu0 %v314, 125
      %v323 = vpop.permute.xlu0 %322
      %vm324 = vcmask 1022976
      %v325 = vsel %vm324, %v319, %v321
      %v326 = vsel %vm324, %v321, %v323
      %329 = vrot.lane.b32.xlu0 %v312, 122
      %v330 = vpop.permute.xlu0 %329
      %331 = vrot.lane.b32.xlu0 %v313, 122
      %v332 = vpop.permute.xlu0 %331
      %333 = vrot.lane.b32.xlu0 %v314, 122
      %v334 = vpop.permute.xlu0 %333
      %vm335 = vcmask 998400
      %v336 = vsel %vm335, %v330, %v332
      %v337 = vsel %vm335, %v332, %v334
      %v340 = vpack.c.bf16 %v325, %v312
      %v341 = vpack.c.bf16 %v326, %v313
      %v342 = vpack.c.bf16 %v336, %v336
      %v343 = vpack.c.bf16 %v337, %v337
      %v344 = vld [vmem:[%s2] sm:$0xf]
      %v345 = vld [vmem:[%s3] sm:$0xff]
      %347 = vset.pattern.permute.xlu0 0
      %348 = vperm.xlu0 %347, %v345
      %v349 = vpop.permute.xlu0 %348
      %vm351 = vcmask 195584
      %v353 = vsel %vm351, %v344, 0
      %vm355 = vcmask 1043456
      %v357 = vsel %vm355, %v342, 0
      %v360 = vsel %vm355, %v343, 0
      %362 = vmatprep.subr.bf16.mxu0 0
      %363 = vmatpush1.bf16.msra.mxu0 0
      %364 = vmatprep.subr.bf16.mxu0 0
      %365 = vmatpush1.bf16.msra.mxu0 0
      %366 = vmatprep.subr.bf16.mxu0 0
      %367 = vmatpush1.bf16.msra.mxu0 0
      %368 = vmatprep.subr.bf16.mxu0 0
      %369 = vmatpush1.bf16.msra.mxu0 0
      %370 = vmatprep.subr.bf16.mxu0 0
      %371 = vmatpush1.bf16.msra.mxu0 0
      %372 = vmatprep.subr.bf16.mxu0 0
      %373 = vmatpush1.bf16.msra.mxu0 0
      %374 = vmatprep.subr.bf16.mxu0 %v360
      %375 = vmatpush1.bf16.msra.mxu0 %v357
      %376 = vmatprep.subr.bf16.mxu0 %v341
      %377 = vmatpush1.bf16.msra.mxu0 %v340
      %378 = vmatprep.subr.bf16.mxu0 0
      %379 = vmatpush2.bf16.msra.mxu0 0
      %380 = vmatprep.subr.bf16.mxu0 0
      %381 = vmatpush2.bf16.msra.mxu0 0
      %382 = vmatprep.subr.bf16.mxu0 0
      %383 = vmatpush2.bf16.msra.mxu0 0
      %384 = vmatprep.subr.bf16.mxu0 0
      %385 = vmatpush2.bf16.msra.mxu0 0
      %386 = vmatprep.subr.bf16.mxu0 0
      %387 = vmatpush2.bf16.msra.mxu0 0
      %388 = vmatprep.subr.bf16.mxu0 0
      %389 = vmatpush2.bf16.msra.mxu0 0
      %390 = vmatprep.subr.bf16.mxu0 0
      %391 = vmatpush2.bf16.msra.mxu0 0
      %392 = vmatprep.subr.bf16.mxu0 0
      %393 = vmatpush2.bf16.msra.mxu0 0
      %394 = vmatprep.mubr.bf16.mxu0 0
      %395 = vmatmul.mubr.bf16.gmra.mxu0 %v353
      %v396 = vpop.f32.mrf.mxu0
      %v397 = vadd.f32 %v349, %v396
      %v398 = vpop.f32.mrf.mxu0
      %v399 = vadd.f32 %v349, %v398
      %v400 = vpop.f32.mrf.mxu0
      %v401 = vpop.f32.mrf.mxu0
      %402 = vdwg.mxu0
      %406 = vrot.lane.b32.xlu0 %v303, 125
      %v407 = vpop.permute.xlu0 %406
      %408 = vrot.lane.b32.xlu0 %v304, 125
      %v409 = vpop.permute.xlu0 %408
      %410 = vrot.lane.b32.xlu0 %v305, 125
      %v411 = vpop.permute.xlu0 %410
      %v412 = vsel %vm324, %v407, %v409
      %v413 = vsel %vm324, %v409, %v411
      %v416 = vadd.f32 %v397, %v412
      %v417 = vadd.f32 %v399, %v413
      %418 = vst [vmem:[%s300] sm:$0xff] %v416
      %419 = vst [vmem:[%s300 + $0x8] sm:$0xff] %v417
      %s420 = smul.u32 2, %s20
      %p421 = scmp.lt.s32.totalorder %s19, 1
      %s422 = scalar_select %p421, %s19, 1
      %p423 = scmp.lt.s32.totalorder %s420, 9
      %s424 = scalar_select %p423, %s420, 9
      %s425 = smul.addr %s422, 10
      %s426 = sadd.s32 %s424, %s425
      %s427 = smul.addr %s426, 8
      %s428 = scalar_lea.vmem %s4, %s427
      // Predicated region
      $region37: #{_lambda_.20} parent=35 // pred_check
        %p429 = pneg %p149
      $region38: #{_lambda_.20} parent=35 // pred_check_branch
        %431 = sbr.rel (%p429) target = $region40
      $region39: #{_lambda_.20} parent=35 // pred_region
        %s432 = smul.u32 2, %s20
      $region40: #{_lambda_.20} parent=35 // pred_fallthru
        _
    $region36: #{_lambda_.20} parent=5 // pred_fallthru
      _
    %p433 = scmp.le.s32.totalorder 2, %s10
    // Predicated region
    $region41: #{_lambda_.20} parent=5 // pred_check
      %p434 = pneg %p433
    $region42: #{_lambda_.20} parent=5 // pred_check_branch
      %436 = sbr.rel (%p434) target = $region44
    $region43: #{_lambda_.20} parent=5 // pred_region
      %s437 = ssub.s32 %s10, 2
      // Predicated region
      $region45: #{_lambda_.20} parent=43 // pred_check
        %p438 = pneg %p155
      $region46: #{_lambda_.20} parent=43 // pred_check_branch
        %440 = sbr.rel (%p438) target = $region48
      $region47: #{_lambda_.20} parent=43 // pred_region
        %s441 = smul.u32 2, %s22
        %p442 = scmp.lt.s32.totalorder %s21, 1
        %s443 = scalar_select %p442, %s21, 1
        %p444 = scmp.lt.s32.totalorder %s441, 9
        %s445 = scalar_select %p444, %s441, 9
        %s446 = smul.addr %s443, 10
        %s447 = sadd.s32 %s445, %s446
        %s448 = smul.addr %s447, 8
        %s449 = scalar_lea.vmem %s4, %s448
      $region48: #{_lambda_.20} parent=43 // pred_fallthru
        _
    $region44: #{_lambda_.20} parent=5 // pred_fallthru
      _
  $region6: #{_lambda_.20} parent=0 // loop_footer
    %s14 = sadd.s32 1, %s10
  $region7: #{_lambda_.20} parent=0 // loop_footer_branch
    %9 = sbr.rel target = $region3
  $region8: #{_lambda_.20} parent=0 // loop_exit
    _

// kernel: _lambda_.21
$region0: #{_lambda_.21}
  #allocation0 [shape = 'u32[]', space=smem, size = 0x4, offset = 0x4, fixed_abs, tag = 'smem constant byte address 0x4 - core index']
  #allocation1 [shape = 'u32[144,128]{1,0:T(1,128)}', space=vmem, size = 0x12000, scoped, tag = 'internal scratch']
  %s0 = inlined_call_operand.vmem [shape: f32[2,8,1408], index: 0, kind: input, shape index: {}, may-alias: {0,1}]
  %s1 = inlined_call_operand.vmem [shape: f32[2,8,1408], index: 1, kind: input, shape index: {}, may-alias: {0,1}]
  %s2 = inlined_call_operand.vmem [shape: bf16[8,40], index: 2, kind: input, shape index: {}]
  %s3 = inlined_call_operand.vmem [shape: f32[8,1], index: 3, kind: input, shape index: {}]
  %s4 = inlined_call_operand.vmem [shape: f32[2,8,1280], index: 4, kind: output, shape index: {}]
  %s5 = sld [smem:[#allocation0]]
  $region49: #{_lambda_.21} parent=0
    _
  %s7 = ssub.s32 1, %s5
  %s8 = scalar_select 0, %s7, %s5
  loop: start=0, step=1, limit=12
  $region2: #{_lambda_.21} parent=0 // loop_pre_header
    _
  $region3: #{_lambda_.21} parent=0 // loop_header
    %s10 = sphi 0, %s14
    %p11 = scmp.ge.s32.totalorder %s10, 12
    %s17 = sphi 0, %s29
    %s18 = sphi 0, %s25
    %s19 = sphi 0, %s17
    %s20 = sphi 0, %s18
    %s21 = sphi 0, %s19
    %s22 = sphi 0, %s20
    %s34 = sphi 0, %s36
    %s37 = sphi 0, %s34
    %s38 = sphi 0, %s37
    %s54 = sphi 0, %s38
    %s66 = sphi 0, %s68
    %s69 = sphi 0, %s66
    %s70 = sphi 0, %s69
    %s86 = sphi 0, %s70
    %s90 = sphi 0, %s90
    %s92 = sphi 0, %s90
    %s93 = sphi 0, %s92
    %s107 = sphi 0, %s93
    %s111 = sphi 0, %s111
    %s113 = sphi 0, %s111
    %s114 = sphi 0, %s113
    %s128 = sphi 0, %s114
    %s136 = sphi 0, %s138
    %s139 = sphi 0, %s136
    %s140 = sphi 0, %s139
    %s156 = sphi 0, %s140
  $region4: #{_lambda_.21} parent=0 // loop_header_branch
    %13 = sbr.rel (%p11) target = $region8
  $region5: #{_lambda_.21} parent=0 // loop_body
    %s15 = ssub.s32 %s10, 1
    %s16 = ssub.s32 %s10, 2
    %s23 = sadd.s32 1, %s18
    %p24 = scmp.ge.s32.totalorder %s23, 5
    %s25 = scalar_select %p24, 0, %s23
    %s26 = sadd.s32 1, %s17
    %s27 = scalar_select %p24, %s26, %s17
    %p28 = scmp.ge.s32.totalorder %s27, 2
    %s29 = scalar_select %p28, 0, %s27
    %s30 = ssub.s32 %s17, %s29
    %s31 = ssub.s32 %s18, %s25
    %s32 = sor.u32 %s30, %s31
    %p33 = scmp.eq.s32.totalorder %s32, 0
    %s35 = sadd.s32 %s34, 1
    %s36 = scalar_select %p33, %s34, %s35
    %p39 = pneg %p33
    %p40 = scmp.eq.s32.totalorder %s10, 9
    %p41 = por %p39, %p40
    %p42 = scmp.ne.s32.totalorder %s34, %s37
    %p43 = scmp.eq.s32.totalorder %s10, 0
    %p44 = por %p42, %p43
    %p45 = scmp.ne.s32.totalorder %s34, %s37
    %p46 = scmp.eq.s32.totalorder %s15, 9
    %p47 = por %p45, %p46
    %p48 = scmp.ne.s32.totalorder %s37, %s38
    %p49 = scmp.eq.s32.totalorder %s15, 0
    %p50 = por %p48, %p49
    %p51 = scmp.ne.s32.totalorder %s37, %s38
    %p52 = scmp.eq.s32.totalorder %s16, 9
    %p53 = por %p51, %p52
    %p55 = scmp.ne.s32.totalorder %s38, %s54
    %p56 = scmp.eq.s32.totalorder %s16, 0
    %p57 = por %p55, %p56
    %s58 = sadd.s32 %s18, 1
    %s59 = smul.u32 %s58, 2
    %s60 = sadd.s32 %s25, 1
    %s61 = smul.u32 %s60, 2
    %s62 = ssub.s32 %s17, %s29
    %s63 = ssub.s32 %s59, %s61
    %s64 = sor.u32 %s62, %s63
    %p65 = scmp.eq.s32.totalorder %s64, 0
    %s67 = sadd.s32 %s66, 1
    %s68 = scalar_select %p65, %s66, %s67
    %p71 = pneg %p65
    %p72 = scmp.eq.s32.totalorder %s10, 9
    %p73 = por %p71, %p72
    %p74 = scmp.ne.s32.totalorder %s66, %s69
    %p75 = scmp.eq.s32.totalorder %s10, 0
    %p76 = por %p74, %p75
    %p77 = scmp.ne.s32.totalorder %s66, %s69
    %p78 = scmp.eq.s32.totalorder %s15, 9
    %p79 = por %p77, %p78
    %p80 = scmp.ne.s32.totalorder %s69, %s70
    %p81 = scmp.eq.s32.totalorder %s15, 0
    %p82 = por %p80, %p81
    %p83 = scmp.ne.s32.totalorder %s69, %s70
    %p84 = scmp.eq.s32.totalorder %s16, 9
    %p85 = por %p83, %p84
    %p87 = scmp.ne.s32.totalorder %s70, %s86
    %p88 = scmp.eq.s32.totalorder %s16, 0
    %p89 = por %p87, %p88
    %s91 = sadd.s32 %s90, 1
    %p94 = scmp.eq.s32.totalorder %s10, 9
    %p95 = scmp.ne.s32.totalorder %s90, %s92
    %p96 = scmp.eq.s32.totalorder %s10, 0
    %p97 = por %p95, %p96
    %p98 = scmp.ne.s32.totalorder %s90, %s92
    %p99 = scmp.eq.s32.totalorder %s15, 9
    %p100 = por %p98, %p99
    %p101 = scmp.ne.s32.totalorder %s92, %s93
    %p102 = scmp.eq.s32.totalorder %s15, 0
    %p103 = por %p101, %p102
    %p104 = scmp.ne.s32.totalorder %s92, %s93
    %p105 = scmp.eq.s32.totalorder %s16, 9
    %p106 = por %p104, %p105
    %p108 = scmp.ne.s32.totalorder %s93, %s107
    %p109 = scmp.eq.s32.totalorder %s16, 0
    %p110 = por %p108, %p109
    %s112 = sadd.s32 %s111, 1
    %p115 = scmp.eq.s32.totalorder %s10, 9
    %p116 = scmp.ne.s32.totalorder %s111, %s113
    %p117 = scmp.eq.s32.totalorder %s10, 0
    %p118 = por %p116, %p117
    %p119 = scmp.ne.s32.totalorder %s111, %s113
    %p120 = scmp.eq.s32.totalorder %s15, 9
    %p121 = por %p119, %p120
    %p122 = scmp.ne.s32.totalorder %s113, %s114
    %p123 = scmp.eq.s32.totalorder %s15, 0
    %p124 = por %p122, %p123
    %p125 = scmp.ne.s32.totalorder %s113, %s114
    %p126 = scmp.eq.s32.totalorder %s16, 9
    %p127 = por %p125, %p126
    %p129 = scmp.ne.s32.totalorder %s114, %s128
    %p130 = scmp.eq.s32.totalorder %s16, 0
    %p131 = por %p129, %p130
    %s132 = ssub.s32 %s17, %s29
    %s133 = ssub.s32 %s18, %s25
    %s134 = sor.u32 %s132, %s133
    %p135 = scmp.eq.s32.totalorder %s134, 0
    %s137 = sadd.s32 %s136, 1
    %s138 = scalar_select %p135, %s136, %s137
    %p141 = pneg %p135
    %p142 = scmp.eq.s32.totalorder %s10, 9
    %p143 = por %p141, %p142
    %p144 = scmp.ne.s32.totalorder %s136, %s139
    %p145 = scmp.eq.s32.totalorder %s10, 0
    %p146 = por %p144, %p145
    %p147 = scmp.ne.s32.totalorder %s136, %s139
    %p148 = scmp.eq.s32.totalorder %s15, 9
    %p149 = por %p147, %p148
    %p150 = scmp.ne.s32.totalorder %s139, %s140
    %p151 = scmp.eq.s32.totalorder %s15, 0
    %p152 = por %p150, %p151
    %p153 = scmp.ne.s32.totalorder %s139, %s140
    %p154 = scmp.eq.s32.totalorder %s16, 9
    %p155 = por %p153, %p154
    %p157 = scmp.ne.s32.totalorder %s140, %s156
    %p158 = scmp.eq.s32.totalorder %s16, 0
    %p159 = por %p157, %p158
    %p160 = scmp.le.s32.totalorder 1, %s10
    %p161 = scmp.lt.s32.totalorder %s10, 11
    %p162 = pnand %p160, %p161
    %p163 = pneg %p162
    // Predicated region
    $region9: #{_lambda_.21} parent=5 // pred_check
      _
    $region10: #{_lambda_.21} parent=5 // pred_check_branch
      %165 = sbr.rel (%p162) target = $region12
    $region11: #{_lambda_.21} parent=5 // pred_region
      %s166 = ssub.s32 %s10, 1
      // Predicated region
      $region13: #{_lambda_.21} parent=11 // pred_check
        %p167 = pneg %p103
      $region14: #{_lambda_.21} parent=11 // pred_check_branch
        %169 = sbr.rel (%p167) target = $region16
      $region15: #{_lambda_.21} parent=11 // pred_region
        _
      $region16: #{_lambda_.21} parent=11 // pred_fallthru
        _
      // Predicated region
      $region17: #{_lambda_.21} parent=11 // pred_check
        %p170 = pneg %p124
      $region18: #{_lambda_.21} parent=11 // pred_check_branch
        %172 = sbr.rel (%p170) target = $region20
      $region19: #{_lambda_.21} parent=11 // pred_region
        _
      $region20: #{_lambda_.21} parent=11 // pred_fallthru
        _
    $region12: #{_lambda_.21} parent=5 // pred_fallthru
      _
    %p173 = scmp.lt.s32.totalorder %s10, 10
    // Predicated region
    $region21: #{_lambda_.21} parent=5 // pred_check
      %p174 = pneg %p173
    $region22: #{_lambda_.21} parent=5 // pred_check_branch
      %176 = sbr.rel (%p174) target = $region24
    $region23: #{_lambda_.21} parent=5 // pred_region
      // Predicated region
      $region25: #{_lambda_.21} parent=23 // pred_check
        %p177 = pneg %p44
      $region26: #{_lambda_.21} parent=23 // pred_check_branch
        %179 = sbr.rel (%p177) target = $region28
      $region27: #{_lambda_.21} parent=23 // pred_region
        %s180 = smul.u32 2, %s18
        %s181 = ssub.s32 11, %s180
        %p182 = scmp.lt.s32.totalorder %s181, 2
        %s183 = scalar_select %p182, %s181, 2
        %s184 = smul.u32 128, %s183
        %p185 = scmp.lt.s32.totalorder %s17, 1
        %s186 = scalar_select %p185, %s17, 1
        %p187 = scmp.lt.s32.totalorder %s180, 10
        %s188 = scalar_select %p187, %s180, 10
        %s189 = smul.addr %s186, 11
        %s190 = sadd.s32 %s188, %s189
        %s191 = smul.addr %s190, 8
        %s192 = scalar_lea.vmem %s0, %s191
        %s193 = smul.u32 2, %s18
        %s194 = ssub.s32 11, %s193
        %p195 = scmp.lt.s32.totalorder %s194, 2
        %s196 = scalar_select %p195, %s194, 2
        %s197 = smul.u32 128, %s196
      $region28: #{_lambda_.21} parent=23 // pred_fallthru
        _
      // Predicated region
      $region29: #{_lambda_.21} parent=23 // pred_check
        %p198 = pneg %p76
      $region30: #{_lambda_.21} parent=23 // pred_check_branch
        %200 = sbr.rel (%p198) target = $region32
      $region31: #{_lambda_.21} parent=23 // pred_region
        %s201 = sadd.s32 %s18, 1
        %s202 = smul.u32 %s201, 2
        %p203 = scmp.lt.s32.totalorder %s17, 1
        %s204 = scalar_select %p203, %s17, 1
        %p205 = scmp.lt.s32.totalorder %s202, 10
        %s206 = scalar_select %p205, %s202, 10
        %s207 = smul.addr %s204, 11
        %s208 = sadd.s32 %s206, %s207
        %s209 = smul.addr %s208, 8
        %s210 = scalar_lea.vmem %s1, %s209
        %s211 = sadd.s32 %s18, 1
        %s212 = smul.u32 %s211, 2
      $region32: #{_lambda_.21} parent=23 // pred_fallthru
        _
    $region24: #{_lambda_.21} parent=5 // pred_fallthru
      _
    %p213 = scmp.le.s32.totalorder 1, %s10
    %p214 = scmp.lt.s32.totalorder %s10, 11
    %p215 = pnand %p213, %p214
    %p216 = pneg %p215
    // Predicated region
    $region33: #{_lambda_.21} parent=5 // pred_check
      _
    $region34: #{_lambda_.21} parent=5 // pred_check_branch
      %218 = sbr.rel (%p215) target = $region36
    $region35: #{_lambda_.21} parent=5 // pred_region
      %s219 = ssub.s32 %s10, 1
      %s220 = smul.u32 2, %s20
      %s221 = ssub.s32 11, %s220
      %p222 = scmp.lt.s32.totalorder %s221, 2
      %s223 = scalar_select %p222, %s221, 2
      %s224 = smul.u32 128, %s223
      %p225 = scmp.lt.s32.totalorder %s19, 1
      %s226 = scalar_select %p225, %s19, 1
      %p227 = scmp.lt.s32.totalorder %s220, 10
      %s228 = scalar_select %p227, %s220, 10
      %s229 = smul.addr %s226, 11
      %s230 = sadd.s32 %s228, %s229
      %s231 = smul.addr %s230, 8
      %s232 = scalar_lea.vmem %s0, %s231
      %p233 = pneg %p50
      %p234 = pneg %p47
      %s235 = sadd.s32 %s20, 1
      %s236 = smul.u32 %s235, 2
      %p237 = scmp.lt.s32.totalorder %s19, 1
      %s238 = scalar_select %p237, %s19, 1
      %p239 = scmp.lt.s32.totalorder %s236, 10
      %s240 = scalar_select %p239, %s236, 10
      %s241 = smul.addr %s238, 11
      %s242 = sadd.s32 %s240, %s241
      %s243 = smul.addr %s242, 8
      %s244 = scalar_lea.vmem %s1, %s243
      %p245 = pneg %p82
      %p246 = pneg %p79
      %p247 = pneg %p103
      %p248 = pneg %p100
      %p249 = pneg %p124
      %p250 = pneg %p121
      %p251 = pneg %p152
      %p252 = pneg %p149
      %s253 = smul.u32 2, %s20
      %p254 = scmp.lt.s32.totalorder %s19, 1
      %s255 = scalar_select %p254, %s19, 1
      %p256 = scmp.lt.s32.totalorder %s253, 9
      %s257 = scalar_select %p256, %s253, 9
      %s258 = smul.addr %s255, 10
      %s259 = sadd.s32 %s257, %s258
      %s260 = smul.addr %s259, 8
      %s261 = scalar_lea.vmem %s4, %s260
      %s262 = smul.u32 2, %s20
      %s263 = ssub.s32 11, %s262
      %p264 = scmp.lt.s32.totalorder %s263, 2
      %s265 = scalar_select %p264, %s263, 2
      %s266 = smul.u32 128, %s265
      %p267 = scmp.lt.s32.totalorder %s19, 1
      %s268 = scalar_select %p267, %s19, 1
      %p269 = scmp.lt.s32.totalorder %s262, 10
      %s270 = scalar_select %p269, %s262, 10
      %s271 = smul.addr %s268, 11
      %s272 = sadd.s32 %s270, %s271
      %s273 = smul.addr %s272, 8
      %s274 = scalar_lea.vmem %s0, %s273
      %s275 = smul.u32 2, %s20
      %s276 = ssub.s32 11, %s275
      %p277 = scmp.lt.s32.totalorder %s276, 2
      %s278 = scalar_select %p277, %s276, 2
      %s279 = smul.u32 128, %s278
      %s280 = sadd.s32 %s20, 1
      %s281 = smul.u32 %s280, 2
      %p282 = scmp.lt.s32.totalorder %s19, 1
      %s283 = scalar_select %p282, %s19, 1
      %p284 = scmp.lt.s32.totalorder %s281, 10
      %s285 = scalar_select %p284, %s281, 10
      %s286 = smul.addr %s283, 11
      %s287 = sadd.s32 %s285, %s286
      %s288 = smul.addr %s287, 8
      %s289 = scalar_lea.vmem %s1, %s288
      %s290 = sadd.s32 %s20, 1
      %s291 = smul.u32 %s290, 2
      %s292 = smul.u32 2, %s20
      %p293 = scmp.lt.s32.totalorder %s19, 1
      %s294 = scalar_select %p293, %s19, 1
      %p295 = scmp.lt.s32.totalorder %s292, 9
      %s296 = scalar_select %p295, %s292, 9
      %s297 = smul.addr %s294, 10
      %s298 = sadd.s32 %s296, %s297
      %s299 = smul.addr %s298, 8
      %s300 = scalar_lea.vmem %s4, %s299
      %s301 = smul.u32 2, %s20
      %v303 = vld [vmem:[%s274] sm:$0xff]
      %v304 = vld [vmem:[%s274 + $0x8] sm:$0xff]
      %v305 = vld [vmem:[%s289] sm:$0xff]
      %vm306 = vcmp.gt.f32.partialorder %v303, 0.0
      %vm307 = vcmp.gt.f32.partialorder %v304, 0.0
      %vm308 = vcmp.gt.f32.partialorder %v305, 0.0
      %v309 = vmul.f32 %v303, 0.01
      %v310 = vmul.f32 %v304, 0.01
      %v311 = vmul.f32 %v305, 0.01
      %v312 = vsel %vm306, %v303, %v309
      %v313 = vsel %vm307, %v304, %v310
      %v314 = vsel %vm308, %v305, %v311
      %318 = vrot.lane.b32.xlu0 %v312, 127
      %v319 = vpop.permute.xlu0 %318
      %320 = vrot.lane.b32.xlu0 %v313, 127
      %v321 = vpop.permute.xlu0 %320
      %322 = vrot.lane.b32.xlu0 %v314, 127
      %v323 = vpop.permute.xlu0 %322
      %vm324 = vcmask 1039360
      %v325 = vsel %vm324, %v319, %v321
      %v326 = vsel %vm324, %v321, %v323
      %329 = vrot.lane.b32.xlu0 %v312, 126
      %v330 = vpop.permute.xlu0 %329
      %331 = vrot.lane.b32.xlu0 %v313, 126
      %v332 = vpop.permute.xlu0 %331
      %333 = vrot.lane.b32.xlu0 %v314, 126
      %v334 = vpop.permute.xlu0 %333
      %vm335 = vcmask 1031168
      %v336 = vsel %vm335, %v330, %v332
      %v337 = vsel %vm335, %v332, %v334
      %340 = vrot.lane.b32.xlu0 %v312, 125
      %v341 = vpop.permute.xlu0 %340
      %342 = vrot.lane.b32.xlu0 %v313, 125
      %v343 = vpop.permute.xlu0 %342
      %344 = vrot.lane.b32.xlu0 %v314, 125
      %v345 = vpop.permute.xlu0 %344
      %vm346 = vcmask 1022976
      %v347 = vsel %vm346, %v341, %v343
      %v348 = vsel %vm346, %v343, %v345
      %351 = vrot.lane.b32.xlu0 %v312, 124
      %v352 = vpop.permute.xlu0 %351
      %353 = vrot.lane.b32.xlu0 %v313, 124
      %v354 = vpop.permute.xlu0 %353
      %355 = vrot.lane.b32.xlu0 %v314, 124
      %v356 = vpop.permute.xlu0 %355
      %vm357 = vcmask 1014784
      %v358 = vsel %vm357, %v352, %v354
      %v359 = vsel %vm357, %v354, %v356
      %v362 = vpack.c.bf16 %v325, %v312
      %v363 = vpack.c.bf16 %v326, %v313
      %v364 = vpack.c.bf16 %v347, %v336
      %v365 = vpack.c.bf16 %v348, %v337
      %v366 = vpack.c.bf16 %v358, %v358
      %v367 = vpack.c.bf16 %v359, %v359
      %v368 = vld [vmem:[%s2] sm:$0xf]
      %v369 = vld [vmem:[%s3] sm:$0xff]
      %371 = vset.pattern.permute.xlu0 0
      %372 = vperm.xlu0 %371, %v369
      %v373 = vpop.permute.xlu0 %372
      %vm375 = vcmask 326656
      %v377 = vsel %vm375, %v368, 0
      %vm379 = vcmask 1043456
      %v381 = vsel %vm379, %v366, 0
      %v384 = vsel %vm379, %v367, 0
      %386 = vmatprep.subr.bf16.mxu0 0
      %387 = vmatpush1.bf16.msra.mxu0 0
      %388 = vmatprep.subr.bf16.mxu0 0
      %389 = vmatpush1.bf16.msra.mxu0 0
      %390 = vmatprep.subr.bf16.mxu0 0
      %391 = vmatpush1.bf16.msra.mxu0 0
      %392 = vmatprep.subr.bf16.mxu0 0
      %393 = vmatpush1.bf16.msra.mxu0 0
      %394 = vmatprep.subr.bf16.mxu0 0
      %395 = vmatpush1.bf16.msra.mxu0 0
      %396 = vmatprep.subr.bf16.mxu0 %v384
      %397 = vmatpush1.bf16.msra.mxu0 %v381
      %398 = vmatprep.subr.bf16.mxu0 %v365
      %399 = vmatpush1.bf16.msra.mxu0 %v364
      %400 = vmatprep.subr.bf16.mxu0 %v363
      %401 = vmatpush1.bf16.msra.mxu0 %v362
      %402 = vmatprep.subr.bf16.mxu0 0
      %403 = vmatpush2.bf16.msra.mxu0 0
      %404 = vmatprep.subr.bf16.mxu0 0
      %405 = vmatpush2.bf16.msra.mxu0 0
      %406 = vmatprep.subr.bf16.mxu0 0
      %407 = vmatpush2.bf16.msra.mxu0 0
      %408 = vmatprep.subr.bf16.mxu0 0
      %409 = vmatpush2.bf16.msra.mxu0 0
      %410 = vmatprep.subr.bf16.mxu0 0
      %411 = vmatpush2.bf16.msra.mxu0 0
      %412 = vmatprep.subr.bf16.mxu0 0
      %413 = vmatpush2.bf16.msra.mxu0 0
      %414 = vmatprep.subr.bf16.mxu0 0
      %415 = vmatpush2.bf16.msra.mxu0 0
      %416 = vmatprep.subr.bf16.mxu0 0
      %417 = vmatpush2.bf16.msra.mxu0 0
      %418 = vmatprep.mubr.bf16.mxu0 0
      %419 = vmatmul.mubr.bf16.gmra.mxu0 %v377
      %v420 = vpop.f32.mrf.mxu0
      %v421 = vadd.f32 %v373, %v420
      %v422 = vpop.f32.mrf.mxu0
      %v423 = vadd.f32 %v373, %v422
      %v424 = vpop.f32.mrf.mxu0
      %v425 = vpop.f32.mrf.mxu0
      %426 = vdwg.mxu0
      %430 = vrot.lane.b32.xlu0 %v303, 126
      %v431 = vpop.permute.xlu0 %430
      %432 = vrot.lane.b32.xlu0 %v304, 126
      %v433 = vpop.permute.xlu0 %432
      %434 = vrot.lane.b32.xlu0 %v305, 126
      %v435 = vpop.permute.xlu0 %434
      %v436 = vsel %vm335, %v431, %v433
      %v437 = vsel %vm335, %v433, %v435
      %v440 = vadd.f32 %v421, %v436
      %v441 = vadd.f32 %v423, %v437
      %442 = vst [vmem:[%s300] sm:$0xff] %v440
      %443 = vst [vmem:[%s300 + $0x8] sm:$0xff] %v441
      %s444 = smul.u32 2, %s20
      %p445 = scmp.lt.s32.totalorder %s19, 1
      %s446 = scalar_select %p445, %s19, 1
      %p447 = scmp.lt.s32.totalorder %s444, 9
      %s448 = scalar_select %p447, %s444, 9
      %s449 = smul.addr %s446, 10
      %s450 = sadd.s32 %s448, %s449
      %s451 = smul.addr %s450, 8
      %s452 = scalar_lea.vmem %s4, %s451
      // Predicated region
      $region37: #{_lambda_.21} parent=35 // pred_check
        %p453 = pneg %p149
      $region38: #{_lambda_.21} parent=35 // pred_check_branch
        %455 = sbr.rel (%p453) target = $region40
      $region39: #{_lambda_.21} parent=35 // pred_region
        %s456 = smul.u32 2, %s20
      $region40: #{_lambda_.21} parent=35 // pred_fallthru
        _
    $region36: #{_lambda_.21} parent=5 // pred_fallthru
      _
    %p457 = scmp.le.s32.totalorder 2, %s10
    // Predicated region
    $region41: #{_lambda_.21} parent=5 // pred_check
      %p458 = pneg %p457
    $region42: #{_lambda_.21} parent=5 // pred_check_branch
      %460 = sbr.rel (%p458) target = $region44
    $region43: #{_lambda_.21} parent=5 // pred_region
      %s461 = ssub.s32 %s10, 2
      // Predicated region
      $region45: #{_lambda_.21} parent=43 // pred_check
        %p462 = pneg %p155
      $region46: #{_lambda_.21} parent=43 // pred_check_branch
        %464 = sbr.rel (%p462) target = $region48
      $region47: #{_lambda_.21} parent=43 // pred_region
        %s465 = smul.u32 2, %s22
        %p466 = scmp.lt.s32.totalorder %s21, 1
        %s467 = scalar_select %p466, %s21, 1
        %p468 = scmp.lt.s32.totalorder %s465, 9
        %s469 = scalar_select %p468, %s465, 9
        %s470 = smul.addr %s467, 10
        %s471 = sadd.s32 %s469, %s470
        %s472 = smul.addr %s471, 8
        %s473 = scalar_lea.vmem %s4, %s472
      $region48: #{_lambda_.21} parent=43 // pred_fallthru
        _
    $region44: #{_lambda_.21} parent=5 // pred_fallthru
      _
  $region6: #{_lambda_.21} parent=0 // loop_footer
    %s14 = sadd.s32 1, %s10
  $region7: #{_lambda_.21} parent=0 // loop_footer_branch
    %9 = sbr.rel target = $region3
  $region8: #{_lambda_.21} parent=0 // loop_exit
    _

// kernel: _lambda_.23
$region0: #{_lambda_.23}
  #allocation0 [shape = 'u32[]', space=smem, size = 0x4, offset = 0x4, fixed_abs, tag = 'smem constant byte address 0x4 - core index']
  #allocation1 [shape = 'u32[144,128]{1,0:T(1,128)}', space=vmem, size = 0x12000, scoped, tag = 'internal scratch']
  #allocation2 [shape = 'f32[1,1]{1,0:T(1,128)S(1)}', space=vmem, size = 0x200, scoped, tag = 'scoped memory for _lambda_.23']
  %s0 = inlined_call_operand.vmem [shape: f32[2,8,1408], index: 0, kind: input, shape index: {}, may-alias: {0,1}]
  %s1 = inlined_call_operand.vmem [shape: f32[2,8,1408], index: 1, kind: input, shape index: {}, may-alias: {0,1}]
  %s2 = inlined_call_operand.vmem [shape: bf16[1,56], index: 2, kind: input, shape index: {}]
  %s3 = inlined_call_operand.<no memory space> [shape: f32[1,1], index: 3, kind: input, shape index: {}]
  %s4 = inlined_call_operand.vmem [shape: f32[2,1,1280], index: 4, kind: output, shape index: {}]
  %s5 = sld [smem:[#allocation0]]
  $region49: #{_lambda_.23} parent=0
    _
  %s7 = ssub.s32 1, %s5
  %s8 = scalar_select 0, %s7, %s5
  %v9 = vstv %s3
  %10 = vst [vmem:[#allocation2] sm:$0x1] %v9
  loop: start=0, step=1, limit=12
  $region2: #{_lambda_.23} parent=0 // loop_pre_header
    _
  $region3: #{_lambda_.23} parent=0 // loop_header
    %s12 = sphi 0, %s16
    %p13 = scmp.ge.s32.totalorder %s12, 12
    %s19 = sphi 0, %s31
    %s20 = sphi 0, %s27
    %s21 = sphi 0, %s19
    %s22 = sphi 0, %s20
    %s23 = sphi 0, %s21
    %s24 = sphi 0, %s22
    %s36 = sphi 0, %s38
    %s39 = sphi 0, %s36
    %s40 = sphi 0, %s39
    %s56 = sphi 0, %s40
    %s68 = sphi 0, %s70
    %s71 = sphi 0, %s68
    %s72 = sphi 0, %s71
    %s88 = sphi 0, %s72
    %s92 = sphi 0, %s92
    %s94 = sphi 0, %s92
    %s95 = sphi 0, %s94
    %s109 = sphi 0, %s95
    %s113 = sphi 0, %s113
    %s115 = sphi 0, %s113
    %s116 = sphi 0, %s115
    %s130 = sphi 0, %s116
    %s138 = sphi 0, %s140
    %s141 = sphi 0, %s138
    %s142 = sphi 0, %s141
    %s158 = sphi 0, %s142
  $region4: #{_lambda_.23} parent=0 // loop_header_branch
    %15 = sbr.rel (%p13) target = $region8
  $region5: #{_lambda_.23} parent=0 // loop_body
    %s17 = ssub.s32 %s12, 1
    %s18 = ssub.s32 %s12, 2
    %s25 = sadd.s32 1, %s20
    %p26 = scmp.ge.s32.totalorder %s25, 5
    %s27 = scalar_select %p26, 0, %s25
    %s28 = sadd.s32 1, %s19
    %s29 = scalar_select %p26, %s28, %s19
    %p30 = scmp.ge.s32.totalorder %s29, 2
    %s31 = scalar_select %p30, 0, %s29
    %s32 = ssub.s32 %s19, %s31
    %s33 = ssub.s32 %s20, %s27
    %s34 = sor.u32 %s32, %s33
    %p35 = scmp.eq.s32.totalorder %s34, 0
    %s37 = sadd.s32 %s36, 1
    %s38 = scalar_select %p35, %s36, %s37
    %p41 = pneg %p35
    %p42 = scmp.eq.s32.totalorder %s12, 9
    %p43 = por %p41, %p42
    %p44 = scmp.ne.s32.totalorder %s36, %s39
    %p45 = scmp.eq.s32.totalorder %s12, 0
    %p46 = por %p44, %p45
    %p47 = scmp.ne.s32.totalorder %s36, %s39
    %p48 = scmp.eq.s32.totalorder %s17, 9
    %p49 = por %p47, %p48
    %p50 = scmp.ne.s32.totalorder %s39, %s40
    %p51 = scmp.eq.s32.totalorder %s17, 0
    %p52 = por %p50, %p51
    %p53 = scmp.ne.s32.totalorder %s39, %s40
    %p54 = scmp.eq.s32.totalorder %s18, 9
    %p55 = por %p53, %p54
    %p57 = scmp.ne.s32.totalorder %s40, %s56
    %p58 = scmp.eq.s32.totalorder %s18, 0
    %p59 = por %p57, %p58
    %s60 = sadd.s32 %s20, 1
    %s61 = smul.u32 %s60, 2
    %s62 = sadd.s32 %s27, 1
    %s63 = smul.u32 %s62, 2
    %s64 = ssub.s32 %s19, %s31
    %s65 = ssub.s32 %s61, %s63
    %s66 = sor.u32 %s64, %s65
    %p67 = scmp.eq.s32.totalorder %s66, 0
    %s69 = sadd.s32 %s68, 1
    %s70 = scalar_select %p67, %s68, %s69
    %p73 = pneg %p67
    %p74 = scmp.eq.s32.totalorder %s12, 9
    %p75 = por %p73, %p74
    %p76 = scmp.ne.s32.totalorder %s68, %s71
    %p77 = scmp.eq.s32.totalorder %s12, 0
    %p78 = por %p76, %p77
    %p79 = scmp.ne.s32.totalorder %s68, %s71
    %p80 = scmp.eq.s32.totalorder %s17, 9
    %p81 = por %p79, %p80
    %p82 = scmp.ne.s32.totalorder %s71, %s72
    %p83 = scmp.eq.s32.totalorder %s17, 0
    %p84 = por %p82, %p83
    %p85 = scmp.ne.s32.totalorder %s71, %s72
    %p86 = scmp.eq.s32.totalorder %s18, 9
    %p87 = por %p85, %p86
    %p89 = scmp.ne.s32.totalorder %s72, %s88
    %p90 = scmp.eq.s32.totalorder %s18, 0
    %p91 = por %p89, %p90
    %s93 = sadd.s32 %s92, 1
    %p96 = scmp.eq.s32.totalorder %s12, 9
    %p97 = scmp.ne.s32.totalorder %s92, %s94
    %p98 = scmp.eq.s32.totalorder %s12, 0
    %p99 = por %p97, %p98
    %p100 = scmp.ne.s32.totalorder %s92, %s94
    %p101 = scmp.eq.s32.totalorder %s17, 9
    %p102 = por %p100, %p101
    %p103 = scmp.ne.s32.totalorder %s94, %s95
    %p104 = scmp.eq.s32.totalorder %s17, 0
    %p105 = por %p103, %p104
    %p106 = scmp.ne.s32.totalorder %s94, %s95
    %p107 = scmp.eq.s32.totalorder %s18, 9
    %p108 = por %p106, %p107
    %p110 = scmp.ne.s32.totalorder %s95, %s109
    %p111 = scmp.eq.s32.totalorder %s18, 0
    %p112 = por %p110, %p111
    %s114 = sadd.s32 %s113, 1
    %p117 = scmp.eq.s32.totalorder %s12, 9
    %p118 = scmp.ne.s32.totalorder %s113, %s115
    %p119 = scmp.eq.s32.totalorder %s12, 0
    %p120 = por %p118, %p119
    %p121 = scmp.ne.s32.totalorder %s113, %s115
    %p122 = scmp.eq.s32.totalorder %s17, 9
    %p123 = por %p121, %p122
    %p124 = scmp.ne.s32.totalorder %s115, %s116
    %p125 = scmp.eq.s32.totalorder %s17, 0
    %p126 = por %p124, %p125
    %p127 = scmp.ne.s32.totalorder %s115, %s116
    %p128 = scmp.eq.s32.totalorder %s18, 9
    %p129 = por %p127, %p128
    %p131 = scmp.ne.s32.totalorder %s116, %s130
    %p132 = scmp.eq.s32.totalorder %s18, 0
    %p133 = por %p131, %p132
    %s134 = ssub.s32 %s19, %s31
    %s135 = ssub.s32 %s20, %s27
    %s136 = sor.u32 %s134, %s135
    %p137 = scmp.eq.s32.totalorder %s136, 0
    %s139 = sadd.s32 %s138, 1
    %s140 = scalar_select %p137, %s138, %s139
    %p143 = pneg %p137
    %p144 = scmp.eq.s32.totalorder %s12, 9
    %p145 = por %p143, %p144
    %p146 = scmp.ne.s32.totalorder %s138, %s141
    %p147 = scmp.eq.s32.totalorder %s12, 0
    %p148 = por %p146, %p147
    %p149 = scmp.ne.s32.totalorder %s138, %s141
    %p150 = scmp.eq.s32.totalorder %s17, 9
    %p151 = por %p149, %p150
    %p152 = scmp.ne.s32.totalorder %s141, %s142
    %p153 = scmp.eq.s32.totalorder %s17, 0
    %p154 = por %p152, %p153
    %p155 = scmp.ne.s32.totalorder %s141, %s142
    %p156 = scmp.eq.s32.totalorder %s18, 9
    %p157 = por %p155, %p156
    %p159 = scmp.ne.s32.totalorder %s142, %s158
    %p160 = scmp.eq.s32.totalorder %s18, 0
    %p161 = por %p159, %p160
    %p162 = scmp.le.s32.totalorder 1, %s12
    %p163 = scmp.lt.s32.totalorder %s12, 11
    %p164 = pnand %p162, %p163
    %p165 = pneg %p164
    // Predicated region
    $region9: #{_lambda_.23} parent=5 // pred_check
      _
    $region10: #{_lambda_.23} parent=5 // pred_check_branch
      %167 = sbr.rel (%p164) target = $region12
    $region11: #{_lambda_.23} parent=5 // pred_region
      %s168 = ssub.s32 %s12, 1
      // Predicated region
      $region13: #{_lambda_.23} parent=11 // pred_check
        %p169 = pneg %p105
      $region14: #{_lambda_.23} parent=11 // pred_check_branch
        %171 = sbr.rel (%p169) target = $region16
      $region15: #{_lambda_.23} parent=11 // pred_region
        _
      $region16: #{_lambda_.23} parent=11 // pred_fallthru
        _
      // Predicated region
      $region17: #{_lambda_.23} parent=11 // pred_check
        %p172 = pneg %p126
      $region18: #{_lambda_.23} parent=11 // pred_check_branch
        %174 = sbr.rel (%p172) target = $region20
      $region19: #{_lambda_.23} parent=11 // pred_region
        _
      $region20: #{_lambda_.23} parent=11 // pred_fallthru
        _
    $region12: #{_lambda_.23} parent=5 // pred_fallthru
      _
    %p175 = scmp.lt.s32.totalorder %s12, 10
    // Predicated region
    $region21: #{_lambda_.23} parent=5 // pred_check
      %p176 = pneg %p175
    $region22: #{_lambda_.23} parent=5 // pred_check_branch
      %178 = sbr.rel (%p176) target = $region24
    $region23: #{_lambda_.23} parent=5 // pred_region
      // Predicated region
      $region25: #{_lambda_.23} parent=23 // pred_check
        %p179 = pneg %p46
      $region26: #{_lambda_.23} parent=23 // pred_check_branch
        %181 = sbr.rel (%p179) target = $region28
      $region27: #{_lambda_.23} parent=23 // pred_region
        %s182 = smul.u32 2, %s20
        %s183 = ssub.s32 11, %s182
        %p184 = scmp.lt.s32.totalorder %s183, 2
        %s185 = scalar_select %p184, %s183, 2
        %s186 = smul.u32 128, %s185
        %p187 = scmp.lt.s32.totalorder %s19, 1
        %s188 = scalar_select %p187, %s19, 1
        %p189 = scmp.lt.s32.totalorder %s182, 10
        %s190 = scalar_select %p189, %s182, 10
        %s191 = smul.addr %s188, 11
        %s192 = sadd.s32 %s190, %s191
        %s193 = smul.addr %s192, 8
        %s194 = scalar_lea.vmem %s0, %s193
        %s195 = smul.u32 2, %s20
        %s196 = ssub.s32 11, %s195
        %p197 = scmp.lt.s32.totalorder %s196, 2
        %s198 = scalar_select %p197, %s196, 2
        %s199 = smul.u32 128, %s198
      $region28: #{_lambda_.23} parent=23 // pred_fallthru
        _
      // Predicated region
      $region29: #{_lambda_.23} parent=23 // pred_check
        %p200 = pneg %p78
      $region30: #{_lambda_.23} parent=23 // pred_check_branch
        %202 = sbr.rel (%p200) target = $region32
      $region31: #{_lambda_.23} parent=23 // pred_region
        %s203 = sadd.s32 %s20, 1
        %s204 = smul.u32 %s203, 2
        %p205 = scmp.lt.s32.totalorder %s19, 1
        %s206 = scalar_select %p205, %s19, 1
        %p207 = scmp.lt.s32.totalorder %s204, 10
        %s208 = scalar_select %p207, %s204, 10
        %s209 = smul.addr %s206, 11
        %s210 = sadd.s32 %s208, %s209
        %s211 = smul.addr %s210, 8
        %s212 = scalar_lea.vmem %s1, %s211
        %s213 = sadd.s32 %s20, 1
        %s214 = smul.u32 %s213, 2
      $region32: #{_lambda_.23} parent=23 // pred_fallthru
        _
    $region24: #{_lambda_.23} parent=5 // pred_fallthru
      _
    %p215 = scmp.le.s32.totalorder 1, %s12
    %p216 = scmp.lt.s32.totalorder %s12, 11
    %p217 = pnand %p215, %p216
    %p218 = pneg %p217
    // Predicated region
    $region33: #{_lambda_.23} parent=5 // pred_check
      _
    $region34: #{_lambda_.23} parent=5 // pred_check_branch
      %220 = sbr.rel (%p217) target = $region36
    $region35: #{_lambda_.23} parent=5 // pred_region
      %s221 = ssub.s32 %s12, 1
      %s222 = smul.u32 2, %s22
      %s223 = ssub.s32 11, %s222
      %p224 = scmp.lt.s32.totalorder %s223, 2
      %s225 = scalar_select %p224, %s223, 2
      %s226 = smul.u32 128, %s225
      %p227 = scmp.lt.s32.totalorder %s21, 1
      %s228 = scalar_select %p227, %s21, 1
      %p229 = scmp.lt.s32.totalorder %s222, 10
      %s230 = scalar_select %p229, %s222, 10
      %s231 = smul.addr %s228, 11
      %s232 = sadd.s32 %s230, %s231
      %s233 = smul.addr %s232, 8
      %s234 = scalar_lea.vmem %s0, %s233
      %p235 = pneg %p52
      %p236 = pneg %p49
      %s237 = sadd.s32 %s22, 1
      %s238 = smul.u32 %s237, 2
      %p239 = scmp.lt.s32.totalorder %s21, 1
      %s240 = scalar_select %p239, %s21, 1
      %p241 = scmp.lt.s32.totalorder %s238, 10
      %s242 = scalar_select %p241, %s238, 10
      %s243 = smul.addr %s240, 11
      %s244 = sadd.s32 %s242, %s243
      %s245 = smul.addr %s244, 8
      %s246 = scalar_lea.vmem %s1, %s245
      %p247 = pneg %p84
      %p248 = pneg %p81
      %p249 = pneg %p105
      %p250 = pneg %p102
      %p251 = pneg %p126
      %p252 = pneg %p123
      %p253 = pneg %p154
      %p254 = pneg %p151
      %s255 = smul.u32 2, %s22
      %p256 = scmp.lt.s32.totalorder %s21, 1
      %s257 = scalar_select %p256, %s21, 1
      %p258 = scmp.lt.s32.totalorder %s255, 9
      %s259 = scalar_select %p258, %s255, 9
      %s260 = smul.addr %s257, 10
      %s261 = sadd.s32 %s259, %s260
      %s262 = scalar_lea.vmem %s4, %s261
      %s263 = smul.u32 2, %s22
      %s264 = ssub.s32 11, %s263
      %p265 = scmp.lt.s32.totalorder %s264, 2
      %s266 = scalar_select %p265, %s264, 2
      %s267 = smul.u32 128, %s266
      %p268 = scmp.lt.s32.totalorder %s21, 1
      %s269 = scalar_select %p268, %s21, 1
      %p270 = scmp.lt.s32.totalorder %s263, 10
      %s271 = scalar_select %p270, %s263, 10
      %s272 = smul.addr %s269, 11
      %s273 = sadd.s32 %s271, %s272
      %s274 = smul.addr %s273, 8
      %s275 = scalar_lea.vmem %s0, %s274
      %s276 = smul.u32 2, %s22
      %s277 = ssub.s32 11, %s276
      %p278 = scmp.lt.s32.totalorder %s277, 2
      %s279 = scalar_select %p278, %s277, 2
      %s280 = smul.u32 128, %s279
      %s281 = sadd.s32 %s22, 1
      %s282 = smul.u32 %s281, 2
      %p283 = scmp.lt.s32.totalorder %s21, 1
      %s284 = scalar_select %p283, %s21, 1
      %p285 = scmp.lt.s32.totalorder %s282, 10
      %s286 = scalar_select %p285, %s282, 10
      %s287 = smul.addr %s284, 11
      %s288 = sadd.s32 %s286, %s287
      %s289 = smul.addr %s288, 8
      %s290 = scalar_lea.vmem %s1, %s289
      %s291 = sadd.s32 %s22, 1
      %s292 = smul.u32 %s291, 2
      %s293 = smul.u32 2, %s22
      %p294 = scmp.lt.s32.totalorder %s21, 1
      %s295 = scalar_select %p294, %s21, 1
      %p296 = scmp.lt.s32.totalorder %s293, 9
      %s297 = scalar_select %p296, %s293, 9
      %s298 = smul.addr %s295, 10
      %s299 = sadd.s32 %s297, %s298
      %s300 = scalar_lea.vmem %s4, %s299
      %s301 = smul.u32 2, %s22
      %v303 = vld [vmem:[%s275] sm:$0xff]
      %v304 = vld [vmem:[%s275 + $0x8] sm:$0xff]
      %v305 = vld [vmem:[%s290] sm:$0xff]
      %vm306 = vcmp.gt.f32.partialorder %v303, 0.0
      %vm307 = vcmp.gt.f32.partialorder %v304, 0.0
      %vm308 = vcmp.gt.f32.partialorder %v305, 0.0
      %v309 = vmul.f32 %v303, 0.01
      %v310 = vmul.f32 %v304, 0.01
      %v311 = vmul.f32 %v305, 0.01
      %v312 = vsel %vm306, %v303, %v309
      %v313 = vsel %vm307, %v304, %v310
      %v314 = vsel %vm308, %v305, %v311
      %318 = vrot.lane.b32.xlu0 %v312, 127
      %v319 = vpop.permute.xlu0 %318
      %320 = vrot.lane.b32.xlu0 %v313, 127
      %v321 = vpop.permute.xlu0 %320
      %322 = vrot.lane.b32.xlu0 %v314, 127
      %v323 = vpop.permute.xlu0 %322
      %vm324 = vcmask 1039360
      %v325 = vsel %vm324, %v319, %v321
      %v326 = vsel %vm324, %v321, %v323
      %329 = vrot.lane.b32.xlu0 %v312, 126
      %v330 = vpop.permute.xlu0 %329
      %331 = vrot.lane.b32.xlu0 %v313, 126
      %v332 = vpop.permute.xlu0 %331
      %333 = vrot.lane.b32.xlu0 %v314, 126
      %v334 = vpop.permute.xlu0 %333
      %vm335 = vcmask 1031168
      %v336 = vsel %vm335, %v330, %v332
      %v337 = vsel %vm335, %v332, %v334
      %340 = vrot.lane.b32.xlu0 %v312, 125
      %v341 = vpop.permute.xlu0 %340
      %342 = vrot.lane.b32.xlu0 %v313, 125
      %v343 = vpop.permute.xlu0 %342
      %344 = vrot.lane.b32.xlu0 %v314, 125
      %v345 = vpop.permute.xlu0 %344
      %vm346 = vcmask 1022976
      %v347 = vsel %vm346, %v341, %v343
      %v348 = vsel %vm346, %v343, %v345
      %351 = vrot.lane.b32.xlu0 %v312, 124
      %v352 = vpop.permute.xlu0 %351
      %353 = vrot.lane.b32.xlu0 %v313, 124
      %v354 = vpop.permute.xlu0 %353
      %355 = vrot.lane.b32.xlu0 %v314, 124
      %v356 = vpop.permute.xlu0 %355
      %vm357 = vcmask 1014784
      %v358 = vsel %vm357, %v352, %v354
      %v359 = vsel %vm357, %v354, %v356
      %362 = vrot.lane.b32.xlu0 %v312, 123
      %v363 = vpop.permute.xlu0 %362
      %364 = vrot.lane.b32.xlu0 %v313, 123
      %v365 = vpop.permute.xlu0 %364
      %366 = vrot.lane.b32.xlu0 %v314, 123
      %v367 = vpop.permute.xlu0 %366
      %vm368 = vcmask 1006592
      %v369 = vsel %vm368, %v363, %v365
      %v370 = vsel %vm368, %v365, %v367
      %373 = vrot.lane.b32.xlu0 %v312, 122
      %v374 = vpop.permute.xlu0 %373
      %375 = vrot.lane.b32.xlu0 %v313, 122
      %v376 = vpop.permute.xlu0 %375
      %377 = vrot.lane.b32.xlu0 %v314, 122
      %v378 = vpop.permute.xlu0 %377
      %vm379 = vcmask 998400
      %v380 = vsel %vm379, %v374, %v376
      %v381 = vsel %vm379, %v376, %v378
      %v384 = vpack.c.bf16 %v325, %v312
      %v385 = vpack.c.bf16 %v326, %v313
      %v386 = vpack.c.bf16 %v347, %v336
      %v387 = vpack.c.bf16 %v348, %v337
      %v388 = vpack.c.bf16 %v369, %v358
      %v389 = vpack.c.bf16 %v370, %v359
      %v390 = vpack.c.bf16 %v380, %v380
      %v391 = vpack.c.bf16 %v381, %v381
      %v392 = vld [vmem:[%s2] sm:$0x1]
      %v393 = vld [vmem:[#allocation2] sm:$0x1]
      %395 = vset.pattern.permute.xlu0 0
      %396 = vperm.xlu0 %395, %v393
      %v397 = vpop.permute.xlu0 %396
      %v399 = vlaneseq
      %v400 = vshrl.u32 %v399, 7
      %v401 = vsub.s32 0, %v400
      %v402 = vrot.slane %v397, %v401
      %vm403 = vcmask 457728
      %v405 = vsel %vm403, %v392, 0
      %vm407 = vcmask 1043456
      %v409 = vsel %vm407, %v390, 0
      %v412 = vsel %vm407, %v391, 0
      %414 = vmatprep.subr.bf16.mxu0 0
      %415 = vmatpush1.bf16.msra.mxu0 0
      %416 = vmatprep.subr.bf16.mxu0 0
      %417 = vmatpush1.bf16.msra.mxu0 0
      %418 = vmatprep.subr.bf16.mxu0 0
      %419 = vmatpush1.bf16.msra.mxu0 0
      %420 = vmatprep.subr.bf16.mxu0 0
      %421 = vmatpush1.bf16.msra.mxu0 0
      %422 = vmatprep.subr.bf16.mxu0 %v412
      %423 = vmatpush1.bf16.msra.mxu0 %v409
      %424 = vmatprep.subr.bf16.mxu0 %v389
      %425 = vmatpush1.bf16.msra.mxu0 %v388
      %426 = vmatprep.subr.bf16.mxu0 %v387
      %427 = vmatpush1.bf16.msra.mxu0 %v386
      %428 = vmatprep.subr.bf16.mxu0 %v385
      %429 = vmatpush1.bf16.msra.mxu0 %v384
      %430 = vmatprep.subr.bf16.mxu0 0
      %431 = vmatpush2.bf16.msra.mxu0 0
      %432 = vmatprep.subr.bf16.mxu0 0
      %433 = vmatpush2.bf16.msra.mxu0 0
      %434 = vmatprep.subr.bf16.mxu0 0
      %435 = vmatpush2.bf16.msra.mxu0 0
      %436 = vmatprep.subr.bf16.mxu0 0
      %437 = vmatpush2.bf16.msra.mxu0 0
      %438 = vmatprep.subr.bf16.mxu0 0
      %439 = vmatpush2.bf16.msra.mxu0 0
      %440 = vmatprep.subr.bf16.mxu0 0
      %441 = vmatpush2.bf16.msra.mxu0 0
      %442 = vmatprep.subr.bf16.mxu0 0
      %443 = vmatpush2.bf16.msra.mxu0 0
      %444 = vmatprep.subr.bf16.mxu0 0
      %445 = vmatpush2.bf16.msra.mxu0 0
      %446 = vmatprep.mubr.bf16.mxu0 0
      %447 = vmatmul.mubr.bf16.gmra.mxu0 %v405
      %v448 = vpop.f32.mrf.mxu0
      %v449 = vadd.f32 %v402, %v448
      %v450 = vpop.f32.mrf.mxu0
      %v451 = vadd.f32 %v402, %v450
      %v452 = vpop.f32.mrf.mxu0
      %v453 = vpop.f32.mrf.mxu0
      %454 = vdwg.mxu0
      %v455 = vtanh.pop %v449
      %v456 = vtanh.pop %v451
      %v459 = vcombine.low %v455, %v456
      %v461 = vunpack.c.l.s4 1966171168
      %v462 = vunpack.c.0.s8 %v461
      %v463 = vlaneseq
      %v464 = vshrl.u32 %v463, 7
      %v465 = vsub.s32 %v462, %v464
      %v466 = vrot.slane %v459, %v465
      %v468 = vunpack.c.l.s4 1966171168
      %v469 = vunpack.c.0.s8 %v468
      %v470 = vlaneseq
      %v471 = vshrl.u32 %v470, 7
      %v472 = vsub.s32 %v469, %v471
      %v473 = vrot.slane %v466, %v472
      %v475 = vlaneseq
      %vm476 = vcmp.ge.s32.totalorder %v475, 0
      %vm477 = vcmp.lt.s32.totalorder %v475, 256
      %vm478 = vmand %vm476, %vm477
      %479 = vst.msk [vmem:[%s300] sm:$0x3] %vm478, %v473
      %s480 = smul.u32 2, %s22
      %p481 = scmp.lt.s32.totalorder %s21, 1
      %s482 = scalar_select %p481, %s21, 1
      %p483 = scmp.lt.s32.totalorder %s480, 9
      %s484 = scalar_select %p483, %s480, 9
      %s485 = smul.addr %s482, 10
      %s486 = sadd.s32 %s484, %s485
      %s487 = scalar_lea.vmem %s4, %s486
      // Predicated region
      $region37: #{_lambda_.23} parent=35 // pred_check
        %p488 = pneg %p151
      $region38: #{_lambda_.23} parent=35 // pred_check_branch
        %490 = sbr.rel (%p488) target = $region40
      $region39: #{_lambda_.23} parent=35 // pred_region
        %s491 = smul.u32 2, %s22
      $region40: #{_lambda_.23} parent=35 // pred_fallthru
        _
    $region36: #{_lambda_.23} parent=5 // pred_fallthru
      _
    %p492 = scmp.le.s32.totalorder 2, %s12
    // Predicated region
    $region41: #{_lambda_.23} parent=5 // pred_check
      %p493 = pneg %p492
    $region42: #{_lambda_.23} parent=5 // pred_check_branch
      %495 = sbr.rel (%p493) target = $region44
    $region43: #{_lambda_.23} parent=5 // pred_region
      %s496 = ssub.s32 %s12, 2
      // Predicated region
      $region45: #{_lambda_.23} parent=43 // pred_check
        %p497 = pneg %p157
      $region46: #{_lambda_.23} parent=43 // pred_check_branch
        %499 = sbr.rel (%p497) target = $region48
      $region47: #{_lambda_.23} parent=43 // pred_region
        %s500 = smul.u32 2, %s24
        %p501 = scmp.lt.s32.totalorder %s23, 1
        %s502 = scalar_select %p501, %s23, 1
        %p503 = scmp.lt.s32.totalorder %s500, 9
        %s504 = scalar_select %p503, %s500, 9
        %s505 = smul.addr %s502, 10
        %s506 = sadd.s32 %s504, %s505
        %s507 = scalar_lea.vmem %s4, %s506
      $region48: #{_lambda_.23} parent=43 // pred_fallthru
        _
    $region44: #{_lambda_.23} parent=5 // pred_fallthru
      _
  $region6: #{_lambda_.23} parent=0 // loop_footer
    %s16 = sadd.s32 1, %s12
  $region7: #{_lambda_.23} parent=0 // loop_footer_branch
    %11 = sbr.rel target = $region3
  $region8: #{_lambda_.23} parent=0 // loop_exit
    _

// kernel: _lambda_.22
$region0: #{_lambda_.22}
  #allocation0 [shape = 'u32[]', space=smem, size = 0x4, offset = 0x4, fixed_abs, tag = 'smem constant byte address 0x4 - core index']
  #allocation1 [shape = 'u32[144,128]{1,0:T(1,128)}', space=vmem, size = 0x12000, scoped, tag = 'internal scratch']
  %s0 = inlined_call_operand.vmem [shape: f32[2,8,1408], index: 0, kind: input, shape index: {}, may-alias: {0,1}]
  %s1 = inlined_call_operand.vmem [shape: f32[2,8,1408], index: 1, kind: input, shape index: {}, may-alias: {0,1}]
  %s2 = inlined_call_operand.vmem [shape: bf16[8,40], index: 2, kind: input, shape index: {}]
  %s3 = inlined_call_operand.vmem [shape: f32[8,1], index: 3, kind: input, shape index: {}]
  %s4 = inlined_call_operand.vmem [shape: f32[2,8,1280], index: 4, kind: input, shape index: {}]
  %s5 = inlined_call_operand.vmem [shape: f32[2,8,1280], index: 5, kind: output, shape index: {}]
  %s6 = sld [smem:[#allocation0]]
  $region53: #{_lambda_.22} parent=0
    _
  %s8 = ssub.s32 1, %s6
  %s9 = scalar_select 0, %s8, %s6
  loop: start=0, step=1, limit=12
  $region2: #{_lambda_.22} parent=0 // loop_pre_header
    _
  $region3: #{_lambda_.22} parent=0 // loop_header
    %s11 = sphi 0, %s15
    %p12 = scmp.ge.s32.totalorder %s11, 12
    %s18 = sphi 0, %s30
    %s19 = sphi 0, %s26
    %s20 = sphi 0, %s18
    %s21 = sphi 0, %s19
    %s22 = sphi 0, %s20
    %s23 = sphi 0, %s21
    %s35 = sphi 0, %s37
    %s38 = sphi 0, %s35
    %s39 = sphi 0, %s38
    %s55 = sphi 0, %s39
    %s67 = sphi 0, %s69
    %s70 = sphi 0, %s67
    %s71 = sphi 0, %s70
    %s87 = sphi 0, %s71
    %s91 = sphi 0, %s91
    %s93 = sphi 0, %s91
    %s94 = sphi 0, %s93
    %s108 = sphi 0, %s94
    %s112 = sphi 0, %s112
    %s114 = sphi 0, %s112
    %s115 = sphi 0, %s114
    %s129 = sphi 0, %s115
    %s137 = sphi 0, %s139
    %s140 = sphi 0, %s137
    %s141 = sphi 0, %s140
    %s157 = sphi 0, %s141
    %s165 = sphi 0, %s167
    %s168 = sphi 0, %s165
    %s169 = sphi 0, %s168
    %s185 = sphi 0, %s169
  $region4: #{_lambda_.22} parent=0 // loop_header_branch
    %14 = sbr.rel (%p12) target = $region8
  $region5: #{_lambda_.22} parent=0 // loop_body
    %s16 = ssub.s32 %s11, 1
    %s17 = ssub.s32 %s11, 2
    %s24 = sadd.s32 1, %s19
    %p25 = scmp.ge.s32.totalorder %s24, 5
    %s26 = scalar_select %p25, 0, %s24
    %s27 = sadd.s32 1, %s18
    %s28 = scalar_select %p25, %s27, %s18
    %p29 = scmp.ge.s32.totalorder %s28, 2
    %s30 = scalar_select %p29, 0, %s28
    %s31 = ssub.s32 %s18, %s30
    %s32 = ssub.s32 %s19, %s26
    %s33 = sor.u32 %s31, %s32
    %p34 = scmp.eq.s32.totalorder %s33, 0
    %s36 = sadd.s32 %s35, 1
    %s37 = scalar_select %p34, %s35, %s36
    %p40 = pneg %p34
    %p41 = scmp.eq.s32.totalorder %s11, 9
    %p42 = por %p40, %p41
    %p43 = scmp.ne.s32.totalorder %s35, %s38
    %p44 = scmp.eq.s32.totalorder %s11, 0
    %p45 = por %p43, %p44
    %p46 = scmp.ne.s32.totalorder %s35, %s38
    %p47 = scmp.eq.s32.totalorder %s16, 9
    %p48 = por %p46, %p47
    %p49 = scmp.ne.s32.totalorder %s38, %s39
    %p50 = scmp.eq.s32.totalorder %s16, 0
    %p51 = por %p49, %p50
    %p52 = scmp.ne.s32.totalorder %s38, %s39
    %p53 = scmp.eq.s32.totalorder %s17, 9
    %p54 = por %p52, %p53
    %p56 = scmp.ne.s32.totalorder %s39, %s55
    %p57 = scmp.eq.s32.totalorder %s17, 0
    %p58 = por %p56, %p57
    %s59 = sadd.s32 %s19, 1
    %s60 = smul.u32 %s59, 2
    %s61 = sadd.s32 %s26, 1
    %s62 = smul.u32 %s61, 2
    %s63 = ssub.s32 %s18, %s30
    %s64 = ssub.s32 %s60, %s62
    %s65 = sor.u32 %s63, %s64
    %p66 = scmp.eq.s32.totalorder %s65, 0
    %s68 = sadd.s32 %s67, 1
    %s69 = scalar_select %p66, %s67, %s68
    %p72 = pneg %p66
    %p73 = scmp.eq.s32.totalorder %s11, 9
    %p74 = por %p72, %p73
    %p75 = scmp.ne.s32.totalorder %s67, %s70
    %p76 = scmp.eq.s32.totalorder %s11, 0
    %p77 = por %p75, %p76
    %p78 = scmp.ne.s32.totalorder %s67, %s70
    %p79 = scmp.eq.s32.totalorder %s16, 9
    %p80 = por %p78, %p79
    %p81 = scmp.ne.s32.totalorder %s70, %s71
    %p82 = scmp.eq.s32.totalorder %s16, 0
    %p83 = por %p81, %p82
    %p84 = scmp.ne.s32.totalorder %s70, %s71
    %p85 = scmp.eq.s32.totalorder %s17, 9
    %p86 = por %p84, %p85
    %p88 = scmp.ne.s32.totalorder %s71, %s87
    %p89 = scmp.eq.s32.totalorder %s17, 0
    %p90 = por %p88, %p89
    %s92 = sadd.s32 %s91, 1
    %p95 = scmp.eq.s32.totalorder %s11, 9
    %p96 = scmp.ne.s32.totalorder %s91, %s93
    %p97 = scmp.eq.s32.totalorder %s11, 0
    %p98 = por %p96, %p97
    %p99 = scmp.ne.s32.totalorder %s91, %s93
    %p100 = scmp.eq.s32.totalorder %s16, 9
    %p101 = por %p99, %p100
    %p102 = scmp.ne.s32.totalorder %s93, %s94
    %p103 = scmp.eq.s32.totalorder %s16, 0
    %p104 = por %p102, %p103
    %p105 = scmp.ne.s32.totalorder %s93, %s94
    %p106 = scmp.eq.s32.totalorder %s17, 9
    %p107 = por %p105, %p106
    %p109 = scmp.ne.s32.totalorder %s94, %s108
    %p110 = scmp.eq.s32.totalorder %s17, 0
    %p111 = por %p109, %p110
    %s113 = sadd.s32 %s112, 1
    %p116 = scmp.eq.s32.totalorder %s11, 9
    %p117 = scmp.ne.s32.totalorder %s112, %s114
    %p118 = scmp.eq.s32.totalorder %s11, 0
    %p119 = por %p117, %p118
    %p120 = scmp.ne.s32.totalorder %s112, %s114
    %p121 = scmp.eq.s32.totalorder %s16, 9
    %p122 = por %p120, %p121
    %p123 = scmp.ne.s32.totalorder %s114, %s115
    %p124 = scmp.eq.s32.totalorder %s16, 0
    %p125 = por %p123, %p124
    %p126 = scmp.ne.s32.totalorder %s114, %s115
    %p127 = scmp.eq.s32.totalorder %s17, 9
    %p128 = por %p126, %p127
    %p130 = scmp.ne.s32.totalorder %s115, %s129
    %p131 = scmp.eq.s32.totalorder %s17, 0
    %p132 = por %p130, %p131
    %s133 = ssub.s32 %s18, %s30
    %s134 = ssub.s32 %s19, %s26
    %s135 = sor.u32 %s133, %s134
    %p136 = scmp.eq.s32.totalorder %s135, 0
    %s138 = sadd.s32 %s137, 1
    %s139 = scalar_select %p136, %s137, %s138
    %p142 = pneg %p136
    %p143 = scmp.eq.s32.totalorder %s11, 9
    %p144 = por %p142, %p143
    %p145 = scmp.ne.s32.totalorder %s137, %s140
    %p146 = scmp.eq.s32.totalorder %s11, 0
    %p147 = por %p145, %p146
    %p148 = scmp.ne.s32.totalorder %s137, %s140
    %p149 = scmp.eq.s32.totalorder %s16, 9
    %p150 = por %p148, %p149
    %p151 = scmp.ne.s32.totalorder %s140, %s141
    %p152 = scmp.eq.s32.totalorder %s16, 0
    %p153 = por %p151, %p152
    %p154 = scmp.ne.s32.totalorder %s140, %s141
    %p155 = scmp.eq.s32.totalorder %s17, 9
    %p156 = por %p154, %p155
    %p158 = scmp.ne.s32.totalorder %s141, %s157
    %p159 = scmp.eq.s32.totalorder %s17, 0
    %p160 = por %p158, %p159
    %s161 = ssub.s32 %s18, %s30
    %s162 = ssub.s32 %s19, %s26
    %s163 = sor.u32 %s161, %s162
    %p164 = scmp.eq.s32.totalorder %s163, 0
    %s166 = sadd.s32 %s165, 1
    %s167 = scalar_select %p164, %s165, %s166
    %p170 = pneg %p164
    %p171 = scmp.eq.s32.totalorder %s11, 9
    %p172 = por %p170, %p171
    %p173 = scmp.ne.s32.totalorder %s165, %s168
    %p174 = scmp.eq.s32.totalorder %s11, 0
    %p175 = por %p173, %p174
    %p176 = scmp.ne.s32.totalorder %s165, %s168
    %p177 = scmp.eq.s32.totalorder %s16, 9
    %p178 = por %p176, %p177
    %p179 = scmp.ne.s32.totalorder %s168, %s169
    %p180 = scmp.eq.s32.totalorder %s16, 0
    %p181 = por %p179, %p180
    %p182 = scmp.ne.s32.totalorder %s168, %s169
    %p183 = scmp.eq.s32.totalorder %s17, 9
    %p184 = por %p182, %p183
    %p186 = scmp.ne.s32.totalorder %s169, %s185
    %p187 = scmp.eq.s32.totalorder %s17, 0
    %p188 = por %p186, %p187
    %p189 = scmp.le.s32.totalorder 1, %s11
    %p190 = scmp.lt.s32.totalorder %s11, 11
    %p191 = pnand %p189, %p190
    %p192 = pneg %p191
    // Predicated region
    $region9: #{_lambda_.22} parent=5 // pred_check
      _
    $region10: #{_lambda_.22} parent=5 // pred_check_branch
      %194 = sbr.rel (%p191) target = $region12
    $region11: #{_lambda_.22} parent=5 // pred_region
      %s195 = ssub.s32 %s11, 1
      // Predicated region
      $region13: #{_lambda_.22} parent=11 // pred_check
        %p196 = pneg %p104
      $region14: #{_lambda_.22} parent=11 // pred_check_branch
        %198 = sbr.rel (%p196) target = $region16
      $region15: #{_lambda_.22} parent=11 // pred_region
        _
      $region16: #{_lambda_.22} parent=11 // pred_fallthru
        _
      // Predicated region
      $region17: #{_lambda_.22} parent=11 // pred_check
        %p199 = pneg %p125
      $region18: #{_lambda_.22} parent=11 // pred_check_branch
        %201 = sbr.rel (%p199) target = $region20
      $region19: #{_lambda_.22} parent=11 // pred_region
        _
      $region20: #{_lambda_.22} parent=11 // pred_fallthru
        _
    $region12: #{_lambda_.22} parent=5 // pred_fallthru
      _
    %p202 = scmp.lt.s32.totalorder %s11, 10
    // Predicated region
    $region21: #{_lambda_.22} parent=5 // pred_check
      %p203 = pneg %p202
    $region22: #{_lambda_.22} parent=5 // pred_check_branch
      %205 = sbr.rel (%p203) target = $region24
    $region23: #{_lambda_.22} parent=5 // pred_region
      // Predicated region
      $region25: #{_lambda_.22} parent=23 // pred_check
        %p206 = pneg %p45
      $region26: #{_lambda_.22} parent=23 // pred_check_branch
        %208 = sbr.rel (%p206) target = $region28
      $region27: #{_lambda_.22} parent=23 // pred_region
        %s209 = smul.u32 2, %s19
        %s210 = ssub.s32 11, %s209
        %p211 = scmp.lt.s32.totalorder %s210, 2
        %s212 = scalar_select %p211, %s210, 2
        %s213 = smul.u32 128, %s212
        %p214 = scmp.lt.s32.totalorder %s18, 1
        %s215 = scalar_select %p214, %s18, 1
        %p216 = scmp.lt.s32.totalorder %s209, 10
        %s217 = scalar_select %p216, %s209, 10
        %s218 = smul.addr %s215, 11
        %s219 = sadd.s32 %s217, %s218
        %s220 = smul.addr %s219, 8
        %s221 = scalar_lea.vmem %s0, %s220
        %s222 = smul.u32 2, %s19
        %s223 = ssub.s32 11, %s222
        %p224 = scmp.lt.s32.totalorder %s223, 2
        %s225 = scalar_select %p224, %s223, 2
        %s226 = smul.u32 128, %s225
      $region28: #{_lambda_.22} parent=23 // pred_fallthru
        _
      // Predicated region
      $region29: #{_lambda_.22} parent=23 // pred_check
        %p227 = pneg %p77
      $region30: #{_lambda_.22} parent=23 // pred_check_branch
        %229 = sbr.rel (%p227) target = $region32
      $region31: #{_lambda_.22} parent=23 // pred_region
        %s230 = sadd.s32 %s19, 1
        %s231 = smul.u32 %s230, 2
        %p232 = scmp.lt.s32.totalorder %s18, 1
        %s233 = scalar_select %p232, %s18, 1
        %p234 = scmp.lt.s32.totalorder %s231, 10
        %s235 = scalar_select %p234, %s231, 10
        %s236 = smul.addr %s233, 11
        %s237 = sadd.s32 %s235, %s236
        %s238 = smul.addr %s237, 8
        %s239 = scalar_lea.vmem %s1, %s238
        %s240 = sadd.s32 %s19, 1
        %s241 = smul.u32 %s240, 2
      $region32: #{_lambda_.22} parent=23 // pred_fallthru
        _
      // Predicated region
      $region33: #{_lambda_.22} parent=23 // pred_check
        %p242 = pneg %p147
      $region34: #{_lambda_.22} parent=23 // pred_check_branch
        %244 = sbr.rel (%p242) target = $region36
      $region35: #{_lambda_.22} parent=23 // pred_region
        %s245 = smul.u32 2, %s19
        %p246 = scmp.lt.s32.totalorder %s18, 1
        %s247 = scalar_select %p246, %s18, 1
        %p248 = scmp.lt.s32.totalorder %s245, 9
        %s249 = scalar_select %p248, %s245, 9
        %s250 = smul.addr %s247, 10
        %s251 = sadd.s32 %s249, %s250
        %s252 = smul.addr %s251, 8
        %s253 = scalar_lea.vmem %s4, %s252
        %s254 = smul.u32 2, %s19
      $region36: #{_lambda_.22} parent=23 // pred_fallthru
        _
    $region24: #{_lambda_.22} parent=5 // pred_fallthru
      _
    %p255 = scmp.le.s32.totalorder 1, %s11
    %p256 = scmp.lt.s32.totalorder %s11, 11
    %p257 = pnand %p255, %p256
    %p258 = pneg %p257
    // Predicated region
    $region37: #{_lambda_.22} parent=5 // pred_check
      _
    $region38: #{_lambda_.22} parent=5 // pred_check_branch
      %260 = sbr.rel (%p257) target = $region40
    $region39: #{_lambda_.22} parent=5 // pred_region
      %s261 = ssub.s32 %s11, 1
      %s262 = smul.u32 2, %s21
      %s263 = ssub.s32 11, %s262
      %p264 = scmp.lt.s32.totalorder %s263, 2
      %s265 = scalar_select %p264, %s263, 2
      %s266 = smul.u32 128, %s265
      %p267 = scmp.lt.s32.totalorder %s20, 1
      %s268 = scalar_select %p267, %s20, 1
      %p269 = scmp.lt.s32.totalorder %s262, 10
      %s270 = scalar_select %p269, %s262, 10
      %s271 = smul.addr %s268, 11
      %s272 = sadd.s32 %s270, %s271
      %s273 = smul.addr %s272, 8
      %s274 = scalar_lea.vmem %s0, %s273
      %p275 = pneg %p51
      %p276 = pneg %p48
      %s277 = sadd.s32 %s21, 1
      %s278 = smul.u32 %s277, 2
      %p279 = scmp.lt.s32.totalorder %s20, 1
      %s280 = scalar_select %p279, %s20, 1
      %p281 = scmp.lt.s32.totalorder %s278, 10
      %s282 = scalar_select %p281, %s278, 10
      %s283 = smul.addr %s280, 11
      %s284 = sadd.s32 %s282, %s283
      %s285 = smul.addr %s284, 8
      %s286 = scalar_lea.vmem %s1, %s285
      %p287 = pneg %p83
      %p288 = pneg %p80
      %p289 = pneg %p104
      %p290 = pneg %p101
      %p291 = pneg %p125
      %p292 = pneg %p122
      %s293 = smul.u32 2, %s21
      %p294 = scmp.lt.s32.totalorder %s20, 1
      %s295 = scalar_select %p294, %s20, 1
      %p296 = scmp.lt.s32.totalorder %s293, 9
      %s297 = scalar_select %p296, %s293, 9
      %s298 = smul.addr %s295, 10
      %s299 = sadd.s32 %s297, %s298
      %s300 = smul.addr %s299, 8
      %s301 = scalar_lea.vmem %s4, %s300
      %p302 = pneg %p153
      %p303 = pneg %p150
      %p304 = pneg %p181
      %p305 = pneg %p178
      %s306 = smul.u32 2, %s21
      %p307 = scmp.lt.s32.totalorder %s20, 1
      %s308 = scalar_select %p307, %s20, 1
      %p309 = scmp.lt.s32.totalorder %s306, 9
      %s310 = scalar_select %p309, %s306, 9
      %s311 = smul.addr %s308, 10
      %s312 = sadd.s32 %s310, %s311
      %s313 = smul.addr %s312, 8
      %s314 = scalar_lea.vmem %s5, %s313
      %s315 = smul.u32 2, %s21
      %s316 = ssub.s32 11, %s315
      %p317 = scmp.lt.s32.totalorder %s316, 2
      %s318 = scalar_select %p317, %s316, 2
      %s319 = smul.u32 128, %s318
      %p320 = scmp.lt.s32.totalorder %s20, 1
      %s321 = scalar_select %p320, %s20, 1
      %p322 = scmp.lt.s32.totalorder %s315, 10
      %s323 = scalar_select %p322, %s315, 10
      %s324 = smul.addr %s321, 11
      %s325 = sadd.s32 %s323, %s324
      %s326 = smul.addr %s325, 8
      %s327 = scalar_lea.vmem %s0, %s326
      %s328 = smul.u32 2, %s21
      %s329 = ssub.s32 11, %s328
      %p330 = scmp.lt.s32.totalorder %s329, 2
      %s331 = scalar_select %p330, %s329, 2
      %s332 = smul.u32 128, %s331
      %s333 = sadd.s32 %s21, 1
      %s334 = smul.u32 %s333, 2
      %p335 = scmp.lt.s32.totalorder %s20, 1
      %s336 = scalar_select %p335, %s20, 1
      %p337 = scmp.lt.s32.totalorder %s334, 10
      %s338 = scalar_select %p337, %s334, 10
      %s339 = smul.addr %s336, 11
      %s340 = sadd.s32 %s338, %s339
      %s341 = smul.addr %s340, 8
      %s342 = scalar_lea.vmem %s1, %s341
      %s343 = sadd.s32 %s21, 1
      %s344 = smul.u32 %s343, 2
      %s345 = smul.u32 2, %s21
      %p346 = scmp.lt.s32.totalorder %s20, 1
      %s347 = scalar_select %p346, %s20, 1
      %p348 = scmp.lt.s32.totalorder %s345, 9
      %s349 = scalar_select %p348, %s345, 9
      %s350 = smul.addr %s347, 10
      %s351 = sadd.s32 %s349, %s350
      %s352 = smul.addr %s351, 8
      %s353 = scalar_lea.vmem %s4, %s352
      %s354 = smul.u32 2, %s21
      %s355 = smul.u32 2, %s21
      %p356 = scmp.lt.s32.totalorder %s20, 1
      %s357 = scalar_select %p356, %s20, 1
      %p358 = scmp.lt.s32.totalorder %s355, 9
      %s359 = scalar_select %p358, %s355, 9
      %s360 = smul.addr %s357, 10
      %s361 = sadd.s32 %s359, %s360
      %s362 = smul.addr %s361, 8
      %s363 = scalar_lea.vmem %s5, %s362
      %s364 = smul.u32 2, %s21
      %v366 = vld [vmem:[%s327] sm:$0xff]
      %v367 = vld [vmem:[%s327 + $0x8] sm:$0xff]
      %v368 = vld [vmem:[%s342] sm:$0xff]
      %vm369 = vcmp.gt.f32.partialorder %v366, 0.0
      %vm370 = vcmp.gt.f32.partialorder %v367, 0.0
      %vm371 = vcmp.gt.f32.partialorder %v368, 0.0
      %v372 = vmul.f32 %v366, 0.01
      %v373 = vmul.f32 %v367, 0.01
      %v374 = vmul.f32 %v368, 0.01
      %v375 = vsel %vm369, %v366, %v372
      %v376 = vsel %vm370, %v367, %v373
      %v377 = vsel %vm371, %v368, %v374
      %381 = vrot.lane.b32.xlu0 %v375, 125
      %v382 = vpop.permute.xlu0 %381
      %383 = vrot.lane.b32.xlu0 %v376, 125
      %v384 = vpop.permute.xlu0 %383
      %385 = vrot.lane.b32.xlu0 %v377, 125
      %v386 = vpop.permute.xlu0 %385
      %vm387 = vcmask 1022976
      %v388 = vsel %vm387, %v382, %v384
      %v389 = vsel %vm387, %v384, %v386
      %392 = vrot.lane.b32.xlu0 %v375, 122
      %v393 = vpop.permute.xlu0 %392
      %394 = vrot.lane.b32.xlu0 %v376, 122
      %v395 = vpop.permute.xlu0 %394
      %396 = vrot.lane.b32.xlu0 %v377, 122
      %v397 = vpop.permute.xlu0 %396
      %vm398 = vcmask 998400
      %v399 = vsel %vm398, %v393, %v395
      %v400 = vsel %vm398, %v395, %v397
      %403 = vrot.lane.b32.xlu0 %v375, 119
      %v404 = vpop.permute.xlu0 %403
      %405 = vrot.lane.b32.xlu0 %v376, 119
      %v406 = vpop.permute.xlu0 %405
      %407 = vrot.lane.b32.xlu0 %v377, 119
      %v408 = vpop.permute.xlu0 %407
      %vm409 = vcmask 973824
      %v410 = vsel %vm409, %v404, %v406
      %v411 = vsel %vm409, %v406, %v408
      %414 = vrot.lane.b32.xlu0 %v375, 116
      %v415 = vpop.permute.xlu0 %414
      %416 = vrot.lane.b32.xlu0 %v376, 116
      %v417 = vpop.permute.xlu0 %416
      %418 = vrot.lane.b32.xlu0 %v377, 116
      %v419 = vpop.permute.xlu0 %418
      %vm420 = vcmask 949248
      %v421 = vsel %vm420, %v415, %v417
      %v422 = vsel %vm420, %v417, %v419
      %v425 = vpack.c.bf16 %v388, %v375
      %v426 = vpack.c.bf16 %v389, %v376
      %v427 = vpack.c.bf16 %v410, %v399
      %v428 = vpack.c.bf16 %v411, %v400
      %v429 = vpack.c.bf16 %v421, %v421
      %v430 = vpack.c.bf16 %v422, %v422
      %v431 = vld [vmem:[%s2] sm:$0xf]
      %v432 = vld [vmem:[%s3] sm:$0xff]
      %434 = vset.pattern.permute.xlu0 0
      %435 = vperm.xlu0 %434, %v432
      %v436 = vpop.permute.xlu0 %435
      %vm438 = vcmask 326656
      %v440 = vsel %vm438, %v431, 0
      %vm442 = vcmask 1043456
      %v444 = vsel %vm442, %v429, 0
      %v447 = vsel %vm442, %v430, 0
      %449 = vmatprep.subr.bf16.mxu0 0
      %450 = vmatpush1.bf16.msra.mxu0 0
      %451 = vmatprep.subr.bf16.mxu0 0
      %452 = vmatpush1.bf16.msra.mxu0 0
      %453 = vmatprep.subr.bf16.mxu0 0
      %454 = vmatpush1.bf16.msra.mxu0 0
      %455 = vmatprep.subr.bf16.mxu0 0
      %456 = vmatpush1.bf16.msra.mxu0 0
      %457 = vmatprep.subr.bf16.mxu0 0
      %458 = vmatpush1.bf16.msra.mxu0 0
      %459 = vmatprep.subr.bf16.mxu0 %v447
      %460 = vmatpush1.bf16.msra.mxu0 %v444
      %461 = vmatprep.subr.bf16.mxu0 %v428
      %462 = vmatpush1.bf16.msra.mxu0 %v427
      %463 = vmatprep.subr.bf16.mxu0 %v426
      %464 = vmatpush1.bf16.msra.mxu0 %v425
      %465 = vmatprep.subr.bf16.mxu0 0
      %466 = vmatpush2.bf16.msra.mxu0 0
      %467 = vmatprep.subr.bf16.mxu0 0
      %468 = vmatpush2.bf16.msra.mxu0 0
      %469 = vmatprep.subr.bf16.mxu0 0
      %470 = vmatpush2.bf16.msra.mxu0 0
      %471 = vmatprep.subr.bf16.mxu0 0
      %472 = vmatpush2.bf16.msra.mxu0 0
      %473 = vmatprep.subr.bf16.mxu0 0
      %474 = vmatpush2.bf16.msra.mxu0 0
      %475 = vmatprep.subr.bf16.mxu0 0
      %476 = vmatpush2.bf16.msra.mxu0 0
      %477 = vmatprep.subr.bf16.mxu0 0
      %478 = vmatpush2.bf16.msra.mxu0 0
      %479 = vmatprep.subr.bf16.mxu0 0
      %480 = vmatpush2.bf16.msra.mxu0 0
      %481 = vmatprep.mubr.bf16.mxu0 0
      %482 = vmatmul.mubr.bf16.gmra.mxu0 %v440
      %v483 = vpop.f32.mrf.mxu0
      %v484 = vadd.f32 %v436, %v483
      %v485 = vpop.f32.mrf.mxu0
      %v486 = vadd.f32 %v436, %v485
      %v487 = vpop.f32.mrf.mxu0
      %v488 = vpop.f32.mrf.mxu0
      %489 = vdwg.mxu0
      %493 = vrot.lane.b32.xlu0 %v366, 122
      %v494 = vpop.permute.xlu0 %493
      %495 = vrot.lane.b32.xlu0 %v367, 122
      %v496 = vpop.permute.xlu0 %495
      %497 = vrot.lane.b32.xlu0 %v368, 122
      %v498 = vpop.permute.xlu0 %497
      %v499 = vsel %vm398, %v494, %v496
      %v500 = vsel %vm398, %v496, %v498
      %v503 = vadd.f32 %v484, %v499
      %v504 = vadd.f32 %v486, %v500
      %v505 = vld [vmem:[%s353] sm:$0xff]
      %v506 = vld [vmem:[%s353 + $0x8] sm:$0xff]
      %v507 = vadd.f32 %v503, %v505
      %v508 = vadd.f32 %v504, %v506
      %v509 = vmul.f32 %v507, 0.5
      %v510 = vmul.f32 %v508, 0.5
      %511 = vst [vmem:[%s363] sm:$0xff] %v509
      %512 = vst [vmem:[%s363 + $0x8] sm:$0xff] %v510
      %s513 = smul.u32 2, %s21
      %p514 = scmp.lt.s32.totalorder %s20, 1
      %s515 = scalar_select %p514, %s20, 1
      %p516 = scmp.lt.s32.totalorder %s513, 9
      %s517 = scalar_select %p516, %s513, 9
      %s518 = smul.addr %s515, 10
      %s519 = sadd.s32 %s517, %s518
      %s520 = smul.addr %s519, 8
      %s521 = scalar_lea.vmem %s5, %s520
      // Predicated region
      $region41: #{_lambda_.22} parent=39 // pred_check
        %p522 = pneg %p178
      $region42: #{_lambda_.22} parent=39 // pred_check_branch
        %524 = sbr.rel (%p522) target = $region44
      $region43: #{_lambda_.22} parent=39 // pred_region
        %s525 = smul.u32 2, %s21
      $region44: #{_lambda_.22} parent=39 // pred_fallthru
        _
    $region40: #{_lambda_.22} parent=5 // pred_fallthru
      _
    %p526 = scmp.le.s32.totalorder 2, %s11
    // Predicated region
    $region45: #{_lambda_.22} parent=5 // pred_check
      %p527 = pneg %p526
    $region46: #{_lambda_.22} parent=5 // pred_check_branch
      %529 = sbr.rel (%p527) target = $region48
    $region47: #{_lambda_.22} parent=5 // pred_region
      %s530 = ssub.s32 %s11, 2
      // Predicated region
      $region49: #{_lambda_.22} parent=47 // pred_check
        %p531 = pneg %p184
      $region50: #{_lambda_.22} parent=47 // pred_check_branch
        %533 = sbr.rel (%p531) target = $region52
      $region51: #{_lambda_.22} parent=47 // pred_region
        %s534 = smul.u32 2, %s23
        %p535 = scmp.lt.s32.totalorder %s22, 1
        %s536 = scalar_select %p535, %s22, 1
        %p537 = scmp.lt.s32.totalorder %s534, 9
        %s538 = scalar_select %p537, %s534, 9
        %s539 = smul.addr %s536, 10
        %s540 = sadd.s32 %s538, %s539
        %s541 = smul.addr %s540, 8
        %s542 = scalar_lea.vmem %s5, %s541
      $region52: #{_lambda_.22} parent=47 // pred_fallthru
        _
    $region48: #{_lambda_.22} parent=5 // pred_fallthru
      _
  $region6: #{_lambda_.22} parent=0 // loop_footer
    %s15 = sadd.s32 1, %s11
  $region7: #{_lambda_.22} parent=0 // loop_footer_branch
    %10 = sbr.rel target = $region3
  $region8: #{_lambda_.22} parent=0 // loop_exit
    _

</llo_original>
